<compile_context>
chip_gen: v6e
topology: v6e:2x2x1
jax: 0.10.0
libtpu: 0.0.40
codegen_flags: <defaults>
</compile_context>

<pallas_src>
import functools

import jax
import jax.numpy as jnp
from jax.experimental import pallas as pl
from jax.experimental.pallas import tpu as pltpu


D_INPUT = 64          # d_input_dim (small synthetic size)
H1, H2, H3 = 1024, 512, 256
DROP_P = 0.3
KEEP_P = 1.0 - DROP_P
LEAK = 0.2
OUT_LANES = 128       # lane-dense output slab; real result lives in column 0


def _leaky_relu(x, slope):
    return jnp.where(x > 0, x, slope * x)


def disc_kernel(x_ref, m1_ref, m2_ref, m3_ref,
                w1_ref, b1_ref, w2_ref, b2_ref,
                w3_ref, b3_ref, w4_ref, b4_ref,
                out_ref):
    x = x_ref[...]                                                        # (BM, D)

    h = jnp.dot(x, w1_ref[...], preferred_element_type=jnp.float32) + b1_ref[...]
    h = _leaky_relu(h, LEAK) * m1_ref[...]                                # dropout (pre-scaled mask)

    h = jnp.dot(h, w2_ref[...], preferred_element_type=jnp.float32) + b2_ref[...]
    h = _leaky_relu(h, LEAK) * m2_ref[...]

    h = jnp.dot(h, w3_ref[...], preferred_element_type=jnp.float32) + b3_ref[...]
    h = _leaky_relu(h, LEAK) * m3_ref[...]                                # (BM, 256)

    # Final layer has out_features == 1: use VPU multiply + XLU lane reduction
    # instead of an MXU matmul with a single useful result column.
    logit = jnp.sum(h * w4_ref[...], axis=-1, keepdims=True) + b4_ref[...]   # (BM, 1)
    y = jax.nn.sigmoid(logit)

    # Lane-dense store: broadcast across 128 lanes; wrapper slices column 0.
    out_ref[...] = jnp.broadcast_to(y, out_ref.shape)


@functools.partial(jax.jit, static_argnames=("block_m", "training"))
def discriminator_forward(x, params, key, *, block_m=256, training=True):
    """x: (B, D) float32; params: dict w1..w4, b1..b4 (PyTorch (in,out) layout);
    key: jax PRNG key for the dropout masks."""
    B, D = x.shape
    n_blocks = pl.cdiv(B, block_m)
    B_pad = n_blocks * block_m
    if B_pad != B:
        x = jnp.pad(x, ((0, B_pad - B), (0, 0)))

    w1, b1 = params["w1"], params["b1"]
    w2, b2 = params["w2"], params["b2"]
    w3, b3 = params["w3"], params["b3"]
    w4, b4 = params["w4"], params["b4"]
    w4_row = w4.T                                         # (1, H3) row for the VPU epilogue

    # Inverted dropout masks, pre-scaled by 1/keep_p (kernel just multiplies).
    if training:
        k1, k2, k3 = jax.random.split(key, 3)
        def _mask(k, h):
            keep = jax.random.uniform(k, (B_pad, h), dtype=jnp.float32) >= DROP_P
            return keep.astype(jnp.float32) * jnp.float32(1.0 / KEEP_P)
        m1, m2, m3 = _mask(k1, H1), _mask(k2, H2), _mask(k3, H3)
    else:
        m1 = jnp.ones((B_pad, H1), jnp.float32)
        m2 = jnp.ones((B_pad, H2), jnp.float32)
        m3 = jnp.ones((B_pad, H3), jnp.float32)

    # Weights/biases are small (<3 MiB f32 total) -> fully VMEM-resident; the grid
    # only tiles the batch dimension.
    row_spec = lambda h: pl.BlockSpec((block_m, h), lambda i: (i, 0))
    full = lambda a: pl.BlockSpec(a.shape, lambda i: (0, 0))

    out = pl.pallas_call(
        disc_kernel,
        out_shape=jax.ShapeDtypeStruct((B_pad, OUT_LANES), jnp.float32),
        grid=(n_blocks,),
        in_specs=[
            row_spec(D),                                   # x
            row_spec(H1), row_spec(H2), row_spec(H3),      # dropout masks
            full(w1), full(b1),
            full(w2), full(b2),
            full(w3), full(b3),
            full(w4_row), full(b4),
        ],
        out_specs=pl.BlockSpec((block_m, OUT_LANES), lambda i: (i, 0)),
        compiler_params=pltpu.CompilerParams(
            dimension_semantics=("parallel",),             # blocks independent -> dual-TC on v7x
            vmem_limit_bytes=32 << 20,                     # ~10 MiB actual footprint; headroom kept
        ),
    )(x, m1, m2, m3, w1, b1, w2, b2, w3, b3, w4_row, b4)

    return out[:B, :1]


def init_params(key, d_input_dim):
    """Deterministic init mirroring nn.Linear: U(-1/sqrt(fan_in), 1/sqrt(fan_in))."""
    dims = [(d_input_dim, H1), (H1, H2), (H2, H3), (H3, 1)]
    params = {}
    keys = jax.random.split(key, 2 * len(dims))
    for idx, (fan_in, fan_out) in enumerate(dims):
        bound = 1.0 / jnp.sqrt(jnp.float32(fan_in))
        w = jax.random.uniform(keys[2 * idx], (fan_in, fan_out),
                               minval=-bound, maxval=bound, dtype=jnp.float32)
        b = jax.random.uniform(keys[2 * idx + 1], (1, fan_out),
                               minval=-bound, maxval=bound, dtype=jnp.float32)
        params[f"w{idx + 1}"] = w
        params[f"b{idx + 1}"] = b
    return params


if __name__ == "__main__":
    key = jax.random.PRNGKey(0)
    k_param, k_x, k_drop = jax.random.split(key, 3)

    B = 8
    x = jax.random.normal(k_x, (B, D_INPUT), dtype=jnp.float32)
    params = init_params(k_param, D_INPUT)

    y = discriminator_forward(x, params, k_drop)   # training-mode dropout, like F.dropout default
    y = jax.block_until_ready(y)

    assert y.shape == (B, 1)
    assert bool(jnp.all((y >= 0.0) & (y <= 1.0)))
    assert bool(jnp.all(jnp.isfinite(y)))
    print("KERNEL_OK")
</pallas_src>

<mosaic_0001>
module attributes {stable_mosaic.version = 11 : i64} {
  func.func @disc_kernel(%arg0: i32, %arg1: memref<256x64xf32, #tpu.memory_space<vmem>>, %arg2: memref<256x1024xf32, #tpu.memory_space<vmem>>, %arg3: memref<256x512xf32, #tpu.memory_space<vmem>>, %arg4: memref<256x256xf32, #tpu.memory_space<vmem>>, %arg5: memref<64x1024xf32, #tpu.memory_space<vmem>>, %arg6: memref<1x1024xf32, #tpu.memory_space<vmem>>, %arg7: memref<1024x512xf32, #tpu.memory_space<vmem>>, %arg8: memref<1x512xf32, #tpu.memory_space<vmem>>, %arg9: memref<512x256xf32, #tpu.memory_space<vmem>>, %arg10: memref<1x256xf32, #tpu.memory_space<vmem>>, %arg11: memref<1x256xf32, #tpu.memory_space<vmem>>, %arg12: memref<1x1xf32, #tpu.memory_space<vmem>>, %arg13: memref<256x128xf32, #tpu.memory_space<vmem>>) attributes {dimension_semantics = [#tpu.dimension_semantics<parallel>], iteration_bounds = array<i64: 1>, scalar_prefetch = 0 : i64, scratch_operands = 0 : i64, tpu.core_type = #tpu.core_type<tc>, window_params = [{transform_indices = @transform_0, window_bounds = array<i64: 256, 64>}, {transform_indices = @transform_1, window_bounds = array<i64: 256, 1024>}, {transform_indices = @transform_2, window_bounds = array<i64: 256, 512>}, {transform_indices = @transform_3, window_bounds = array<i64: 256, 256>}, {pipeline_mode = #tpu.pipeline_mode<synchronous>, transform_indices = @transform_4, window_bounds = array<i64: 64, 1024>}, {pipeline_mode = #tpu.pipeline_mode<synchronous>, transform_indices = @transform_5, window_bounds = array<i64: 1, 1024>}, {pipeline_mode = #tpu.pipeline_mode<synchronous>, transform_indices = @transform_6, window_bounds = array<i64: 1024, 512>}, {pipeline_mode = #tpu.pipeline_mode<synchronous>, transform_indices = @transform_7, window_bounds = array<i64: 1, 512>}, {pipeline_mode = #tpu.pipeline_mode<synchronous>, transform_indices = @transform_8, window_bounds = array<i64: 512, 256>}, {pipeline_mode = #tpu.pipeline_mode<synchronous>, transform_indices = @transform_9, window_bounds = array<i64: 1, 256>}, {pipeline_mode = #tpu.pipeline_mode<synchronous>, transform_indices = @transform_10, window_bounds = array<i64: 1, 256>}, {pipeline_mode = #tpu.pipeline_mode<synchronous>, transform_indices = @transform_11, window_bounds = array<i64: 1, 1>}, {transform_indices = @transform_12, window_bounds = array<i64: 256, 128>}]} {
    %c0 = arith.constant 0 : index
    %c0_0 = arith.constant 0 : index
    %0 = vector.load %arg1[%c0, %c0_0] : memref<256x64xf32, #tpu.memory_space<vmem>>, vector<256x64xf32>
    %c0_1 = arith.constant 0 : index
    %c0_2 = arith.constant 0 : index
    %1 = vector.load %arg5[%c0_1, %c0_2] : memref<64x1024xf32, #tpu.memory_space<vmem>>, vector<64x1024xf32>
    %cst = arith.constant dense<0.000000e+00> : vector<256x1024xf32>
    %2 = tpu.matmul %0, %1, %cst {dimension_numbers = #tpu.dot_dimension_numbers<[1], [0], [0], [1], [0, 0, 1, 1], [], []>} : vector<256x64xf32>, vector<64x1024xf32>, vector<256x1024xf32> -> vector<256x1024xf32>
    %c0_3 = arith.constant 0 : index
    %c0_4 = arith.constant 0 : index
    %3 = vector.load %arg6[%c0_3, %c0_4] : memref<1x1024xf32, #tpu.memory_space<vmem>>, vector<1x1024xf32>
    %4 = vector.broadcast %3 : vector<1x1024xf32> to vector<256x1024xf32>
    %5 = arith.addf %2, %4 : vector<256x1024xf32>
    %cst_5 = arith.constant 0.000000e+00 : f32
    %6 = vector.broadcast %cst_5 : f32 to vector<256x1024xf32>
    %7 = arith.cmpf ogt, %5, %6 : vector<256x1024xf32>
    %cst_6 = arith.constant 2.000000e-01 : f32
    %8 = vector.broadcast %cst_6 : f32 to vector<256x1024xf32>
    %9 = arith.mulf %8, %5 : vector<256x1024xf32>
    %10 = arith.select %7, %5, %9 : vector<256x1024xi1>, vector<256x1024xf32>
    %c0_7 = arith.constant 0 : index
    %c0_8 = arith.constant 0 : index
    %11 = vector.load %arg2[%c0_7, %c0_8] : memref<256x1024xf32, #tpu.memory_space<vmem>>, vector<256x1024xf32>
    %12 = arith.mulf %10, %11 : vector<256x1024xf32>
    %c0_9 = arith.constant 0 : index
    %c0_10 = arith.constant 0 : index
    %13 = vector.load %arg7[%c0_9, %c0_10] : memref<1024x512xf32, #tpu.memory_space<vmem>>, vector<1024x512xf32>
    %cst_11 = arith.constant dense<0.000000e+00> : vector<256x512xf32>
    %14 = tpu.matmul %12, %13, %cst_11 {dimension_numbers = #tpu.dot_dimension_numbers<[1], [0], [0], [1], [0, 0, 1, 1], [], []>} : vector<256x1024xf32>, vector<1024x512xf32>, vector<256x512xf32> -> vector<256x512xf32>
    %c0_12 = arith.constant 0 : index
    %c0_13 = arith.constant 0 : index
    %15 = vector.load %arg8[%c0_12, %c0_13] : memref<1x512xf32, #tpu.memory_space<vmem>>, vector<1x512xf32>
    %16 = vector.broadcast %15 : vector<1x512xf32> to vector<256x512xf32>
    %17 = arith.addf %14, %16 : vector<256x512xf32>
    %cst_14 = arith.constant 0.000000e+00 : f32
    %18 = vector.broadcast %cst_14 : f32 to vector<256x512xf32>
    %19 = arith.cmpf ogt, %17, %18 : vector<256x512xf32>
    %cst_15 = arith.constant 2.000000e-01 : f32
    %20 = vector.broadcast %cst_15 : f32 to vector<256x512xf32>
    %21 = arith.mulf %20, %17 : vector<256x512xf32>
    %22 = arith.select %19, %17, %21 : vector<256x512xi1>, vector<256x512xf32>
    %c0_16 = arith.constant 0 : index
    %c0_17 = arith.constant 0 : index
    %23 = vector.load %arg3[%c0_16, %c0_17] : memref<256x512xf32, #tpu.memory_space<vmem>>, vector<256x512xf32>
    %24 = arith.mulf %22, %23 : vector<256x512xf32>
    %c0_18 = arith.constant 0 : index
    %c0_19 = arith.constant 0 : index
    %25 = vector.load %arg9[%c0_18, %c0_19] : memref<512x256xf32, #tpu.memory_space<vmem>>, vector<512x256xf32>
    %cst_20 = arith.constant dense<0.000000e+00> : vector<256x256xf32>
    %26 = tpu.matmul %24, %25, %cst_20 {dimension_numbers = #tpu.dot_dimension_numbers<[1], [0], [0], [1], [0, 0, 1, 1], [], []>} : vector<256x512xf32>, vector<512x256xf32>, vector<256x256xf32> -> vector<256x256xf32>
    %c0_21 = arith.constant 0 : index
    %c0_22 = arith.constant 0 : index
    %27 = vector.load %arg10[%c0_21, %c0_22] : memref<1x256xf32, #tpu.memory_space<vmem>>, vector<1x256xf32>
    %28 = vector.broadcast %27 : vector<1x256xf32> to vector<256x256xf32>
    %29 = arith.addf %26, %28 : vector<256x256xf32>
    %cst_23 = arith.constant 0.000000e+00 : f32
    %30 = vector.broadcast %cst_23 : f32 to vector<256x256xf32>
    %31 = arith.cmpf ogt, %29, %30 : vector<256x256xf32>
    %cst_24 = arith.constant 2.000000e-01 : f32
    %32 = vector.broadcast %cst_24 : f32 to vector<256x256xf32>
    %33 = arith.mulf %32, %29 : vector<256x256xf32>
    %34 = arith.select %31, %29, %33 : vector<256x256xi1>, vector<256x256xf32>
    %c0_25 = arith.constant 0 : index
    %c0_26 = arith.constant 0 : index
    %35 = vector.load %arg4[%c0_25, %c0_26] : memref<256x256xf32, #tpu.memory_space<vmem>>, vector<256x256xf32>
    %36 = arith.mulf %34, %35 : vector<256x256xf32>
    %c0_27 = arith.constant 0 : index
    %c0_28 = arith.constant 0 : index
    %37 = vector.load %arg11[%c0_27, %c0_28] : memref<1x256xf32, #tpu.memory_space<vmem>>, vector<1x256xf32>
    %38 = vector.broadcast %37 : vector<1x256xf32> to vector<256x256xf32>
    %39 = arith.mulf %36, %38 : vector<256x256xf32>
    %cst_29 = arith.constant dense<0.000000e+00> : vector<256xf32>
    %40 = vector.multi_reduction <add>, %39, %cst_29 [1] : vector<256x256xf32> to vector<256xf32>
    %41 = vector.shape_cast %40 : vector<256xf32> to vector<256x1xf32>
    %c0_30 = arith.constant 0 : index
    %c0_31 = arith.constant 0 : index
    %42 = vector.load %arg12[%c0_30, %c0_31] : memref<1x1xf32, #tpu.memory_space<vmem>>, vector<1x1xf32>
    %43 = vector.broadcast %42 : vector<1x1xf32> to vector<256x1xf32>
    %44 = arith.addf %41, %43 : vector<256x1xf32>
    %45 = arith.negf %44 : vector<256x1xf32>
    %46 = math.exp %45 : vector<256x1xf32>
    %cst_32 = arith.constant 1.000000e+00 : f32
    %47 = vector.broadcast %cst_32 : f32 to vector<256x1xf32>
    %48 = arith.addf %47, %46 : vector<256x1xf32>
    %49 = arith.divf %47, %48 : vector<256x1xf32>
    %50 = vector.shape_cast %49 : vector<256x1xf32> to vector<256x1xf32>
    %51 = vector.broadcast %50 : vector<256x1xf32> to vector<256x128xf32>
    %c0_33 = arith.constant 0 : index
    %c0_34 = arith.constant 0 : index
    %52 = vector.load %arg13[%c0_33, %c0_34] : memref<256x128xf32, #tpu.memory_space<vmem>>, vector<256x128xf32>
    tpu.vector_store %arg13[%c0_33, %c0_34], %51 {strides = array<i32>} : memref<256x128xf32, #tpu.memory_space<vmem>>, vector<256x128xf32>,
    return
  }
  func.func @transform_0(%arg0: i32) -> (i32, i32) {
    %c0_i32 = arith.constant 0 : i32
    %c0_i32_0 = arith.constant 0 : i32
    return %arg0, %c0_i32 : i32, i32
  }
  func.func @transform_1(%arg0: i32) -> (i32, i32) {
    %c0_i32 = arith.constant 0 : i32
    %c0_i32_0 = arith.constant 0 : i32
    return %arg0, %c0_i32 : i32, i32
  }
  func.func @transform_2(%arg0: i32) -> (i32, i32) {
    %c0_i32 = arith.constant 0 : i32
    %c0_i32_0 = arith.constant 0 : i32
    return %arg0, %c0_i32 : i32, i32
  }
  func.func @transform_3(%arg0: i32) -> (i32, i32) {
    %c0_i32 = arith.constant 0 : i32
    %c0_i32_0 = arith.constant 0 : i32
    return %arg0, %c0_i32 : i32, i32
  }
  func.func @transform_4(%arg0: i32) -> (i32, i32) {
    %c0_i32 = arith.constant 0 : i32
    %c0_i32_0 = arith.constant 0 : i32
    %c0_i32_1 = arith.constant 0 : i32
    return %c0_i32, %c0_i32_0 : i32, i32
  }
  func.func @transform_5(%arg0: i32) -> (i32, i32) {
    %c0_i32 = arith.constant 0 : i32
    %c0_i32_0 = arith.constant 0 : i32
    %c0_i32_1 = arith.constant 0 : i32
    return %c0_i32, %c0_i32_0 : i32, i32
  }
  func.func @transform_6(%arg0: i32) -> (i32, i32) {
    %c0_i32 = arith.constant 0 : i32
    %c0_i32_0 = arith.constant 0 : i32
    %c0_i32_1 = arith.constant 0 : i32
    return %c0_i32, %c0_i32_0 : i32, i32
  }
  func.func @transform_7(%arg0: i32) -> (i32, i32) {
    %c0_i32 = arith.constant 0 : i32
    %c0_i32_0 = arith.constant 0 : i32
    %c0_i32_1 = arith.constant 0 : i32
    return %c0_i32, %c0_i32_0 : i32, i32
  }
  func.func @transform_8(%arg0: i32) -> (i32, i32) {
    %c0_i32 = arith.constant 0 : i32
    %c0_i32_0 = arith.constant 0 : i32
    %c0_i32_1 = arith.constant 0 : i32
    return %c0_i32, %c0_i32_0 : i32, i32
  }
  func.func @transform_9(%arg0: i32) -> (i32, i32) {
    %c0_i32 = arith.constant 0 : i32
    %c0_i32_0 = arith.constant 0 : i32
    %c0_i32_1 = arith.constant 0 : i32
    return %c0_i32, %c0_i32_0 : i32, i32
  }
  func.func @transform_10(%arg0: i32) -> (i32, i32) {
    %c0_i32 = arith.constant 0 : i32
    %c0_i32_0 = arith.constant 0 : i32
    %c0_i32_1 = arith.constant 0 : i32
    return %c0_i32, %c0_i32_0 : i32, i32
  }
  func.func @transform_11(%arg0: i32) -> (i32, i32) {
    %c0_i32 = arith.constant 0 : i32
    %c0_i32_0 = arith.constant 0 : i32
    %c0_i32_1 = arith.constant 0 : i32
    return %c0_i32, %c0_i32_0 : i32, i32
  }
  func.func @transform_12(%arg0: i32) -> (i32, i32) {
    %c0_i32 = arith.constant 0 : i32
    %c0_i32_0 = arith.constant 0 : i32
    return %arg0, %c0_i32 : i32, i32
  }
}

</mosaic_0001>

<llo_original>
// kernel: discriminator_forward.3
$region0: #{discriminator_forward.3}
  #allocation0 [shape = 'u32[]', space=smem, size = 0x4, offset = 0x4, fixed_abs, tag = 'smem constant byte address 0x4 - core index']
  #allocation1 [shape = 'u32[144,128]{1,0:T(1,128)}', space=vmem, size = 0x12000, scoped, tag = 'internal scratch']
  #allocation2 [shape = 'f32[1,1]{1,0:T(1,128)S(1)}', space=vmem, size = 0x200, scoped, tag = 'scoped memory for discriminator_forward.3']
  %s0 = inlined_call_operand.vmem [shape: f32[256,64], index: 0, kind: input, shape index: {}]
  %s1 = inlined_call_operand.vmem [shape: f32[256,1024], index: 1, kind: input, shape index: {}]
  %s2 = inlined_call_operand.vmem [shape: f32[256,512], index: 2, kind: input, shape index: {}]
  %s3 = inlined_call_operand.vmem [shape: f32[256,256], index: 3, kind: input, shape index: {}]
  %s4 = inlined_call_operand.vmem [shape: f32[64,1024], index: 4, kind: input, shape index: {}]
  %s5 = inlined_call_operand.hbm [shape: f32[1,1024], index: 5, kind: input, shape index: {}]
  %s6 = inlined_call_operand.hbm [shape: f32[1024,512], index: 6, kind: input, shape index: {}]
  %s7 = inlined_call_operand.hbm [shape: f32[1,512], index: 7, kind: input, shape index: {}]
  %s8 = inlined_call_operand.vmem [shape: f32[512,256], index: 8, kind: input, shape index: {}]
  %s9 = inlined_call_operand.hbm [shape: f32[1,256], index: 9, kind: input, shape index: {}]
  %s10 = inlined_call_operand.hbm [shape: f32[1,256], index: 10, kind: input, shape index: {}]
  %s11 = inlined_call_operand.<no memory space> [shape: f32[1,1], index: 11, kind: input, shape index: {}]
  %s12 = inlined_call_operand.vmem [shape: f32[256,128], index: 12, kind: output, shape index: {}]
  %s13 = sld [smem:[#allocation0]]
  $region78: #{discriminator_forward.3} parent=0
    _
  %s15 = ssub.s32 1, %s13
  %s16 = scalar_select 0, %s15, %s13
  %v17 = vstv %s11
  %18 = vst [vmem:[#allocation2] sm:$0x1] %v17
  $region1: #{discriminator_forward.3} parent=0
    #allocation3 [shape = 'u8[4096]{0}', space=vmem, size = 0x1000, scoped, tag = 'input window, operand 5, single buffered']
    #allocation4 [shape = 's32[1]{0}', space=sflag, size = 0x4, scoped, tag = 'scoped memory for discriminator_forward.3']
    #allocation5 [shape = 'u8[2097152]{0}', space=vmem, size = 0x200000, scoped, tag = 'input window, operand 6, single buffered']
    #allocation6 [shape = 's32[1]{0}', space=sflag, size = 0x4, scoped, tag = 'scoped memory for discriminator_forward.3']
    #allocation7 [shape = 'u8[2048]{0}', space=vmem, size = 0x800, scoped, tag = 'input window, operand 7, single buffered']
    #allocation8 [shape = 'u8[1024]{0}', space=vmem, size = 0x400, scoped, tag = 'input window, operand 9, single buffered']
    #allocation9 [shape = 's32[1]{0}', space=sflag, size = 0x4, scoped, tag = 'scoped memory for discriminator_forward.3']
    #allocation10 [shape = 'u8[1024]{0}', space=vmem, size = 0x400, scoped, tag = 'input window, operand 10, single buffered']
    %19 = vsyncpa [#allocation4], 0
    %20 = vsyncpa [#allocation6], 0
    %21 = vsyncpa [#allocation9], 0
    // Predicated region
    $region2: #{discriminator_forward.3} parent=1 // pred_check
      _
    $region3: #{discriminator_forward.3} parent=1 // pred_check_branch
      %23 = sbr.rel (0) target = $region5
    $region4: #{discriminator_forward.3} parent=1 // pred_region
      _
    $region5: #{discriminator_forward.3} parent=1 // pred_fallthru
      _
    // Predicated region
    $region6: #{discriminator_forward.3} parent=1 // pred_check
      _
    $region7: #{discriminator_forward.3} parent=1 // pred_check_branch
      %25 = sbr.rel (0) target = $region9
    $region8: #{discriminator_forward.3} parent=1 // pred_region
      _
    $region9: #{discriminator_forward.3} parent=1 // pred_fallthru
      _
    // Predicated region
    $region10: #{discriminator_forward.3} parent=1 // pred_check
      _
    $region11: #{discriminator_forward.3} parent=1 // pred_check_branch
      %27 = sbr.rel (0) target = $region13
    $region12: #{discriminator_forward.3} parent=1 // pred_region
      _
    $region13: #{discriminator_forward.3} parent=1 // pred_fallthru
      _
    // Predicated region
    $region14: #{discriminator_forward.3} parent=1 // pred_check
      _
    $region15: #{discriminator_forward.3} parent=1 // pred_check_branch
      %29 = sbr.rel (0) target = $region17
    $region16: #{discriminator_forward.3} parent=1 // pred_region
      _
    $region17: #{discriminator_forward.3} parent=1 // pred_fallthru
      _
    // Predicated region
    $region18: #{discriminator_forward.3} parent=1 // pred_check
      _
    $region19: #{discriminator_forward.3} parent=1 // pred_check_branch
      %31 = sbr.rel (0) target = $region21
    $region20: #{discriminator_forward.3} parent=1 // pred_region
      _
    $region21: #{discriminator_forward.3} parent=1 // pred_fallthru
      _
    // Predicated region
    $region22: #{discriminator_forward.3} parent=1 // pred_check
      _
    $region23: #{discriminator_forward.3} parent=1 // pred_check_branch
      %33 = sbr.rel (0) target = $region25
    $region24: #{discriminator_forward.3} parent=1 // pred_region
      %s35 = ssub.s32 128, 128
      %36 = vsyncadd [#allocation4], %s35
      %s38 = sshll.u32 [#allocation3], 4
      %s39 = int_to_ptr.vmem [resolvable:$true] %s38
      %41 = dma.hbm_to_vmem [thread:$0]  %s5, 128, %s39, [#allocation4]
    $region25: #{discriminator_forward.3} parent=1 // pred_fallthru
      _
    // Predicated region
    $region26: #{discriminator_forward.3} parent=1 // pred_check
      _
    $region27: #{discriminator_forward.3} parent=1 // pred_check_branch
      %43 = sbr.rel (0) target = $region29
    $region28: #{discriminator_forward.3} parent=1 // pred_region
      %s45 = ssub.s32 65536, 65536
      %46 = vsyncadd [#allocation6], %s45
      %s47 = sshll.u32 [#allocation5], 4
      %s48 = int_to_ptr.vmem [resolvable:$true] %s47
      %53 = dma.hbm_to_vmem [thread:$0]  %s6, 65536, %s48, [#allocation6], 512, 512, 32
    $region29: #{discriminator_forward.3} parent=1 // pred_fallthru
      _
    // Predicated region
    $region30: #{discriminator_forward.3} parent=1 // pred_check
      _
    $region31: #{discriminator_forward.3} parent=1 // pred_check_branch
      %55 = sbr.rel (0) target = $region33
    $region32: #{discriminator_forward.3} parent=1 // pred_region
      %s57 = ssub.s32 64, 64
      %58 = vsyncadd [#allocation6], %s57
      %s60 = sshll.u32 [#allocation7], 4
      %s61 = int_to_ptr.vmem [resolvable:$true] %s60
      %63 = dma.hbm_to_vmem [thread:$0]  %s7, 64, %s61, [#allocation6]
    $region33: #{discriminator_forward.3} parent=1 // pred_fallthru
      _
    // Predicated region
    $region34: #{discriminator_forward.3} parent=1 // pred_check
      _
    $region35: #{discriminator_forward.3} parent=1 // pred_check_branch
      %65 = sbr.rel (0) target = $region37
    $region36: #{discriminator_forward.3} parent=1 // pred_region
      _
    $region37: #{discriminator_forward.3} parent=1 // pred_fallthru
      _
    // Predicated region
    $region38: #{discriminator_forward.3} parent=1 // pred_check
      _
    $region39: #{discriminator_forward.3} parent=1 // pred_check_branch
      %67 = sbr.rel (0) target = $region41
    $region40: #{discriminator_forward.3} parent=1 // pred_region
      %s69 = ssub.s32 32, 32
      %70 = vsyncadd [#allocation9], %s69
      %s72 = sshll.u32 [#allocation8], 4
      %s73 = int_to_ptr.vmem [resolvable:$true] %s72
      %75 = dma.hbm_to_vmem [thread:$0]  %s9, 32, %s73, [#allocation9]
    $region41: #{discriminator_forward.3} parent=1 // pred_fallthru
      _
    // Predicated region
    $region42: #{discriminator_forward.3} parent=1 // pred_check
      _
    $region43: #{discriminator_forward.3} parent=1 // pred_check_branch
      %77 = sbr.rel (0) target = $region45
    $region44: #{discriminator_forward.3} parent=1 // pred_region
      %s79 = ssub.s32 32, 32
      %80 = vsyncadd [#allocation9], %s79
      %s82 = sshll.u32 [#allocation10], 4
      %s83 = int_to_ptr.vmem [resolvable:$true] %s82
      %85 = dma.hbm_to_vmem [thread:$0]  %s10, 32, %s83, [#allocation9]
    $region45: #{discriminator_forward.3} parent=1 // pred_fallthru
      _
    // Predicated region
    $region46: #{discriminator_forward.3} parent=1 // pred_check
      _
    $region47: #{discriminator_forward.3} parent=1 // pred_check_branch
      %87 = sbr.rel (0) target = $region49
    $region48: #{discriminator_forward.3} parent=1 // pred_region
      _
    $region49: #{discriminator_forward.3} parent=1 // pred_fallthru
      _
    // Predicated region
    $region50: #{discriminator_forward.3} parent=1 // pred_check
      _
    $region51: #{discriminator_forward.3} parent=1 // pred_check_branch
      %89 = sbr.rel (0) target = $region53
    $region52: #{discriminator_forward.3} parent=1 // pred_region
      %90 = dma.done [#allocation4], 128
    $region53: #{discriminator_forward.3} parent=1 // pred_fallthru
      _
    // Predicated region
    $region54: #{discriminator_forward.3} parent=1 // pred_check
      _
    $region55: #{discriminator_forward.3} parent=1 // pred_check_branch
      %92 = sbr.rel (0) target = $region57
    $region56: #{discriminator_forward.3} parent=1 // pred_region
      %93 = dma.done [#allocation6], 65536
    $region57: #{discriminator_forward.3} parent=1 // pred_fallthru
      _
    // Predicated region
    $region58: #{discriminator_forward.3} parent=1 // pred_check
      _
    $region59: #{discriminator_forward.3} parent=1 // pred_check_branch
      %95 = sbr.rel (0) target = $region61
    $region60: #{discriminator_forward.3} parent=1 // pred_region
      %96 = dma.done [#allocation6], 64
    $region61: #{discriminator_forward.3} parent=1 // pred_fallthru
      _
    // Predicated region
    $region62: #{discriminator_forward.3} parent=1 // pred_check
      _
    $region63: #{discriminator_forward.3} parent=1 // pred_check_branch
      %98 = sbr.rel (0) target = $region65
    $region64: #{discriminator_forward.3} parent=1 // pred_region
      %99 = dma.done [#allocation9], 32
    $region65: #{discriminator_forward.3} parent=1 // pred_fallthru
      _
    // Predicated region
    $region66: #{discriminator_forward.3} parent=1 // pred_check
      _
    $region67: #{discriminator_forward.3} parent=1 // pred_check_branch
      %101 = sbr.rel (0) target = $region69
    $region68: #{discriminator_forward.3} parent=1 // pred_region
      %102 = dma.done [#allocation9], 32
    $region69: #{discriminator_forward.3} parent=1 // pred_fallthru
      _
    %v103 = vld [vmem:[%s0] sm:$0xff]
    %v104 = vld [vmem:[%s0 + $0x8] sm:$0xff]
    %v105 = vld [vmem:[%s0 + $0x10] sm:$0xff]
    %v106 = vld [vmem:[%s0 + $0x18] sm:$0xff]
    %v107 = vld [vmem:[%s0 + $0x20] sm:$0xff]
    %v108 = vld [vmem:[%s0 + $0x28] sm:$0xff]
    %v109 = vld [vmem:[%s0 + $0x30] sm:$0xff]
    %v110 = vld [vmem:[%s0 + $0x38] sm:$0xff]
    %v111 = vld [vmem:[%s0 + $0x40] sm:$0xff]
    %v112 = vld [vmem:[%s0 + $0x48] sm:$0xff]
    %v113 = vld [vmem:[%s0 + $0x50] sm:$0xff]
    %v114 = vld [vmem:[%s0 + $0x58] sm:$0xff]
    %v115 = vld [vmem:[%s0 + $0x60] sm:$0xff]
    %v116 = vld [vmem:[%s0 + $0x68] sm:$0xff]
    %v117 = vld [vmem:[%s0 + $0x70] sm:$0xff]
    %v118 = vld [vmem:[%s0 + $0x78] sm:$0xff]
    %v119 = vld [vmem:[%s0 + $0x80] sm:$0xff]
    %v120 = vld [vmem:[%s0 + $0x88] sm:$0xff]
    %v121 = vld [vmem:[%s0 + $0x90] sm:$0xff]
    %v122 = vld [vmem:[%s0 + $0x98] sm:$0xff]
    %v123 = vld [vmem:[%s0 + $0xa0] sm:$0xff]
    %v124 = vld [vmem:[%s0 + $0xa8] sm:$0xff]
    %v125 = vld [vmem:[%s0 + $0xb0] sm:$0xff]
    %v126 = vld [vmem:[%s0 + $0xb8] sm:$0xff]
    %v127 = vld [vmem:[%s0 + $0xc0] sm:$0xff]
    %v128 = vld [vmem:[%s0 + $0xc8] sm:$0xff]
    %v129 = vld [vmem:[%s0 + $0xd0] sm:$0xff]
    %v130 = vld [vmem:[%s0 + $0xd8] sm:$0xff]
    %v131 = vld [vmem:[%s0 + $0xe0] sm:$0xff]
    %v132 = vld [vmem:[%s0 + $0xe8] sm:$0xff]
    %v133 = vld [vmem:[%s0 + $0xf0] sm:$0xff]
    %v134 = vld [vmem:[%s0 + $0xf8] sm:$0xff]
    %v135 = vld [vmem:[%s4] sm:$0xff]
    %v136 = vld [vmem:[%s4 + $0x8] sm:$0xff]
    %v137 = vld [vmem:[%s4 + $0x10] sm:$0xff]
    %v138 = vld [vmem:[%s4 + $0x18] sm:$0xff]
    %v139 = vld [vmem:[%s4 + $0x20] sm:$0xff]
    %v140 = vld [vmem:[%s4 + $0x28] sm:$0xff]
    %v141 = vld [vmem:[%s4 + $0x30] sm:$0xff]
    %v142 = vld [vmem:[%s4 + $0x38] sm:$0xff]
    %v143 = vld [vmem:[%s4 + $0x40] sm:$0xff]
    %v144 = vld [vmem:[%s4 + $0x48] sm:$0xff]
    %v145 = vld [vmem:[%s4 + $0x50] sm:$0xff]
    %v146 = vld [vmem:[%s4 + $0x58] sm:$0xff]
    %v147 = vld [vmem:[%s4 + $0x60] sm:$0xff]
    %v148 = vld [vmem:[%s4 + $0x68] sm:$0xff]
    %v149 = vld [vmem:[%s4 + $0x70] sm:$0xff]
    %v150 = vld [vmem:[%s4 + $0x78] sm:$0xff]
    %v151 = vld [vmem:[%s4 + $0x80] sm:$0xff]
    %v152 = vld [vmem:[%s4 + $0x88] sm:$0xff]
    %v153 = vld [vmem:[%s4 + $0x90] sm:$0xff]
    %v154 = vld [vmem:[%s4 + $0x98] sm:$0xff]
    %v155 = vld [vmem:[%s4 + $0xa0] sm:$0xff]
    %v156 = vld [vmem:[%s4 + $0xa8] sm:$0xff]
    %v157 = vld [vmem:[%s4 + $0xb0] sm:$0xff]
    %v158 = vld [vmem:[%s4 + $0xb8] sm:$0xff]
    %v159 = vld [vmem:[%s4 + $0xc0] sm:$0xff]
    %v160 = vld [vmem:[%s4 + $0xc8] sm:$0xff]
    %v161 = vld [vmem:[%s4 + $0xd0] sm:$0xff]
    %v162 = vld [vmem:[%s4 + $0xd8] sm:$0xff]
    %v163 = vld [vmem:[%s4 + $0xe0] sm:$0xff]
    %v164 = vld [vmem:[%s4 + $0xe8] sm:$0xff]
    %v165 = vld [vmem:[%s4 + $0xf0] sm:$0xff]
    %v166 = vld [vmem:[%s4 + $0xf8] sm:$0xff]
    %v167 = vld [vmem:[%s4 + $0x100] sm:$0xff]
    %v168 = vld [vmem:[%s4 + $0x108] sm:$0xff]
    %v169 = vld [vmem:[%s4 + $0x110] sm:$0xff]
    %v170 = vld [vmem:[%s4 + $0x118] sm:$0xff]
    %v171 = vld [vmem:[%s4 + $0x120] sm:$0xff]
    %v172 = vld [vmem:[%s4 + $0x128] sm:$0xff]
    %v173 = vld [vmem:[%s4 + $0x130] sm:$0xff]
    %v174 = vld [vmem:[%s4 + $0x138] sm:$0xff]
    %v175 = vld [vmem:[%s4 + $0x140] sm:$0xff]
    %v176 = vld [vmem:[%s4 + $0x148] sm:$0xff]
    %v177 = vld [vmem:[%s4 + $0x150] sm:$0xff]
    %v178 = vld [vmem:[%s4 + $0x158] sm:$0xff]
    %v179 = vld [vmem:[%s4 + $0x160] sm:$0xff]
    %v180 = vld [vmem:[%s4 + $0x168] sm:$0xff]
    %v181 = vld [vmem:[%s4 + $0x170] sm:$0xff]
    %v182 = vld [vmem:[%s4 + $0x178] sm:$0xff]
    %v183 = vld [vmem:[%s4 + $0x180] sm:$0xff]
    %v184 = vld [vmem:[%s4 + $0x188] sm:$0xff]
    %v185 = vld [vmem:[%s4 + $0x190] sm:$0xff]
    %v186 = vld [vmem:[%s4 + $0x198] sm:$0xff]
    %v187 = vld [vmem:[%s4 + $0x1a0] sm:$0xff]
    %v188 = vld [vmem:[%s4 + $0x1a8] sm:$0xff]
    %v189 = vld [vmem:[%s4 + $0x1b0] sm:$0xff]
    %v190 = vld [vmem:[%s4 + $0x1b8] sm:$0xff]
    %v191 = vld [vmem:[%s4 + $0x1c0] sm:$0xff]
    %v192 = vld [vmem:[%s4 + $0x1c8] sm:$0xff]
    %v193 = vld [vmem:[%s4 + $0x1d0] sm:$0xff]
    %v194 = vld [vmem:[%s4 + $0x1d8] sm:$0xff]
    %v195 = vld [vmem:[%s4 + $0x1e0] sm:$0xff]
    %v196 = vld [vmem:[%s4 + $0x1e8] sm:$0xff]
    %v197 = vld [vmem:[%s4 + $0x1f0] sm:$0xff]
    %v198 = vld [vmem:[%s4 + $0x1f8] sm:$0xff]
    %v199 = vld [vmem:[#allocation3] sm:$0xff]
    %v201 = vlaneseq
    %v202 = vshrl.u32 %v201, 7
    %v203 = vsub.s32 0, %v202
    %v204 = vrot.slane %v199, %v203
    %v205 = vlaneseq
    %v206 = vshrl.u32 %v205, 7
    %v207 = vsub.s32 1, %v206
    %v208 = vrot.slane %v199, %v207
    %v209 = vlaneseq
    %v210 = vshrl.u32 %v209, 7
    %v211 = vsub.s32 2, %v210
    %v212 = vrot.slane %v199, %v211
    %v213 = vlaneseq
    %v214 = vshrl.u32 %v213, 7
    %v215 = vsub.s32 3, %v214
    %v216 = vrot.slane %v199, %v215
    %v217 = vlaneseq
    %v218 = vshrl.u32 %v217, 7
    %v219 = vsub.s32 4, %v218
    %v220 = vrot.slane %v199, %v219
    %v221 = vlaneseq
    %v222 = vshrl.u32 %v221, 7
    %v223 = vsub.s32 5, %v222
    %v224 = vrot.slane %v199, %v223
    %v225 = vlaneseq
    %v226 = vshrl.u32 %v225, 7
    %v227 = vsub.s32 6, %v226
    %v228 = vrot.slane %v199, %v227
    %v229 = vlaneseq
    %v230 = vshrl.u32 %v229, 7
    %v231 = vsub.s32 7, %v230
    %v232 = vrot.slane %v199, %v231
    %vm241 = vcmask 523264
    %v243 = vsel %vm241, %v103, 0
    %v246 = vsel %vm241, %v104, 0
    %v249 = vsel %vm241, %v105, 0
    %v252 = vsel %vm241, %v106, 0
    %v255 = vsel %vm241, %v107, 0
    %v258 = vsel %vm241, %v108, 0
    %v261 = vsel %vm241, %v109, 0
    %v264 = vsel %vm241, %v110, 0
    %v267 = vsel %vm241, %v111, 0
    %v270 = vsel %vm241, %v112, 0
    %v273 = vsel %vm241, %v113, 0
    %v276 = vsel %vm241, %v114, 0
    %v279 = vsel %vm241, %v115, 0
    %v282 = vsel %vm241, %v116, 0
    %v285 = vsel %vm241, %v117, 0
    %v288 = vsel %vm241, %v118, 0
    %v291 = vsel %vm241, %v119, 0
    %v294 = vsel %vm241, %v120, 0
    %v297 = vsel %vm241, %v121, 0
    %v300 = vsel %vm241, %v122, 0
    %v303 = vsel %vm241, %v123, 0
    %v306 = vsel %vm241, %v124, 0
    %v309 = vsel %vm241, %v125, 0
    %v312 = vsel %vm241, %v126, 0
    %v315 = vsel %vm241, %v127, 0
    %v318 = vsel %vm241, %v128, 0
    %v321 = vsel %vm241, %v129, 0
    %v324 = vsel %vm241, %v130, 0
    %v327 = vsel %vm241, %v131, 0
    %v330 = vsel %vm241, %v132, 0
    %v333 = vsel %vm241, %v133, 0
    %v336 = vsel %vm241, %v134, 0
    %338 = vmatprep.subr.mxu0 0.0
    %339 = vmatpush1.msra.mxu0 0.0
    %340 = vmatprep.subr.mxu0 0.0
    %341 = vmatpush1.msra.mxu0 0.0
    %342 = vmatprep.subr.mxu0 0.0
    %343 = vmatpush1.msra.mxu0 0.0
    %344 = vmatprep.subr.mxu0 0.0
    %345 = vmatpush1.msra.mxu0 0.0
    %346 = vmatprep.subr.mxu0 0.0
    %347 = vmatpush1.msra.mxu0 0.0
    %348 = vmatprep.subr.mxu0 0.0
    %349 = vmatpush1.msra.mxu0 0.0
    %350 = vmatprep.subr.mxu0 0.0
    %351 = vmatpush1.msra.mxu0 0.0
    %352 = vmatprep.subr.mxu0 0.0
    %353 = vmatpush1.msra.mxu0 0.0
    %354 = vmatprep.subr.mxu0 %v192
    %355 = vmatpush1.msra.mxu0 %v191
    %356 = vmatprep.subr.mxu0 %v184
    %357 = vmatpush1.msra.mxu0 %v183
    %358 = vmatprep.subr.mxu0 %v176
    %359 = vmatpush1.msra.mxu0 %v175
    %360 = vmatprep.subr.mxu0 %v168
    %361 = vmatpush1.msra.mxu0 %v167
    %362 = vmatprep.subr.mxu0 %v160
    %363 = vmatpush1.msra.mxu0 %v159
    %364 = vmatprep.subr.mxu0 %v152
    %365 = vmatpush1.msra.mxu0 %v151
    %366 = vmatprep.subr.mxu0 %v144
    %367 = vmatpush1.msra.mxu0 %v143
    %368 = vmatprep.subr.mxu0 %v136
    %369 = vmatpush1.msra.mxu0 %v135
    %370 = vmatprep.subr.mxu0 0.0
    %371 = vmatpush2.msra.mxu0 0.0
    %372 = vmatprep.subr.mxu0 0.0
    %373 = vmatpush2.msra.mxu0 0.0
    %374 = vmatprep.subr.mxu0 0.0
    %375 = vmatpush2.msra.mxu0 0.0
    %376 = vmatprep.subr.mxu0 0.0
    %377 = vmatpush2.msra.mxu0 0.0
    %378 = vmatprep.subr.mxu0 0.0
    %379 = vmatpush2.msra.mxu0 0.0
    %380 = vmatprep.subr.mxu0 0.0
    %381 = vmatpush2.msra.mxu0 0.0
    %382 = vmatprep.subr.mxu0 0.0
    %383 = vmatpush2.msra.mxu0 0.0
    %384 = vmatprep.subr.mxu0 0.0
    %385 = vmatpush2.msra.mxu0 0.0
    %386 = vmatprep.subr.mxu0 0.0
    %387 = vmatpush2.msra.mxu0 0.0
    %388 = vmatprep.subr.mxu0 0.0
    %389 = vmatpush2.msra.mxu0 0.0
    %390 = vmatprep.subr.mxu0 0.0
    %391 = vmatpush2.msra.mxu0 0.0
    %392 = vmatprep.subr.mxu0 0.0
    %393 = vmatpush2.msra.mxu0 0.0
    %394 = vmatprep.subr.mxu0 0.0
    %395 = vmatpush2.msra.mxu0 0.0
    %396 = vmatprep.subr.mxu0 0.0
    %397 = vmatpush2.msra.mxu0 0.0
    %398 = vmatprep.subr.mxu0 0.0
    %399 = vmatpush2.msra.mxu0 0.0
    %400 = vmatprep.subr.mxu0 0.0
    %401 = vmatpush2.msra.mxu0 0.0
    %402 = vmatprep.mubr.f32.mxu0 0.0
    %403 = vmatmul.mubr.f32.gmra.mxu0 %v243
    %v404 = vpop.f32.mrf.mxu0
    %v405 = vadd.f32 %v204, %v404
    %v406 = vpop.f32.mrf.mxu0
    %v407 = vadd.f32 %v208, %v406
    %408 = vmatprep.mubr.f32.mxu0 0.0
    %409 = vmatmul.mubr.f32.gmra.mxu0 %v246
    %v410 = vpop.f32.mrf.mxu0
    %v411 = vadd.f32 %v204, %v410
    %v412 = vpop.f32.mrf.mxu0
    %v413 = vadd.f32 %v208, %v412
    %414 = vmatprep.mubr.f32.mxu0 0.0
    %415 = vmatmul.mubr.f32.gmra.mxu0 %v249
    %v416 = vpop.f32.mrf.mxu0
    %v417 = vadd.f32 %v204, %v416
    %v418 = vpop.f32.mrf.mxu0
    %v419 = vadd.f32 %v208, %v418
    %420 = vmatprep.mubr.f32.mxu0 0.0
    %421 = vmatmul.mubr.f32.gmra.mxu0 %v252
    %v422 = vpop.f32.mrf.mxu0
    %v423 = vadd.f32 %v204, %v422
    %v424 = vpop.f32.mrf.mxu0
    %v425 = vadd.f32 %v208, %v424
    %426 = vmatprep.mubr.f32.mxu0 0.0
    %427 = vmatmul.mubr.f32.gmra.mxu0 %v255
    %v428 = vpop.f32.mrf.mxu0
    %v429 = vadd.f32 %v204, %v428
    %v430 = vpop.f32.mrf.mxu0
    %v431 = vadd.f32 %v208, %v430
    %432 = vmatprep.mubr.f32.mxu0 0.0
    %433 = vmatmul.mubr.f32.gmra.mxu0 %v258
    %v434 = vpop.f32.mrf.mxu0
    %v435 = vadd.f32 %v204, %v434
    %v436 = vpop.f32.mrf.mxu0
    %v437 = vadd.f32 %v208, %v436
    %438 = vmatprep.mubr.f32.mxu0 0.0
    %439 = vmatmul.mubr.f32.gmra.mxu0 %v261
    %v440 = vpop.f32.mrf.mxu0
    %v441 = vadd.f32 %v204, %v440
    %v442 = vpop.f32.mrf.mxu0
    %v443 = vadd.f32 %v208, %v442
    %444 = vmatprep.mubr.f32.mxu0 0.0
    %445 = vmatmul.mubr.f32.gmra.mxu0 %v264
    %v446 = vpop.f32.mrf.mxu0
    %v447 = vadd.f32 %v204, %v446
    %v448 = vpop.f32.mrf.mxu0
    %v449 = vadd.f32 %v208, %v448
    %450 = vmatprep.mubr.f32.mxu0 0.0
    %451 = vmatmul.mubr.f32.gmra.mxu0 %v267
    %v452 = vpop.f32.mrf.mxu0
    %v453 = vadd.f32 %v204, %v452
    %v454 = vpop.f32.mrf.mxu0
    %v455 = vadd.f32 %v208, %v454
    %456 = vmatprep.mubr.f32.mxu0 0.0
    %457 = vmatmul.mubr.f32.gmra.mxu0 %v270
    %v458 = vpop.f32.mrf.mxu0
    %v459 = vadd.f32 %v204, %v458
    %v460 = vpop.f32.mrf.mxu0
    %v461 = vadd.f32 %v208, %v460
    %462 = vmatprep.mubr.f32.mxu0 0.0
    %463 = vmatmul.mubr.f32.gmra.mxu0 %v273
    %v464 = vpop.f32.mrf.mxu0
    %v465 = vadd.f32 %v204, %v464
    %v466 = vpop.f32.mrf.mxu0
    %v467 = vadd.f32 %v208, %v466
    %468 = vmatprep.mubr.f32.mxu0 0.0
    %469 = vmatmul.mubr.f32.gmra.mxu0 %v276
    %v470 = vpop.f32.mrf.mxu0
    %v471 = vadd.f32 %v204, %v470
    %v472 = vpop.f32.mrf.mxu0
    %v473 = vadd.f32 %v208, %v472
    %474 = vmatprep.mubr.f32.mxu0 0.0
    %475 = vmatmul.mubr.f32.gmra.mxu0 %v279
    %v476 = vpop.f32.mrf.mxu0
    %v477 = vadd.f32 %v204, %v476
    %v478 = vpop.f32.mrf.mxu0
    %v479 = vadd.f32 %v208, %v478
    %480 = vmatprep.mubr.f32.mxu0 0.0
    %481 = vmatmul.mubr.f32.gmra.mxu0 %v282
    %v482 = vpop.f32.mrf.mxu0
    %v483 = vadd.f32 %v204, %v482
    %v484 = vpop.f32.mrf.mxu0
    %v485 = vadd.f32 %v208, %v484
    %486 = vmatprep.mubr.f32.mxu0 0.0
    %487 = vmatmul.mubr.f32.gmra.mxu0 %v285
    %v488 = vpop.f32.mrf.mxu0
    %v489 = vadd.f32 %v204, %v488
    %v490 = vpop.f32.mrf.mxu0
    %v491 = vadd.f32 %v208, %v490
    %492 = vmatprep.mubr.f32.mxu0 0.0
    %493 = vmatmul.mubr.f32.gmra.mxu0 %v288
    %v494 = vpop.f32.mrf.mxu0
    %v495 = vadd.f32 %v204, %v494
    %v496 = vpop.f32.mrf.mxu0
    %v497 = vadd.f32 %v208, %v496
    %498 = vmatprep.mubr.f32.mxu0 0.0
    %499 = vmatmul.mubr.f32.gmra.mxu0 %v291
    %v500 = vpop.f32.mrf.mxu0
    %v501 = vadd.f32 %v204, %v500
    %v502 = vpop.f32.mrf.mxu0
    %v503 = vadd.f32 %v208, %v502
    %504 = vmatprep.mubr.f32.mxu0 0.0
    %505 = vmatmul.mubr.f32.gmra.mxu0 %v294
    %v506 = vpop.f32.mrf.mxu0
    %v507 = vadd.f32 %v204, %v506
    %v508 = vpop.f32.mrf.mxu0
    %v509 = vadd.f32 %v208, %v508
    %510 = vmatprep.mubr.f32.mxu0 0.0
    %511 = vmatmul.mubr.f32.gmra.mxu0 %v297
    %v512 = vpop.f32.mrf.mxu0
    %v513 = vadd.f32 %v204, %v512
    %v514 = vpop.f32.mrf.mxu0
    %v515 = vadd.f32 %v208, %v514
    %516 = vmatprep.mubr.f32.mxu0 0.0
    %517 = vmatmul.mubr.f32.gmra.mxu0 %v300
    %v518 = vpop.f32.mrf.mxu0
    %v519 = vadd.f32 %v204, %v518
    %v520 = vpop.f32.mrf.mxu0
    %v521 = vadd.f32 %v208, %v520
    %522 = vmatprep.mubr.f32.mxu0 0.0
    %523 = vmatmul.mubr.f32.gmra.mxu0 %v303
    %v524 = vpop.f32.mrf.mxu0
    %v525 = vadd.f32 %v204, %v524
    %v526 = vpop.f32.mrf.mxu0
    %v527 = vadd.f32 %v208, %v526
    %528 = vmatprep.mubr.f32.mxu0 0.0
    %529 = vmatmul.mubr.f32.gmra.mxu0 %v306
    %v530 = vpop.f32.mrf.mxu0
    %v531 = vadd.f32 %v204, %v530
    %v532 = vpop.f32.mrf.mxu0
    %v533 = vadd.f32 %v208, %v532
    %534 = vmatprep.mubr.f32.mxu0 0.0
    %535 = vmatmul.mubr.f32.gmra.mxu0 %v309
    %v536 = vpop.f32.mrf.mxu0
    %v537 = vadd.f32 %v204, %v536
    %v538 = vpop.f32.mrf.mxu0
    %v539 = vadd.f32 %v208, %v538
    %540 = vmatprep.mubr.f32.mxu0 0.0
    %541 = vmatmul.mubr.f32.gmra.mxu0 %v312
    %v542 = vpop.f32.mrf.mxu0
    %v543 = vadd.f32 %v204, %v542
    %v544 = vpop.f32.mrf.mxu0
    %v545 = vadd.f32 %v208, %v544
    %546 = vmatprep.mubr.f32.mxu0 0.0
    %547 = vmatmul.mubr.f32.gmra.mxu0 %v315
    %v548 = vpop.f32.mrf.mxu0
    %v549 = vadd.f32 %v204, %v548
    %v550 = vpop.f32.mrf.mxu0
    %v551 = vadd.f32 %v208, %v550
    %552 = vmatprep.mubr.f32.mxu0 0.0
    %553 = vmatmul.mubr.f32.gmra.mxu0 %v318
    %v554 = vpop.f32.mrf.mxu0
    %v555 = vadd.f32 %v204, %v554
    %v556 = vpop.f32.mrf.mxu0
    %v557 = vadd.f32 %v208, %v556
    %558 = vmatprep.mubr.f32.mxu0 0.0
    %559 = vmatmul.mubr.f32.gmra.mxu0 %v321
    %v560 = vpop.f32.mrf.mxu0
    %v561 = vadd.f32 %v204, %v560
    %v562 = vpop.f32.mrf.mxu0
    %v563 = vadd.f32 %v208, %v562
    %564 = vmatprep.mubr.f32.mxu0 0.0
    %565 = vmatmul.mubr.f32.gmra.mxu0 %v324
    %v566 = vpop.f32.mrf.mxu0
    %v567 = vadd.f32 %v204, %v566
    %v568 = vpop.f32.mrf.mxu0
    %v569 = vadd.f32 %v208, %v568
    %570 = vmatprep.mubr.f32.mxu0 0.0
    %571 = vmatmul.mubr.f32.gmra.mxu0 %v327
    %v572 = vpop.f32.mrf.mxu0
    %v573 = vadd.f32 %v204, %v572
    %v574 = vpop.f32.mrf.mxu0
    %v575 = vadd.f32 %v208, %v574
    %576 = vmatprep.mubr.f32.mxu0 0.0
    %577 = vmatmul.mubr.f32.gmra.mxu0 %v330
    %v578 = vpop.f32.mrf.mxu0
    %v579 = vadd.f32 %v204, %v578
    %v580 = vpop.f32.mrf.mxu0
    %v581 = vadd.f32 %v208, %v580
    %582 = vmatprep.mubr.f32.mxu0 0.0
    %583 = vmatmul.mubr.f32.gmra.mxu0 %v333
    %v584 = vpop.f32.mrf.mxu0
    %v585 = vadd.f32 %v204, %v584
    %v586 = vpop.f32.mrf.mxu0
    %v587 = vadd.f32 %v208, %v586
    %588 = vmatprep.mubr.f32.mxu0 0.0
    %589 = vmatmul.mubr.f32.gmra.mxu0 %v336
    %v590 = vpop.f32.mrf.mxu0
    %v591 = vadd.f32 %v204, %v590
    %v592 = vpop.f32.mrf.mxu0
    %v593 = vadd.f32 %v208, %v592
    %594 = vdwg.mxu0
    %595 = vmatprep.subr.mxu0 0.0
    %596 = vmatpush1.msra.mxu0 0.0
    %597 = vmatprep.subr.mxu0 0.0
    %598 = vmatpush1.msra.mxu0 0.0
    %599 = vmatprep.subr.mxu0 0.0
    %600 = vmatpush1.msra.mxu0 0.0
    %601 = vmatprep.subr.mxu0 0.0
    %602 = vmatpush1.msra.mxu0 0.0
    %603 = vmatprep.subr.mxu0 0.0
    %604 = vmatpush1.msra.mxu0 0.0
    %605 = vmatprep.subr.mxu0 0.0
    %606 = vmatpush1.msra.mxu0 0.0
    %607 = vmatprep.subr.mxu0 0.0
    %608 = vmatpush1.msra.mxu0 0.0
    %609 = vmatprep.subr.mxu0 0.0
    %610 = vmatpush1.msra.mxu0 0.0
    %611 = vmatprep.subr.mxu0 %v194
    %612 = vmatpush1.msra.mxu0 %v193
    %613 = vmatprep.subr.mxu0 %v186
    %614 = vmatpush1.msra.mxu0 %v185
    %615 = vmatprep.subr.mxu0 %v178
    %616 = vmatpush1.msra.mxu0 %v177
    %617 = vmatprep.subr.mxu0 %v170
    %618 = vmatpush1.msra.mxu0 %v169
    %619 = vmatprep.subr.mxu0 %v162
    %620 = vmatpush1.msra.mxu0 %v161
    %621 = vmatprep.subr.mxu0 %v154
    %622 = vmatpush1.msra.mxu0 %v153
    %623 = vmatprep.subr.mxu0 %v146
    %624 = vmatpush1.msra.mxu0 %v145
    %625 = vmatprep.subr.mxu0 %v138
    %626 = vmatpush1.msra.mxu0 %v137
    %627 = vmatprep.subr.mxu0 0.0
    %628 = vmatpush2.msra.mxu0 0.0
    %629 = vmatprep.subr.mxu0 0.0
    %630 = vmatpush2.msra.mxu0 0.0
    %631 = vmatprep.subr.mxu0 0.0
    %632 = vmatpush2.msra.mxu0 0.0
    %633 = vmatprep.subr.mxu0 0.0
    %634 = vmatpush2.msra.mxu0 0.0
    %635 = vmatprep.subr.mxu0 0.0
    %636 = vmatpush2.msra.mxu0 0.0
    %637 = vmatprep.subr.mxu0 0.0
    %638 = vmatpush2.msra.mxu0 0.0
    %639 = vmatprep.subr.mxu0 0.0
    %640 = vmatpush2.msra.mxu0 0.0
    %641 = vmatprep.subr.mxu0 0.0
    %642 = vmatpush2.msra.mxu0 0.0
    %643 = vmatprep.subr.mxu0 0.0
    %644 = vmatpush2.msra.mxu0 0.0
    %645 = vmatprep.subr.mxu0 0.0
    %646 = vmatpush2.msra.mxu0 0.0
    %647 = vmatprep.subr.mxu0 0.0
    %648 = vmatpush2.msra.mxu0 0.0
    %649 = vmatprep.subr.mxu0 0.0
    %650 = vmatpush2.msra.mxu0 0.0
    %651 = vmatprep.subr.mxu0 0.0
    %652 = vmatpush2.msra.mxu0 0.0
    %653 = vmatprep.subr.mxu0 0.0
    %654 = vmatpush2.msra.mxu0 0.0
    %655 = vmatprep.subr.mxu0 0.0
    %656 = vmatpush2.msra.mxu0 0.0
    %657 = vmatprep.subr.mxu0 0.0
    %658 = vmatpush2.msra.mxu0 0.0
    %659 = vmatprep.mubr.f32.mxu0 0.0
    %660 = vmatmul.mubr.f32.gmra.mxu0 %v243
    %v661 = vpop.f32.mrf.mxu0
    %v662 = vadd.f32 %v212, %v661
    %v663 = vpop.f32.mrf.mxu0
    %v664 = vadd.f32 %v216, %v663
    %665 = vmatprep.mubr.f32.mxu0 0.0
    %666 = vmatmul.mubr.f32.gmra.mxu0 %v246
    %v667 = vpop.f32.mrf.mxu0
    %v668 = vadd.f32 %v212, %v667
    %v669 = vpop.f32.mrf.mxu0
    %v670 = vadd.f32 %v216, %v669
    %671 = vmatprep.mubr.f32.mxu0 0.0
    %672 = vmatmul.mubr.f32.gmra.mxu0 %v249
    %v673 = vpop.f32.mrf.mxu0
    %v674 = vadd.f32 %v212, %v673
    %v675 = vpop.f32.mrf.mxu0
    %v676 = vadd.f32 %v216, %v675
    %677 = vmatprep.mubr.f32.mxu0 0.0
    %678 = vmatmul.mubr.f32.gmra.mxu0 %v252
    %v679 = vpop.f32.mrf.mxu0
    %v680 = vadd.f32 %v212, %v679
    %v681 = vpop.f32.mrf.mxu0
    %v682 = vadd.f32 %v216, %v681
    %683 = vmatprep.mubr.f32.mxu0 0.0
    %684 = vmatmul.mubr.f32.gmra.mxu0 %v255
    %v685 = vpop.f32.mrf.mxu0
    %v686 = vadd.f32 %v212, %v685
    %v687 = vpop.f32.mrf.mxu0
    %v688 = vadd.f32 %v216, %v687
    %689 = vmatprep.mubr.f32.mxu0 0.0
    %690 = vmatmul.mubr.f32.gmra.mxu0 %v258
    %v691 = vpop.f32.mrf.mxu0
    %v692 = vadd.f32 %v212, %v691
    %v693 = vpop.f32.mrf.mxu0
    %v694 = vadd.f32 %v216, %v693
    %695 = vmatprep.mubr.f32.mxu0 0.0
    %696 = vmatmul.mubr.f32.gmra.mxu0 %v261
    %v697 = vpop.f32.mrf.mxu0
    %v698 = vadd.f32 %v212, %v697
    %v699 = vpop.f32.mrf.mxu0
    %v700 = vadd.f32 %v216, %v699
    %701 = vmatprep.mubr.f32.mxu0 0.0
    %702 = vmatmul.mubr.f32.gmra.mxu0 %v264
    %v703 = vpop.f32.mrf.mxu0
    %v704 = vadd.f32 %v212, %v703
    %v705 = vpop.f32.mrf.mxu0
    %v706 = vadd.f32 %v216, %v705
    %707 = vmatprep.mubr.f32.mxu0 0.0
    %708 = vmatmul.mubr.f32.gmra.mxu0 %v267
    %v709 = vpop.f32.mrf.mxu0
    %v710 = vadd.f32 %v212, %v709
    %v711 = vpop.f32.mrf.mxu0
    %v712 = vadd.f32 %v216, %v711
    %713 = vmatprep.mubr.f32.mxu0 0.0
    %714 = vmatmul.mubr.f32.gmra.mxu0 %v270
    %v715 = vpop.f32.mrf.mxu0
    %v716 = vadd.f32 %v212, %v715
    %v717 = vpop.f32.mrf.mxu0
    %v718 = vadd.f32 %v216, %v717
    %719 = vmatprep.mubr.f32.mxu0 0.0
    %720 = vmatmul.mubr.f32.gmra.mxu0 %v273
    %v721 = vpop.f32.mrf.mxu0
    %v722 = vadd.f32 %v212, %v721
    %v723 = vpop.f32.mrf.mxu0
    %v724 = vadd.f32 %v216, %v723
    %725 = vmatprep.mubr.f32.mxu0 0.0
    %726 = vmatmul.mubr.f32.gmra.mxu0 %v276
    %v727 = vpop.f32.mrf.mxu0
    %v728 = vadd.f32 %v212, %v727
    %v729 = vpop.f32.mrf.mxu0
    %v730 = vadd.f32 %v216, %v729
    %731 = vmatprep.mubr.f32.mxu0 0.0
    %732 = vmatmul.mubr.f32.gmra.mxu0 %v279
    %v733 = vpop.f32.mrf.mxu0
    %v734 = vadd.f32 %v212, %v733
    %v735 = vpop.f32.mrf.mxu0
    %v736 = vadd.f32 %v216, %v735
    %737 = vmatprep.mubr.f32.mxu0 0.0
    %738 = vmatmul.mubr.f32.gmra.mxu0 %v282
    %v739 = vpop.f32.mrf.mxu0
    %v740 = vadd.f32 %v212, %v739
    %v741 = vpop.f32.mrf.mxu0
    %v742 = vadd.f32 %v216, %v741
    %743 = vmatprep.mubr.f32.mxu0 0.0
    %744 = vmatmul.mubr.f32.gmra.mxu0 %v285
    %v745 = vpop.f32.mrf.mxu0
    %v746 = vadd.f32 %v212, %v745
    %v747 = vpop.f32.mrf.mxu0
    %v748 = vadd.f32 %v216, %v747
    %749 = vmatprep.mubr.f32.mxu0 0.0
    %750 = vmatmul.mubr.f32.gmra.mxu0 %v288
    %v751 = vpop.f32.mrf.mxu0
    %v752 = vadd.f32 %v212, %v751
    %v753 = vpop.f32.mrf.mxu0
    %v754 = vadd.f32 %v216, %v753
    %755 = vmatprep.mubr.f32.mxu0 0.0
    %756 = vmatmul.mubr.f32.gmra.mxu0 %v291
    %v757 = vpop.f32.mrf.mxu0
    %v758 = vadd.f32 %v212, %v757
    %v759 = vpop.f32.mrf.mxu0
    %v760 = vadd.f32 %v216, %v759
    %761 = vmatprep.mubr.f32.mxu0 0.0
    %762 = vmatmul.mubr.f32.gmra.mxu0 %v294
    %v763 = vpop.f32.mrf.mxu0
    %v764 = vadd.f32 %v212, %v763
    %v765 = vpop.f32.mrf.mxu0
    %v766 = vadd.f32 %v216, %v765
    %767 = vmatprep.mubr.f32.mxu0 0.0
    %768 = vmatmul.mubr.f32.gmra.mxu0 %v297
    %v769 = vpop.f32.mrf.mxu0
    %v770 = vadd.f32 %v212, %v769
    %v771 = vpop.f32.mrf.mxu0
    %v772 = vadd.f32 %v216, %v771
    %773 = vmatprep.mubr.f32.mxu0 0.0
    %774 = vmatmul.mubr.f32.gmra.mxu0 %v300
    %v775 = vpop.f32.mrf.mxu0
    %v776 = vadd.f32 %v212, %v775
    %v777 = vpop.f32.mrf.mxu0
    %v778 = vadd.f32 %v216, %v777
    %779 = vmatprep.mubr.f32.mxu0 0.0
    %780 = vmatmul.mubr.f32.gmra.mxu0 %v303
    %v781 = vpop.f32.mrf.mxu0
    %v782 = vadd.f32 %v212, %v781
    %v783 = vpop.f32.mrf.mxu0
    %v784 = vadd.f32 %v216, %v783
    %785 = vmatprep.mubr.f32.mxu0 0.0
    %786 = vmatmul.mubr.f32.gmra.mxu0 %v306
    %v787 = vpop.f32.mrf.mxu0
    %v788 = vadd.f32 %v212, %v787
    %v789 = vpop.f32.mrf.mxu0
    %v790 = vadd.f32 %v216, %v789
    %791 = vmatprep.mubr.f32.mxu0 0.0
    %792 = vmatmul.mubr.f32.gmra.mxu0 %v309
    %v793 = vpop.f32.mrf.mxu0
    %v794 = vadd.f32 %v212, %v793
    %v795 = vpop.f32.mrf.mxu0
    %v796 = vadd.f32 %v216, %v795
    %797 = vmatprep.mubr.f32.mxu0 0.0
    %798 = vmatmul.mubr.f32.gmra.mxu0 %v312
    %v799 = vpop.f32.mrf.mxu0
    %v800 = vadd.f32 %v212, %v799
    %v801 = vpop.f32.mrf.mxu0
    %v802 = vadd.f32 %v216, %v801
    %803 = vmatprep.mubr.f32.mxu0 0.0
    %804 = vmatmul.mubr.f32.gmra.mxu0 %v315
    %v805 = vpop.f32.mrf.mxu0
    %v806 = vadd.f32 %v212, %v805
    %v807 = vpop.f32.mrf.mxu0
    %v808 = vadd.f32 %v216, %v807
    %809 = vmatprep.mubr.f32.mxu0 0.0
    %810 = vmatmul.mubr.f32.gmra.mxu0 %v318
    %v811 = vpop.f32.mrf.mxu0
    %v812 = vadd.f32 %v212, %v811
    %v813 = vpop.f32.mrf.mxu0
    %v814 = vadd.f32 %v216, %v813
    %815 = vmatprep.mubr.f32.mxu0 0.0
    %816 = vmatmul.mubr.f32.gmra.mxu0 %v321
    %v817 = vpop.f32.mrf.mxu0
    %v818 = vadd.f32 %v212, %v817
    %v819 = vpop.f32.mrf.mxu0
    %v820 = vadd.f32 %v216, %v819
    %821 = vmatprep.mubr.f32.mxu0 0.0
    %822 = vmatmul.mubr.f32.gmra.mxu0 %v324
    %v823 = vpop.f32.mrf.mxu0
    %v824 = vadd.f32 %v212, %v823
    %v825 = vpop.f32.mrf.mxu0
    %v826 = vadd.f32 %v216, %v825
    %827 = vmatprep.mubr.f32.mxu0 0.0
    %828 = vmatmul.mubr.f32.gmra.mxu0 %v327
    %v829 = vpop.f32.mrf.mxu0
    %v830 = vadd.f32 %v212, %v829
    %v831 = vpop.f32.mrf.mxu0
    %v832 = vadd.f32 %v216, %v831
    %833 = vmatprep.mubr.f32.mxu0 0.0
    %834 = vmatmul.mubr.f32.gmra.mxu0 %v330
    %v835 = vpop.f32.mrf.mxu0
    %v836 = vadd.f32 %v212, %v835
    %v837 = vpop.f32.mrf.mxu0
    %v838 = vadd.f32 %v216, %v837
    %839 = vmatprep.mubr.f32.mxu0 0.0
    %840 = vmatmul.mubr.f32.gmra.mxu0 %v333
    %v841 = vpop.f32.mrf.mxu0
    %v842 = vadd.f32 %v212, %v841
    %v843 = vpop.f32.mrf.mxu0
    %v844 = vadd.f32 %v216, %v843
    %845 = vmatprep.mubr.f32.mxu0 0.0
    %846 = vmatmul.mubr.f32.gmra.mxu0 %v336
    %v847 = vpop.f32.mrf.mxu0
    %v848 = vadd.f32 %v212, %v847
    %v849 = vpop.f32.mrf.mxu0
    %v850 = vadd.f32 %v216, %v849
    %851 = vdwg.mxu0
    %852 = vmatprep.subr.mxu0 0.0
    %853 = vmatpush1.msra.mxu0 0.0
    %854 = vmatprep.subr.mxu0 0.0
    %855 = vmatpush1.msra.mxu0 0.0
    %856 = vmatprep.subr.mxu0 0.0
    %857 = vmatpush1.msra.mxu0 0.0
    %858 = vmatprep.subr.mxu0 0.0
    %859 = vmatpush1.msra.mxu0 0.0
    %860 = vmatprep.subr.mxu0 0.0
    %861 = vmatpush1.msra.mxu0 0.0
    %862 = vmatprep.subr.mxu0 0.0
    %863 = vmatpush1.msra.mxu0 0.0
    %864 = vmatprep.subr.mxu0 0.0
    %865 = vmatpush1.msra.mxu0 0.0
    %866 = vmatprep.subr.mxu0 0.0
    %867 = vmatpush1.msra.mxu0 0.0
    %868 = vmatprep.subr.mxu0 %v196
    %869 = vmatpush1.msra.mxu0 %v195
    %870 = vmatprep.subr.mxu0 %v188
    %871 = vmatpush1.msra.mxu0 %v187
    %872 = vmatprep.subr.mxu0 %v180
    %873 = vmatpush1.msra.mxu0 %v179
    %874 = vmatprep.subr.mxu0 %v172
    %875 = vmatpush1.msra.mxu0 %v171
    %876 = vmatprep.subr.mxu0 %v164
    %877 = vmatpush1.msra.mxu0 %v163
    %878 = vmatprep.subr.mxu0 %v156
    %879 = vmatpush1.msra.mxu0 %v155
    %880 = vmatprep.subr.mxu0 %v148
    %881 = vmatpush1.msra.mxu0 %v147
    %882 = vmatprep.subr.mxu0 %v140
    %883 = vmatpush1.msra.mxu0 %v139
    %884 = vmatprep.subr.mxu0 0.0
    %885 = vmatpush2.msra.mxu0 0.0
    %886 = vmatprep.subr.mxu0 0.0
    %887 = vmatpush2.msra.mxu0 0.0
    %888 = vmatprep.subr.mxu0 0.0
    %889 = vmatpush2.msra.mxu0 0.0
    %890 = vmatprep.subr.mxu0 0.0
    %891 = vmatpush2.msra.mxu0 0.0
    %892 = vmatprep.subr.mxu0 0.0
    %893 = vmatpush2.msra.mxu0 0.0
    %894 = vmatprep.subr.mxu0 0.0
    %895 = vmatpush2.msra.mxu0 0.0
    %896 = vmatprep.subr.mxu0 0.0
    %897 = vmatpush2.msra.mxu0 0.0
    %898 = vmatprep.subr.mxu0 0.0
    %899 = vmatpush2.msra.mxu0 0.0
    %900 = vmatprep.subr.mxu0 0.0
    %901 = vmatpush2.msra.mxu0 0.0
    %902 = vmatprep.subr.mxu0 0.0
    %903 = vmatpush2.msra.mxu0 0.0
    %904 = vmatprep.subr.mxu0 0.0
    %905 = vmatpush2.msra.mxu0 0.0
    %906 = vmatprep.subr.mxu0 0.0
    %907 = vmatpush2.msra.mxu0 0.0
    %908 = vmatprep.subr.mxu0 0.0
    %909 = vmatpush2.msra.mxu0 0.0
    %910 = vmatprep.subr.mxu0 0.0
    %911 = vmatpush2.msra.mxu0 0.0
    %912 = vmatprep.subr.mxu0 0.0
    %913 = vmatpush2.msra.mxu0 0.0
    %914 = vmatprep.subr.mxu0 0.0
    %915 = vmatpush2.msra.mxu0 0.0
    %916 = vmatprep.mubr.f32.mxu0 0.0
    %917 = vmatmul.mubr.f32.gmra.mxu0 %v243
    %v918 = vpop.f32.mrf.mxu0
    %v919 = vadd.f32 %v220, %v918
    %v920 = vpop.f32.mrf.mxu0
    %v921 = vadd.f32 %v224, %v920
    %922 = vmatprep.mubr.f32.mxu0 0.0
    %923 = vmatmul.mubr.f32.gmra.mxu0 %v246
    %v924 = vpop.f32.mrf.mxu0
    %v925 = vadd.f32 %v220, %v924
    %v926 = vpop.f32.mrf.mxu0
    %v927 = vadd.f32 %v224, %v926
    %928 = vmatprep.mubr.f32.mxu0 0.0
    %929 = vmatmul.mubr.f32.gmra.mxu0 %v249
    %v930 = vpop.f32.mrf.mxu0
    %v931 = vadd.f32 %v220, %v930
    %v932 = vpop.f32.mrf.mxu0
    %v933 = vadd.f32 %v224, %v932
    %934 = vmatprep.mubr.f32.mxu0 0.0
    %935 = vmatmul.mubr.f32.gmra.mxu0 %v252
    %v936 = vpop.f32.mrf.mxu0
    %v937 = vadd.f32 %v220, %v936
    %v938 = vpop.f32.mrf.mxu0
    %v939 = vadd.f32 %v224, %v938
    %940 = vmatprep.mubr.f32.mxu0 0.0
    %941 = vmatmul.mubr.f32.gmra.mxu0 %v255
    %v942 = vpop.f32.mrf.mxu0
    %v943 = vadd.f32 %v220, %v942
    %v944 = vpop.f32.mrf.mxu0
    %v945 = vadd.f32 %v224, %v944
    %946 = vmatprep.mubr.f32.mxu0 0.0
    %947 = vmatmul.mubr.f32.gmra.mxu0 %v258
    %v948 = vpop.f32.mrf.mxu0
    %v949 = vadd.f32 %v220, %v948
    %v950 = vpop.f32.mrf.mxu0
    %v951 = vadd.f32 %v224, %v950
    %952 = vmatprep.mubr.f32.mxu0 0.0
    %953 = vmatmul.mubr.f32.gmra.mxu0 %v261
    %v954 = vpop.f32.mrf.mxu0
    %v955 = vadd.f32 %v220, %v954
    %v956 = vpop.f32.mrf.mxu0
    %v957 = vadd.f32 %v224, %v956
    %958 = vmatprep.mubr.f32.mxu0 0.0
    %959 = vmatmul.mubr.f32.gmra.mxu0 %v264
    %v960 = vpop.f32.mrf.mxu0
    %v961 = vadd.f32 %v220, %v960
    %v962 = vpop.f32.mrf.mxu0
    %v963 = vadd.f32 %v224, %v962
    %964 = vmatprep.mubr.f32.mxu0 0.0
    %965 = vmatmul.mubr.f32.gmra.mxu0 %v267
    %v966 = vpop.f32.mrf.mxu0
    %v967 = vadd.f32 %v220, %v966
    %v968 = vpop.f32.mrf.mxu0
    %v969 = vadd.f32 %v224, %v968
    %970 = vmatprep.mubr.f32.mxu0 0.0
    %971 = vmatmul.mubr.f32.gmra.mxu0 %v270
    %v972 = vpop.f32.mrf.mxu0
    %v973 = vadd.f32 %v220, %v972
    %v974 = vpop.f32.mrf.mxu0
    %v975 = vadd.f32 %v224, %v974
    %976 = vmatprep.mubr.f32.mxu0 0.0
    %977 = vmatmul.mubr.f32.gmra.mxu0 %v273
    %v978 = vpop.f32.mrf.mxu0
    %v979 = vadd.f32 %v220, %v978
    %v980 = vpop.f32.mrf.mxu0
    %v981 = vadd.f32 %v224, %v980
    %982 = vmatprep.mubr.f32.mxu0 0.0
    %983 = vmatmul.mubr.f32.gmra.mxu0 %v276
    %v984 = vpop.f32.mrf.mxu0
    %v985 = vadd.f32 %v220, %v984
    %v986 = vpop.f32.mrf.mxu0
    %v987 = vadd.f32 %v224, %v986
    %988 = vmatprep.mubr.f32.mxu0 0.0
    %989 = vmatmul.mubr.f32.gmra.mxu0 %v279
    %v990 = vpop.f32.mrf.mxu0
    %v991 = vadd.f32 %v220, %v990
    %v992 = vpop.f32.mrf.mxu0
    %v993 = vadd.f32 %v224, %v992
    %994 = vmatprep.mubr.f32.mxu0 0.0
    %995 = vmatmul.mubr.f32.gmra.mxu0 %v282
    %v996 = vpop.f32.mrf.mxu0
    %v997 = vadd.f32 %v220, %v996
    %v998 = vpop.f32.mrf.mxu0
    %v999 = vadd.f32 %v224, %v998
    %1000 = vmatprep.mubr.f32.mxu0 0.0
    %1001 = vmatmul.mubr.f32.gmra.mxu0 %v285
    %v1002 = vpop.f32.mrf.mxu0
    %v1003 = vadd.f32 %v220, %v1002
    %v1004 = vpop.f32.mrf.mxu0
    %v1005 = vadd.f32 %v224, %v1004
    %1006 = vmatprep.mubr.f32.mxu0 0.0
    %1007 = vmatmul.mubr.f32.gmra.mxu0 %v288
    %v1008 = vpop.f32.mrf.mxu0
    %v1009 = vadd.f32 %v220, %v1008
    %v1010 = vpop.f32.mrf.mxu0
    %v1011 = vadd.f32 %v224, %v1010
    %1012 = vmatprep.mubr.f32.mxu0 0.0
    %1013 = vmatmul.mubr.f32.gmra.mxu0 %v291
    %v1014 = vpop.f32.mrf.mxu0
    %v1015 = vadd.f32 %v220, %v1014
    %v1016 = vpop.f32.mrf.mxu0
    %v1017 = vadd.f32 %v224, %v1016
    %1018 = vmatprep.mubr.f32.mxu0 0.0
    %1019 = vmatmul.mubr.f32.gmra.mxu0 %v294
    %v1020 = vpop.f32.mrf.mxu0
    %v1021 = vadd.f32 %v220, %v1020
    %v1022 = vpop.f32.mrf.mxu0
    %v1023 = vadd.f32 %v224, %v1022
    %1024 = vmatprep.mubr.f32.mxu0 0.0
    %1025 = vmatmul.mubr.f32.gmra.mxu0 %v297
    %v1026 = vpop.f32.mrf.mxu0
    %v1027 = vadd.f32 %v220, %v1026
    %v1028 = vpop.f32.mrf.mxu0
    %v1029 = vadd.f32 %v224, %v1028
    %1030 = vmatprep.mubr.f32.mxu0 0.0
    %1031 = vmatmul.mubr.f32.gmra.mxu0 %v300
    %v1032 = vpop.f32.mrf.mxu0
    %v1033 = vadd.f32 %v220, %v1032
    %v1034 = vpop.f32.mrf.mxu0
    %v1035 = vadd.f32 %v224, %v1034
    %1036 = vmatprep.mubr.f32.mxu0 0.0
    %1037 = vmatmul.mubr.f32.gmra.mxu0 %v303
    %v1038 = vpop.f32.mrf.mxu0
    %v1039 = vadd.f32 %v220, %v1038
    %v1040 = vpop.f32.mrf.mxu0
    %v1041 = vadd.f32 %v224, %v1040
    %1042 = vmatprep.mubr.f32.mxu0 0.0
    %1043 = vmatmul.mubr.f32.gmra.mxu0 %v306
    %v1044 = vpop.f32.mrf.mxu0
    %v1045 = vadd.f32 %v220, %v1044
    %v1046 = vpop.f32.mrf.mxu0
    %v1047 = vadd.f32 %v224, %v1046
    %1048 = vmatprep.mubr.f32.mxu0 0.0
    %1049 = vmatmul.mubr.f32.gmra.mxu0 %v309
    %v1050 = vpop.f32.mrf.mxu0
    %v1051 = vadd.f32 %v220, %v1050
    %v1052 = vpop.f32.mrf.mxu0
    %v1053 = vadd.f32 %v224, %v1052
    %1054 = vmatprep.mubr.f32.mxu0 0.0
    %1055 = vmatmul.mubr.f32.gmra.mxu0 %v312
    %v1056 = vpop.f32.mrf.mxu0
    %v1057 = vadd.f32 %v220, %v1056
    %v1058 = vpop.f32.mrf.mxu0
    %v1059 = vadd.f32 %v224, %v1058
    %1060 = vmatprep.mubr.f32.mxu0 0.0
    %1061 = vmatmul.mubr.f32.gmra.mxu0 %v315
    %v1062 = vpop.f32.mrf.mxu0
    %v1063 = vadd.f32 %v220, %v1062
    %v1064 = vpop.f32.mrf.mxu0
    %v1065 = vadd.f32 %v224, %v1064
    %1066 = vmatprep.mubr.f32.mxu0 0.0
    %1067 = vmatmul.mubr.f32.gmra.mxu0 %v318
    %v1068 = vpop.f32.mrf.mxu0
    %v1069 = vadd.f32 %v220, %v1068
    %v1070 = vpop.f32.mrf.mxu0
    %v1071 = vadd.f32 %v224, %v1070
    %1072 = vmatprep.mubr.f32.mxu0 0.0
    %1073 = vmatmul.mubr.f32.gmra.mxu0 %v321
    %v1074 = vpop.f32.mrf.mxu0
    %v1075 = vadd.f32 %v220, %v1074
    %v1076 = vpop.f32.mrf.mxu0
    %v1077 = vadd.f32 %v224, %v1076
    %1078 = vmatprep.mubr.f32.mxu0 0.0
    %1079 = vmatmul.mubr.f32.gmra.mxu0 %v324
    %v1080 = vpop.f32.mrf.mxu0
    %v1081 = vadd.f32 %v220, %v1080
    %v1082 = vpop.f32.mrf.mxu0
    %v1083 = vadd.f32 %v224, %v1082
    %1084 = vmatprep.mubr.f32.mxu0 0.0
    %1085 = vmatmul.mubr.f32.gmra.mxu0 %v327
    %v1086 = vpop.f32.mrf.mxu0
    %v1087 = vadd.f32 %v220, %v1086
    %v1088 = vpop.f32.mrf.mxu0
    %v1089 = vadd.f32 %v224, %v1088
    %1090 = vmatprep.mubr.f32.mxu0 0.0
    %1091 = vmatmul.mubr.f32.gmra.mxu0 %v330
    %v1092 = vpop.f32.mrf.mxu0
    %v1093 = vadd.f32 %v220, %v1092
    %v1094 = vpop.f32.mrf.mxu0
    %v1095 = vadd.f32 %v224, %v1094
    %1096 = vmatprep.mubr.f32.mxu0 0.0
    %1097 = vmatmul.mubr.f32.gmra.mxu0 %v333
    %v1098 = vpop.f32.mrf.mxu0
    %v1099 = vadd.f32 %v220, %v1098
    %v1100 = vpop.f32.mrf.mxu0
    %v1101 = vadd.f32 %v224, %v1100
    %1102 = vmatprep.mubr.f32.mxu0 0.0
    %1103 = vmatmul.mubr.f32.gmra.mxu0 %v336
    %v1104 = vpop.f32.mrf.mxu0
    %v1105 = vadd.f32 %v220, %v1104
    %v1106 = vpop.f32.mrf.mxu0
    %v1107 = vadd.f32 %v224, %v1106
    %1108 = vdwg.mxu0
    %1109 = vmatprep.subr.mxu0 0.0
    %1110 = vmatpush1.msra.mxu0 0.0
    %1111 = vmatprep.subr.mxu0 0.0
    %1112 = vmatpush1.msra.mxu0 0.0
    %1113 = vmatprep.subr.mxu0 0.0
    %1114 = vmatpush1.msra.mxu0 0.0
    %1115 = vmatprep.subr.mxu0 0.0
    %1116 = vmatpush1.msra.mxu0 0.0
    %1117 = vmatprep.subr.mxu0 0.0
    %1118 = vmatpush1.msra.mxu0 0.0
    %1119 = vmatprep.subr.mxu0 0.0
    %1120 = vmatpush1.msra.mxu0 0.0
    %1121 = vmatprep.subr.mxu0 0.0
    %1122 = vmatpush1.msra.mxu0 0.0
    %1123 = vmatprep.subr.mxu0 0.0
    %1124 = vmatpush1.msra.mxu0 0.0
    %1125 = vmatprep.subr.mxu0 %v198
    %1126 = vmatpush1.msra.mxu0 %v197
    %1127 = vmatprep.subr.mxu0 %v190
    %1128 = vmatpush1.msra.mxu0 %v189
    %1129 = vmatprep.subr.mxu0 %v182
    %1130 = vmatpush1.msra.mxu0 %v181
    %1131 = vmatprep.subr.mxu0 %v174
    %1132 = vmatpush1.msra.mxu0 %v173
    %1133 = vmatprep.subr.mxu0 %v166
    %1134 = vmatpush1.msra.mxu0 %v165
    %1135 = vmatprep.subr.mxu0 %v158
    %1136 = vmatpush1.msra.mxu0 %v157
    %1137 = vmatprep.subr.mxu0 %v150
    %1138 = vmatpush1.msra.mxu0 %v149
    %1139 = vmatprep.subr.mxu0 %v142
    %1140 = vmatpush1.msra.mxu0 %v141
    %1141 = vmatprep.subr.mxu0 0.0
    %1142 = vmatpush2.msra.mxu0 0.0
    %1143 = vmatprep.subr.mxu0 0.0
    %1144 = vmatpush2.msra.mxu0 0.0
    %1145 = vmatprep.subr.mxu0 0.0
    %1146 = vmatpush2.msra.mxu0 0.0
    %1147 = vmatprep.subr.mxu0 0.0
    %1148 = vmatpush2.msra.mxu0 0.0
    %1149 = vmatprep.subr.mxu0 0.0
    %1150 = vmatpush2.msra.mxu0 0.0
    %1151 = vmatprep.subr.mxu0 0.0
    %1152 = vmatpush2.msra.mxu0 0.0
    %1153 = vmatprep.subr.mxu0 0.0
    %1154 = vmatpush2.msra.mxu0 0.0
    %1155 = vmatprep.subr.mxu0 0.0
    %1156 = vmatpush2.msra.mxu0 0.0
    %1157 = vmatprep.subr.mxu0 0.0
    %1158 = vmatpush2.msra.mxu0 0.0
    %1159 = vmatprep.subr.mxu0 0.0
    %1160 = vmatpush2.msra.mxu0 0.0
    %1161 = vmatprep.subr.mxu0 0.0
    %1162 = vmatpush2.msra.mxu0 0.0
    %1163 = vmatprep.subr.mxu0 0.0
    %1164 = vmatpush2.msra.mxu0 0.0
    %1165 = vmatprep.subr.mxu0 0.0
    %1166 = vmatpush2.msra.mxu0 0.0
    %1167 = vmatprep.subr.mxu0 0.0
    %1168 = vmatpush2.msra.mxu0 0.0
    %1169 = vmatprep.subr.mxu0 0.0
    %1170 = vmatpush2.msra.mxu0 0.0
    %1171 = vmatprep.subr.mxu0 0.0
    %1172 = vmatpush2.msra.mxu0 0.0
    %1173 = vmatprep.mubr.f32.mxu0 0.0
    %1174 = vmatmul.mubr.f32.gmra.mxu0 %v243
    %v1175 = vpop.f32.mrf.mxu0
    %v1176 = vadd.f32 %v228, %v1175
    %v1177 = vpop.f32.mrf.mxu0
    %v1178 = vadd.f32 %v232, %v1177
    %1179 = vmatprep.mubr.f32.mxu0 0.0
    %1180 = vmatmul.mubr.f32.gmra.mxu0 %v246
    %v1181 = vpop.f32.mrf.mxu0
    %v1182 = vadd.f32 %v228, %v1181
    %v1183 = vpop.f32.mrf.mxu0
    %v1184 = vadd.f32 %v232, %v1183
    %1185 = vmatprep.mubr.f32.mxu0 0.0
    %1186 = vmatmul.mubr.f32.gmra.mxu0 %v249
    %v1187 = vpop.f32.mrf.mxu0
    %v1188 = vadd.f32 %v228, %v1187
    %v1189 = vpop.f32.mrf.mxu0
    %v1190 = vadd.f32 %v232, %v1189
    %1191 = vmatprep.mubr.f32.mxu0 0.0
    %1192 = vmatmul.mubr.f32.gmra.mxu0 %v252
    %v1193 = vpop.f32.mrf.mxu0
    %v1194 = vadd.f32 %v228, %v1193
    %v1195 = vpop.f32.mrf.mxu0
    %v1196 = vadd.f32 %v232, %v1195
    %1197 = vmatprep.mubr.f32.mxu0 0.0
    %1198 = vmatmul.mubr.f32.gmra.mxu0 %v255
    %v1199 = vpop.f32.mrf.mxu0
    %v1200 = vadd.f32 %v228, %v1199
    %v1201 = vpop.f32.mrf.mxu0
    %v1202 = vadd.f32 %v232, %v1201
    %1203 = vmatprep.mubr.f32.mxu0 0.0
    %1204 = vmatmul.mubr.f32.gmra.mxu0 %v258
    %v1205 = vpop.f32.mrf.mxu0
    %v1206 = vadd.f32 %v228, %v1205
    %v1207 = vpop.f32.mrf.mxu0
    %v1208 = vadd.f32 %v232, %v1207
    %1209 = vmatprep.mubr.f32.mxu0 0.0
    %1210 = vmatmul.mubr.f32.gmra.mxu0 %v261
    %v1211 = vpop.f32.mrf.mxu0
    %v1212 = vadd.f32 %v228, %v1211
    %v1213 = vpop.f32.mrf.mxu0
    %v1214 = vadd.f32 %v232, %v1213
    %1215 = vmatprep.mubr.f32.mxu0 0.0
    %1216 = vmatmul.mubr.f32.gmra.mxu0 %v264
    %v1217 = vpop.f32.mrf.mxu0
    %v1218 = vadd.f32 %v228, %v1217
    %v1219 = vpop.f32.mrf.mxu0
    %v1220 = vadd.f32 %v232, %v1219
    %1221 = vmatprep.mubr.f32.mxu0 0.0
    %1222 = vmatmul.mubr.f32.gmra.mxu0 %v267
    %v1223 = vpop.f32.mrf.mxu0
    %v1224 = vadd.f32 %v228, %v1223
    %v1225 = vpop.f32.mrf.mxu0
    %v1226 = vadd.f32 %v232, %v1225
    %1227 = vmatprep.mubr.f32.mxu0 0.0
    %1228 = vmatmul.mubr.f32.gmra.mxu0 %v270
    %v1229 = vpop.f32.mrf.mxu0
    %v1230 = vadd.f32 %v228, %v1229
    %v1231 = vpop.f32.mrf.mxu0
    %v1232 = vadd.f32 %v232, %v1231
    %1233 = vmatprep.mubr.f32.mxu0 0.0
    %1234 = vmatmul.mubr.f32.gmra.mxu0 %v273
    %v1235 = vpop.f32.mrf.mxu0
    %v1236 = vadd.f32 %v228, %v1235
    %v1237 = vpop.f32.mrf.mxu0
    %v1238 = vadd.f32 %v232, %v1237
    %1239 = vmatprep.mubr.f32.mxu0 0.0
    %1240 = vmatmul.mubr.f32.gmra.mxu0 %v276
    %v1241 = vpop.f32.mrf.mxu0
    %v1242 = vadd.f32 %v228, %v1241
    %v1243 = vpop.f32.mrf.mxu0
    %v1244 = vadd.f32 %v232, %v1243
    %1245 = vmatprep.mubr.f32.mxu0 0.0
    %1246 = vmatmul.mubr.f32.gmra.mxu0 %v279
    %v1247 = vpop.f32.mrf.mxu0
    %v1248 = vadd.f32 %v228, %v1247
    %v1249 = vpop.f32.mrf.mxu0
    %v1250 = vadd.f32 %v232, %v1249
    %1251 = vmatprep.mubr.f32.mxu0 0.0
    %1252 = vmatmul.mubr.f32.gmra.mxu0 %v282
    %v1253 = vpop.f32.mrf.mxu0
    %v1254 = vadd.f32 %v228, %v1253
    %v1255 = vpop.f32.mrf.mxu0
    %v1256 = vadd.f32 %v232, %v1255
    %1257 = vmatprep.mubr.f32.mxu0 0.0
    %1258 = vmatmul.mubr.f32.gmra.mxu0 %v285
    %v1259 = vpop.f32.mrf.mxu0
    %v1260 = vadd.f32 %v228, %v1259
    %v1261 = vpop.f32.mrf.mxu0
    %v1262 = vadd.f32 %v232, %v1261
    %1263 = vmatprep.mubr.f32.mxu0 0.0
    %1264 = vmatmul.mubr.f32.gmra.mxu0 %v288
    %v1265 = vpop.f32.mrf.mxu0
    %v1266 = vadd.f32 %v228, %v1265
    %v1267 = vpop.f32.mrf.mxu0
    %v1268 = vadd.f32 %v232, %v1267
    %1269 = vmatprep.mubr.f32.mxu0 0.0
    %1270 = vmatmul.mubr.f32.gmra.mxu0 %v291
    %v1271 = vpop.f32.mrf.mxu0
    %v1272 = vadd.f32 %v228, %v1271
    %v1273 = vpop.f32.mrf.mxu0
    %v1274 = vadd.f32 %v232, %v1273
    %1275 = vmatprep.mubr.f32.mxu0 0.0
    %1276 = vmatmul.mubr.f32.gmra.mxu0 %v294
    %v1277 = vpop.f32.mrf.mxu0
    %v1278 = vadd.f32 %v228, %v1277
    %v1279 = vpop.f32.mrf.mxu0
    %v1280 = vadd.f32 %v232, %v1279
    %1281 = vmatprep.mubr.f32.mxu0 0.0
    %1282 = vmatmul.mubr.f32.gmra.mxu0 %v297
    %v1283 = vpop.f32.mrf.mxu0
    %v1284 = vadd.f32 %v228, %v1283
    %v1285 = vpop.f32.mrf.mxu0
    %v1286 = vadd.f32 %v232, %v1285
    %1287 = vmatprep.mubr.f32.mxu0 0.0
    %1288 = vmatmul.mubr.f32.gmra.mxu0 %v300
    %v1289 = vpop.f32.mrf.mxu0
    %v1290 = vadd.f32 %v228, %v1289
    %v1291 = vpop.f32.mrf.mxu0
    %v1292 = vadd.f32 %v232, %v1291
    %1293 = vmatprep.mubr.f32.mxu0 0.0
    %1294 = vmatmul.mubr.f32.gmra.mxu0 %v303
    %v1295 = vpop.f32.mrf.mxu0
    %v1296 = vadd.f32 %v228, %v1295
    %v1297 = vpop.f32.mrf.mxu0
    %v1298 = vadd.f32 %v232, %v1297
    %1299 = vmatprep.mubr.f32.mxu0 0.0
    %1300 = vmatmul.mubr.f32.gmra.mxu0 %v306
    %v1301 = vpop.f32.mrf.mxu0
    %v1302 = vadd.f32 %v228, %v1301
    %v1303 = vpop.f32.mrf.mxu0
    %v1304 = vadd.f32 %v232, %v1303
    %1305 = vmatprep.mubr.f32.mxu0 0.0
    %1306 = vmatmul.mubr.f32.gmra.mxu0 %v309
    %v1307 = vpop.f32.mrf.mxu0
    %v1308 = vadd.f32 %v228, %v1307
    %v1309 = vpop.f32.mrf.mxu0
    %v1310 = vadd.f32 %v232, %v1309
    %1311 = vmatprep.mubr.f32.mxu0 0.0
    %1312 = vmatmul.mubr.f32.gmra.mxu0 %v312
    %v1313 = vpop.f32.mrf.mxu0
    %v1314 = vadd.f32 %v228, %v1313
    %v1315 = vpop.f32.mrf.mxu0
    %v1316 = vadd.f32 %v232, %v1315
    %1317 = vmatprep.mubr.f32.mxu0 0.0
    %1318 = vmatmul.mubr.f32.gmra.mxu0 %v315
    %v1319 = vpop.f32.mrf.mxu0
    %v1320 = vadd.f32 %v228, %v1319
    %v1321 = vpop.f32.mrf.mxu0
    %v1322 = vadd.f32 %v232, %v1321
    %1323 = vmatprep.mubr.f32.mxu0 0.0
    %1324 = vmatmul.mubr.f32.gmra.mxu0 %v318
    %v1325 = vpop.f32.mrf.mxu0
    %v1326 = vadd.f32 %v228, %v1325
    %v1327 = vpop.f32.mrf.mxu0
    %v1328 = vadd.f32 %v232, %v1327
    %1329 = vmatprep.mubr.f32.mxu0 0.0
    %1330 = vmatmul.mubr.f32.gmra.mxu0 %v321
    %v1331 = vpop.f32.mrf.mxu0
    %v1332 = vadd.f32 %v228, %v1331
    %v1333 = vpop.f32.mrf.mxu0
    %v1334 = vadd.f32 %v232, %v1333
    %1335 = vmatprep.mubr.f32.mxu0 0.0
    %1336 = vmatmul.mubr.f32.gmra.mxu0 %v324
    %v1337 = vpop.f32.mrf.mxu0
    %v1338 = vadd.f32 %v228, %v1337
    %v1339 = vpop.f32.mrf.mxu0
    %v1340 = vadd.f32 %v232, %v1339
    %1341 = vmatprep.mubr.f32.mxu0 0.0
    %1342 = vmatmul.mubr.f32.gmra.mxu0 %v327
    %v1343 = vpop.f32.mrf.mxu0
    %v1344 = vadd.f32 %v228, %v1343
    %v1345 = vpop.f32.mrf.mxu0
    %v1346 = vadd.f32 %v232, %v1345
    %1347 = vmatprep.mubr.f32.mxu0 0.0
    %1348 = vmatmul.mubr.f32.gmra.mxu0 %v330
    %v1349 = vpop.f32.mrf.mxu0
    %v1350 = vadd.f32 %v228, %v1349
    %v1351 = vpop.f32.mrf.mxu0
    %v1352 = vadd.f32 %v232, %v1351
    %1353 = vmatprep.mubr.f32.mxu0 0.0
    %1354 = vmatmul.mubr.f32.gmra.mxu0 %v333
    %v1355 = vpop.f32.mrf.mxu0
    %v1356 = vadd.f32 %v228, %v1355
    %v1357 = vpop.f32.mrf.mxu0
    %v1358 = vadd.f32 %v232, %v1357
    %1359 = vmatprep.mubr.f32.mxu0 0.0
    %1360 = vmatmul.mubr.f32.gmra.mxu0 %v336
    %v1361 = vpop.f32.mrf.mxu0
    %v1362 = vadd.f32 %v228, %v1361
    %v1363 = vpop.f32.mrf.mxu0
    %v1364 = vadd.f32 %v232, %v1363
    %1365 = vdwg.mxu0
    %vm1366 = vcmp.gt.f32.partialorder %v405, 0.0
    %vm1367 = vcmp.gt.f32.partialorder %v407, 0.0
    %vm1368 = vcmp.gt.f32.partialorder %v662, 0.0
    %vm1369 = vcmp.gt.f32.partialorder %v664, 0.0
    %vm1370 = vcmp.gt.f32.partialorder %v919, 0.0
    %vm1371 = vcmp.gt.f32.partialorder %v921, 0.0
    %vm1372 = vcmp.gt.f32.partialorder %v1176, 0.0
    %vm1373 = vcmp.gt.f32.partialorder %v1178, 0.0
    %vm1374 = vcmp.gt.f32.partialorder %v411, 0.0
    %vm1375 = vcmp.gt.f32.partialorder %v413, 0.0
    %vm1376 = vcmp.gt.f32.partialorder %v668, 0.0
    %vm1377 = vcmp.gt.f32.partialorder %v670, 0.0
    %vm1378 = vcmp.gt.f32.partialorder %v925, 0.0
    %vm1379 = vcmp.gt.f32.partialorder %v927, 0.0
    %vm1380 = vcmp.gt.f32.partialorder %v1182, 0.0
    %vm1381 = vcmp.gt.f32.partialorder %v1184, 0.0
    %vm1382 = vcmp.gt.f32.partialorder %v417, 0.0
    %vm1383 = vcmp.gt.f32.partialorder %v419, 0.0
    %vm1384 = vcmp.gt.f32.partialorder %v674, 0.0
    %vm1385 = vcmp.gt.f32.partialorder %v676, 0.0
    %vm1386 = vcmp.gt.f32.partialorder %v931, 0.0
    %vm1387 = vcmp.gt.f32.partialorder %v933, 0.0
    %vm1388 = vcmp.gt.f32.partialorder %v1188, 0.0
    %vm1389 = vcmp.gt.f32.partialorder %v1190, 0.0
    %vm1390 = vcmp.gt.f32.partialorder %v423, 0.0
    %vm1391 = vcmp.gt.f32.partialorder %v425, 0.0
    %vm1392 = vcmp.gt.f32.partialorder %v680, 0.0
    %vm1393 = vcmp.gt.f32.partialorder %v682, 0.0
    %vm1394 = vcmp.gt.f32.partialorder %v937, 0.0
    %vm1395 = vcmp.gt.f32.partialorder %v939, 0.0
    %vm1396 = vcmp.gt.f32.partialorder %v1194, 0.0
    %vm1397 = vcmp.gt.f32.partialorder %v1196, 0.0
    %vm1398 = vcmp.gt.f32.partialorder %v429, 0.0
    %vm1399 = vcmp.gt.f32.partialorder %v431, 0.0
    %vm1400 = vcmp.gt.f32.partialorder %v686, 0.0
    %vm1401 = vcmp.gt.f32.partialorder %v688, 0.0
    %vm1402 = vcmp.gt.f32.partialorder %v943, 0.0
    %vm1403 = vcmp.gt.f32.partialorder %v945, 0.0
    %vm1404 = vcmp.gt.f32.partialorder %v1200, 0.0
    %vm1405 = vcmp.gt.f32.partialorder %v1202, 0.0
    %vm1406 = vcmp.gt.f32.partialorder %v435, 0.0
    %vm1407 = vcmp.gt.f32.partialorder %v437, 0.0
    %vm1408 = vcmp.gt.f32.partialorder %v692, 0.0
    %vm1409 = vcmp.gt.f32.partialorder %v694, 0.0
    %vm1410 = vcmp.gt.f32.partialorder %v949, 0.0
    %vm1411 = vcmp.gt.f32.partialorder %v951, 0.0
    %vm1412 = vcmp.gt.f32.partialorder %v1206, 0.0
    %vm1413 = vcmp.gt.f32.partialorder %v1208, 0.0
    %vm1414 = vcmp.gt.f32.partialorder %v441, 0.0
    %vm1415 = vcmp.gt.f32.partialorder %v443, 0.0
    %vm1416 = vcmp.gt.f32.partialorder %v698, 0.0
    %vm1417 = vcmp.gt.f32.partialorder %v700, 0.0
    %vm1418 = vcmp.gt.f32.partialorder %v955, 0.0
    %vm1419 = vcmp.gt.f32.partialorder %v957, 0.0
    %vm1420 = vcmp.gt.f32.partialorder %v1212, 0.0
    %vm1421 = vcmp.gt.f32.partialorder %v1214, 0.0
    %vm1422 = vcmp.gt.f32.partialorder %v447, 0.0
    %vm1423 = vcmp.gt.f32.partialorder %v449, 0.0
    %vm1424 = vcmp.gt.f32.partialorder %v704, 0.0
    %vm1425 = vcmp.gt.f32.partialorder %v706, 0.0
    %vm1426 = vcmp.gt.f32.partialorder %v961, 0.0
    %vm1427 = vcmp.gt.f32.partialorder %v963, 0.0
    %vm1428 = vcmp.gt.f32.partialorder %v1218, 0.0
    %vm1429 = vcmp.gt.f32.partialorder %v1220, 0.0
    %vm1430 = vcmp.gt.f32.partialorder %v453, 0.0
    %vm1431 = vcmp.gt.f32.partialorder %v455, 0.0
    %vm1432 = vcmp.gt.f32.partialorder %v710, 0.0
    %vm1433 = vcmp.gt.f32.partialorder %v712, 0.0
    %vm1434 = vcmp.gt.f32.partialorder %v967, 0.0
    %vm1435 = vcmp.gt.f32.partialorder %v969, 0.0
    %vm1436 = vcmp.gt.f32.partialorder %v1224, 0.0
    %vm1437 = vcmp.gt.f32.partialorder %v1226, 0.0
    %vm1438 = vcmp.gt.f32.partialorder %v459, 0.0
    %vm1439 = vcmp.gt.f32.partialorder %v461, 0.0
    %vm1440 = vcmp.gt.f32.partialorder %v716, 0.0
    %vm1441 = vcmp.gt.f32.partialorder %v718, 0.0
    %vm1442 = vcmp.gt.f32.partialorder %v973, 0.0
    %vm1443 = vcmp.gt.f32.partialorder %v975, 0.0
    %vm1444 = vcmp.gt.f32.partialorder %v1230, 0.0
    %vm1445 = vcmp.gt.f32.partialorder %v1232, 0.0
    %vm1446 = vcmp.gt.f32.partialorder %v465, 0.0
    %vm1447 = vcmp.gt.f32.partialorder %v467, 0.0
    %vm1448 = vcmp.gt.f32.partialorder %v722, 0.0
    %vm1449 = vcmp.gt.f32.partialorder %v724, 0.0
    %vm1450 = vcmp.gt.f32.partialorder %v979, 0.0
    %vm1451 = vcmp.gt.f32.partialorder %v981, 0.0
    %vm1452 = vcmp.gt.f32.partialorder %v1236, 0.0
    %vm1453 = vcmp.gt.f32.partialorder %v1238, 0.0
    %vm1454 = vcmp.gt.f32.partialorder %v471, 0.0
    %vm1455 = vcmp.gt.f32.partialorder %v473, 0.0
    %vm1456 = vcmp.gt.f32.partialorder %v728, 0.0
    %vm1457 = vcmp.gt.f32.partialorder %v730, 0.0
    %vm1458 = vcmp.gt.f32.partialorder %v985, 0.0
    %vm1459 = vcmp.gt.f32.partialorder %v987, 0.0
    %vm1460 = vcmp.gt.f32.partialorder %v1242, 0.0
    %vm1461 = vcmp.gt.f32.partialorder %v1244, 0.0
    %vm1462 = vcmp.gt.f32.partialorder %v477, 0.0
    %vm1463 = vcmp.gt.f32.partialorder %v479, 0.0
    %vm1464 = vcmp.gt.f32.partialorder %v734, 0.0
    %vm1465 = vcmp.gt.f32.partialorder %v736, 0.0
    %vm1466 = vcmp.gt.f32.partialorder %v991, 0.0
    %vm1467 = vcmp.gt.f32.partialorder %v993, 0.0
    %vm1468 = vcmp.gt.f32.partialorder %v1248, 0.0
    %vm1469 = vcmp.gt.f32.partialorder %v1250, 0.0
    %vm1470 = vcmp.gt.f32.partialorder %v483, 0.0
    %vm1471 = vcmp.gt.f32.partialorder %v485, 0.0
    %vm1472 = vcmp.gt.f32.partialorder %v740, 0.0
    %vm1473 = vcmp.gt.f32.partialorder %v742, 0.0
    %vm1474 = vcmp.gt.f32.partialorder %v997, 0.0
    %vm1475 = vcmp.gt.f32.partialorder %v999, 0.0
    %vm1476 = vcmp.gt.f32.partialorder %v1254, 0.0
    %vm1477 = vcmp.gt.f32.partialorder %v1256, 0.0
    %vm1478 = vcmp.gt.f32.partialorder %v489, 0.0
    %vm1479 = vcmp.gt.f32.partialorder %v491, 0.0
    %vm1480 = vcmp.gt.f32.partialorder %v746, 0.0
    %vm1481 = vcmp.gt.f32.partialorder %v748, 0.0
    %vm1482 = vcmp.gt.f32.partialorder %v1003, 0.0
    %vm1483 = vcmp.gt.f32.partialorder %v1005, 0.0
    %vm1484 = vcmp.gt.f32.partialorder %v1260, 0.0
    %vm1485 = vcmp.gt.f32.partialorder %v1262, 0.0
    %vm1486 = vcmp.gt.f32.partialorder %v495, 0.0
    %vm1487 = vcmp.gt.f32.partialorder %v497, 0.0
    %vm1488 = vcmp.gt.f32.partialorder %v752, 0.0
    %vm1489 = vcmp.gt.f32.partialorder %v754, 0.0
    %vm1490 = vcmp.gt.f32.partialorder %v1009, 0.0
    %vm1491 = vcmp.gt.f32.partialorder %v1011, 0.0
    %vm1492 = vcmp.gt.f32.partialorder %v1266, 0.0
    %vm1493 = vcmp.gt.f32.partialorder %v1268, 0.0
    %vm1494 = vcmp.gt.f32.partialorder %v501, 0.0
    %vm1495 = vcmp.gt.f32.partialorder %v503, 0.0
    %vm1496 = vcmp.gt.f32.partialorder %v758, 0.0
    %vm1497 = vcmp.gt.f32.partialorder %v760, 0.0
    %vm1498 = vcmp.gt.f32.partialorder %v1015, 0.0
    %vm1499 = vcmp.gt.f32.partialorder %v1017, 0.0
    %vm1500 = vcmp.gt.f32.partialorder %v1272, 0.0
    %vm1501 = vcmp.gt.f32.partialorder %v1274, 0.0
    %vm1502 = vcmp.gt.f32.partialorder %v507, 0.0
    %vm1503 = vcmp.gt.f32.partialorder %v509, 0.0
    %vm1504 = vcmp.gt.f32.partialorder %v764, 0.0
    %vm1505 = vcmp.gt.f32.partialorder %v766, 0.0
    %vm1506 = vcmp.gt.f32.partialorder %v1021, 0.0
    %vm1507 = vcmp.gt.f32.partialorder %v1023, 0.0
    %vm1508 = vcmp.gt.f32.partialorder %v1278, 0.0
    %vm1509 = vcmp.gt.f32.partialorder %v1280, 0.0
    %vm1510 = vcmp.gt.f32.partialorder %v513, 0.0
    %vm1511 = vcmp.gt.f32.partialorder %v515, 0.0
    %vm1512 = vcmp.gt.f32.partialorder %v770, 0.0
    %vm1513 = vcmp.gt.f32.partialorder %v772, 0.0
    %vm1514 = vcmp.gt.f32.partialorder %v1027, 0.0
    %vm1515 = vcmp.gt.f32.partialorder %v1029, 0.0
    %vm1516 = vcmp.gt.f32.partialorder %v1284, 0.0
    %vm1517 = vcmp.gt.f32.partialorder %v1286, 0.0
    %vm1518 = vcmp.gt.f32.partialorder %v519, 0.0
    %vm1519 = vcmp.gt.f32.partialorder %v521, 0.0
    %vm1520 = vcmp.gt.f32.partialorder %v776, 0.0
    %vm1521 = vcmp.gt.f32.partialorder %v778, 0.0
    %vm1522 = vcmp.gt.f32.partialorder %v1033, 0.0
    %vm1523 = vcmp.gt.f32.partialorder %v1035, 0.0
    %vm1524 = vcmp.gt.f32.partialorder %v1290, 0.0
    %vm1525 = vcmp.gt.f32.partialorder %v1292, 0.0
    %vm1526 = vcmp.gt.f32.partialorder %v525, 0.0
    %vm1527 = vcmp.gt.f32.partialorder %v527, 0.0
    %vm1528 = vcmp.gt.f32.partialorder %v782, 0.0
    %vm1529 = vcmp.gt.f32.partialorder %v784, 0.0
    %vm1530 = vcmp.gt.f32.partialorder %v1039, 0.0
    %vm1531 = vcmp.gt.f32.partialorder %v1041, 0.0
    %vm1532 = vcmp.gt.f32.partialorder %v1296, 0.0
    %vm1533 = vcmp.gt.f32.partialorder %v1298, 0.0
    %vm1534 = vcmp.gt.f32.partialorder %v531, 0.0
    %vm1535 = vcmp.gt.f32.partialorder %v533, 0.0
    %vm1536 = vcmp.gt.f32.partialorder %v788, 0.0
    %vm1537 = vcmp.gt.f32.partialorder %v790, 0.0
    %vm1538 = vcmp.gt.f32.partialorder %v1045, 0.0
    %vm1539 = vcmp.gt.f32.partialorder %v1047, 0.0
    %vm1540 = vcmp.gt.f32.partialorder %v1302, 0.0
    %vm1541 = vcmp.gt.f32.partialorder %v1304, 0.0
    %vm1542 = vcmp.gt.f32.partialorder %v537, 0.0
    %vm1543 = vcmp.gt.f32.partialorder %v539, 0.0
    %vm1544 = vcmp.gt.f32.partialorder %v794, 0.0
    %vm1545 = vcmp.gt.f32.partialorder %v796, 0.0
    %vm1546 = vcmp.gt.f32.partialorder %v1051, 0.0
    %vm1547 = vcmp.gt.f32.partialorder %v1053, 0.0
    %vm1548 = vcmp.gt.f32.partialorder %v1308, 0.0
    %vm1549 = vcmp.gt.f32.partialorder %v1310, 0.0
    %vm1550 = vcmp.gt.f32.partialorder %v543, 0.0
    %vm1551 = vcmp.gt.f32.partialorder %v545, 0.0
    %vm1552 = vcmp.gt.f32.partialorder %v800, 0.0
    %vm1553 = vcmp.gt.f32.partialorder %v802, 0.0
    %vm1554 = vcmp.gt.f32.partialorder %v1057, 0.0
    %vm1555 = vcmp.gt.f32.partialorder %v1059, 0.0
    %vm1556 = vcmp.gt.f32.partialorder %v1314, 0.0
    %vm1557 = vcmp.gt.f32.partialorder %v1316, 0.0
    %vm1558 = vcmp.gt.f32.partialorder %v549, 0.0
    %vm1559 = vcmp.gt.f32.partialorder %v551, 0.0
    %vm1560 = vcmp.gt.f32.partialorder %v806, 0.0
    %vm1561 = vcmp.gt.f32.partialorder %v808, 0.0
    %vm1562 = vcmp.gt.f32.partialorder %v1063, 0.0
    %vm1563 = vcmp.gt.f32.partialorder %v1065, 0.0
    %vm1564 = vcmp.gt.f32.partialorder %v1320, 0.0
    %vm1565 = vcmp.gt.f32.partialorder %v1322, 0.0
    %vm1566 = vcmp.gt.f32.partialorder %v555, 0.0
    %vm1567 = vcmp.gt.f32.partialorder %v557, 0.0
    %vm1568 = vcmp.gt.f32.partialorder %v812, 0.0
    %vm1569 = vcmp.gt.f32.partialorder %v814, 0.0
    %vm1570 = vcmp.gt.f32.partialorder %v1069, 0.0
    %vm1571 = vcmp.gt.f32.partialorder %v1071, 0.0
    %vm1572 = vcmp.gt.f32.partialorder %v1326, 0.0
    %vm1573 = vcmp.gt.f32.partialorder %v1328, 0.0
    %vm1574 = vcmp.gt.f32.partialorder %v561, 0.0
    %vm1575 = vcmp.gt.f32.partialorder %v563, 0.0
    %vm1576 = vcmp.gt.f32.partialorder %v818, 0.0
    %vm1577 = vcmp.gt.f32.partialorder %v820, 0.0
    %vm1578 = vcmp.gt.f32.partialorder %v1075, 0.0
    %vm1579 = vcmp.gt.f32.partialorder %v1077, 0.0
    %vm1580 = vcmp.gt.f32.partialorder %v1332, 0.0
    %vm1581 = vcmp.gt.f32.partialorder %v1334, 0.0
    %vm1582 = vcmp.gt.f32.partialorder %v567, 0.0
    %vm1583 = vcmp.gt.f32.partialorder %v569, 0.0
    %vm1584 = vcmp.gt.f32.partialorder %v824, 0.0
    %vm1585 = vcmp.gt.f32.partialorder %v826, 0.0
    %vm1586 = vcmp.gt.f32.partialorder %v1081, 0.0
    %vm1587 = vcmp.gt.f32.partialorder %v1083, 0.0
    %vm1588 = vcmp.gt.f32.partialorder %v1338, 0.0
    %vm1589 = vcmp.gt.f32.partialorder %v1340, 0.0
    %vm1590 = vcmp.gt.f32.partialorder %v573, 0.0
    %vm1591 = vcmp.gt.f32.partialorder %v575, 0.0
    %vm1592 = vcmp.gt.f32.partialorder %v830, 0.0
    %vm1593 = vcmp.gt.f32.partialorder %v832, 0.0
    %vm1594 = vcmp.gt.f32.partialorder %v1087, 0.0
    %vm1595 = vcmp.gt.f32.partialorder %v1089, 0.0
    %vm1596 = vcmp.gt.f32.partialorder %v1344, 0.0
    %vm1597 = vcmp.gt.f32.partialorder %v1346, 0.0
    %vm1598 = vcmp.gt.f32.partialorder %v579, 0.0
    %vm1599 = vcmp.gt.f32.partialorder %v581, 0.0
    %vm1600 = vcmp.gt.f32.partialorder %v836, 0.0
    %vm1601 = vcmp.gt.f32.partialorder %v838, 0.0
    %vm1602 = vcmp.gt.f32.partialorder %v1093, 0.0
    %vm1603 = vcmp.gt.f32.partialorder %v1095, 0.0
    %vm1604 = vcmp.gt.f32.partialorder %v1350, 0.0
    %vm1605 = vcmp.gt.f32.partialorder %v1352, 0.0
    %vm1606 = vcmp.gt.f32.partialorder %v585, 0.0
    %vm1607 = vcmp.gt.f32.partialorder %v587, 0.0
    %vm1608 = vcmp.gt.f32.partialorder %v842, 0.0
    %vm1609 = vcmp.gt.f32.partialorder %v844, 0.0
    %vm1610 = vcmp.gt.f32.partialorder %v1099, 0.0
    %vm1611 = vcmp.gt.f32.partialorder %v1101, 0.0
    %vm1612 = vcmp.gt.f32.partialorder %v1356, 0.0
    %vm1613 = vcmp.gt.f32.partialorder %v1358, 0.0
    %vm1614 = vcmp.gt.f32.partialorder %v591, 0.0
    %vm1615 = vcmp.gt.f32.partialorder %v593, 0.0
    %vm1616 = vcmp.gt.f32.partialorder %v848, 0.0
    %vm1617 = vcmp.gt.f32.partialorder %v850, 0.0
    %vm1618 = vcmp.gt.f32.partialorder %v1105, 0.0
    %vm1619 = vcmp.gt.f32.partialorder %v1107, 0.0
    %vm1620 = vcmp.gt.f32.partialorder %v1362, 0.0
    %vm1621 = vcmp.gt.f32.partialorder %v1364, 0.0
    %v1622 = vmul.f32 %v405, 0.2
    %v1623 = vmul.f32 %v407, 0.2
    %v1624 = vmul.f32 %v662, 0.2
    %v1625 = vmul.f32 %v664, 0.2
    %v1626 = vmul.f32 %v919, 0.2
    %v1627 = vmul.f32 %v921, 0.2
    %v1628 = vmul.f32 %v1176, 0.2
    %v1629 = vmul.f32 %v1178, 0.2
    %v1630 = vmul.f32 %v411, 0.2
    %v1631 = vmul.f32 %v413, 0.2
    %v1632 = vmul.f32 %v668, 0.2
    %v1633 = vmul.f32 %v670, 0.2
    %v1634 = vmul.f32 %v925, 0.2
    %v1635 = vmul.f32 %v927, 0.2
    %v1636 = vmul.f32 %v1182, 0.2
    %v1637 = vmul.f32 %v1184, 0.2
    %v1638 = vmul.f32 %v417, 0.2
    %v1639 = vmul.f32 %v419, 0.2
    %v1640 = vmul.f32 %v674, 0.2
    %v1641 = vmul.f32 %v676, 0.2
    %v1642 = vmul.f32 %v931, 0.2
    %v1643 = vmul.f32 %v933, 0.2
    %v1644 = vmul.f32 %v1188, 0.2
    %v1645 = vmul.f32 %v1190, 0.2
    %v1646 = vmul.f32 %v423, 0.2
    %v1647 = vmul.f32 %v425, 0.2
    %v1648 = vmul.f32 %v680, 0.2
    %v1649 = vmul.f32 %v682, 0.2
    %v1650 = vmul.f32 %v937, 0.2
    %v1651 = vmul.f32 %v939, 0.2
    %v1652 = vmul.f32 %v1194, 0.2
    %v1653 = vmul.f32 %v1196, 0.2
    %v1654 = vmul.f32 %v429, 0.2
    %v1655 = vmul.f32 %v431, 0.2
    %v1656 = vmul.f32 %v686, 0.2
    %v1657 = vmul.f32 %v688, 0.2
    %v1658 = vmul.f32 %v943, 0.2
    %v1659 = vmul.f32 %v945, 0.2
    %v1660 = vmul.f32 %v1200, 0.2
    %v1661 = vmul.f32 %v1202, 0.2
    %v1662 = vmul.f32 %v435, 0.2
    %v1663 = vmul.f32 %v437, 0.2
    %v1664 = vmul.f32 %v692, 0.2
    %v1665 = vmul.f32 %v694, 0.2
    %v1666 = vmul.f32 %v949, 0.2
    %v1667 = vmul.f32 %v951, 0.2
    %v1668 = vmul.f32 %v1206, 0.2
    %v1669 = vmul.f32 %v1208, 0.2
    %v1670 = vmul.f32 %v441, 0.2
    %v1671 = vmul.f32 %v443, 0.2
    %v1672 = vmul.f32 %v698, 0.2
    %v1673 = vmul.f32 %v700, 0.2
    %v1674 = vmul.f32 %v955, 0.2
    %v1675 = vmul.f32 %v957, 0.2
    %v1676 = vmul.f32 %v1212, 0.2
    %v1677 = vmul.f32 %v1214, 0.2
    %v1678 = vmul.f32 %v447, 0.2
    %v1679 = vmul.f32 %v449, 0.2
    %v1680 = vmul.f32 %v704, 0.2
    %v1681 = vmul.f32 %v706, 0.2
    %v1682 = vmul.f32 %v961, 0.2
    %v1683 = vmul.f32 %v963, 0.2
    %v1684 = vmul.f32 %v1218, 0.2
    %v1685 = vmul.f32 %v1220, 0.2
    %v1686 = vmul.f32 %v453, 0.2
    %v1687 = vmul.f32 %v455, 0.2
    %v1688 = vmul.f32 %v710, 0.2
    %v1689 = vmul.f32 %v712, 0.2
    %v1690 = vmul.f32 %v967, 0.2
    %v1691 = vmul.f32 %v969, 0.2
    %v1692 = vmul.f32 %v1224, 0.2
    %v1693 = vmul.f32 %v1226, 0.2
    %v1694 = vmul.f32 %v459, 0.2
    %v1695 = vmul.f32 %v461, 0.2
    %v1696 = vmul.f32 %v716, 0.2
    %v1697 = vmul.f32 %v718, 0.2
    %v1698 = vmul.f32 %v973, 0.2
    %v1699 = vmul.f32 %v975, 0.2
    %v1700 = vmul.f32 %v1230, 0.2
    %v1701 = vmul.f32 %v1232, 0.2
    %v1702 = vmul.f32 %v465, 0.2
    %v1703 = vmul.f32 %v467, 0.2
    %v1704 = vmul.f32 %v722, 0.2
    %v1705 = vmul.f32 %v724, 0.2
    %v1706 = vmul.f32 %v979, 0.2
    %v1707 = vmul.f32 %v981, 0.2
    %v1708 = vmul.f32 %v1236, 0.2
    %v1709 = vmul.f32 %v1238, 0.2
    %v1710 = vmul.f32 %v471, 0.2
    %v1711 = vmul.f32 %v473, 0.2
    %v1712 = vmul.f32 %v728, 0.2
    %v1713 = vmul.f32 %v730, 0.2
    %v1714 = vmul.f32 %v985, 0.2
    %v1715 = vmul.f32 %v987, 0.2
    %v1716 = vmul.f32 %v1242, 0.2
    %v1717 = vmul.f32 %v1244, 0.2
    %v1718 = vmul.f32 %v477, 0.2
    %v1719 = vmul.f32 %v479, 0.2
    %v1720 = vmul.f32 %v734, 0.2
    %v1721 = vmul.f32 %v736, 0.2
    %v1722 = vmul.f32 %v991, 0.2
    %v1723 = vmul.f32 %v993, 0.2
    %v1724 = vmul.f32 %v1248, 0.2
    %v1725 = vmul.f32 %v1250, 0.2
    %v1726 = vmul.f32 %v483, 0.2
    %v1727 = vmul.f32 %v485, 0.2
    %v1728 = vmul.f32 %v740, 0.2
    %v1729 = vmul.f32 %v742, 0.2
    %v1730 = vmul.f32 %v997, 0.2
    %v1731 = vmul.f32 %v999, 0.2
    %v1732 = vmul.f32 %v1254, 0.2
    %v1733 = vmul.f32 %v1256, 0.2
    %v1734 = vmul.f32 %v489, 0.2
    %v1735 = vmul.f32 %v491, 0.2
    %v1736 = vmul.f32 %v746, 0.2
    %v1737 = vmul.f32 %v748, 0.2
    %v1738 = vmul.f32 %v1003, 0.2
    %v1739 = vmul.f32 %v1005, 0.2
    %v1740 = vmul.f32 %v1260, 0.2
    %v1741 = vmul.f32 %v1262, 0.2
    %v1742 = vmul.f32 %v495, 0.2
    %v1743 = vmul.f32 %v497, 0.2
    %v1744 = vmul.f32 %v752, 0.2
    %v1745 = vmul.f32 %v754, 0.2
    %v1746 = vmul.f32 %v1009, 0.2
    %v1747 = vmul.f32 %v1011, 0.2
    %v1748 = vmul.f32 %v1266, 0.2
    %v1749 = vmul.f32 %v1268, 0.2
    %v1750 = vmul.f32 %v501, 0.2
    %v1751 = vmul.f32 %v503, 0.2
    %v1752 = vmul.f32 %v758, 0.2
    %v1753 = vmul.f32 %v760, 0.2
    %v1754 = vmul.f32 %v1015, 0.2
    %v1755 = vmul.f32 %v1017, 0.2
    %v1756 = vmul.f32 %v1272, 0.2
    %v1757 = vmul.f32 %v1274, 0.2
    %v1758 = vmul.f32 %v507, 0.2
    %v1759 = vmul.f32 %v509, 0.2
    %v1760 = vmul.f32 %v764, 0.2
    %v1761 = vmul.f32 %v766, 0.2
    %v1762 = vmul.f32 %v1021, 0.2
    %v1763 = vmul.f32 %v1023, 0.2
    %v1764 = vmul.f32 %v1278, 0.2
    %v1765 = vmul.f32 %v1280, 0.2
    %v1766 = vmul.f32 %v513, 0.2
    %v1767 = vmul.f32 %v515, 0.2
    %v1768 = vmul.f32 %v770, 0.2
    %v1769 = vmul.f32 %v772, 0.2
    %v1770 = vmul.f32 %v1027, 0.2
    %v1771 = vmul.f32 %v1029, 0.2
    %v1772 = vmul.f32 %v1284, 0.2
    %v1773 = vmul.f32 %v1286, 0.2
    %v1774 = vmul.f32 %v519, 0.2
    %v1775 = vmul.f32 %v521, 0.2
    %v1776 = vmul.f32 %v776, 0.2
    %v1777 = vmul.f32 %v778, 0.2
    %v1778 = vmul.f32 %v1033, 0.2
    %v1779 = vmul.f32 %v1035, 0.2
    %v1780 = vmul.f32 %v1290, 0.2
    %v1781 = vmul.f32 %v1292, 0.2
    %v1782 = vmul.f32 %v525, 0.2
    %v1783 = vmul.f32 %v527, 0.2
    %v1784 = vmul.f32 %v782, 0.2
    %v1785 = vmul.f32 %v784, 0.2
    %v1786 = vmul.f32 %v1039, 0.2
    %v1787 = vmul.f32 %v1041, 0.2
    %v1788 = vmul.f32 %v1296, 0.2
    %v1789 = vmul.f32 %v1298, 0.2
    %v1790 = vmul.f32 %v531, 0.2
    %v1791 = vmul.f32 %v533, 0.2
    %v1792 = vmul.f32 %v788, 0.2
    %v1793 = vmul.f32 %v790, 0.2
    %v1794 = vmul.f32 %v1045, 0.2
    %v1795 = vmul.f32 %v1047, 0.2
    %v1796 = vmul.f32 %v1302, 0.2
    %v1797 = vmul.f32 %v1304, 0.2
    %v1798 = vmul.f32 %v537, 0.2
    %v1799 = vmul.f32 %v539, 0.2
    %v1800 = vmul.f32 %v794, 0.2
    %v1801 = vmul.f32 %v796, 0.2
    %v1802 = vmul.f32 %v1051, 0.2
    %v1803 = vmul.f32 %v1053, 0.2
    %v1804 = vmul.f32 %v1308, 0.2
    %v1805 = vmul.f32 %v1310, 0.2
    %v1806 = vmul.f32 %v543, 0.2
    %v1807 = vmul.f32 %v545, 0.2
    %v1808 = vmul.f32 %v800, 0.2
    %v1809 = vmul.f32 %v802, 0.2
    %v1810 = vmul.f32 %v1057, 0.2
    %v1811 = vmul.f32 %v1059, 0.2
    %v1812 = vmul.f32 %v1314, 0.2
    %v1813 = vmul.f32 %v1316, 0.2
    %v1814 = vmul.f32 %v549, 0.2
    %v1815 = vmul.f32 %v551, 0.2
    %v1816 = vmul.f32 %v806, 0.2
    %v1817 = vmul.f32 %v808, 0.2
    %v1818 = vmul.f32 %v1063, 0.2
    %v1819 = vmul.f32 %v1065, 0.2
    %v1820 = vmul.f32 %v1320, 0.2
    %v1821 = vmul.f32 %v1322, 0.2
    %v1822 = vmul.f32 %v555, 0.2
    %v1823 = vmul.f32 %v557, 0.2
    %v1824 = vmul.f32 %v812, 0.2
    %v1825 = vmul.f32 %v814, 0.2
    %v1826 = vmul.f32 %v1069, 0.2
    %v1827 = vmul.f32 %v1071, 0.2
    %v1828 = vmul.f32 %v1326, 0.2
    %v1829 = vmul.f32 %v1328, 0.2
    %v1830 = vmul.f32 %v561, 0.2
    %v1831 = vmul.f32 %v563, 0.2
    %v1832 = vmul.f32 %v818, 0.2
    %v1833 = vmul.f32 %v820, 0.2
    %v1834 = vmul.f32 %v1075, 0.2
    %v1835 = vmul.f32 %v1077, 0.2
    %v1836 = vmul.f32 %v1332, 0.2
    %v1837 = vmul.f32 %v1334, 0.2
    %v1838 = vmul.f32 %v567, 0.2
    %v1839 = vmul.f32 %v569, 0.2
    %v1840 = vmul.f32 %v824, 0.2
    %v1841 = vmul.f32 %v826, 0.2
    %v1842 = vmul.f32 %v1081, 0.2
    %v1843 = vmul.f32 %v1083, 0.2
    %v1844 = vmul.f32 %v1338, 0.2
    %v1845 = vmul.f32 %v1340, 0.2
    %v1846 = vmul.f32 %v573, 0.2
    %v1847 = vmul.f32 %v575, 0.2
    %v1848 = vmul.f32 %v830, 0.2
    %v1849 = vmul.f32 %v832, 0.2
    %v1850 = vmul.f32 %v1087, 0.2
    %v1851 = vmul.f32 %v1089, 0.2
    %v1852 = vmul.f32 %v1344, 0.2
    %v1853 = vmul.f32 %v1346, 0.2
    %v1854 = vmul.f32 %v579, 0.2
    %v1855 = vmul.f32 %v581, 0.2
    %v1856 = vmul.f32 %v836, 0.2
    %v1857 = vmul.f32 %v838, 0.2
    %v1858 = vmul.f32 %v1093, 0.2
    %v1859 = vmul.f32 %v1095, 0.2
    %v1860 = vmul.f32 %v1350, 0.2
    %v1861 = vmul.f32 %v1352, 0.2
    %v1862 = vmul.f32 %v585, 0.2
    %v1863 = vmul.f32 %v587, 0.2
    %v1864 = vmul.f32 %v842, 0.2
    %v1865 = vmul.f32 %v844, 0.2
    %v1866 = vmul.f32 %v1099, 0.2
    %v1867 = vmul.f32 %v1101, 0.2
    %v1868 = vmul.f32 %v1356, 0.2
    %v1869 = vmul.f32 %v1358, 0.2
    %v1870 = vmul.f32 %v591, 0.2
    %v1871 = vmul.f32 %v593, 0.2
    %v1872 = vmul.f32 %v848, 0.2
    %v1873 = vmul.f32 %v850, 0.2
    %v1874 = vmul.f32 %v1105, 0.2
    %v1875 = vmul.f32 %v1107, 0.2
    %v1876 = vmul.f32 %v1362, 0.2
    %v1877 = vmul.f32 %v1364, 0.2
    %v1878 = vsel %vm1366, %v405, %v1622
    %v1879 = vsel %vm1367, %v407, %v1623
    %v1880 = vsel %vm1368, %v662, %v1624
    %v1881 = vsel %vm1369, %v664, %v1625
    %v1882 = vsel %vm1370, %v919, %v1626
    %v1883 = vsel %vm1371, %v921, %v1627
    %v1884 = vsel %vm1372, %v1176, %v1628
    %v1885 = vsel %vm1373, %v1178, %v1629
    %v1886 = vsel %vm1374, %v411, %v1630
    %v1887 = vsel %vm1375, %v413, %v1631
    %v1888 = vsel %vm1376, %v668, %v1632
    %v1889 = vsel %vm1377, %v670, %v1633
    %v1890 = vsel %vm1378, %v925, %v1634
    %v1891 = vsel %vm1379, %v927, %v1635
    %v1892 = vsel %vm1380, %v1182, %v1636
    %v1893 = vsel %vm1381, %v1184, %v1637
    %v1894 = vsel %vm1382, %v417, %v1638
    %v1895 = vsel %vm1383, %v419, %v1639
    %v1896 = vsel %vm1384, %v674, %v1640
    %v1897 = vsel %vm1385, %v676, %v1641
    %v1898 = vsel %vm1386, %v931, %v1642
    %v1899 = vsel %vm1387, %v933, %v1643
    %v1900 = vsel %vm1388, %v1188, %v1644
    %v1901 = vsel %vm1389, %v1190, %v1645
    %v1902 = vsel %vm1390, %v423, %v1646
    %v1903 = vsel %vm1391, %v425, %v1647
    %v1904 = vsel %vm1392, %v680, %v1648
    %v1905 = vsel %vm1393, %v682, %v1649
    %v1906 = vsel %vm1394, %v937, %v1650
    %v1907 = vsel %vm1395, %v939, %v1651
    %v1908 = vsel %vm1396, %v1194, %v1652
    %v1909 = vsel %vm1397, %v1196, %v1653
    %v1910 = vsel %vm1398, %v429, %v1654
    %v1911 = vsel %vm1399, %v431, %v1655
    %v1912 = vsel %vm1400, %v686, %v1656
    %v1913 = vsel %vm1401, %v688, %v1657
    %v1914 = vsel %vm1402, %v943, %v1658
    %v1915 = vsel %vm1403, %v945, %v1659
    %v1916 = vsel %vm1404, %v1200, %v1660
    %v1917 = vsel %vm1405, %v1202, %v1661
    %v1918 = vsel %vm1406, %v435, %v1662
    %v1919 = vsel %vm1407, %v437, %v1663
    %v1920 = vsel %vm1408, %v692, %v1664
    %v1921 = vsel %vm1409, %v694, %v1665
    %v1922 = vsel %vm1410, %v949, %v1666
    %v1923 = vsel %vm1411, %v951, %v1667
    %v1924 = vsel %vm1412, %v1206, %v1668
    %v1925 = vsel %vm1413, %v1208, %v1669
    %v1926 = vsel %vm1414, %v441, %v1670
    %v1927 = vsel %vm1415, %v443, %v1671
    %v1928 = vsel %vm1416, %v698, %v1672
    %v1929 = vsel %vm1417, %v700, %v1673
    %v1930 = vsel %vm1418, %v955, %v1674
    %v1931 = vsel %vm1419, %v957, %v1675
    %v1932 = vsel %vm1420, %v1212, %v1676
    %v1933 = vsel %vm1421, %v1214, %v1677
    %v1934 = vsel %vm1422, %v447, %v1678
    %v1935 = vsel %vm1423, %v449, %v1679
    %v1936 = vsel %vm1424, %v704, %v1680
    %v1937 = vsel %vm1425, %v706, %v1681
    %v1938 = vsel %vm1426, %v961, %v1682
    %v1939 = vsel %vm1427, %v963, %v1683
    %v1940 = vsel %vm1428, %v1218, %v1684
    %v1941 = vsel %vm1429, %v1220, %v1685
    %v1942 = vsel %vm1430, %v453, %v1686
    %v1943 = vsel %vm1431, %v455, %v1687
    %v1944 = vsel %vm1432, %v710, %v1688
    %v1945 = vsel %vm1433, %v712, %v1689
    %v1946 = vsel %vm1434, %v967, %v1690
    %v1947 = vsel %vm1435, %v969, %v1691
    %v1948 = vsel %vm1436, %v1224, %v1692
    %v1949 = vsel %vm1437, %v1226, %v1693
    %v1950 = vsel %vm1438, %v459, %v1694
    %v1951 = vsel %vm1439, %v461, %v1695
    %v1952 = vsel %vm1440, %v716, %v1696
    %v1953 = vsel %vm1441, %v718, %v1697
    %v1954 = vsel %vm1442, %v973, %v1698
    %v1955 = vsel %vm1443, %v975, %v1699
    %v1956 = vsel %vm1444, %v1230, %v1700
    %v1957 = vsel %vm1445, %v1232, %v1701
    %v1958 = vsel %vm1446, %v465, %v1702
    %v1959 = vsel %vm1447, %v467, %v1703
    %v1960 = vsel %vm1448, %v722, %v1704
    %v1961 = vsel %vm1449, %v724, %v1705
    %v1962 = vsel %vm1450, %v979, %v1706
    %v1963 = vsel %vm1451, %v981, %v1707
    %v1964 = vsel %vm1452, %v1236, %v1708
    %v1965 = vsel %vm1453, %v1238, %v1709
    %v1966 = vsel %vm1454, %v471, %v1710
    %v1967 = vsel %vm1455, %v473, %v1711
    %v1968 = vsel %vm1456, %v728, %v1712
    %v1969 = vsel %vm1457, %v730, %v1713
    %v1970 = vsel %vm1458, %v985, %v1714
    %v1971 = vsel %vm1459, %v987, %v1715
    %v1972 = vsel %vm1460, %v1242, %v1716
    %v1973 = vsel %vm1461, %v1244, %v1717
    %v1974 = vsel %vm1462, %v477, %v1718
    %v1975 = vsel %vm1463, %v479, %v1719
    %v1976 = vsel %vm1464, %v734, %v1720
    %v1977 = vsel %vm1465, %v736, %v1721
    %v1978 = vsel %vm1466, %v991, %v1722
    %v1979 = vsel %vm1467, %v993, %v1723
    %v1980 = vsel %vm1468, %v1248, %v1724
    %v1981 = vsel %vm1469, %v1250, %v1725
    %v1982 = vsel %vm1470, %v483, %v1726
    %v1983 = vsel %vm1471, %v485, %v1727
    %v1984 = vsel %vm1472, %v740, %v1728
    %v1985 = vsel %vm1473, %v742, %v1729
    %v1986 = vsel %vm1474, %v997, %v1730
    %v1987 = vsel %vm1475, %v999, %v1731
    %v1988 = vsel %vm1476, %v1254, %v1732
    %v1989 = vsel %vm1477, %v1256, %v1733
    %v1990 = vsel %vm1478, %v489, %v1734
    %v1991 = vsel %vm1479, %v491, %v1735
    %v1992 = vsel %vm1480, %v746, %v1736
    %v1993 = vsel %vm1481, %v748, %v1737
    %v1994 = vsel %vm1482, %v1003, %v1738
    %v1995 = vsel %vm1483, %v1005, %v1739
    %v1996 = vsel %vm1484, %v1260, %v1740
    %v1997 = vsel %vm1485, %v1262, %v1741
    %v1998 = vsel %vm1486, %v495, %v1742
    %v1999 = vsel %vm1487, %v497, %v1743
    %v2000 = vsel %vm1488, %v752, %v1744
    %v2001 = vsel %vm1489, %v754, %v1745
    %v2002 = vsel %vm1490, %v1009, %v1746
    %v2003 = vsel %vm1491, %v1011, %v1747
    %v2004 = vsel %vm1492, %v1266, %v1748
    %v2005 = vsel %vm1493, %v1268, %v1749
    %v2006 = vsel %vm1494, %v501, %v1750
    %v2007 = vsel %vm1495, %v503, %v1751
    %v2008 = vsel %vm1496, %v758, %v1752
    %v2009 = vsel %vm1497, %v760, %v1753
    %v2010 = vsel %vm1498, %v1015, %v1754
    %v2011 = vsel %vm1499, %v1017, %v1755
    %v2012 = vsel %vm1500, %v1272, %v1756
    %v2013 = vsel %vm1501, %v1274, %v1757
    %v2014 = vsel %vm1502, %v507, %v1758
    %v2015 = vsel %vm1503, %v509, %v1759
    %v2016 = vsel %vm1504, %v764, %v1760
    %v2017 = vsel %vm1505, %v766, %v1761
    %v2018 = vsel %vm1506, %v1021, %v1762
    %v2019 = vsel %vm1507, %v1023, %v1763
    %v2020 = vsel %vm1508, %v1278, %v1764
    %v2021 = vsel %vm1509, %v1280, %v1765
    %v2022 = vsel %vm1510, %v513, %v1766
    %v2023 = vsel %vm1511, %v515, %v1767
    %v2024 = vsel %vm1512, %v770, %v1768
    %v2025 = vsel %vm1513, %v772, %v1769
    %v2026 = vsel %vm1514, %v1027, %v1770
    %v2027 = vsel %vm1515, %v1029, %v1771
    %v2028 = vsel %vm1516, %v1284, %v1772
    %v2029 = vsel %vm1517, %v1286, %v1773
    %v2030 = vsel %vm1518, %v519, %v1774
    %v2031 = vsel %vm1519, %v521, %v1775
    %v2032 = vsel %vm1520, %v776, %v1776
    %v2033 = vsel %vm1521, %v778, %v1777
    %v2034 = vsel %vm1522, %v1033, %v1778
    %v2035 = vsel %vm1523, %v1035, %v1779
    %v2036 = vsel %vm1524, %v1290, %v1780
    %v2037 = vsel %vm1525, %v1292, %v1781
    %v2038 = vsel %vm1526, %v525, %v1782
    %v2039 = vsel %vm1527, %v527, %v1783
    %v2040 = vsel %vm1528, %v782, %v1784
    %v2041 = vsel %vm1529, %v784, %v1785
    %v2042 = vsel %vm1530, %v1039, %v1786
    %v2043 = vsel %vm1531, %v1041, %v1787
    %v2044 = vsel %vm1532, %v1296, %v1788
    %v2045 = vsel %vm1533, %v1298, %v1789
    %v2046 = vsel %vm1534, %v531, %v1790
    %v2047 = vsel %vm1535, %v533, %v1791
    %v2048 = vsel %vm1536, %v788, %v1792
    %v2049 = vsel %vm1537, %v790, %v1793
    %v2050 = vsel %vm1538, %v1045, %v1794
    %v2051 = vsel %vm1539, %v1047, %v1795
    %v2052 = vsel %vm1540, %v1302, %v1796
    %v2053 = vsel %vm1541, %v1304, %v1797
    %v2054 = vsel %vm1542, %v537, %v1798
    %v2055 = vsel %vm1543, %v539, %v1799
    %v2056 = vsel %vm1544, %v794, %v1800
    %v2057 = vsel %vm1545, %v796, %v1801
    %v2058 = vsel %vm1546, %v1051, %v1802
    %v2059 = vsel %vm1547, %v1053, %v1803
    %v2060 = vsel %vm1548, %v1308, %v1804
    %v2061 = vsel %vm1549, %v1310, %v1805
    %v2062 = vsel %vm1550, %v543, %v1806
    %v2063 = vsel %vm1551, %v545, %v1807
    %v2064 = vsel %vm1552, %v800, %v1808
    %v2065 = vsel %vm1553, %v802, %v1809
    %v2066 = vsel %vm1554, %v1057, %v1810
    %v2067 = vsel %vm1555, %v1059, %v1811
    %v2068 = vsel %vm1556, %v1314, %v1812
    %v2069 = vsel %vm1557, %v1316, %v1813
    %v2070 = vsel %vm1558, %v549, %v1814
    %v2071 = vsel %vm1559, %v551, %v1815
    %v2072 = vsel %vm1560, %v806, %v1816
    %v2073 = vsel %vm1561, %v808, %v1817
    %v2074 = vsel %vm1562, %v1063, %v1818
    %v2075 = vsel %vm1563, %v1065, %v1819
    %v2076 = vsel %vm1564, %v1320, %v1820
    %v2077 = vsel %vm1565, %v1322, %v1821
    %v2078 = vsel %vm1566, %v555, %v1822
    %v2079 = vsel %vm1567, %v557, %v1823
    %v2080 = vsel %vm1568, %v812, %v1824
    %v2081 = vsel %vm1569, %v814, %v1825
    %v2082 = vsel %vm1570, %v1069, %v1826
    %v2083 = vsel %vm1571, %v1071, %v1827
    %v2084 = vsel %vm1572, %v1326, %v1828
    %v2085 = vsel %vm1573, %v1328, %v1829
    %v2086 = vsel %vm1574, %v561, %v1830
    %v2087 = vsel %vm1575, %v563, %v1831
    %v2088 = vsel %vm1576, %v818, %v1832
    %v2089 = vsel %vm1577, %v820, %v1833
    %v2090 = vsel %vm1578, %v1075, %v1834
    %v2091 = vsel %vm1579, %v1077, %v1835
    %v2092 = vsel %vm1580, %v1332, %v1836
    %v2093 = vsel %vm1581, %v1334, %v1837
    %v2094 = vsel %vm1582, %v567, %v1838
    %v2095 = vsel %vm1583, %v569, %v1839
    %v2096 = vsel %vm1584, %v824, %v1840
    %v2097 = vsel %vm1585, %v826, %v1841
    %v2098 = vsel %vm1586, %v1081, %v1842
    %v2099 = vsel %vm1587, %v1083, %v1843
    %v2100 = vsel %vm1588, %v1338, %v1844
    %v2101 = vsel %vm1589, %v1340, %v1845
    %v2102 = vsel %vm1590, %v573, %v1846
    %v2103 = vsel %vm1591, %v575, %v1847
    %v2104 = vsel %vm1592, %v830, %v1848
    %v2105 = vsel %vm1593, %v832, %v1849
    %v2106 = vsel %vm1594, %v1087, %v1850
    %v2107 = vsel %vm1595, %v1089, %v1851
    %v2108 = vsel %vm1596, %v1344, %v1852
    %v2109 = vsel %vm1597, %v1346, %v1853
    %v2110 = vsel %vm1598, %v579, %v1854
    %v2111 = vsel %vm1599, %v581, %v1855
    %v2112 = vsel %vm1600, %v836, %v1856
    %v2113 = vsel %vm1601, %v838, %v1857
    %v2114 = vsel %vm1602, %v1093, %v1858
    %v2115 = vsel %vm1603, %v1095, %v1859
    %v2116 = vsel %vm1604, %v1350, %v1860
    %v2117 = vsel %vm1605, %v1352, %v1861
    %v2118 = vsel %vm1606, %v585, %v1862
    %v2119 = vsel %vm1607, %v587, %v1863
    %v2120 = vsel %vm1608, %v842, %v1864
    %v2121 = vsel %vm1609, %v844, %v1865
    %v2122 = vsel %vm1610, %v1099, %v1866
    %v2123 = vsel %vm1611, %v1101, %v1867
    %v2124 = vsel %vm1612, %v1356, %v1868
    %v2125 = vsel %vm1613, %v1358, %v1869
    %v2126 = vsel %vm1614, %v591, %v1870
    %v2127 = vsel %vm1615, %v593, %v1871
    %v2128 = vsel %vm1616, %v848, %v1872
    %v2129 = vsel %vm1617, %v850, %v1873
    %v2130 = vsel %vm1618, %v1105, %v1874
    %v2131 = vsel %vm1619, %v1107, %v1875
    %v2132 = vsel %vm1620, %v1362, %v1876
    %v2133 = vsel %vm1621, %v1364, %v1877
    %v2134 = vld [vmem:[%s1] sm:$0xff]
    %v2135 = vld [vmem:[%s1 + $0x8] sm:$0xff]
    %v2136 = vld [vmem:[%s1 + $0x10] sm:$0xff]
    %v2137 = vld [vmem:[%s1 + $0x18] sm:$0xff]
    %v2138 = vld [vmem:[%s1 + $0x20] sm:$0xff]
    %v2139 = vld [vmem:[%s1 + $0x28] sm:$0xff]
    %v2140 = vld [vmem:[%s1 + $0x30] sm:$0xff]
    %v2141 = vld [vmem:[%s1 + $0x38] sm:$0xff]
    %v2142 = vld [vmem:[%s1 + $0x40] sm:$0xff]
    %v2143 = vld [vmem:[%s1 + $0x48] sm:$0xff]
    %v2144 = vld [vmem:[%s1 + $0x50] sm:$0xff]
    %v2145 = vld [vmem:[%s1 + $0x58] sm:$0xff]
    %v2146 = vld [vmem:[%s1 + $0x60] sm:$0xff]
    %v2147 = vld [vmem:[%s1 + $0x68] sm:$0xff]
    %v2148 = vld [vmem:[%s1 + $0x70] sm:$0xff]
    %v2149 = vld [vmem:[%s1 + $0x78] sm:$0xff]
    %v2150 = vld [vmem:[%s1 + $0x80] sm:$0xff]
    %v2151 = vld [vmem:[%s1 + $0x88] sm:$0xff]
    %v2152 = vld [vmem:[%s1 + $0x90] sm:$0xff]
    %v2153 = vld [vmem:[%s1 + $0x98] sm:$0xff]
    %v2154 = vld [vmem:[%s1 + $0xa0] sm:$0xff]
    %v2155 = vld [vmem:[%s1 + $0xa8] sm:$0xff]
    %v2156 = vld [vmem:[%s1 + $0xb0] sm:$0xff]
    %v2157 = vld [vmem:[%s1 + $0xb8] sm:$0xff]
    %v2158 = vld [vmem:[%s1 + $0xc0] sm:$0xff]
    %v2159 = vld [vmem:[%s1 + $0xc8] sm:$0xff]
    %v2160 = vld [vmem:[%s1 + $0xd0] sm:$0xff]
    %v2161 = vld [vmem:[%s1 + $0xd8] sm:$0xff]
    %v2162 = vld [vmem:[%s1 + $0xe0] sm:$0xff]
    %v2163 = vld [vmem:[%s1 + $0xe8] sm:$0xff]
    %v2164 = vld [vmem:[%s1 + $0xf0] sm:$0xff]
    %v2165 = vld [vmem:[%s1 + $0xf8] sm:$0xff]
    %v2166 = vld [vmem:[%s1 + $0x100] sm:$0xff]
    %v2167 = vld [vmem:[%s1 + $0x108] sm:$0xff]
    %v2168 = vld [vmem:[%s1 + $0x110] sm:$0xff]
    %v2169 = vld [vmem:[%s1 + $0x118] sm:$0xff]
    %v2170 = vld [vmem:[%s1 + $0x120] sm:$0xff]
    %v2171 = vld [vmem:[%s1 + $0x128] sm:$0xff]
    %v2172 = vld [vmem:[%s1 + $0x130] sm:$0xff]
    %v2173 = vld [vmem:[%s1 + $0x138] sm:$0xff]
    %v2174 = vld [vmem:[%s1 + $0x140] sm:$0xff]
    %v2175 = vld [vmem:[%s1 + $0x148] sm:$0xff]
    %v2176 = vld [vmem:[%s1 + $0x150] sm:$0xff]
    %v2177 = vld [vmem:[%s1 + $0x158] sm:$0xff]
    %v2178 = vld [vmem:[%s1 + $0x160] sm:$0xff]
    %v2179 = vld [vmem:[%s1 + $0x168] sm:$0xff]
    %v2180 = vld [vmem:[%s1 + $0x170] sm:$0xff]
    %v2181 = vld [vmem:[%s1 + $0x178] sm:$0xff]
    %v2182 = vld [vmem:[%s1 + $0x180] sm:$0xff]
    %v2183 = vld [vmem:[%s1 + $0x188] sm:$0xff]
    %v2184 = vld [vmem:[%s1 + $0x190] sm:$0xff]
    %v2185 = vld [vmem:[%s1 + $0x198] sm:$0xff]
    %v2186 = vld [vmem:[%s1 + $0x1a0] sm:$0xff]
    %v2187 = vld [vmem:[%s1 + $0x1a8] sm:$0xff]
    %v2188 = vld [vmem:[%s1 + $0x1b0] sm:$0xff]
    %v2189 = vld [vmem:[%s1 + $0x1b8] sm:$0xff]
    %v2190 = vld [vmem:[%s1 + $0x1c0] sm:$0xff]
    %v2191 = vld [vmem:[%s1 + $0x1c8] sm:$0xff]
    %v2192 = vld [vmem:[%s1 + $0x1d0] sm:$0xff]
    %v2193 = vld [vmem:[%s1 + $0x1d8] sm:$0xff]
    %v2194 = vld [vmem:[%s1 + $0x1e0] sm:$0xff]
    %v2195 = vld [vmem:[%s1 + $0x1e8] sm:$0xff]
    %v2196 = vld [vmem:[%s1 + $0x1f0] sm:$0xff]
    %v2197 = vld [vmem:[%s1 + $0x1f8] sm:$0xff]
    %v2198 = vld [vmem:[%s1 + $0x200] sm:$0xff]
    %v2199 = vld [vmem:[%s1 + $0x208] sm:$0xff]
    %v2200 = vld [vmem:[%s1 + $0x210] sm:$0xff]
    %v2201 = vld [vmem:[%s1 + $0x218] sm:$0xff]
    %v2202 = vld [vmem:[%s1 + $0x220] sm:$0xff]
    %v2203 = vld [vmem:[%s1 + $0x228] sm:$0xff]
    %v2204 = vld [vmem:[%s1 + $0x230] sm:$0xff]
    %v2205 = vld [vmem:[%s1 + $0x238] sm:$0xff]
    %v2206 = vld [vmem:[%s1 + $0x240] sm:$0xff]
    %v2207 = vld [vmem:[%s1 + $0x248] sm:$0xff]
    %v2208 = vld [vmem:[%s1 + $0x250] sm:$0xff]
    %v2209 = vld [vmem:[%s1 + $0x258] sm:$0xff]
    %v2210 = vld [vmem:[%s1 + $0x260] sm:$0xff]
    %v2211 = vld [vmem:[%s1 + $0x268] sm:$0xff]
    %v2212 = vld [vmem:[%s1 + $0x270] sm:$0xff]
    %v2213 = vld [vmem:[%s1 + $0x278] sm:$0xff]
    %v2214 = vld [vmem:[%s1 + $0x280] sm:$0xff]
    %v2215 = vld [vmem:[%s1 + $0x288] sm:$0xff]
    %v2216 = vld [vmem:[%s1 + $0x290] sm:$0xff]
    %v2217 = vld [vmem:[%s1 + $0x298] sm:$0xff]
    %v2218 = vld [vmem:[%s1 + $0x2a0] sm:$0xff]
    %v2219 = vld [vmem:[%s1 + $0x2a8] sm:$0xff]
    %v2220 = vld [vmem:[%s1 + $0x2b0] sm:$0xff]
    %v2221 = vld [vmem:[%s1 + $0x2b8] sm:$0xff]
    %v2222 = vld [vmem:[%s1 + $0x2c0] sm:$0xff]
    %v2223 = vld [vmem:[%s1 + $0x2c8] sm:$0xff]
    %v2224 = vld [vmem:[%s1 + $0x2d0] sm:$0xff]
    %v2225 = vld [vmem:[%s1 + $0x2d8] sm:$0xff]
    %v2226 = vld [vmem:[%s1 + $0x2e0] sm:$0xff]
    %v2227 = vld [vmem:[%s1 + $0x2e8] sm:$0xff]
    %v2228 = vld [vmem:[%s1 + $0x2f0] sm:$0xff]
    %v2229 = vld [vmem:[%s1 + $0x2f8] sm:$0xff]
    %v2230 = vld [vmem:[%s1 + $0x300] sm:$0xff]
    %v2231 = vld [vmem:[%s1 + $0x308] sm:$0xff]
    %v2232 = vld [vmem:[%s1 + $0x310] sm:$0xff]
    %v2233 = vld [vmem:[%s1 + $0x318] sm:$0xff]
    %v2234 = vld [vmem:[%s1 + $0x320] sm:$0xff]
    %v2235 = vld [vmem:[%s1 + $0x328] sm:$0xff]
    %v2236 = vld [vmem:[%s1 + $0x330] sm:$0xff]
    %v2237 = vld [vmem:[%s1 + $0x338] sm:$0xff]
    %v2238 = vld [vmem:[%s1 + $0x340] sm:$0xff]
    %v2239 = vld [vmem:[%s1 + $0x348] sm:$0xff]
    %v2240 = vld [vmem:[%s1 + $0x350] sm:$0xff]
    %v2241 = vld [vmem:[%s1 + $0x358] sm:$0xff]
    %v2242 = vld [vmem:[%s1 + $0x360] sm:$0xff]
    %v2243 = vld [vmem:[%s1 + $0x368] sm:$0xff]
    %v2244 = vld [vmem:[%s1 + $0x370] sm:$0xff]
    %v2245 = vld [vmem:[%s1 + $0x378] sm:$0xff]
    %v2246 = vld [vmem:[%s1 + $0x380] sm:$0xff]
    %v2247 = vld [vmem:[%s1 + $0x388] sm:$0xff]
    %v2248 = vld [vmem:[%s1 + $0x390] sm:$0xff]
    %v2249 = vld [vmem:[%s1 + $0x398] sm:$0xff]
    %v2250 = vld [vmem:[%s1 + $0x3a0] sm:$0xff]
    %v2251 = vld [vmem:[%s1 + $0x3a8] sm:$0xff]
    %v2252 = vld [vmem:[%s1 + $0x3b0] sm:$0xff]
    %v2253 = vld [vmem:[%s1 + $0x3b8] sm:$0xff]
    %v2254 = vld [vmem:[%s1 + $0x3c0] sm:$0xff]
    %v2255 = vld [vmem:[%s1 + $0x3c8] sm:$0xff]
    %v2256 = vld [vmem:[%s1 + $0x3d0] sm:$0xff]
    %v2257 = vld [vmem:[%s1 + $0x3d8] sm:$0xff]
    %v2258 = vld [vmem:[%s1 + $0x3e0] sm:$0xff]
    %v2259 = vld [vmem:[%s1 + $0x3e8] sm:$0xff]
    %v2260 = vld [vmem:[%s1 + $0x3f0] sm:$0xff]
    %v2261 = vld [vmem:[%s1 + $0x3f8] sm:$0xff]
    %v2262 = vld [vmem:[%s1 + $0x400] sm:$0xff]
    %v2263 = vld [vmem:[%s1 + $0x408] sm:$0xff]
    %v2264 = vld [vmem:[%s1 + $0x410] sm:$0xff]
    %v2265 = vld [vmem:[%s1 + $0x418] sm:$0xff]
    %v2266 = vld [vmem:[%s1 + $0x420] sm:$0xff]
    %v2267 = vld [vmem:[%s1 + $0x428] sm:$0xff]
    %v2268 = vld [vmem:[%s1 + $0x430] sm:$0xff]
    %v2269 = vld [vmem:[%s1 + $0x438] sm:$0xff]
    %v2270 = vld [vmem:[%s1 + $0x440] sm:$0xff]
    %v2271 = vld [vmem:[%s1 + $0x448] sm:$0xff]
    %v2272 = vld [vmem:[%s1 + $0x450] sm:$0xff]
    %v2273 = vld [vmem:[%s1 + $0x458] sm:$0xff]
    %v2274 = vld [vmem:[%s1 + $0x460] sm:$0xff]
    %v2275 = vld [vmem:[%s1 + $0x468] sm:$0xff]
    %v2276 = vld [vmem:[%s1 + $0x470] sm:$0xff]
    %v2277 = vld [vmem:[%s1 + $0x478] sm:$0xff]
    %v2278 = vld [vmem:[%s1 + $0x480] sm:$0xff]
    %v2279 = vld [vmem:[%s1 + $0x488] sm:$0xff]
    %v2280 = vld [vmem:[%s1 + $0x490] sm:$0xff]
    %v2281 = vld [vmem:[%s1 + $0x498] sm:$0xff]
    %v2282 = vld [vmem:[%s1 + $0x4a0] sm:$0xff]
    %v2283 = vld [vmem:[%s1 + $0x4a8] sm:$0xff]
    %v2284 = vld [vmem:[%s1 + $0x4b0] sm:$0xff]
    %v2285 = vld [vmem:[%s1 + $0x4b8] sm:$0xff]
    %v2286 = vld [vmem:[%s1 + $0x4c0] sm:$0xff]
    %v2287 = vld [vmem:[%s1 + $0x4c8] sm:$0xff]
    %v2288 = vld [vmem:[%s1 + $0x4d0] sm:$0xff]
    %v2289 = vld [vmem:[%s1 + $0x4d8] sm:$0xff]
    %v2290 = vld [vmem:[%s1 + $0x4e0] sm:$0xff]
    %v2291 = vld [vmem:[%s1 + $0x4e8] sm:$0xff]
    %v2292 = vld [vmem:[%s1 + $0x4f0] sm:$0xff]
    %v2293 = vld [vmem:[%s1 + $0x4f8] sm:$0xff]
    %v2294 = vld [vmem:[%s1 + $0x500] sm:$0xff]
    %v2295 = vld [vmem:[%s1 + $0x508] sm:$0xff]
    %v2296 = vld [vmem:[%s1 + $0x510] sm:$0xff]
    %v2297 = vld [vmem:[%s1 + $0x518] sm:$0xff]
    %v2298 = vld [vmem:[%s1 + $0x520] sm:$0xff]
    %v2299 = vld [vmem:[%s1 + $0x528] sm:$0xff]
    %v2300 = vld [vmem:[%s1 + $0x530] sm:$0xff]
    %v2301 = vld [vmem:[%s1 + $0x538] sm:$0xff]
    %v2302 = vld [vmem:[%s1 + $0x540] sm:$0xff]
    %v2303 = vld [vmem:[%s1 + $0x548] sm:$0xff]
    %v2304 = vld [vmem:[%s1 + $0x550] sm:$0xff]
    %v2305 = vld [vmem:[%s1 + $0x558] sm:$0xff]
    %v2306 = vld [vmem:[%s1 + $0x560] sm:$0xff]
    %v2307 = vld [vmem:[%s1 + $0x568] sm:$0xff]
    %v2308 = vld [vmem:[%s1 + $0x570] sm:$0xff]
    %v2309 = vld [vmem:[%s1 + $0x578] sm:$0xff]
    %v2310 = vld [vmem:[%s1 + $0x580] sm:$0xff]
    %v2311 = vld [vmem:[%s1 + $0x588] sm:$0xff]
    %v2312 = vld [vmem:[%s1 + $0x590] sm:$0xff]
    %v2313 = vld [vmem:[%s1 + $0x598] sm:$0xff]
    %v2314 = vld [vmem:[%s1 + $0x5a0] sm:$0xff]
    %v2315 = vld [vmem:[%s1 + $0x5a8] sm:$0xff]
    %v2316 = vld [vmem:[%s1 + $0x5b0] sm:$0xff]
    %v2317 = vld [vmem:[%s1 + $0x5b8] sm:$0xff]
    %v2318 = vld [vmem:[%s1 + $0x5c0] sm:$0xff]
    %v2319 = vld [vmem:[%s1 + $0x5c8] sm:$0xff]
    %v2320 = vld [vmem:[%s1 + $0x5d0] sm:$0xff]
    %v2321 = vld [vmem:[%s1 + $0x5d8] sm:$0xff]
    %v2322 = vld [vmem:[%s1 + $0x5e0] sm:$0xff]
    %v2323 = vld [vmem:[%s1 + $0x5e8] sm:$0xff]
    %v2324 = vld [vmem:[%s1 + $0x5f0] sm:$0xff]
    %v2325 = vld [vmem:[%s1 + $0x5f8] sm:$0xff]
    %v2326 = vld [vmem:[%s1 + $0x600] sm:$0xff]
    %v2327 = vld [vmem:[%s1 + $0x608] sm:$0xff]
    %v2328 = vld [vmem:[%s1 + $0x610] sm:$0xff]
    %v2329 = vld [vmem:[%s1 + $0x618] sm:$0xff]
    %v2330 = vld [vmem:[%s1 + $0x620] sm:$0xff]
    %v2331 = vld [vmem:[%s1 + $0x628] sm:$0xff]
    %v2332 = vld [vmem:[%s1 + $0x630] sm:$0xff]
    %v2333 = vld [vmem:[%s1 + $0x638] sm:$0xff]
    %v2334 = vld [vmem:[%s1 + $0x640] sm:$0xff]
    %v2335 = vld [vmem:[%s1 + $0x648] sm:$0xff]
    %v2336 = vld [vmem:[%s1 + $0x650] sm:$0xff]
    %v2337 = vld [vmem:[%s1 + $0x658] sm:$0xff]
    %v2338 = vld [vmem:[%s1 + $0x660] sm:$0xff]
    %v2339 = vld [vmem:[%s1 + $0x668] sm:$0xff]
    %v2340 = vld [vmem:[%s1 + $0x670] sm:$0xff]
    %v2341 = vld [vmem:[%s1 + $0x678] sm:$0xff]
    %v2342 = vld [vmem:[%s1 + $0x680] sm:$0xff]
    %v2343 = vld [vmem:[%s1 + $0x688] sm:$0xff]
    %v2344 = vld [vmem:[%s1 + $0x690] sm:$0xff]
    %v2345 = vld [vmem:[%s1 + $0x698] sm:$0xff]
    %v2346 = vld [vmem:[%s1 + $0x6a0] sm:$0xff]
    %v2347 = vld [vmem:[%s1 + $0x6a8] sm:$0xff]
    %v2348 = vld [vmem:[%s1 + $0x6b0] sm:$0xff]
    %v2349 = vld [vmem:[%s1 + $0x6b8] sm:$0xff]
    %v2350 = vld [vmem:[%s1 + $0x6c0] sm:$0xff]
    %v2351 = vld [vmem:[%s1 + $0x6c8] sm:$0xff]
    %v2352 = vld [vmem:[%s1 + $0x6d0] sm:$0xff]
    %v2353 = vld [vmem:[%s1 + $0x6d8] sm:$0xff]
    %v2354 = vld [vmem:[%s1 + $0x6e0] sm:$0xff]
    %v2355 = vld [vmem:[%s1 + $0x6e8] sm:$0xff]
    %v2356 = vld [vmem:[%s1 + $0x6f0] sm:$0xff]
    %v2357 = vld [vmem:[%s1 + $0x6f8] sm:$0xff]
    %v2358 = vld [vmem:[%s1 + $0x700] sm:$0xff]
    %v2359 = vld [vmem:[%s1 + $0x708] sm:$0xff]
    %v2360 = vld [vmem:[%s1 + $0x710] sm:$0xff]
    %v2361 = vld [vmem:[%s1 + $0x718] sm:$0xff]
    %v2362 = vld [vmem:[%s1 + $0x720] sm:$0xff]
    %v2363 = vld [vmem:[%s1 + $0x728] sm:$0xff]
    %v2364 = vld [vmem:[%s1 + $0x730] sm:$0xff]
    %v2365 = vld [vmem:[%s1 + $0x738] sm:$0xff]
    %v2366 = vld [vmem:[%s1 + $0x740] sm:$0xff]
    %v2367 = vld [vmem:[%s1 + $0x748] sm:$0xff]
    %v2368 = vld [vmem:[%s1 + $0x750] sm:$0xff]
    %v2369 = vld [vmem:[%s1 + $0x758] sm:$0xff]
    %v2370 = vld [vmem:[%s1 + $0x760] sm:$0xff]
    %v2371 = vld [vmem:[%s1 + $0x768] sm:$0xff]
    %v2372 = vld [vmem:[%s1 + $0x770] sm:$0xff]
    %v2373 = vld [vmem:[%s1 + $0x778] sm:$0xff]
    %v2374 = vld [vmem:[%s1 + $0x780] sm:$0xff]
    %v2375 = vld [vmem:[%s1 + $0x788] sm:$0xff]
    %v2376 = vld [vmem:[%s1 + $0x790] sm:$0xff]
    %v2377 = vld [vmem:[%s1 + $0x798] sm:$0xff]
    %v2378 = vld [vmem:[%s1 + $0x7a0] sm:$0xff]
    %v2379 = vld [vmem:[%s1 + $0x7a8] sm:$0xff]
    %v2380 = vld [vmem:[%s1 + $0x7b0] sm:$0xff]
    %v2381 = vld [vmem:[%s1 + $0x7b8] sm:$0xff]
    %v2382 = vld [vmem:[%s1 + $0x7c0] sm:$0xff]
    %v2383 = vld [vmem:[%s1 + $0x7c8] sm:$0xff]
    %v2384 = vld [vmem:[%s1 + $0x7d0] sm:$0xff]
    %v2385 = vld [vmem:[%s1 + $0x7d8] sm:$0xff]
    %v2386 = vld [vmem:[%s1 + $0x7e0] sm:$0xff]
    %v2387 = vld [vmem:[%s1 + $0x7e8] sm:$0xff]
    %v2388 = vld [vmem:[%s1 + $0x7f0] sm:$0xff]
    %v2389 = vld [vmem:[%s1 + $0x7f8] sm:$0xff]
    %v2390 = vmul.f32 %v1878, %v2134
    %v2391 = vmul.f32 %v1879, %v2135
    %v2392 = vmul.f32 %v1880, %v2136
    %v2393 = vmul.f32 %v1881, %v2137
    %v2394 = vmul.f32 %v1882, %v2138
    %v2395 = vmul.f32 %v1883, %v2139
    %v2396 = vmul.f32 %v1884, %v2140
    %v2397 = vmul.f32 %v1885, %v2141
    %v2398 = vmul.f32 %v1886, %v2142
    %v2399 = vmul.f32 %v1887, %v2143
    %v2400 = vmul.f32 %v1888, %v2144
    %v2401 = vmul.f32 %v1889, %v2145
    %v2402 = vmul.f32 %v1890, %v2146
    %v2403 = vmul.f32 %v1891, %v2147
    %v2404 = vmul.f32 %v1892, %v2148
    %v2405 = vmul.f32 %v1893, %v2149
    %v2406 = vmul.f32 %v1894, %v2150
    %v2407 = vmul.f32 %v1895, %v2151
    %v2408 = vmul.f32 %v1896, %v2152
    %v2409 = vmul.f32 %v1897, %v2153
    %v2410 = vmul.f32 %v1898, %v2154
    %v2411 = vmul.f32 %v1899, %v2155
    %v2412 = vmul.f32 %v1900, %v2156
    %v2413 = vmul.f32 %v1901, %v2157
    %v2414 = vmul.f32 %v1902, %v2158
    %v2415 = vmul.f32 %v1903, %v2159
    %v2416 = vmul.f32 %v1904, %v2160
    %v2417 = vmul.f32 %v1905, %v2161
    %v2418 = vmul.f32 %v1906, %v2162
    %v2419 = vmul.f32 %v1907, %v2163
    %v2420 = vmul.f32 %v1908, %v2164
    %v2421 = vmul.f32 %v1909, %v2165
    %v2422 = vmul.f32 %v1910, %v2166
    %v2423 = vmul.f32 %v1911, %v2167
    %v2424 = vmul.f32 %v1912, %v2168
    %v2425 = vmul.f32 %v1913, %v2169
    %v2426 = vmul.f32 %v1914, %v2170
    %v2427 = vmul.f32 %v1915, %v2171
    %v2428 = vmul.f32 %v1916, %v2172
    %v2429 = vmul.f32 %v1917, %v2173
    %v2430 = vmul.f32 %v1918, %v2174
    %v2431 = vmul.f32 %v1919, %v2175
    %v2432 = vmul.f32 %v1920, %v2176
    %v2433 = vmul.f32 %v1921, %v2177
    %v2434 = vmul.f32 %v1922, %v2178
    %v2435 = vmul.f32 %v1923, %v2179
    %v2436 = vmul.f32 %v1924, %v2180
    %v2437 = vmul.f32 %v1925, %v2181
    %v2438 = vmul.f32 %v1926, %v2182
    %v2439 = vmul.f32 %v1927, %v2183
    %v2440 = vmul.f32 %v1928, %v2184
    %v2441 = vmul.f32 %v1929, %v2185
    %v2442 = vmul.f32 %v1930, %v2186
    %v2443 = vmul.f32 %v1931, %v2187
    %v2444 = vmul.f32 %v1932, %v2188
    %v2445 = vmul.f32 %v1933, %v2189
    %v2446 = vmul.f32 %v1934, %v2190
    %v2447 = vmul.f32 %v1935, %v2191
    %v2448 = vmul.f32 %v1936, %v2192
    %v2449 = vmul.f32 %v1937, %v2193
    %v2450 = vmul.f32 %v1938, %v2194
    %v2451 = vmul.f32 %v1939, %v2195
    %v2452 = vmul.f32 %v1940, %v2196
    %v2453 = vmul.f32 %v1941, %v2197
    %v2454 = vmul.f32 %v1942, %v2198
    %v2455 = vmul.f32 %v1943, %v2199
    %v2456 = vmul.f32 %v1944, %v2200
    %v2457 = vmul.f32 %v1945, %v2201
    %v2458 = vmul.f32 %v1946, %v2202
    %v2459 = vmul.f32 %v1947, %v2203
    %v2460 = vmul.f32 %v1948, %v2204
    %v2461 = vmul.f32 %v1949, %v2205
    %v2462 = vmul.f32 %v1950, %v2206
    %v2463 = vmul.f32 %v1951, %v2207
    %v2464 = vmul.f32 %v1952, %v2208
    %v2465 = vmul.f32 %v1953, %v2209
    %v2466 = vmul.f32 %v1954, %v2210
    %v2467 = vmul.f32 %v1955, %v2211
    %v2468 = vmul.f32 %v1956, %v2212
    %v2469 = vmul.f32 %v1957, %v2213
    %v2470 = vmul.f32 %v1958, %v2214
    %v2471 = vmul.f32 %v1959, %v2215
    %v2472 = vmul.f32 %v1960, %v2216
    %v2473 = vmul.f32 %v1961, %v2217
    %v2474 = vmul.f32 %v1962, %v2218
    %v2475 = vmul.f32 %v1963, %v2219
    %v2476 = vmul.f32 %v1964, %v2220
    %v2477 = vmul.f32 %v1965, %v2221
    %v2478 = vmul.f32 %v1966, %v2222
    %v2479 = vmul.f32 %v1967, %v2223
    %v2480 = vmul.f32 %v1968, %v2224
    %v2481 = vmul.f32 %v1969, %v2225
    %v2482 = vmul.f32 %v1970, %v2226
    %v2483 = vmul.f32 %v1971, %v2227
    %v2484 = vmul.f32 %v1972, %v2228
    %v2485 = vmul.f32 %v1973, %v2229
    %v2486 = vmul.f32 %v1974, %v2230
    %v2487 = vmul.f32 %v1975, %v2231
    %v2488 = vmul.f32 %v1976, %v2232
    %v2489 = vmul.f32 %v1977, %v2233
    %v2490 = vmul.f32 %v1978, %v2234
    %v2491 = vmul.f32 %v1979, %v2235
    %v2492 = vmul.f32 %v1980, %v2236
    %v2493 = vmul.f32 %v1981, %v2237
    %v2494 = vmul.f32 %v1982, %v2238
    %v2495 = vmul.f32 %v1983, %v2239
    %v2496 = vmul.f32 %v1984, %v2240
    %v2497 = vmul.f32 %v1985, %v2241
    %v2498 = vmul.f32 %v1986, %v2242
    %v2499 = vmul.f32 %v1987, %v2243
    %v2500 = vmul.f32 %v1988, %v2244
    %v2501 = vmul.f32 %v1989, %v2245
    %v2502 = vmul.f32 %v1990, %v2246
    %v2503 = vmul.f32 %v1991, %v2247
    %v2504 = vmul.f32 %v1992, %v2248
    %v2505 = vmul.f32 %v1993, %v2249
    %v2506 = vmul.f32 %v1994, %v2250
    %v2507 = vmul.f32 %v1995, %v2251
    %v2508 = vmul.f32 %v1996, %v2252
    %v2509 = vmul.f32 %v1997, %v2253
    %v2510 = vmul.f32 %v1998, %v2254
    %v2511 = vmul.f32 %v1999, %v2255
    %v2512 = vmul.f32 %v2000, %v2256
    %v2513 = vmul.f32 %v2001, %v2257
    %v2514 = vmul.f32 %v2002, %v2258
    %v2515 = vmul.f32 %v2003, %v2259
    %v2516 = vmul.f32 %v2004, %v2260
    %v2517 = vmul.f32 %v2005, %v2261
    %v2518 = vmul.f32 %v2006, %v2262
    %v2519 = vmul.f32 %v2007, %v2263
    %v2520 = vmul.f32 %v2008, %v2264
    %v2521 = vmul.f32 %v2009, %v2265
    %v2522 = vmul.f32 %v2010, %v2266
    %v2523 = vmul.f32 %v2011, %v2267
    %v2524 = vmul.f32 %v2012, %v2268
    %v2525 = vmul.f32 %v2013, %v2269
    %v2526 = vmul.f32 %v2014, %v2270
    %v2527 = vmul.f32 %v2015, %v2271
    %v2528 = vmul.f32 %v2016, %v2272
    %v2529 = vmul.f32 %v2017, %v2273
    %v2530 = vmul.f32 %v2018, %v2274
    %v2531 = vmul.f32 %v2019, %v2275
    %v2532 = vmul.f32 %v2020, %v2276
    %v2533 = vmul.f32 %v2021, %v2277
    %v2534 = vmul.f32 %v2022, %v2278
    %v2535 = vmul.f32 %v2023, %v2279
    %v2536 = vmul.f32 %v2024, %v2280
    %v2537 = vmul.f32 %v2025, %v2281
    %v2538 = vmul.f32 %v2026, %v2282
    %v2539 = vmul.f32 %v2027, %v2283
    %v2540 = vmul.f32 %v2028, %v2284
    %v2541 = vmul.f32 %v2029, %v2285
    %v2542 = vmul.f32 %v2030, %v2286
    %v2543 = vmul.f32 %v2031, %v2287
    %v2544 = vmul.f32 %v2032, %v2288
    %v2545 = vmul.f32 %v2033, %v2289
    %v2546 = vmul.f32 %v2034, %v2290
    %v2547 = vmul.f32 %v2035, %v2291
    %v2548 = vmul.f32 %v2036, %v2292
    %v2549 = vmul.f32 %v2037, %v2293
    %v2550 = vmul.f32 %v2038, %v2294
    %v2551 = vmul.f32 %v2039, %v2295
    %v2552 = vmul.f32 %v2040, %v2296
    %v2553 = vmul.f32 %v2041, %v2297
    %v2554 = vmul.f32 %v2042, %v2298
    %v2555 = vmul.f32 %v2043, %v2299
    %v2556 = vmul.f32 %v2044, %v2300
    %v2557 = vmul.f32 %v2045, %v2301
    %v2558 = vmul.f32 %v2046, %v2302
    %v2559 = vmul.f32 %v2047, %v2303
    %v2560 = vmul.f32 %v2048, %v2304
    %v2561 = vmul.f32 %v2049, %v2305
    %v2562 = vmul.f32 %v2050, %v2306
    %v2563 = vmul.f32 %v2051, %v2307
    %v2564 = vmul.f32 %v2052, %v2308
    %v2565 = vmul.f32 %v2053, %v2309
    %v2566 = vmul.f32 %v2054, %v2310
    %v2567 = vmul.f32 %v2055, %v2311
    %v2568 = vmul.f32 %v2056, %v2312
    %v2569 = vmul.f32 %v2057, %v2313
    %v2570 = vmul.f32 %v2058, %v2314
    %v2571 = vmul.f32 %v2059, %v2315
    %v2572 = vmul.f32 %v2060, %v2316
    %v2573 = vmul.f32 %v2061, %v2317
    %v2574 = vmul.f32 %v2062, %v2318
    %v2575 = vmul.f32 %v2063, %v2319
    %v2576 = vmul.f32 %v2064, %v2320
    %v2577 = vmul.f32 %v2065, %v2321
    %v2578 = vmul.f32 %v2066, %v2322
    %v2579 = vmul.f32 %v2067, %v2323
    %v2580 = vmul.f32 %v2068, %v2324
    %v2581 = vmul.f32 %v2069, %v2325
    %v2582 = vmul.f32 %v2070, %v2326
    %v2583 = vmul.f32 %v2071, %v2327
    %v2584 = vmul.f32 %v2072, %v2328
    %v2585 = vmul.f32 %v2073, %v2329
    %v2586 = vmul.f32 %v2074, %v2330
    %v2587 = vmul.f32 %v2075, %v2331
    %v2588 = vmul.f32 %v2076, %v2332
    %v2589 = vmul.f32 %v2077, %v2333
    %v2590 = vmul.f32 %v2078, %v2334
    %v2591 = vmul.f32 %v2079, %v2335
    %v2592 = vmul.f32 %v2080, %v2336
    %v2593 = vmul.f32 %v2081, %v2337
    %v2594 = vmul.f32 %v2082, %v2338
    %v2595 = vmul.f32 %v2083, %v2339
    %v2596 = vmul.f32 %v2084, %v2340
    %v2597 = vmul.f32 %v2085, %v2341
    %v2598 = vmul.f32 %v2086, %v2342
    %v2599 = vmul.f32 %v2087, %v2343
    %v2600 = vmul.f32 %v2088, %v2344
    %v2601 = vmul.f32 %v2089, %v2345
    %v2602 = vmul.f32 %v2090, %v2346
    %v2603 = vmul.f32 %v2091, %v2347
    %v2604 = vmul.f32 %v2092, %v2348
    %v2605 = vmul.f32 %v2093, %v2349
    %v2606 = vmul.f32 %v2094, %v2350
    %v2607 = vmul.f32 %v2095, %v2351
    %v2608 = vmul.f32 %v2096, %v2352
    %v2609 = vmul.f32 %v2097, %v2353
    %v2610 = vmul.f32 %v2098, %v2354
    %v2611 = vmul.f32 %v2099, %v2355
    %v2612 = vmul.f32 %v2100, %v2356
    %v2613 = vmul.f32 %v2101, %v2357
    %v2614 = vmul.f32 %v2102, %v2358
    %v2615 = vmul.f32 %v2103, %v2359
    %v2616 = vmul.f32 %v2104, %v2360
    %v2617 = vmul.f32 %v2105, %v2361
    %v2618 = vmul.f32 %v2106, %v2362
    %v2619 = vmul.f32 %v2107, %v2363
    %v2620 = vmul.f32 %v2108, %v2364
    %v2621 = vmul.f32 %v2109, %v2365
    %v2622 = vmul.f32 %v2110, %v2366
    %v2623 = vmul.f32 %v2111, %v2367
    %v2624 = vmul.f32 %v2112, %v2368
    %v2625 = vmul.f32 %v2113, %v2369
    %v2626 = vmul.f32 %v2114, %v2370
    %v2627 = vmul.f32 %v2115, %v2371
    %v2628 = vmul.f32 %v2116, %v2372
    %v2629 = vmul.f32 %v2117, %v2373
    %v2630 = vmul.f32 %v2118, %v2374
    %v2631 = vmul.f32 %v2119, %v2375
    %v2632 = vmul.f32 %v2120, %v2376
    %v2633 = vmul.f32 %v2121, %v2377
    %v2634 = vmul.f32 %v2122, %v2378
    %v2635 = vmul.f32 %v2123, %v2379
    %v2636 = vmul.f32 %v2124, %v2380
    %v2637 = vmul.f32 %v2125, %v2381
    %v2638 = vmul.f32 %v2126, %v2382
    %v2639 = vmul.f32 %v2127, %v2383
    %v2640 = vmul.f32 %v2128, %v2384
    %v2641 = vmul.f32 %v2129, %v2385
    %v2642 = vmul.f32 %v2130, %v2386
    %v2643 = vmul.f32 %v2131, %v2387
    %v2644 = vmul.f32 %v2132, %v2388
    %v2645 = vmul.f32 %v2133, %v2389
    %v2646 = vld [vmem:[#allocation5] sm:$0xff]
    %v2647 = vld [vmem:[#allocation5 + $0x8] sm:$0xff]
    %v2648 = vld [vmem:[#allocation5 + $0x10] sm:$0xff]
    %v2649 = vld [vmem:[#allocation5 + $0x18] sm:$0xff]
    %v2650 = vld [vmem:[#allocation5 + $0x20] sm:$0xff]
    %v2651 = vld [vmem:[#allocation5 + $0x28] sm:$0xff]
    %v2652 = vld [vmem:[#allocation5 + $0x30] sm:$0xff]
    %v2653 = vld [vmem:[#allocation5 + $0x38] sm:$0xff]
    %v2654 = vld [vmem:[#allocation5 + $0x40] sm:$0xff]
    %v2655 = vld [vmem:[#allocation5 + $0x48] sm:$0xff]
    %v2656 = vld [vmem:[#allocation5 + $0x50] sm:$0xff]
    %v2657 = vld [vmem:[#allocation5 + $0x58] sm:$0xff]
    %v2658 = vld [vmem:[#allocation5 + $0x60] sm:$0xff]
    %v2659 = vld [vmem:[#allocation5 + $0x68] sm:$0xff]
    %v2660 = vld [vmem:[#allocation5 + $0x70] sm:$0xff]
    %v2661 = vld [vmem:[#allocation5 + $0x78] sm:$0xff]
    %v2662 = vld [vmem:[#allocation5 + $0x80] sm:$0xff]
    %v2663 = vld [vmem:[#allocation5 + $0x88] sm:$0xff]
    %v2664 = vld [vmem:[#allocation5 + $0x90] sm:$0xff]
    %v2665 = vld [vmem:[#allocation5 + $0x98] sm:$0xff]
    %v2666 = vld [vmem:[#allocation5 + $0xa0] sm:$0xff]
    %v2667 = vld [vmem:[#allocation5 + $0xa8] sm:$0xff]
    %v2668 = vld [vmem:[#allocation5 + $0xb0] sm:$0xff]
    %v2669 = vld [vmem:[#allocation5 + $0xb8] sm:$0xff]
    %v2670 = vld [vmem:[#allocation5 + $0xc0] sm:$0xff]
    %v2671 = vld [vmem:[#allocation5 + $0xc8] sm:$0xff]
    %v2672 = vld [vmem:[#allocation5 + $0xd0] sm:$0xff]
    %v2673 = vld [vmem:[#allocation5 + $0xd8] sm:$0xff]
    %v2674 = vld [vmem:[#allocation5 + $0xe0] sm:$0xff]
    %v2675 = vld [vmem:[#allocation5 + $0xe8] sm:$0xff]
    %v2676 = vld [vmem:[#allocation5 + $0xf0] sm:$0xff]
    %v2677 = vld [vmem:[#allocation5 + $0xf8] sm:$0xff]
    %v2678 = vld [vmem:[#allocation5 + $0x100] sm:$0xff]
    %v2679 = vld [vmem:[#allocation5 + $0x108] sm:$0xff]
    %v2680 = vld [vmem:[#allocation5 + $0x110] sm:$0xff]
    %v2681 = vld [vmem:[#allocation5 + $0x118] sm:$0xff]
    %v2682 = vld [vmem:[#allocation5 + $0x120] sm:$0xff]
    %v2683 = vld [vmem:[#allocation5 + $0x128] sm:$0xff]
    %v2684 = vld [vmem:[#allocation5 + $0x130] sm:$0xff]
    %v2685 = vld [vmem:[#allocation5 + $0x138] sm:$0xff]
    %v2686 = vld [vmem:[#allocation5 + $0x140] sm:$0xff]
    %v2687 = vld [vmem:[#allocation5 + $0x148] sm:$0xff]
    %v2688 = vld [vmem:[#allocation5 + $0x150] sm:$0xff]
    %v2689 = vld [vmem:[#allocation5 + $0x158] sm:$0xff]
    %v2690 = vld [vmem:[#allocation5 + $0x160] sm:$0xff]
    %v2691 = vld [vmem:[#allocation5 + $0x168] sm:$0xff]
    %v2692 = vld [vmem:[#allocation5 + $0x170] sm:$0xff]
    %v2693 = vld [vmem:[#allocation5 + $0x178] sm:$0xff]
    %v2694 = vld [vmem:[#allocation5 + $0x180] sm:$0xff]
    %v2695 = vld [vmem:[#allocation5 + $0x188] sm:$0xff]
    %v2696 = vld [vmem:[#allocation5 + $0x190] sm:$0xff]
    %v2697 = vld [vmem:[#allocation5 + $0x198] sm:$0xff]
    %v2698 = vld [vmem:[#allocation5 + $0x1a0] sm:$0xff]
    %v2699 = vld [vmem:[#allocation5 + $0x1a8] sm:$0xff]
    %v2700 = vld [vmem:[#allocation5 + $0x1b0] sm:$0xff]
    %v2701 = vld [vmem:[#allocation5 + $0x1b8] sm:$0xff]
    %v2702 = vld [vmem:[#allocation5 + $0x1c0] sm:$0xff]
    %v2703 = vld [vmem:[#allocation5 + $0x1c8] sm:$0xff]
    %v2704 = vld [vmem:[#allocation5 + $0x1d0] sm:$0xff]
    %v2705 = vld [vmem:[#allocation5 + $0x1d8] sm:$0xff]
    %v2706 = vld [vmem:[#allocation5 + $0x1e0] sm:$0xff]
    %v2707 = vld [vmem:[#allocation5 + $0x1e8] sm:$0xff]
    %v2708 = vld [vmem:[#allocation5 + $0x1f0] sm:$0xff]
    %v2709 = vld [vmem:[#allocation5 + $0x1f8] sm:$0xff]
    %v2710 = vld [vmem:[#allocation5 + $0x200] sm:$0xff]
    %v2711 = vld [vmem:[#allocation5 + $0x208] sm:$0xff]
    %v2712 = vld [vmem:[#allocation5 + $0x210] sm:$0xff]
    %v2713 = vld [vmem:[#allocation5 + $0x218] sm:$0xff]
    %v2714 = vld [vmem:[#allocation5 + $0x220] sm:$0xff]
    %v2715 = vld [vmem:[#allocation5 + $0x228] sm:$0xff]
    %v2716 = vld [vmem:[#allocation5 + $0x230] sm:$0xff]
    %v2717 = vld [vmem:[#allocation5 + $0x238] sm:$0xff]
    %v2718 = vld [vmem:[#allocation5 + $0x240] sm:$0xff]
    %v2719 = vld [vmem:[#allocation5 + $0x248] sm:$0xff]
    %v2720 = vld [vmem:[#allocation5 + $0x250] sm:$0xff]
    %v2721 = vld [vmem:[#allocation5 + $0x258] sm:$0xff]
    %v2722 = vld [vmem:[#allocation5 + $0x260] sm:$0xff]
    %v2723 = vld [vmem:[#allocation5 + $0x268] sm:$0xff]
    %v2724 = vld [vmem:[#allocation5 + $0x270] sm:$0xff]
    %v2725 = vld [vmem:[#allocation5 + $0x278] sm:$0xff]
    %v2726 = vld [vmem:[#allocation5 + $0x280] sm:$0xff]
    %v2727 = vld [vmem:[#allocation5 + $0x288] sm:$0xff]
    %v2728 = vld [vmem:[#allocation5 + $0x290] sm:$0xff]
    %v2729 = vld [vmem:[#allocation5 + $0x298] sm:$0xff]
    %v2730 = vld [vmem:[#allocation5 + $0x2a0] sm:$0xff]
    %v2731 = vld [vmem:[#allocation5 + $0x2a8] sm:$0xff]
    %v2732 = vld [vmem:[#allocation5 + $0x2b0] sm:$0xff]
    %v2733 = vld [vmem:[#allocation5 + $0x2b8] sm:$0xff]
    %v2734 = vld [vmem:[#allocation5 + $0x2c0] sm:$0xff]
    %v2735 = vld [vmem:[#allocation5 + $0x2c8] sm:$0xff]
    %v2736 = vld [vmem:[#allocation5 + $0x2d0] sm:$0xff]
    %v2737 = vld [vmem:[#allocation5 + $0x2d8] sm:$0xff]
    %v2738 = vld [vmem:[#allocation5 + $0x2e0] sm:$0xff]
    %v2739 = vld [vmem:[#allocation5 + $0x2e8] sm:$0xff]
    %v2740 = vld [vmem:[#allocation5 + $0x2f0] sm:$0xff]
    %v2741 = vld [vmem:[#allocation5 + $0x2f8] sm:$0xff]
    %v2742 = vld [vmem:[#allocation5 + $0x300] sm:$0xff]
    %v2743 = vld [vmem:[#allocation5 + $0x308] sm:$0xff]
    %v2744 = vld [vmem:[#allocation5 + $0x310] sm:$0xff]
    %v2745 = vld [vmem:[#allocation5 + $0x318] sm:$0xff]
    %v2746 = vld [vmem:[#allocation5 + $0x320] sm:$0xff]
    %v2747 = vld [vmem:[#allocation5 + $0x328] sm:$0xff]
    %v2748 = vld [vmem:[#allocation5 + $0x330] sm:$0xff]
    %v2749 = vld [vmem:[#allocation5 + $0x338] sm:$0xff]
    %v2750 = vld [vmem:[#allocation5 + $0x340] sm:$0xff]
    %v2751 = vld [vmem:[#allocation5 + $0x348] sm:$0xff]
    %v2752 = vld [vmem:[#allocation5 + $0x350] sm:$0xff]
    %v2753 = vld [vmem:[#allocation5 + $0x358] sm:$0xff]
    %v2754 = vld [vmem:[#allocation5 + $0x360] sm:$0xff]
    %v2755 = vld [vmem:[#allocation5 + $0x368] sm:$0xff]
    %v2756 = vld [vmem:[#allocation5 + $0x370] sm:$0xff]
    %v2757 = vld [vmem:[#allocation5 + $0x378] sm:$0xff]
    %v2758 = vld [vmem:[#allocation5 + $0x380] sm:$0xff]
    %v2759 = vld [vmem:[#allocation5 + $0x388] sm:$0xff]
    %v2760 = vld [vmem:[#allocation5 + $0x390] sm:$0xff]
    %v2761 = vld [vmem:[#allocation5 + $0x398] sm:$0xff]
    %v2762 = vld [vmem:[#allocation5 + $0x3a0] sm:$0xff]
    %v2763 = vld [vmem:[#allocation5 + $0x3a8] sm:$0xff]
    %v2764 = vld [vmem:[#allocation5 + $0x3b0] sm:$0xff]
    %v2765 = vld [vmem:[#allocation5 + $0x3b8] sm:$0xff]
    %v2766 = vld [vmem:[#allocation5 + $0x3c0] sm:$0xff]
    %v2767 = vld [vmem:[#allocation5 + $0x3c8] sm:$0xff]
    %v2768 = vld [vmem:[#allocation5 + $0x3d0] sm:$0xff]
    %v2769 = vld [vmem:[#allocation5 + $0x3d8] sm:$0xff]
    %v2770 = vld [vmem:[#allocation5 + $0x3e0] sm:$0xff]
    %v2771 = vld [vmem:[#allocation5 + $0x3e8] sm:$0xff]
    %v2772 = vld [vmem:[#allocation5 + $0x3f0] sm:$0xff]
    %v2773 = vld [vmem:[#allocation5 + $0x3f8] sm:$0xff]
    %v2774 = vld [vmem:[#allocation5 + $0x400] sm:$0xff]
    %v2775 = vld [vmem:[#allocation5 + $0x408] sm:$0xff]
    %v2776 = vld [vmem:[#allocation5 + $0x410] sm:$0xff]
    %v2777 = vld [vmem:[#allocation5 + $0x418] sm:$0xff]
    %v2778 = vld [vmem:[#allocation5 + $0x420] sm:$0xff]
    %v2779 = vld [vmem:[#allocation5 + $0x428] sm:$0xff]
    %v2780 = vld [vmem:[#allocation5 + $0x430] sm:$0xff]
    %v2781 = vld [vmem:[#allocation5 + $0x438] sm:$0xff]
    %v2782 = vld [vmem:[#allocation5 + $0x440] sm:$0xff]
    %v2783 = vld [vmem:[#allocation5 + $0x448] sm:$0xff]
    %v2784 = vld [vmem:[#allocation5 + $0x450] sm:$0xff]
    %v2785 = vld [vmem:[#allocation5 + $0x458] sm:$0xff]
    %v2786 = vld [vmem:[#allocation5 + $0x460] sm:$0xff]
    %v2787 = vld [vmem:[#allocation5 + $0x468] sm:$0xff]
    %v2788 = vld [vmem:[#allocation5 + $0x470] sm:$0xff]
    %v2789 = vld [vmem:[#allocation5 + $0x478] sm:$0xff]
    %v2790 = vld [vmem:[#allocation5 + $0x480] sm:$0xff]
    %v2791 = vld [vmem:[#allocation5 + $0x488] sm:$0xff]
    %v2792 = vld [vmem:[#allocation5 + $0x490] sm:$0xff]
    %v2793 = vld [vmem:[#allocation5 + $0x498] sm:$0xff]
    %v2794 = vld [vmem:[#allocation5 + $0x4a0] sm:$0xff]
    %v2795 = vld [vmem:[#allocation5 + $0x4a8] sm:$0xff]
    %v2796 = vld [vmem:[#allocation5 + $0x4b0] sm:$0xff]
    %v2797 = vld [vmem:[#allocation5 + $0x4b8] sm:$0xff]
    %v2798 = vld [vmem:[#allocation5 + $0x4c0] sm:$0xff]
    %v2799 = vld [vmem:[#allocation5 + $0x4c8] sm:$0xff]
    %v2800 = vld [vmem:[#allocation5 + $0x4d0] sm:$0xff]
    %v2801 = vld [vmem:[#allocation5 + $0x4d8] sm:$0xff]
    %v2802 = vld [vmem:[#allocation5 + $0x4e0] sm:$0xff]
    %v2803 = vld [vmem:[#allocation5 + $0x4e8] sm:$0xff]
    %v2804 = vld [vmem:[#allocation5 + $0x4f0] sm:$0xff]
    %v2805 = vld [vmem:[#allocation5 + $0x4f8] sm:$0xff]
    %v2806 = vld [vmem:[#allocation5 + $0x500] sm:$0xff]
    %v2807 = vld [vmem:[#allocation5 + $0x508] sm:$0xff]
    %v2808 = vld [vmem:[#allocation5 + $0x510] sm:$0xff]
    %v2809 = vld [vmem:[#allocation5 + $0x518] sm:$0xff]
    %v2810 = vld [vmem:[#allocation5 + $0x520] sm:$0xff]
    %v2811 = vld [vmem:[#allocation5 + $0x528] sm:$0xff]
    %v2812 = vld [vmem:[#allocation5 + $0x530] sm:$0xff]
    %v2813 = vld [vmem:[#allocation5 + $0x538] sm:$0xff]
    %v2814 = vld [vmem:[#allocation5 + $0x540] sm:$0xff]
    %v2815 = vld [vmem:[#allocation5 + $0x548] sm:$0xff]
    %v2816 = vld [vmem:[#allocation5 + $0x550] sm:$0xff]
    %v2817 = vld [vmem:[#allocation5 + $0x558] sm:$0xff]
    %v2818 = vld [vmem:[#allocation5 + $0x560] sm:$0xff]
    %v2819 = vld [vmem:[#allocation5 + $0x568] sm:$0xff]
    %v2820 = vld [vmem:[#allocation5 + $0x570] sm:$0xff]
    %v2821 = vld [vmem:[#allocation5 + $0x578] sm:$0xff]
    %v2822 = vld [vmem:[#allocation5 + $0x580] sm:$0xff]
    %v2823 = vld [vmem:[#allocation5 + $0x588] sm:$0xff]
    %v2824 = vld [vmem:[#allocation5 + $0x590] sm:$0xff]
    %v2825 = vld [vmem:[#allocation5 + $0x598] sm:$0xff]
    %v2826 = vld [vmem:[#allocation5 + $0x5a0] sm:$0xff]
    %v2827 = vld [vmem:[#allocation5 + $0x5a8] sm:$0xff]
    %v2828 = vld [vmem:[#allocation5 + $0x5b0] sm:$0xff]
    %v2829 = vld [vmem:[#allocation5 + $0x5b8] sm:$0xff]
    %v2830 = vld [vmem:[#allocation5 + $0x5c0] sm:$0xff]
    %v2831 = vld [vmem:[#allocation5 + $0x5c8] sm:$0xff]
    %v2832 = vld [vmem:[#allocation5 + $0x5d0] sm:$0xff]
    %v2833 = vld [vmem:[#allocation5 + $0x5d8] sm:$0xff]
    %v2834 = vld [vmem:[#allocation5 + $0x5e0] sm:$0xff]
    %v2835 = vld [vmem:[#allocation5 + $0x5e8] sm:$0xff]
    %v2836 = vld [vmem:[#allocation5 + $0x5f0] sm:$0xff]
    %v2837 = vld [vmem:[#allocation5 + $0x5f8] sm:$0xff]
    %v2838 = vld [vmem:[#allocation5 + $0x600] sm:$0xff]
    %v2839 = vld [vmem:[#allocation5 + $0x608] sm:$0xff]
    %v2840 = vld [vmem:[#allocation5 + $0x610] sm:$0xff]
    %v2841 = vld [vmem:[#allocation5 + $0x618] sm:$0xff]
    %v2842 = vld [vmem:[#allocation5 + $0x620] sm:$0xff]
    %v2843 = vld [vmem:[#allocation5 + $0x628] sm:$0xff]
    %v2844 = vld [vmem:[#allocation5 + $0x630] sm:$0xff]
    %v2845 = vld [vmem:[#allocation5 + $0x638] sm:$0xff]
    %v2846 = vld [vmem:[#allocation5 + $0x640] sm:$0xff]
    %v2847 = vld [vmem:[#allocation5 + $0x648] sm:$0xff]
    %v2848 = vld [vmem:[#allocation5 + $0x650] sm:$0xff]
    %v2849 = vld [vmem:[#allocation5 + $0x658] sm:$0xff]
    %v2850 = vld [vmem:[#allocation5 + $0x660] sm:$0xff]
    %v2851 = vld [vmem:[#allocation5 + $0x668] sm:$0xff]
    %v2852 = vld [vmem:[#allocation5 + $0x670] sm:$0xff]
    %v2853 = vld [vmem:[#allocation5 + $0x678] sm:$0xff]
    %v2854 = vld [vmem:[#allocation5 + $0x680] sm:$0xff]
    %v2855 = vld [vmem:[#allocation5 + $0x688] sm:$0xff]
    %v2856 = vld [vmem:[#allocation5 + $0x690] sm:$0xff]
    %v2857 = vld [vmem:[#allocation5 + $0x698] sm:$0xff]
    %v2858 = vld [vmem:[#allocation5 + $0x6a0] sm:$0xff]
    %v2859 = vld [vmem:[#allocation5 + $0x6a8] sm:$0xff]
    %v2860 = vld [vmem:[#allocation5 + $0x6b0] sm:$0xff]
    %v2861 = vld [vmem:[#allocation5 + $0x6b8] sm:$0xff]
    %v2862 = vld [vmem:[#allocation5 + $0x6c0] sm:$0xff]
    %v2863 = vld [vmem:[#allocation5 + $0x6c8] sm:$0xff]
    %v2864 = vld [vmem:[#allocation5 + $0x6d0] sm:$0xff]
    %v2865 = vld [vmem:[#allocation5 + $0x6d8] sm:$0xff]
    %v2866 = vld [vmem:[#allocation5 + $0x6e0] sm:$0xff]
    %v2867 = vld [vmem:[#allocation5 + $0x6e8] sm:$0xff]
    %v2868 = vld [vmem:[#allocation5 + $0x6f0] sm:$0xff]
    %v2869 = vld [vmem:[#allocation5 + $0x6f8] sm:$0xff]
    %v2870 = vld [vmem:[#allocation5 + $0x700] sm:$0xff]
    %v2871 = vld [vmem:[#allocation5 + $0x708] sm:$0xff]
    %v2872 = vld [vmem:[#allocation5 + $0x710] sm:$0xff]
    %v2873 = vld [vmem:[#allocation5 + $0x718] sm:$0xff]
    %v2874 = vld [vmem:[#allocation5 + $0x720] sm:$0xff]
    %v2875 = vld [vmem:[#allocation5 + $0x728] sm:$0xff]
    %v2876 = vld [vmem:[#allocation5 + $0x730] sm:$0xff]
    %v2877 = vld [vmem:[#allocation5 + $0x738] sm:$0xff]
    %v2878 = vld [vmem:[#allocation5 + $0x740] sm:$0xff]
    %v2879 = vld [vmem:[#allocation5 + $0x748] sm:$0xff]
    %v2880 = vld [vmem:[#allocation5 + $0x750] sm:$0xff]
    %v2881 = vld [vmem:[#allocation5 + $0x758] sm:$0xff]
    %v2882 = vld [vmem:[#allocation5 + $0x760] sm:$0xff]
    %v2883 = vld [vmem:[#allocation5 + $0x768] sm:$0xff]
    %v2884 = vld [vmem:[#allocation5 + $0x770] sm:$0xff]
    %v2885 = vld [vmem:[#allocation5 + $0x778] sm:$0xff]
    %v2886 = vld [vmem:[#allocation5 + $0x780] sm:$0xff]
    %v2887 = vld [vmem:[#allocation5 + $0x788] sm:$0xff]
    %v2888 = vld [vmem:[#allocation5 + $0x790] sm:$0xff]
    %v2889 = vld [vmem:[#allocation5 + $0x798] sm:$0xff]
    %v2890 = vld [vmem:[#allocation5 + $0x7a0] sm:$0xff]
    %v2891 = vld [vmem:[#allocation5 + $0x7a8] sm:$0xff]
    %v2892 = vld [vmem:[#allocation5 + $0x7b0] sm:$0xff]
    %v2893 = vld [vmem:[#allocation5 + $0x7b8] sm:$0xff]
    %v2894 = vld [vmem:[#allocation5 + $0x7c0] sm:$0xff]
    %v2895 = vld [vmem:[#allocation5 + $0x7c8] sm:$0xff]
    %v2896 = vld [vmem:[#allocation5 + $0x7d0] sm:$0xff]
    %v2897 = vld [vmem:[#allocation5 + $0x7d8] sm:$0xff]
    %v2898 = vld [vmem:[#allocation5 + $0x7e0] sm:$0xff]
    %v2899 = vld [vmem:[#allocation5 + $0x7e8] sm:$0xff]
    %v2900 = vld [vmem:[#allocation5 + $0x7f0] sm:$0xff]
    %v2901 = vld [vmem:[#allocation5 + $0x7f8] sm:$0xff]
    %v2902 = vld [vmem:[#allocation5 + $0x800] sm:$0xff]
    %v2903 = vld [vmem:[#allocation5 + $0x808] sm:$0xff]
    %v2904 = vld [vmem:[#allocation5 + $0x810] sm:$0xff]
    %v2905 = vld [vmem:[#allocation5 + $0x818] sm:$0xff]
    %v2906 = vld [vmem:[#allocation5 + $0x820] sm:$0xff]
    %v2907 = vld [vmem:[#allocation5 + $0x828] sm:$0xff]
    %v2908 = vld [vmem:[#allocation5 + $0x830] sm:$0xff]
    %v2909 = vld [vmem:[#allocation5 + $0x838] sm:$0xff]
    %v2910 = vld [vmem:[#allocation5 + $0x840] sm:$0xff]
    %v2911 = vld [vmem:[#allocation5 + $0x848] sm:$0xff]
    %v2912 = vld [vmem:[#allocation5 + $0x850] sm:$0xff]
    %v2913 = vld [vmem:[#allocation5 + $0x858] sm:$0xff]
    %v2914 = vld [vmem:[#allocation5 + $0x860] sm:$0xff]
    %v2915 = vld [vmem:[#allocation5 + $0x868] sm:$0xff]
    %v2916 = vld [vmem:[#allocation5 + $0x870] sm:$0xff]
    %v2917 = vld [vmem:[#allocation5 + $0x878] sm:$0xff]
    %v2918 = vld [vmem:[#allocation5 + $0x880] sm:$0xff]
    %v2919 = vld [vmem:[#allocation5 + $0x888] sm:$0xff]
    %v2920 = vld [vmem:[#allocation5 + $0x890] sm:$0xff]
    %v2921 = vld [vmem:[#allocation5 + $0x898] sm:$0xff]
    %v2922 = vld [vmem:[#allocation5 + $0x8a0] sm:$0xff]
    %v2923 = vld [vmem:[#allocation5 + $0x8a8] sm:$0xff]
    %v2924 = vld [vmem:[#allocation5 + $0x8b0] sm:$0xff]
    %v2925 = vld [vmem:[#allocation5 + $0x8b8] sm:$0xff]
    %v2926 = vld [vmem:[#allocation5 + $0x8c0] sm:$0xff]
    %v2927 = vld [vmem:[#allocation5 + $0x8c8] sm:$0xff]
    %v2928 = vld [vmem:[#allocation5 + $0x8d0] sm:$0xff]
    %v2929 = vld [vmem:[#allocation5 + $0x8d8] sm:$0xff]
    %v2930 = vld [vmem:[#allocation5 + $0x8e0] sm:$0xff]
    %v2931 = vld [vmem:[#allocation5 + $0x8e8] sm:$0xff]
    %v2932 = vld [vmem:[#allocation5 + $0x8f0] sm:$0xff]
    %v2933 = vld [vmem:[#allocation5 + $0x8f8] sm:$0xff]
    %v2934 = vld [vmem:[#allocation5 + $0x900] sm:$0xff]
    %v2935 = vld [vmem:[#allocation5 + $0x908] sm:$0xff]
    %v2936 = vld [vmem:[#allocation5 + $0x910] sm:$0xff]
    %v2937 = vld [vmem:[#allocation5 + $0x918] sm:$0xff]
    %v2938 = vld [vmem:[#allocation5 + $0x920] sm:$0xff]
    %v2939 = vld [vmem:[#allocation5 + $0x928] sm:$0xff]
    %v2940 = vld [vmem:[#allocation5 + $0x930] sm:$0xff]
    %v2941 = vld [vmem:[#allocation5 + $0x938] sm:$0xff]
    %v2942 = vld [vmem:[#allocation5 + $0x940] sm:$0xff]
    %v2943 = vld [vmem:[#allocation5 + $0x948] sm:$0xff]
    %v2944 = vld [vmem:[#allocation5 + $0x950] sm:$0xff]
    %v2945 = vld [vmem:[#allocation5 + $0x958] sm:$0xff]
    %v2946 = vld [vmem:[#allocation5 + $0x960] sm:$0xff]
    %v2947 = vld [vmem:[#allocation5 + $0x968] sm:$0xff]
    %v2948 = vld [vmem:[#allocation5 + $0x970] sm:$0xff]
    %v2949 = vld [vmem:[#allocation5 + $0x978] sm:$0xff]
    %v2950 = vld [vmem:[#allocation5 + $0x980] sm:$0xff]
    %v2951 = vld [vmem:[#allocation5 + $0x988] sm:$0xff]
    %v2952 = vld [vmem:[#allocation5 + $0x990] sm:$0xff]
    %v2953 = vld [vmem:[#allocation5 + $0x998] sm:$0xff]
    %v2954 = vld [vmem:[#allocation5 + $0x9a0] sm:$0xff]
    %v2955 = vld [vmem:[#allocation5 + $0x9a8] sm:$0xff]
    %v2956 = vld [vmem:[#allocation5 + $0x9b0] sm:$0xff]
    %v2957 = vld [vmem:[#allocation5 + $0x9b8] sm:$0xff]
    %v2958 = vld [vmem:[#allocation5 + $0x9c0] sm:$0xff]
    %v2959 = vld [vmem:[#allocation5 + $0x9c8] sm:$0xff]
    %v2960 = vld [vmem:[#allocation5 + $0x9d0] sm:$0xff]
    %v2961 = vld [vmem:[#allocation5 + $0x9d8] sm:$0xff]
    %v2962 = vld [vmem:[#allocation5 + $0x9e0] sm:$0xff]
    %v2963 = vld [vmem:[#allocation5 + $0x9e8] sm:$0xff]
    %v2964 = vld [vmem:[#allocation5 + $0x9f0] sm:$0xff]
    %v2965 = vld [vmem:[#allocation5 + $0x9f8] sm:$0xff]
    %v2966 = vld [vmem:[#allocation5 + $0xa00] sm:$0xff]
    %v2967 = vld [vmem:[#allocation5 + $0xa08] sm:$0xff]
    %v2968 = vld [vmem:[#allocation5 + $0xa10] sm:$0xff]
    %v2969 = vld [vmem:[#allocation5 + $0xa18] sm:$0xff]
    %v2970 = vld [vmem:[#allocation5 + $0xa20] sm:$0xff]
    %v2971 = vld [vmem:[#allocation5 + $0xa28] sm:$0xff]
    %v2972 = vld [vmem:[#allocation5 + $0xa30] sm:$0xff]
    %v2973 = vld [vmem:[#allocation5 + $0xa38] sm:$0xff]
    %v2974 = vld [vmem:[#allocation5 + $0xa40] sm:$0xff]
    %v2975 = vld [vmem:[#allocation5 + $0xa48] sm:$0xff]
    %v2976 = vld [vmem:[#allocation5 + $0xa50] sm:$0xff]
    %v2977 = vld [vmem:[#allocation5 + $0xa58] sm:$0xff]
    %v2978 = vld [vmem:[#allocation5 + $0xa60] sm:$0xff]
    %v2979 = vld [vmem:[#allocation5 + $0xa68] sm:$0xff]
    %v2980 = vld [vmem:[#allocation5 + $0xa70] sm:$0xff]
    %v2981 = vld [vmem:[#allocation5 + $0xa78] sm:$0xff]
    %v2982 = vld [vmem:[#allocation5 + $0xa80] sm:$0xff]
    %v2983 = vld [vmem:[#allocation5 + $0xa88] sm:$0xff]
    %v2984 = vld [vmem:[#allocation5 + $0xa90] sm:$0xff]
    %v2985 = vld [vmem:[#allocation5 + $0xa98] sm:$0xff]
    %v2986 = vld [vmem:[#allocation5 + $0xaa0] sm:$0xff]
    %v2987 = vld [vmem:[#allocation5 + $0xaa8] sm:$0xff]
    %v2988 = vld [vmem:[#allocation5 + $0xab0] sm:$0xff]
    %v2989 = vld [vmem:[#allocation5 + $0xab8] sm:$0xff]
    %v2990 = vld [vmem:[#allocation5 + $0xac0] sm:$0xff]
    %v2991 = vld [vmem:[#allocation5 + $0xac8] sm:$0xff]
    %v2992 = vld [vmem:[#allocation5 + $0xad0] sm:$0xff]
    %v2993 = vld [vmem:[#allocation5 + $0xad8] sm:$0xff]
    %v2994 = vld [vmem:[#allocation5 + $0xae0] sm:$0xff]
    %v2995 = vld [vmem:[#allocation5 + $0xae8] sm:$0xff]
    %v2996 = vld [vmem:[#allocation5 + $0xaf0] sm:$0xff]
    %v2997 = vld [vmem:[#allocation5 + $0xaf8] sm:$0xff]
    %v2998 = vld [vmem:[#allocation5 + $0xb00] sm:$0xff]
    %v2999 = vld [vmem:[#allocation5 + $0xb08] sm:$0xff]
    %v3000 = vld [vmem:[#allocation5 + $0xb10] sm:$0xff]
    %v3001 = vld [vmem:[#allocation5 + $0xb18] sm:$0xff]
    %v3002 = vld [vmem:[#allocation5 + $0xb20] sm:$0xff]
    %v3003 = vld [vmem:[#allocation5 + $0xb28] sm:$0xff]
    %v3004 = vld [vmem:[#allocation5 + $0xb30] sm:$0xff]
    %v3005 = vld [vmem:[#allocation5 + $0xb38] sm:$0xff]
    %v3006 = vld [vmem:[#allocation5 + $0xb40] sm:$0xff]
    %v3007 = vld [vmem:[#allocation5 + $0xb48] sm:$0xff]
    %v3008 = vld [vmem:[#allocation5 + $0xb50] sm:$0xff]
    %v3009 = vld [vmem:[#allocation5 + $0xb58] sm:$0xff]
    %v3010 = vld [vmem:[#allocation5 + $0xb60] sm:$0xff]
    %v3011 = vld [vmem:[#allocation5 + $0xb68] sm:$0xff]
    %v3012 = vld [vmem:[#allocation5 + $0xb70] sm:$0xff]
    %v3013 = vld [vmem:[#allocation5 + $0xb78] sm:$0xff]
    %v3014 = vld [vmem:[#allocation5 + $0xb80] sm:$0xff]
    %v3015 = vld [vmem:[#allocation5 + $0xb88] sm:$0xff]
    %v3016 = vld [vmem:[#allocation5 + $0xb90] sm:$0xff]
    %v3017 = vld [vmem:[#allocation5 + $0xb98] sm:$0xff]
    %v3018 = vld [vmem:[#allocation5 + $0xba0] sm:$0xff]
    %v3019 = vld [vmem:[#allocation5 + $0xba8] sm:$0xff]
    %v3020 = vld [vmem:[#allocation5 + $0xbb0] sm:$0xff]
    %v3021 = vld [vmem:[#allocation5 + $0xbb8] sm:$0xff]
    %v3022 = vld [vmem:[#allocation5 + $0xbc0] sm:$0xff]
    %v3023 = vld [vmem:[#allocation5 + $0xbc8] sm:$0xff]
    %v3024 = vld [vmem:[#allocation5 + $0xbd0] sm:$0xff]
    %v3025 = vld [vmem:[#allocation5 + $0xbd8] sm:$0xff]
    %v3026 = vld [vmem:[#allocation5 + $0xbe0] sm:$0xff]
    %v3027 = vld [vmem:[#allocation5 + $0xbe8] sm:$0xff]
    %v3028 = vld [vmem:[#allocation5 + $0xbf0] sm:$0xff]
    %v3029 = vld [vmem:[#allocation5 + $0xbf8] sm:$0xff]
    %v3030 = vld [vmem:[#allocation5 + $0xc00] sm:$0xff]
    %v3031 = vld [vmem:[#allocation5 + $0xc08] sm:$0xff]
    %v3032 = vld [vmem:[#allocation5 + $0xc10] sm:$0xff]
    %v3033 = vld [vmem:[#allocation5 + $0xc18] sm:$0xff]
    %v3034 = vld [vmem:[#allocation5 + $0xc20] sm:$0xff]
    %v3035 = vld [vmem:[#allocation5 + $0xc28] sm:$0xff]
    %v3036 = vld [vmem:[#allocation5 + $0xc30] sm:$0xff]
    %v3037 = vld [vmem:[#allocation5 + $0xc38] sm:$0xff]
    %v3038 = vld [vmem:[#allocation5 + $0xc40] sm:$0xff]
    %v3039 = vld [vmem:[#allocation5 + $0xc48] sm:$0xff]
    %v3040 = vld [vmem:[#allocation5 + $0xc50] sm:$0xff]
    %v3041 = vld [vmem:[#allocation5 + $0xc58] sm:$0xff]
    %v3042 = vld [vmem:[#allocation5 + $0xc60] sm:$0xff]
    %v3043 = vld [vmem:[#allocation5 + $0xc68] sm:$0xff]
    %v3044 = vld [vmem:[#allocation5 + $0xc70] sm:$0xff]
    %v3045 = vld [vmem:[#allocation5 + $0xc78] sm:$0xff]
    %v3046 = vld [vmem:[#allocation5 + $0xc80] sm:$0xff]
    %v3047 = vld [vmem:[#allocation5 + $0xc88] sm:$0xff]
    %v3048 = vld [vmem:[#allocation5 + $0xc90] sm:$0xff]
    %v3049 = vld [vmem:[#allocation5 + $0xc98] sm:$0xff]
    %v3050 = vld [vmem:[#allocation5 + $0xca0] sm:$0xff]
    %v3051 = vld [vmem:[#allocation5 + $0xca8] sm:$0xff]
    %v3052 = vld [vmem:[#allocation5 + $0xcb0] sm:$0xff]
    %v3053 = vld [vmem:[#allocation5 + $0xcb8] sm:$0xff]
    %v3054 = vld [vmem:[#allocation5 + $0xcc0] sm:$0xff]
    %v3055 = vld [vmem:[#allocation5 + $0xcc8] sm:$0xff]
    %v3056 = vld [vmem:[#allocation5 + $0xcd0] sm:$0xff]
    %v3057 = vld [vmem:[#allocation5 + $0xcd8] sm:$0xff]
    %v3058 = vld [vmem:[#allocation5 + $0xce0] sm:$0xff]
    %v3059 = vld [vmem:[#allocation5 + $0xce8] sm:$0xff]
    %v3060 = vld [vmem:[#allocation5 + $0xcf0] sm:$0xff]
    %v3061 = vld [vmem:[#allocation5 + $0xcf8] sm:$0xff]
    %v3062 = vld [vmem:[#allocation5 + $0xd00] sm:$0xff]
    %v3063 = vld [vmem:[#allocation5 + $0xd08] sm:$0xff]
    %v3064 = vld [vmem:[#allocation5 + $0xd10] sm:$0xff]
    %v3065 = vld [vmem:[#allocation5 + $0xd18] sm:$0xff]
    %v3066 = vld [vmem:[#allocation5 + $0xd20] sm:$0xff]
    %v3067 = vld [vmem:[#allocation5 + $0xd28] sm:$0xff]
    %v3068 = vld [vmem:[#allocation5 + $0xd30] sm:$0xff]
    %v3069 = vld [vmem:[#allocation5 + $0xd38] sm:$0xff]
    %v3070 = vld [vmem:[#allocation5 + $0xd40] sm:$0xff]
    %v3071 = vld [vmem:[#allocation5 + $0xd48] sm:$0xff]
    %v3072 = vld [vmem:[#allocation5 + $0xd50] sm:$0xff]
    %v3073 = vld [vmem:[#allocation5 + $0xd58] sm:$0xff]
    %v3074 = vld [vmem:[#allocation5 + $0xd60] sm:$0xff]
    %v3075 = vld [vmem:[#allocation5 + $0xd68] sm:$0xff]
    %v3076 = vld [vmem:[#allocation5 + $0xd70] sm:$0xff]
    %v3077 = vld [vmem:[#allocation5 + $0xd78] sm:$0xff]
    %v3078 = vld [vmem:[#allocation5 + $0xd80] sm:$0xff]
    %v3079 = vld [vmem:[#allocation5 + $0xd88] sm:$0xff]
    %v3080 = vld [vmem:[#allocation5 + $0xd90] sm:$0xff]
    %v3081 = vld [vmem:[#allocation5 + $0xd98] sm:$0xff]
    %v3082 = vld [vmem:[#allocation5 + $0xda0] sm:$0xff]
    %v3083 = vld [vmem:[#allocation5 + $0xda8] sm:$0xff]
    %v3084 = vld [vmem:[#allocation5 + $0xdb0] sm:$0xff]
    %v3085 = vld [vmem:[#allocation5 + $0xdb8] sm:$0xff]
    %v3086 = vld [vmem:[#allocation5 + $0xdc0] sm:$0xff]
    %v3087 = vld [vmem:[#allocation5 + $0xdc8] sm:$0xff]
    %v3088 = vld [vmem:[#allocation5 + $0xdd0] sm:$0xff]
    %v3089 = vld [vmem:[#allocation5 + $0xdd8] sm:$0xff]
    %v3090 = vld [vmem:[#allocation5 + $0xde0] sm:$0xff]
    %v3091 = vld [vmem:[#allocation5 + $0xde8] sm:$0xff]
    %v3092 = vld [vmem:[#allocation5 + $0xdf0] sm:$0xff]
    %v3093 = vld [vmem:[#allocation5 + $0xdf8] sm:$0xff]
    %v3094 = vld [vmem:[#allocation5 + $0xe00] sm:$0xff]
    %v3095 = vld [vmem:[#allocation5 + $0xe08] sm:$0xff]
    %v3096 = vld [vmem:[#allocation5 + $0xe10] sm:$0xff]
    %v3097 = vld [vmem:[#allocation5 + $0xe18] sm:$0xff]
    %v3098 = vld [vmem:[#allocation5 + $0xe20] sm:$0xff]
    %v3099 = vld [vmem:[#allocation5 + $0xe28] sm:$0xff]
    %v3100 = vld [vmem:[#allocation5 + $0xe30] sm:$0xff]
    %v3101 = vld [vmem:[#allocation5 + $0xe38] sm:$0xff]
    %v3102 = vld [vmem:[#allocation5 + $0xe40] sm:$0xff]
    %v3103 = vld [vmem:[#allocation5 + $0xe48] sm:$0xff]
    %v3104 = vld [vmem:[#allocation5 + $0xe50] sm:$0xff]
    %v3105 = vld [vmem:[#allocation5 + $0xe58] sm:$0xff]
    %v3106 = vld [vmem:[#allocation5 + $0xe60] sm:$0xff]
    %v3107 = vld [vmem:[#allocation5 + $0xe68] sm:$0xff]
    %v3108 = vld [vmem:[#allocation5 + $0xe70] sm:$0xff]
    %v3109 = vld [vmem:[#allocation5 + $0xe78] sm:$0xff]
    %v3110 = vld [vmem:[#allocation5 + $0xe80] sm:$0xff]
    %v3111 = vld [vmem:[#allocation5 + $0xe88] sm:$0xff]
    %v3112 = vld [vmem:[#allocation5 + $0xe90] sm:$0xff]
    %v3113 = vld [vmem:[#allocation5 + $0xe98] sm:$0xff]
    %v3114 = vld [vmem:[#allocation5 + $0xea0] sm:$0xff]
    %v3115 = vld [vmem:[#allocation5 + $0xea8] sm:$0xff]
    %v3116 = vld [vmem:[#allocation5 + $0xeb0] sm:$0xff]
    %v3117 = vld [vmem:[#allocation5 + $0xeb8] sm:$0xff]
    %v3118 = vld [vmem:[#allocation5 + $0xec0] sm:$0xff]
    %v3119 = vld [vmem:[#allocation5 + $0xec8] sm:$0xff]
    %v3120 = vld [vmem:[#allocation5 + $0xed0] sm:$0xff]
    %v3121 = vld [vmem:[#allocation5 + $0xed8] sm:$0xff]
    %v3122 = vld [vmem:[#allocation5 + $0xee0] sm:$0xff]
    %v3123 = vld [vmem:[#allocation5 + $0xee8] sm:$0xff]
    %v3124 = vld [vmem:[#allocation5 + $0xef0] sm:$0xff]
    %v3125 = vld [vmem:[#allocation5 + $0xef8] sm:$0xff]
    %v3126 = vld [vmem:[#allocation5 + $0xf00] sm:$0xff]
    %v3127 = vld [vmem:[#allocation5 + $0xf08] sm:$0xff]
    %v3128 = vld [vmem:[#allocation5 + $0xf10] sm:$0xff]
    %v3129 = vld [vmem:[#allocation5 + $0xf18] sm:$0xff]
    %v3130 = vld [vmem:[#allocation5 + $0xf20] sm:$0xff]
    %v3131 = vld [vmem:[#allocation5 + $0xf28] sm:$0xff]
    %v3132 = vld [vmem:[#allocation5 + $0xf30] sm:$0xff]
    %v3133 = vld [vmem:[#allocation5 + $0xf38] sm:$0xff]
    %v3134 = vld [vmem:[#allocation5 + $0xf40] sm:$0xff]
    %v3135 = vld [vmem:[#allocation5 + $0xf48] sm:$0xff]
    %v3136 = vld [vmem:[#allocation5 + $0xf50] sm:$0xff]
    %v3137 = vld [vmem:[#allocation5 + $0xf58] sm:$0xff]
    %v3138 = vld [vmem:[#allocation5 + $0xf60] sm:$0xff]
    %v3139 = vld [vmem:[#allocation5 + $0xf68] sm:$0xff]
    %v3140 = vld [vmem:[#allocation5 + $0xf70] sm:$0xff]
    %v3141 = vld [vmem:[#allocation5 + $0xf78] sm:$0xff]
    %v3142 = vld [vmem:[#allocation5 + $0xf80] sm:$0xff]
    %v3143 = vld [vmem:[#allocation5 + $0xf88] sm:$0xff]
    %v3144 = vld [vmem:[#allocation5 + $0xf90] sm:$0xff]
    %v3145 = vld [vmem:[#allocation5 + $0xf98] sm:$0xff]
    %v3146 = vld [vmem:[#allocation5 + $0xfa0] sm:$0xff]
    %v3147 = vld [vmem:[#allocation5 + $0xfa8] sm:$0xff]
    %v3148 = vld [vmem:[#allocation5 + $0xfb0] sm:$0xff]
    %v3149 = vld [vmem:[#allocation5 + $0xfb8] sm:$0xff]
    %v3150 = vld [vmem:[#allocation5 + $0xfc0] sm:$0xff]
    %v3151 = vld [vmem:[#allocation5 + $0xfc8] sm:$0xff]
    %v3152 = vld [vmem:[#allocation5 + $0xfd0] sm:$0xff]
    %v3153 = vld [vmem:[#allocation5 + $0xfd8] sm:$0xff]
    %v3154 = vld [vmem:[#allocation5 + $0xfe0] sm:$0xff]
    %v3155 = vld [vmem:[#allocation5 + $0xfe8] sm:$0xff]
    %v3156 = vld [vmem:[#allocation5 + $0xff0] sm:$0xff]
    %v3157 = vld [vmem:[#allocation5 + $0xff8] sm:$0xff]
    %v3158 = vld [vmem:[#allocation7] sm:$0xf]
    %v3160 = vlaneseq
    %v3161 = vshrl.u32 %v3160, 7
    %v3162 = vsub.s32 0, %v3161
    %v3163 = vrot.slane %v3158, %v3162
    %v3164 = vlaneseq
    %v3165 = vshrl.u32 %v3164, 7
    %v3166 = vsub.s32 1, %v3165
    %v3167 = vrot.slane %v3158, %v3166
    %v3168 = vlaneseq
    %v3169 = vshrl.u32 %v3168, 7
    %v3170 = vsub.s32 2, %v3169
    %v3171 = vrot.slane %v3158, %v3170
    %v3172 = vlaneseq
    %v3173 = vshrl.u32 %v3172, 7
    %v3174 = vsub.s32 3, %v3173
    %v3175 = vrot.slane %v3158, %v3174
    %3180 = vmatprep.subr.mxu0 %v2707
    %3181 = vmatpush1.msra.mxu0 %v2706
    %3182 = vmatprep.subr.mxu0 %v2703
    %3183 = vmatpush1.msra.mxu0 %v2702
    %3184 = vmatprep.subr.mxu0 %v2699
    %3185 = vmatpush1.msra.mxu0 %v2698
    %3186 = vmatprep.subr.mxu0 %v2695
    %3187 = vmatpush1.msra.mxu0 %v2694
    %3188 = vmatprep.subr.mxu0 %v2691
    %3189 = vmatpush1.msra.mxu0 %v2690
    %3190 = vmatprep.subr.mxu0 %v2687
    %3191 = vmatpush1.msra.mxu0 %v2686
    %3192 = vmatprep.subr.mxu0 %v2683
    %3193 = vmatpush1.msra.mxu0 %v2682
    %3194 = vmatprep.subr.mxu0 %v2679
    %3195 = vmatpush1.msra.mxu0 %v2678
    %3196 = vmatprep.subr.mxu0 %v2675
    %3197 = vmatpush1.msra.mxu0 %v2674
    %3198 = vmatprep.subr.mxu0 %v2671
    %3199 = vmatpush1.msra.mxu0 %v2670
    %3200 = vmatprep.subr.mxu0 %v2667
    %3201 = vmatpush1.msra.mxu0 %v2666
    %3202 = vmatprep.subr.mxu0 %v2663
    %3203 = vmatpush1.msra.mxu0 %v2662
    %3204 = vmatprep.subr.mxu0 %v2659
    %3205 = vmatpush1.msra.mxu0 %v2658
    %3206 = vmatprep.subr.mxu0 %v2655
    %3207 = vmatpush1.msra.mxu0 %v2654
    %3208 = vmatprep.subr.mxu0 %v2651
    %3209 = vmatpush1.msra.mxu0 %v2650
    %3210 = vmatprep.subr.mxu0 %v2647
    %3211 = vmatpush1.msra.mxu0 %v2646
    %3212 = vmatprep.subr.mxu0 %v2771
    %3213 = vmatpush2.msra.mxu0 %v2770
    %3214 = vmatprep.subr.mxu0 %v2767
    %3215 = vmatpush2.msra.mxu0 %v2766
    %3216 = vmatprep.subr.mxu0 %v2763
    %3217 = vmatpush2.msra.mxu0 %v2762
    %3218 = vmatprep.subr.mxu0 %v2759
    %3219 = vmatpush2.msra.mxu0 %v2758
    %3220 = vmatprep.subr.mxu0 %v2755
    %3221 = vmatpush2.msra.mxu0 %v2754
    %3222 = vmatprep.subr.mxu0 %v2751
    %3223 = vmatpush2.msra.mxu0 %v2750
    %3224 = vmatprep.subr.mxu0 %v2747
    %3225 = vmatpush2.msra.mxu0 %v2746
    %3226 = vmatprep.subr.mxu0 %v2743
    %3227 = vmatpush2.msra.mxu0 %v2742
    %3228 = vmatprep.subr.mxu0 %v2739
    %3229 = vmatpush2.msra.mxu0 %v2738
    %3230 = vmatprep.subr.mxu0 %v2735
    %3231 = vmatpush2.msra.mxu0 %v2734
    %3232 = vmatprep.subr.mxu0 %v2731
    %3233 = vmatpush2.msra.mxu0 %v2730
    %3234 = vmatprep.subr.mxu0 %v2727
    %3235 = vmatpush2.msra.mxu0 %v2726
    %3236 = vmatprep.subr.mxu0 %v2723
    %3237 = vmatpush2.msra.mxu0 %v2722
    %3238 = vmatprep.subr.mxu0 %v2719
    %3239 = vmatpush2.msra.mxu0 %v2718
    %3240 = vmatprep.subr.mxu0 %v2715
    %3241 = vmatpush2.msra.mxu0 %v2714
    %3242 = vmatprep.subr.mxu0 %v2711
    %3243 = vmatpush2.msra.mxu0 %v2710
    %3244 = vmatprep.mubr.f32.mxu0 %v2391
    %3245 = vmatmul.mubr.f32.gmra.mxu0 %v2390
    %v3246 = vpop.f32.mrf.mxu0
    %v3247 = vadd.f32 %v3163, %v3246
    %v3248 = vpop.f32.mrf.mxu0
    %v3249 = vadd.f32 %v3167, %v3248
    %3250 = vmatprep.mubr.f32.mxu0 %v2399
    %3251 = vmatmul.mubr.f32.gmra.mxu0 %v2398
    %v3252 = vpop.f32.mrf.mxu0
    %v3253 = vadd.f32 %v3163, %v3252
    %v3254 = vpop.f32.mrf.mxu0
    %v3255 = vadd.f32 %v3167, %v3254
    %3256 = vmatprep.mubr.f32.mxu0 %v2407
    %3257 = vmatmul.mubr.f32.gmra.mxu0 %v2406
    %v3258 = vpop.f32.mrf.mxu0
    %v3259 = vadd.f32 %v3163, %v3258
    %v3260 = vpop.f32.mrf.mxu0
    %v3261 = vadd.f32 %v3167, %v3260
    %3262 = vmatprep.mubr.f32.mxu0 %v2415
    %3263 = vmatmul.mubr.f32.gmra.mxu0 %v2414
    %v3264 = vpop.f32.mrf.mxu0
    %v3265 = vadd.f32 %v3163, %v3264
    %v3266 = vpop.f32.mrf.mxu0
    %v3267 = vadd.f32 %v3167, %v3266
    %3268 = vmatprep.mubr.f32.mxu0 %v2423
    %3269 = vmatmul.mubr.f32.gmra.mxu0 %v2422
    %v3270 = vpop.f32.mrf.mxu0
    %v3271 = vadd.f32 %v3163, %v3270
    %v3272 = vpop.f32.mrf.mxu0
    %v3273 = vadd.f32 %v3167, %v3272
    %3274 = vmatprep.mubr.f32.mxu0 %v2431
    %3275 = vmatmul.mubr.f32.gmra.mxu0 %v2430
    %v3276 = vpop.f32.mrf.mxu0
    %v3277 = vadd.f32 %v3163, %v3276
    %v3278 = vpop.f32.mrf.mxu0
    %v3279 = vadd.f32 %v3167, %v3278
    %3280 = vmatprep.mubr.f32.mxu0 %v2439
    %3281 = vmatmul.mubr.f32.gmra.mxu0 %v2438
    %v3282 = vpop.f32.mrf.mxu0
    %v3283 = vadd.f32 %v3163, %v3282
    %v3284 = vpop.f32.mrf.mxu0
    %v3285 = vadd.f32 %v3167, %v3284
    %3286 = vmatprep.mubr.f32.mxu0 %v2447
    %3287 = vmatmul.mubr.f32.gmra.mxu0 %v2446
    %v3288 = vpop.f32.mrf.mxu0
    %v3289 = vadd.f32 %v3163, %v3288
    %v3290 = vpop.f32.mrf.mxu0
    %v3291 = vadd.f32 %v3167, %v3290
    %3292 = vmatprep.mubr.f32.mxu0 %v2455
    %3293 = vmatmul.mubr.f32.gmra.mxu0 %v2454
    %v3294 = vpop.f32.mrf.mxu0
    %v3295 = vadd.f32 %v3163, %v3294
    %v3296 = vpop.f32.mrf.mxu0
    %v3297 = vadd.f32 %v3167, %v3296
    %3298 = vmatprep.mubr.f32.mxu0 %v2463
    %3299 = vmatmul.mubr.f32.gmra.mxu0 %v2462
    %v3300 = vpop.f32.mrf.mxu0
    %v3301 = vadd.f32 %v3163, %v3300
    %v3302 = vpop.f32.mrf.mxu0
    %v3303 = vadd.f32 %v3167, %v3302
    %3304 = vmatprep.mubr.f32.mxu0 %v2471
    %3305 = vmatmul.mubr.f32.gmra.mxu0 %v2470
    %v3306 = vpop.f32.mrf.mxu0
    %v3307 = vadd.f32 %v3163, %v3306
    %v3308 = vpop.f32.mrf.mxu0
    %v3309 = vadd.f32 %v3167, %v3308
    %3310 = vmatprep.mubr.f32.mxu0 %v2479
    %3311 = vmatmul.mubr.f32.gmra.mxu0 %v2478
    %v3312 = vpop.f32.mrf.mxu0
    %v3313 = vadd.f32 %v3163, %v3312
    %v3314 = vpop.f32.mrf.mxu0
    %v3315 = vadd.f32 %v3167, %v3314
    %3316 = vmatprep.mubr.f32.mxu0 %v2487
    %3317 = vmatmul.mubr.f32.gmra.mxu0 %v2486
    %v3318 = vpop.f32.mrf.mxu0
    %v3319 = vadd.f32 %v3163, %v3318
    %v3320 = vpop.f32.mrf.mxu0
    %v3321 = vadd.f32 %v3167, %v3320
    %3322 = vmatprep.mubr.f32.mxu0 %v2495
    %3323 = vmatmul.mubr.f32.gmra.mxu0 %v2494
    %v3324 = vpop.f32.mrf.mxu0
    %v3325 = vadd.f32 %v3163, %v3324
    %v3326 = vpop.f32.mrf.mxu0
    %v3327 = vadd.f32 %v3167, %v3326
    %3328 = vmatprep.mubr.f32.mxu0 %v2503
    %3329 = vmatmul.mubr.f32.gmra.mxu0 %v2502
    %v3330 = vpop.f32.mrf.mxu0
    %v3331 = vadd.f32 %v3163, %v3330
    %v3332 = vpop.f32.mrf.mxu0
    %v3333 = vadd.f32 %v3167, %v3332
    %3334 = vmatprep.mubr.f32.mxu0 %v2511
    %3335 = vmatmul.mubr.f32.gmra.mxu0 %v2510
    %v3336 = vpop.f32.mrf.mxu0
    %v3337 = vadd.f32 %v3163, %v3336
    %v3338 = vpop.f32.mrf.mxu0
    %v3339 = vadd.f32 %v3167, %v3338
    %3340 = vmatprep.mubr.f32.mxu0 %v2519
    %3341 = vmatmul.mubr.f32.gmra.mxu0 %v2518
    %v3342 = vpop.f32.mrf.mxu0
    %v3343 = vadd.f32 %v3163, %v3342
    %v3344 = vpop.f32.mrf.mxu0
    %v3345 = vadd.f32 %v3167, %v3344
    %3346 = vmatprep.mubr.f32.mxu0 %v2527
    %3347 = vmatmul.mubr.f32.gmra.mxu0 %v2526
    %v3348 = vpop.f32.mrf.mxu0
    %v3349 = vadd.f32 %v3163, %v3348
    %v3350 = vpop.f32.mrf.mxu0
    %v3351 = vadd.f32 %v3167, %v3350
    %3352 = vmatprep.mubr.f32.mxu0 %v2535
    %3353 = vmatmul.mubr.f32.gmra.mxu0 %v2534
    %v3354 = vpop.f32.mrf.mxu0
    %v3355 = vadd.f32 %v3163, %v3354
    %v3356 = vpop.f32.mrf.mxu0
    %v3357 = vadd.f32 %v3167, %v3356
    %3358 = vmatprep.mubr.f32.mxu0 %v2543
    %3359 = vmatmul.mubr.f32.gmra.mxu0 %v2542
    %v3360 = vpop.f32.mrf.mxu0
    %v3361 = vadd.f32 %v3163, %v3360
    %v3362 = vpop.f32.mrf.mxu0
    %v3363 = vadd.f32 %v3167, %v3362
    %3364 = vmatprep.mubr.f32.mxu0 %v2551
    %3365 = vmatmul.mubr.f32.gmra.mxu0 %v2550
    %v3366 = vpop.f32.mrf.mxu0
    %v3367 = vadd.f32 %v3163, %v3366
    %v3368 = vpop.f32.mrf.mxu0
    %v3369 = vadd.f32 %v3167, %v3368
    %3370 = vmatprep.mubr.f32.mxu0 %v2559
    %3371 = vmatmul.mubr.f32.gmra.mxu0 %v2558
    %v3372 = vpop.f32.mrf.mxu0
    %v3373 = vadd.f32 %v3163, %v3372
    %v3374 = vpop.f32.mrf.mxu0
    %v3375 = vadd.f32 %v3167, %v3374
    %3376 = vmatprep.mubr.f32.mxu0 %v2567
    %3377 = vmatmul.mubr.f32.gmra.mxu0 %v2566
    %v3378 = vpop.f32.mrf.mxu0
    %v3379 = vadd.f32 %v3163, %v3378
    %v3380 = vpop.f32.mrf.mxu0
    %v3381 = vadd.f32 %v3167, %v3380
    %3382 = vmatprep.mubr.f32.mxu0 %v2575
    %3383 = vmatmul.mubr.f32.gmra.mxu0 %v2574
    %v3384 = vpop.f32.mrf.mxu0
    %v3385 = vadd.f32 %v3163, %v3384
    %v3386 = vpop.f32.mrf.mxu0
    %v3387 = vadd.f32 %v3167, %v3386
    %3388 = vmatprep.mubr.f32.mxu0 %v2583
    %3389 = vmatmul.mubr.f32.gmra.mxu0 %v2582
    %v3390 = vpop.f32.mrf.mxu0
    %v3391 = vadd.f32 %v3163, %v3390
    %v3392 = vpop.f32.mrf.mxu0
    %v3393 = vadd.f32 %v3167, %v3392
    %3394 = vmatprep.mubr.f32.mxu0 %v2591
    %3395 = vmatmul.mubr.f32.gmra.mxu0 %v2590
    %v3396 = vpop.f32.mrf.mxu0
    %v3397 = vadd.f32 %v3163, %v3396
    %v3398 = vpop.f32.mrf.mxu0
    %v3399 = vadd.f32 %v3167, %v3398
    %3400 = vmatprep.mubr.f32.mxu0 %v2599
    %3401 = vmatmul.mubr.f32.gmra.mxu0 %v2598
    %v3402 = vpop.f32.mrf.mxu0
    %v3403 = vadd.f32 %v3163, %v3402
    %v3404 = vpop.f32.mrf.mxu0
    %v3405 = vadd.f32 %v3167, %v3404
    %3406 = vmatprep.mubr.f32.mxu0 %v2607
    %3407 = vmatmul.mubr.f32.gmra.mxu0 %v2606
    %v3408 = vpop.f32.mrf.mxu0
    %v3409 = vadd.f32 %v3163, %v3408
    %v3410 = vpop.f32.mrf.mxu0
    %v3411 = vadd.f32 %v3167, %v3410
    %3412 = vmatprep.mubr.f32.mxu0 %v2615
    %3413 = vmatmul.mubr.f32.gmra.mxu0 %v2614
    %v3414 = vpop.f32.mrf.mxu0
    %v3415 = vadd.f32 %v3163, %v3414
    %v3416 = vpop.f32.mrf.mxu0
    %v3417 = vadd.f32 %v3167, %v3416
    %3418 = vmatprep.mubr.f32.mxu0 %v2623
    %3419 = vmatmul.mubr.f32.gmra.mxu0 %v2622
    %v3420 = vpop.f32.mrf.mxu0
    %v3421 = vadd.f32 %v3163, %v3420
    %v3422 = vpop.f32.mrf.mxu0
    %v3423 = vadd.f32 %v3167, %v3422
    %3424 = vmatprep.mubr.f32.mxu0 %v2631
    %3425 = vmatmul.mubr.f32.gmra.mxu0 %v2630
    %v3426 = vpop.f32.mrf.mxu0
    %v3427 = vadd.f32 %v3163, %v3426
    %v3428 = vpop.f32.mrf.mxu0
    %v3429 = vadd.f32 %v3167, %v3428
    %3430 = vmatprep.mubr.f32.mxu0 %v2639
    %3431 = vmatmul.mubr.f32.gmra.mxu0 %v2638
    %v3432 = vpop.f32.mrf.mxu0
    %v3433 = vadd.f32 %v3163, %v3432
    %v3434 = vpop.f32.mrf.mxu0
    %v3435 = vadd.f32 %v3167, %v3434
    %3436 = vdwg.mxu0
    %3437 = vmatprep.subr.mxu0 %v2835
    %3438 = vmatpush1.msra.mxu0 %v2834
    %3439 = vmatprep.subr.mxu0 %v2831
    %3440 = vmatpush1.msra.mxu0 %v2830
    %3441 = vmatprep.subr.mxu0 %v2827
    %3442 = vmatpush1.msra.mxu0 %v2826
    %3443 = vmatprep.subr.mxu0 %v2823
    %3444 = vmatpush1.msra.mxu0 %v2822
    %3445 = vmatprep.subr.mxu0 %v2819
    %3446 = vmatpush1.msra.mxu0 %v2818
    %3447 = vmatprep.subr.mxu0 %v2815
    %3448 = vmatpush1.msra.mxu0 %v2814
    %3449 = vmatprep.subr.mxu0 %v2811
    %3450 = vmatpush1.msra.mxu0 %v2810
    %3451 = vmatprep.subr.mxu0 %v2807
    %3452 = vmatpush1.msra.mxu0 %v2806
    %3453 = vmatprep.subr.mxu0 %v2803
    %3454 = vmatpush1.msra.mxu0 %v2802
    %3455 = vmatprep.subr.mxu0 %v2799
    %3456 = vmatpush1.msra.mxu0 %v2798
    %3457 = vmatprep.subr.mxu0 %v2795
    %3458 = vmatpush1.msra.mxu0 %v2794
    %3459 = vmatprep.subr.mxu0 %v2791
    %3460 = vmatpush1.msra.mxu0 %v2790
    %3461 = vmatprep.subr.mxu0 %v2787
    %3462 = vmatpush1.msra.mxu0 %v2786
    %3463 = vmatprep.subr.mxu0 %v2783
    %3464 = vmatpush1.msra.mxu0 %v2782
    %3465 = vmatprep.subr.mxu0 %v2779
    %3466 = vmatpush1.msra.mxu0 %v2778
    %3467 = vmatprep.subr.mxu0 %v2775
    %3468 = vmatpush1.msra.mxu0 %v2774
    %3469 = vmatprep.subr.mxu0 %v2899
    %3470 = vmatpush2.msra.mxu0 %v2898
    %3471 = vmatprep.subr.mxu0 %v2895
    %3472 = vmatpush2.msra.mxu0 %v2894
    %3473 = vmatprep.subr.mxu0 %v2891
    %3474 = vmatpush2.msra.mxu0 %v2890
    %3475 = vmatprep.subr.mxu0 %v2887
    %3476 = vmatpush2.msra.mxu0 %v2886
    %3477 = vmatprep.subr.mxu0 %v2883
    %3478 = vmatpush2.msra.mxu0 %v2882
    %3479 = vmatprep.subr.mxu0 %v2879
    %3480 = vmatpush2.msra.mxu0 %v2878
    %3481 = vmatprep.subr.mxu0 %v2875
    %3482 = vmatpush2.msra.mxu0 %v2874
    %3483 = vmatprep.subr.mxu0 %v2871
    %3484 = vmatpush2.msra.mxu0 %v2870
    %3485 = vmatprep.subr.mxu0 %v2867
    %3486 = vmatpush2.msra.mxu0 %v2866
    %3487 = vmatprep.subr.mxu0 %v2863
    %3488 = vmatpush2.msra.mxu0 %v2862
    %3489 = vmatprep.subr.mxu0 %v2859
    %3490 = vmatpush2.msra.mxu0 %v2858
    %3491 = vmatprep.subr.mxu0 %v2855
    %3492 = vmatpush2.msra.mxu0 %v2854
    %3493 = vmatprep.subr.mxu0 %v2851
    %3494 = vmatpush2.msra.mxu0 %v2850
    %3495 = vmatprep.subr.mxu0 %v2847
    %3496 = vmatpush2.msra.mxu0 %v2846
    %3497 = vmatprep.subr.mxu0 %v2843
    %3498 = vmatpush2.msra.mxu0 %v2842
    %3499 = vmatprep.subr.mxu0 %v2839
    %3500 = vmatpush2.msra.mxu0 %v2838
    %3501 = vmatprep.mubr.f32.mxu0 %v2393
    %3502 = vmatmul.mubr.f32.gmra.mxu0 %v2392
    %v3503 = vpop.f32.mrf.mxu0
    %v3504 = vadd.f32 %v3247, %v3503
    %v3505 = vpop.f32.mrf.mxu0
    %v3506 = vadd.f32 %v3249, %v3505
    %3507 = vmatprep.mubr.f32.mxu0 %v2401
    %3508 = vmatmul.mubr.f32.gmra.mxu0 %v2400
    %v3509 = vpop.f32.mrf.mxu0
    %v3510 = vadd.f32 %v3253, %v3509
    %v3511 = vpop.f32.mrf.mxu0
    %v3512 = vadd.f32 %v3255, %v3511
    %3513 = vmatprep.mubr.f32.mxu0 %v2409
    %3514 = vmatmul.mubr.f32.gmra.mxu0 %v2408
    %v3515 = vpop.f32.mrf.mxu0
    %v3516 = vadd.f32 %v3259, %v3515
    %v3517 = vpop.f32.mrf.mxu0
    %v3518 = vadd.f32 %v3261, %v3517
    %3519 = vmatprep.mubr.f32.mxu0 %v2417
    %3520 = vmatmul.mubr.f32.gmra.mxu0 %v2416
    %v3521 = vpop.f32.mrf.mxu0
    %v3522 = vadd.f32 %v3265, %v3521
    %v3523 = vpop.f32.mrf.mxu0
    %v3524 = vadd.f32 %v3267, %v3523
    %3525 = vmatprep.mubr.f32.mxu0 %v2425
    %3526 = vmatmul.mubr.f32.gmra.mxu0 %v2424
    %v3527 = vpop.f32.mrf.mxu0
    %v3528 = vadd.f32 %v3271, %v3527
    %v3529 = vpop.f32.mrf.mxu0
    %v3530 = vadd.f32 %v3273, %v3529
    %3531 = vmatprep.mubr.f32.mxu0 %v2433
    %3532 = vmatmul.mubr.f32.gmra.mxu0 %v2432
    %v3533 = vpop.f32.mrf.mxu0
    %v3534 = vadd.f32 %v3277, %v3533
    %v3535 = vpop.f32.mrf.mxu0
    %v3536 = vadd.f32 %v3279, %v3535
    %3537 = vmatprep.mubr.f32.mxu0 %v2441
    %3538 = vmatmul.mubr.f32.gmra.mxu0 %v2440
    %v3539 = vpop.f32.mrf.mxu0
    %v3540 = vadd.f32 %v3283, %v3539
    %v3541 = vpop.f32.mrf.mxu0
    %v3542 = vadd.f32 %v3285, %v3541
    %3543 = vmatprep.mubr.f32.mxu0 %v2449
    %3544 = vmatmul.mubr.f32.gmra.mxu0 %v2448
    %v3545 = vpop.f32.mrf.mxu0
    %v3546 = vadd.f32 %v3289, %v3545
    %v3547 = vpop.f32.mrf.mxu0
    %v3548 = vadd.f32 %v3291, %v3547
    %3549 = vmatprep.mubr.f32.mxu0 %v2457
    %3550 = vmatmul.mubr.f32.gmra.mxu0 %v2456
    %v3551 = vpop.f32.mrf.mxu0
    %v3552 = vadd.f32 %v3295, %v3551
    %v3553 = vpop.f32.mrf.mxu0
    %v3554 = vadd.f32 %v3297, %v3553
    %3555 = vmatprep.mubr.f32.mxu0 %v2465
    %3556 = vmatmul.mubr.f32.gmra.mxu0 %v2464
    %v3557 = vpop.f32.mrf.mxu0
    %v3558 = vadd.f32 %v3301, %v3557
    %v3559 = vpop.f32.mrf.mxu0
    %v3560 = vadd.f32 %v3303, %v3559
    %3561 = vmatprep.mubr.f32.mxu0 %v2473
    %3562 = vmatmul.mubr.f32.gmra.mxu0 %v2472
    %v3563 = vpop.f32.mrf.mxu0
    %v3564 = vadd.f32 %v3307, %v3563
    %v3565 = vpop.f32.mrf.mxu0
    %v3566 = vadd.f32 %v3309, %v3565
    %3567 = vmatprep.mubr.f32.mxu0 %v2481
    %3568 = vmatmul.mubr.f32.gmra.mxu0 %v2480
    %v3569 = vpop.f32.mrf.mxu0
    %v3570 = vadd.f32 %v3313, %v3569
    %v3571 = vpop.f32.mrf.mxu0
    %v3572 = vadd.f32 %v3315, %v3571
    %3573 = vmatprep.mubr.f32.mxu0 %v2489
    %3574 = vmatmul.mubr.f32.gmra.mxu0 %v2488
    %v3575 = vpop.f32.mrf.mxu0
    %v3576 = vadd.f32 %v3319, %v3575
    %v3577 = vpop.f32.mrf.mxu0
    %v3578 = vadd.f32 %v3321, %v3577
    %3579 = vmatprep.mubr.f32.mxu0 %v2497
    %3580 = vmatmul.mubr.f32.gmra.mxu0 %v2496
    %v3581 = vpop.f32.mrf.mxu0
    %v3582 = vadd.f32 %v3325, %v3581
    %v3583 = vpop.f32.mrf.mxu0
    %v3584 = vadd.f32 %v3327, %v3583
    %3585 = vmatprep.mubr.f32.mxu0 %v2505
    %3586 = vmatmul.mubr.f32.gmra.mxu0 %v2504
    %v3587 = vpop.f32.mrf.mxu0
    %v3588 = vadd.f32 %v3331, %v3587
    %v3589 = vpop.f32.mrf.mxu0
    %v3590 = vadd.f32 %v3333, %v3589
    %3591 = vmatprep.mubr.f32.mxu0 %v2513
    %3592 = vmatmul.mubr.f32.gmra.mxu0 %v2512
    %v3593 = vpop.f32.mrf.mxu0
    %v3594 = vadd.f32 %v3337, %v3593
    %v3595 = vpop.f32.mrf.mxu0
    %v3596 = vadd.f32 %v3339, %v3595
    %3597 = vmatprep.mubr.f32.mxu0 %v2521
    %3598 = vmatmul.mubr.f32.gmra.mxu0 %v2520
    %v3599 = vpop.f32.mrf.mxu0
    %v3600 = vadd.f32 %v3343, %v3599
    %v3601 = vpop.f32.mrf.mxu0
    %v3602 = vadd.f32 %v3345, %v3601
    %3603 = vmatprep.mubr.f32.mxu0 %v2529
    %3604 = vmatmul.mubr.f32.gmra.mxu0 %v2528
    %v3605 = vpop.f32.mrf.mxu0
    %v3606 = vadd.f32 %v3349, %v3605
    %v3607 = vpop.f32.mrf.mxu0
    %v3608 = vadd.f32 %v3351, %v3607
    %3609 = vmatprep.mubr.f32.mxu0 %v2537
    %3610 = vmatmul.mubr.f32.gmra.mxu0 %v2536
    %v3611 = vpop.f32.mrf.mxu0
    %v3612 = vadd.f32 %v3355, %v3611
    %v3613 = vpop.f32.mrf.mxu0
    %v3614 = vadd.f32 %v3357, %v3613
    %3615 = vmatprep.mubr.f32.mxu0 %v2545
    %3616 = vmatmul.mubr.f32.gmra.mxu0 %v2544
    %v3617 = vpop.f32.mrf.mxu0
    %v3618 = vadd.f32 %v3361, %v3617
    %v3619 = vpop.f32.mrf.mxu0
    %v3620 = vadd.f32 %v3363, %v3619
    %3621 = vmatprep.mubr.f32.mxu0 %v2553
    %3622 = vmatmul.mubr.f32.gmra.mxu0 %v2552
    %v3623 = vpop.f32.mrf.mxu0
    %v3624 = vadd.f32 %v3367, %v3623
    %v3625 = vpop.f32.mrf.mxu0
    %v3626 = vadd.f32 %v3369, %v3625
    %3627 = vmatprep.mubr.f32.mxu0 %v2561
    %3628 = vmatmul.mubr.f32.gmra.mxu0 %v2560
    %v3629 = vpop.f32.mrf.mxu0
    %v3630 = vadd.f32 %v3373, %v3629
    %v3631 = vpop.f32.mrf.mxu0
    %v3632 = vadd.f32 %v3375, %v3631
    %3633 = vmatprep.mubr.f32.mxu0 %v2569
    %3634 = vmatmul.mubr.f32.gmra.mxu0 %v2568
    %v3635 = vpop.f32.mrf.mxu0
    %v3636 = vadd.f32 %v3379, %v3635
    %v3637 = vpop.f32.mrf.mxu0
    %v3638 = vadd.f32 %v3381, %v3637
    %3639 = vmatprep.mubr.f32.mxu0 %v2577
    %3640 = vmatmul.mubr.f32.gmra.mxu0 %v2576
    %v3641 = vpop.f32.mrf.mxu0
    %v3642 = vadd.f32 %v3385, %v3641
    %v3643 = vpop.f32.mrf.mxu0
    %v3644 = vadd.f32 %v3387, %v3643
    %3645 = vmatprep.mubr.f32.mxu0 %v2585
    %3646 = vmatmul.mubr.f32.gmra.mxu0 %v2584
    %v3647 = vpop.f32.mrf.mxu0
    %v3648 = vadd.f32 %v3391, %v3647
    %v3649 = vpop.f32.mrf.mxu0
    %v3650 = vadd.f32 %v3393, %v3649
    %3651 = vmatprep.mubr.f32.mxu0 %v2593
    %3652 = vmatmul.mubr.f32.gmra.mxu0 %v2592
    %v3653 = vpop.f32.mrf.mxu0
    %v3654 = vadd.f32 %v3397, %v3653
    %v3655 = vpop.f32.mrf.mxu0
    %v3656 = vadd.f32 %v3399, %v3655
    %3657 = vmatprep.mubr.f32.mxu0 %v2601
    %3658 = vmatmul.mubr.f32.gmra.mxu0 %v2600
    %v3659 = vpop.f32.mrf.mxu0
    %v3660 = vadd.f32 %v3403, %v3659
    %v3661 = vpop.f32.mrf.mxu0
    %v3662 = vadd.f32 %v3405, %v3661
    %3663 = vmatprep.mubr.f32.mxu0 %v2609
    %3664 = vmatmul.mubr.f32.gmra.mxu0 %v2608
    %v3665 = vpop.f32.mrf.mxu0
    %v3666 = vadd.f32 %v3409, %v3665
    %v3667 = vpop.f32.mrf.mxu0
    %v3668 = vadd.f32 %v3411, %v3667
    %3669 = vmatprep.mubr.f32.mxu0 %v2617
    %3670 = vmatmul.mubr.f32.gmra.mxu0 %v2616
    %v3671 = vpop.f32.mrf.mxu0
    %v3672 = vadd.f32 %v3415, %v3671
    %v3673 = vpop.f32.mrf.mxu0
    %v3674 = vadd.f32 %v3417, %v3673
    %3675 = vmatprep.mubr.f32.mxu0 %v2625
    %3676 = vmatmul.mubr.f32.gmra.mxu0 %v2624
    %v3677 = vpop.f32.mrf.mxu0
    %v3678 = vadd.f32 %v3421, %v3677
    %v3679 = vpop.f32.mrf.mxu0
    %v3680 = vadd.f32 %v3423, %v3679
    %3681 = vmatprep.mubr.f32.mxu0 %v2633
    %3682 = vmatmul.mubr.f32.gmra.mxu0 %v2632
    %v3683 = vpop.f32.mrf.mxu0
    %v3684 = vadd.f32 %v3427, %v3683
    %v3685 = vpop.f32.mrf.mxu0
    %v3686 = vadd.f32 %v3429, %v3685
    %3687 = vmatprep.mubr.f32.mxu0 %v2641
    %3688 = vmatmul.mubr.f32.gmra.mxu0 %v2640
    %v3689 = vpop.f32.mrf.mxu0
    %v3690 = vadd.f32 %v3433, %v3689
    %v3691 = vpop.f32.mrf.mxu0
    %v3692 = vadd.f32 %v3435, %v3691
    %3693 = vdwg.mxu0
    %3694 = vmatprep.subr.mxu0 %v2963
    %3695 = vmatpush1.msra.mxu0 %v2962
    %3696 = vmatprep.subr.mxu0 %v2959
    %3697 = vmatpush1.msra.mxu0 %v2958
    %3698 = vmatprep.subr.mxu0 %v2955
    %3699 = vmatpush1.msra.mxu0 %v2954
    %3700 = vmatprep.subr.mxu0 %v2951
    %3701 = vmatpush1.msra.mxu0 %v2950
    %3702 = vmatprep.subr.mxu0 %v2947
    %3703 = vmatpush1.msra.mxu0 %v2946
    %3704 = vmatprep.subr.mxu0 %v2943
    %3705 = vmatpush1.msra.mxu0 %v2942
    %3706 = vmatprep.subr.mxu0 %v2939
    %3707 = vmatpush1.msra.mxu0 %v2938
    %3708 = vmatprep.subr.mxu0 %v2935
    %3709 = vmatpush1.msra.mxu0 %v2934
    %3710 = vmatprep.subr.mxu0 %v2931
    %3711 = vmatpush1.msra.mxu0 %v2930
    %3712 = vmatprep.subr.mxu0 %v2927
    %3713 = vmatpush1.msra.mxu0 %v2926
    %3714 = vmatprep.subr.mxu0 %v2923
    %3715 = vmatpush1.msra.mxu0 %v2922
    %3716 = vmatprep.subr.mxu0 %v2919
    %3717 = vmatpush1.msra.mxu0 %v2918
    %3718 = vmatprep.subr.mxu0 %v2915
    %3719 = vmatpush1.msra.mxu0 %v2914
    %3720 = vmatprep.subr.mxu0 %v2911
    %3721 = vmatpush1.msra.mxu0 %v2910
    %3722 = vmatprep.subr.mxu0 %v2907
    %3723 = vmatpush1.msra.mxu0 %v2906
    %3724 = vmatprep.subr.mxu0 %v2903
    %3725 = vmatpush1.msra.mxu0 %v2902
    %3726 = vmatprep.subr.mxu0 %v3027
    %3727 = vmatpush2.msra.mxu0 %v3026
    %3728 = vmatprep.subr.mxu0 %v3023
    %3729 = vmatpush2.msra.mxu0 %v3022
    %3730 = vmatprep.subr.mxu0 %v3019
    %3731 = vmatpush2.msra.mxu0 %v3018
    %3732 = vmatprep.subr.mxu0 %v3015
    %3733 = vmatpush2.msra.mxu0 %v3014
    %3734 = vmatprep.subr.mxu0 %v3011
    %3735 = vmatpush2.msra.mxu0 %v3010
    %3736 = vmatprep.subr.mxu0 %v3007
    %3737 = vmatpush2.msra.mxu0 %v3006
    %3738 = vmatprep.subr.mxu0 %v3003
    %3739 = vmatpush2.msra.mxu0 %v3002
    %3740 = vmatprep.subr.mxu0 %v2999
    %3741 = vmatpush2.msra.mxu0 %v2998
    %3742 = vmatprep.subr.mxu0 %v2995
    %3743 = vmatpush2.msra.mxu0 %v2994
    %3744 = vmatprep.subr.mxu0 %v2991
    %3745 = vmatpush2.msra.mxu0 %v2990
    %3746 = vmatprep.subr.mxu0 %v2987
    %3747 = vmatpush2.msra.mxu0 %v2986
    %3748 = vmatprep.subr.mxu0 %v2983
    %3749 = vmatpush2.msra.mxu0 %v2982
    %3750 = vmatprep.subr.mxu0 %v2979
    %3751 = vmatpush2.msra.mxu0 %v2978
    %3752 = vmatprep.subr.mxu0 %v2975
    %3753 = vmatpush2.msra.mxu0 %v2974
    %3754 = vmatprep.subr.mxu0 %v2971
    %3755 = vmatpush2.msra.mxu0 %v2970
    %3756 = vmatprep.subr.mxu0 %v2967
    %3757 = vmatpush2.msra.mxu0 %v2966
    %3758 = vmatprep.mubr.f32.mxu0 %v2395
    %3759 = vmatmul.mubr.f32.gmra.mxu0 %v2394
    %v3760 = vpop.f32.mrf.mxu0
    %v3761 = vadd.f32 %v3504, %v3760
    %v3762 = vpop.f32.mrf.mxu0
    %v3763 = vadd.f32 %v3506, %v3762
    %3764 = vmatprep.mubr.f32.mxu0 %v2403
    %3765 = vmatmul.mubr.f32.gmra.mxu0 %v2402
    %v3766 = vpop.f32.mrf.mxu0
    %v3767 = vadd.f32 %v3510, %v3766
    %v3768 = vpop.f32.mrf.mxu0
    %v3769 = vadd.f32 %v3512, %v3768
    %3770 = vmatprep.mubr.f32.mxu0 %v2411
    %3771 = vmatmul.mubr.f32.gmra.mxu0 %v2410
    %v3772 = vpop.f32.mrf.mxu0
    %v3773 = vadd.f32 %v3516, %v3772
    %v3774 = vpop.f32.mrf.mxu0
    %v3775 = vadd.f32 %v3518, %v3774
    %3776 = vmatprep.mubr.f32.mxu0 %v2419
    %3777 = vmatmul.mubr.f32.gmra.mxu0 %v2418
    %v3778 = vpop.f32.mrf.mxu0
    %v3779 = vadd.f32 %v3522, %v3778
    %v3780 = vpop.f32.mrf.mxu0
    %v3781 = vadd.f32 %v3524, %v3780
    %3782 = vmatprep.mubr.f32.mxu0 %v2427
    %3783 = vmatmul.mubr.f32.gmra.mxu0 %v2426
    %v3784 = vpop.f32.mrf.mxu0
    %v3785 = vadd.f32 %v3528, %v3784
    %v3786 = vpop.f32.mrf.mxu0
    %v3787 = vadd.f32 %v3530, %v3786
    %3788 = vmatprep.mubr.f32.mxu0 %v2435
    %3789 = vmatmul.mubr.f32.gmra.mxu0 %v2434
    %v3790 = vpop.f32.mrf.mxu0
    %v3791 = vadd.f32 %v3534, %v3790
    %v3792 = vpop.f32.mrf.mxu0
    %v3793 = vadd.f32 %v3536, %v3792
    %3794 = vmatprep.mubr.f32.mxu0 %v2443
    %3795 = vmatmul.mubr.f32.gmra.mxu0 %v2442
    %v3796 = vpop.f32.mrf.mxu0
    %v3797 = vadd.f32 %v3540, %v3796
    %v3798 = vpop.f32.mrf.mxu0
    %v3799 = vadd.f32 %v3542, %v3798
    %3800 = vmatprep.mubr.f32.mxu0 %v2451
    %3801 = vmatmul.mubr.f32.gmra.mxu0 %v2450
    %v3802 = vpop.f32.mrf.mxu0
    %v3803 = vadd.f32 %v3546, %v3802
    %v3804 = vpop.f32.mrf.mxu0
    %v3805 = vadd.f32 %v3548, %v3804
    %3806 = vmatprep.mubr.f32.mxu0 %v2459
    %3807 = vmatmul.mubr.f32.gmra.mxu0 %v2458
    %v3808 = vpop.f32.mrf.mxu0
    %v3809 = vadd.f32 %v3552, %v3808
    %v3810 = vpop.f32.mrf.mxu0
    %v3811 = vadd.f32 %v3554, %v3810
    %3812 = vmatprep.mubr.f32.mxu0 %v2467
    %3813 = vmatmul.mubr.f32.gmra.mxu0 %v2466
    %v3814 = vpop.f32.mrf.mxu0
    %v3815 = vadd.f32 %v3558, %v3814
    %v3816 = vpop.f32.mrf.mxu0
    %v3817 = vadd.f32 %v3560, %v3816
    %3818 = vmatprep.mubr.f32.mxu0 %v2475
    %3819 = vmatmul.mubr.f32.gmra.mxu0 %v2474
    %v3820 = vpop.f32.mrf.mxu0
    %v3821 = vadd.f32 %v3564, %v3820
    %v3822 = vpop.f32.mrf.mxu0
    %v3823 = vadd.f32 %v3566, %v3822
    %3824 = vmatprep.mubr.f32.mxu0 %v2483
    %3825 = vmatmul.mubr.f32.gmra.mxu0 %v2482
    %v3826 = vpop.f32.mrf.mxu0
    %v3827 = vadd.f32 %v3570, %v3826
    %v3828 = vpop.f32.mrf.mxu0
    %v3829 = vadd.f32 %v3572, %v3828
    %3830 = vmatprep.mubr.f32.mxu0 %v2491
    %3831 = vmatmul.mubr.f32.gmra.mxu0 %v2490
    %v3832 = vpop.f32.mrf.mxu0
    %v3833 = vadd.f32 %v3576, %v3832
    %v3834 = vpop.f32.mrf.mxu0
    %v3835 = vadd.f32 %v3578, %v3834
    %3836 = vmatprep.mubr.f32.mxu0 %v2499
    %3837 = vmatmul.mubr.f32.gmra.mxu0 %v2498
    %v3838 = vpop.f32.mrf.mxu0
    %v3839 = vadd.f32 %v3582, %v3838
    %v3840 = vpop.f32.mrf.mxu0
    %v3841 = vadd.f32 %v3584, %v3840
    %3842 = vmatprep.mubr.f32.mxu0 %v2507
    %3843 = vmatmul.mubr.f32.gmra.mxu0 %v2506
    %v3844 = vpop.f32.mrf.mxu0
    %v3845 = vadd.f32 %v3588, %v3844
    %v3846 = vpop.f32.mrf.mxu0
    %v3847 = vadd.f32 %v3590, %v3846
    %3848 = vmatprep.mubr.f32.mxu0 %v2515
    %3849 = vmatmul.mubr.f32.gmra.mxu0 %v2514
    %v3850 = vpop.f32.mrf.mxu0
    %v3851 = vadd.f32 %v3594, %v3850
    %v3852 = vpop.f32.mrf.mxu0
    %v3853 = vadd.f32 %v3596, %v3852
    %3854 = vmatprep.mubr.f32.mxu0 %v2523
    %3855 = vmatmul.mubr.f32.gmra.mxu0 %v2522
    %v3856 = vpop.f32.mrf.mxu0
    %v3857 = vadd.f32 %v3600, %v3856
    %v3858 = vpop.f32.mrf.mxu0
    %v3859 = vadd.f32 %v3602, %v3858
    %3860 = vmatprep.mubr.f32.mxu0 %v2531
    %3861 = vmatmul.mubr.f32.gmra.mxu0 %v2530
    %v3862 = vpop.f32.mrf.mxu0
    %v3863 = vadd.f32 %v3606, %v3862
    %v3864 = vpop.f32.mrf.mxu0
    %v3865 = vadd.f32 %v3608, %v3864
    %3866 = vmatprep.mubr.f32.mxu0 %v2539
    %3867 = vmatmul.mubr.f32.gmra.mxu0 %v2538
    %v3868 = vpop.f32.mrf.mxu0
    %v3869 = vadd.f32 %v3612, %v3868
    %v3870 = vpop.f32.mrf.mxu0
    %v3871 = vadd.f32 %v3614, %v3870
    %3872 = vmatprep.mubr.f32.mxu0 %v2547
    %3873 = vmatmul.mubr.f32.gmra.mxu0 %v2546
    %v3874 = vpop.f32.mrf.mxu0
    %v3875 = vadd.f32 %v3618, %v3874
    %v3876 = vpop.f32.mrf.mxu0
    %v3877 = vadd.f32 %v3620, %v3876
    %3878 = vmatprep.mubr.f32.mxu0 %v2555
    %3879 = vmatmul.mubr.f32.gmra.mxu0 %v2554
    %v3880 = vpop.f32.mrf.mxu0
    %v3881 = vadd.f32 %v3624, %v3880
    %v3882 = vpop.f32.mrf.mxu0
    %v3883 = vadd.f32 %v3626, %v3882
    %3884 = vmatprep.mubr.f32.mxu0 %v2563
    %3885 = vmatmul.mubr.f32.gmra.mxu0 %v2562
    %v3886 = vpop.f32.mrf.mxu0
    %v3887 = vadd.f32 %v3630, %v3886
    %v3888 = vpop.f32.mrf.mxu0
    %v3889 = vadd.f32 %v3632, %v3888
    %3890 = vmatprep.mubr.f32.mxu0 %v2571
    %3891 = vmatmul.mubr.f32.gmra.mxu0 %v2570
    %v3892 = vpop.f32.mrf.mxu0
    %v3893 = vadd.f32 %v3636, %v3892
    %v3894 = vpop.f32.mrf.mxu0
    %v3895 = vadd.f32 %v3638, %v3894
    %3896 = vmatprep.mubr.f32.mxu0 %v2579
    %3897 = vmatmul.mubr.f32.gmra.mxu0 %v2578
    %v3898 = vpop.f32.mrf.mxu0
    %v3899 = vadd.f32 %v3642, %v3898
    %v3900 = vpop.f32.mrf.mxu0
    %v3901 = vadd.f32 %v3644, %v3900
    %3902 = vmatprep.mubr.f32.mxu0 %v2587
    %3903 = vmatmul.mubr.f32.gmra.mxu0 %v2586
    %v3904 = vpop.f32.mrf.mxu0
    %v3905 = vadd.f32 %v3648, %v3904
    %v3906 = vpop.f32.mrf.mxu0
    %v3907 = vadd.f32 %v3650, %v3906
    %3908 = vmatprep.mubr.f32.mxu0 %v2595
    %3909 = vmatmul.mubr.f32.gmra.mxu0 %v2594
    %v3910 = vpop.f32.mrf.mxu0
    %v3911 = vadd.f32 %v3654, %v3910
    %v3912 = vpop.f32.mrf.mxu0
    %v3913 = vadd.f32 %v3656, %v3912
    %3914 = vmatprep.mubr.f32.mxu0 %v2603
    %3915 = vmatmul.mubr.f32.gmra.mxu0 %v2602
    %v3916 = vpop.f32.mrf.mxu0
    %v3917 = vadd.f32 %v3660, %v3916
    %v3918 = vpop.f32.mrf.mxu0
    %v3919 = vadd.f32 %v3662, %v3918
    %3920 = vmatprep.mubr.f32.mxu0 %v2611
    %3921 = vmatmul.mubr.f32.gmra.mxu0 %v2610
    %v3922 = vpop.f32.mrf.mxu0
    %v3923 = vadd.f32 %v3666, %v3922
    %v3924 = vpop.f32.mrf.mxu0
    %v3925 = vadd.f32 %v3668, %v3924
    %3926 = vmatprep.mubr.f32.mxu0 %v2619
    %3927 = vmatmul.mubr.f32.gmra.mxu0 %v2618
    %v3928 = vpop.f32.mrf.mxu0
    %v3929 = vadd.f32 %v3672, %v3928
    %v3930 = vpop.f32.mrf.mxu0
    %v3931 = vadd.f32 %v3674, %v3930
    %3932 = vmatprep.mubr.f32.mxu0 %v2627
    %3933 = vmatmul.mubr.f32.gmra.mxu0 %v2626
    %v3934 = vpop.f32.mrf.mxu0
    %v3935 = vadd.f32 %v3678, %v3934
    %v3936 = vpop.f32.mrf.mxu0
    %v3937 = vadd.f32 %v3680, %v3936
    %3938 = vmatprep.mubr.f32.mxu0 %v2635
    %3939 = vmatmul.mubr.f32.gmra.mxu0 %v2634
    %v3940 = vpop.f32.mrf.mxu0
    %v3941 = vadd.f32 %v3684, %v3940
    %v3942 = vpop.f32.mrf.mxu0
    %v3943 = vadd.f32 %v3686, %v3942
    %3944 = vmatprep.mubr.f32.mxu0 %v2643
    %3945 = vmatmul.mubr.f32.gmra.mxu0 %v2642
    %v3946 = vpop.f32.mrf.mxu0
    %v3947 = vadd.f32 %v3690, %v3946
    %v3948 = vpop.f32.mrf.mxu0
    %v3949 = vadd.f32 %v3692, %v3948
    %3950 = vdwg.mxu0
    %3951 = vmatprep.subr.mxu0 %v3091
    %3952 = vmatpush1.msra.mxu0 %v3090
    %3953 = vmatprep.subr.mxu0 %v3087
    %3954 = vmatpush1.msra.mxu0 %v3086
    %3955 = vmatprep.subr.mxu0 %v3083
    %3956 = vmatpush1.msra.mxu0 %v3082
    %3957 = vmatprep.subr.mxu0 %v3079
    %3958 = vmatpush1.msra.mxu0 %v3078
    %3959 = vmatprep.subr.mxu0 %v3075
    %3960 = vmatpush1.msra.mxu0 %v3074
    %3961 = vmatprep.subr.mxu0 %v3071
    %3962 = vmatpush1.msra.mxu0 %v3070
    %3963 = vmatprep.subr.mxu0 %v3067
    %3964 = vmatpush1.msra.mxu0 %v3066
    %3965 = vmatprep.subr.mxu0 %v3063
    %3966 = vmatpush1.msra.mxu0 %v3062
    %3967 = vmatprep.subr.mxu0 %v3059
    %3968 = vmatpush1.msra.mxu0 %v3058
    %3969 = vmatprep.subr.mxu0 %v3055
    %3970 = vmatpush1.msra.mxu0 %v3054
    %3971 = vmatprep.subr.mxu0 %v3051
    %3972 = vmatpush1.msra.mxu0 %v3050
    %3973 = vmatprep.subr.mxu0 %v3047
    %3974 = vmatpush1.msra.mxu0 %v3046
    %3975 = vmatprep.subr.mxu0 %v3043
    %3976 = vmatpush1.msra.mxu0 %v3042
    %3977 = vmatprep.subr.mxu0 %v3039
    %3978 = vmatpush1.msra.mxu0 %v3038
    %3979 = vmatprep.subr.mxu0 %v3035
    %3980 = vmatpush1.msra.mxu0 %v3034
    %3981 = vmatprep.subr.mxu0 %v3031
    %3982 = vmatpush1.msra.mxu0 %v3030
    %3983 = vmatprep.subr.mxu0 %v3155
    %3984 = vmatpush2.msra.mxu0 %v3154
    %3985 = vmatprep.subr.mxu0 %v3151
    %3986 = vmatpush2.msra.mxu0 %v3150
    %3987 = vmatprep.subr.mxu0 %v3147
    %3988 = vmatpush2.msra.mxu0 %v3146
    %3989 = vmatprep.subr.mxu0 %v3143
    %3990 = vmatpush2.msra.mxu0 %v3142
    %3991 = vmatprep.subr.mxu0 %v3139
    %3992 = vmatpush2.msra.mxu0 %v3138
    %3993 = vmatprep.subr.mxu0 %v3135
    %3994 = vmatpush2.msra.mxu0 %v3134
    %3995 = vmatprep.subr.mxu0 %v3131
    %3996 = vmatpush2.msra.mxu0 %v3130
    %3997 = vmatprep.subr.mxu0 %v3127
    %3998 = vmatpush2.msra.mxu0 %v3126
    %3999 = vmatprep.subr.mxu0 %v3123
    %4000 = vmatpush2.msra.mxu0 %v3122
    %4001 = vmatprep.subr.mxu0 %v3119
    %4002 = vmatpush2.msra.mxu0 %v3118
    %4003 = vmatprep.subr.mxu0 %v3115
    %4004 = vmatpush2.msra.mxu0 %v3114
    %4005 = vmatprep.subr.mxu0 %v3111
    %4006 = vmatpush2.msra.mxu0 %v3110
    %4007 = vmatprep.subr.mxu0 %v3107
    %4008 = vmatpush2.msra.mxu0 %v3106
    %4009 = vmatprep.subr.mxu0 %v3103
    %4010 = vmatpush2.msra.mxu0 %v3102
    %4011 = vmatprep.subr.mxu0 %v3099
    %4012 = vmatpush2.msra.mxu0 %v3098
    %4013 = vmatprep.subr.mxu0 %v3095
    %4014 = vmatpush2.msra.mxu0 %v3094
    %4015 = vmatprep.mubr.f32.mxu0 %v2397
    %4016 = vmatmul.mubr.f32.gmra.mxu0 %v2396
    %v4017 = vpop.f32.mrf.mxu0
    %v4018 = vadd.f32 %v3761, %v4017
    %v4019 = vpop.f32.mrf.mxu0
    %v4020 = vadd.f32 %v3763, %v4019
    %4021 = vmatprep.mubr.f32.mxu0 %v2405
    %4022 = vmatmul.mubr.f32.gmra.mxu0 %v2404
    %v4023 = vpop.f32.mrf.mxu0
    %v4024 = vadd.f32 %v3767, %v4023
    %v4025 = vpop.f32.mrf.mxu0
    %v4026 = vadd.f32 %v3769, %v4025
    %4027 = vmatprep.mubr.f32.mxu0 %v2413
    %4028 = vmatmul.mubr.f32.gmra.mxu0 %v2412
    %v4029 = vpop.f32.mrf.mxu0
    %v4030 = vadd.f32 %v3773, %v4029
    %v4031 = vpop.f32.mrf.mxu0
    %v4032 = vadd.f32 %v3775, %v4031
    %4033 = vmatprep.mubr.f32.mxu0 %v2421
    %4034 = vmatmul.mubr.f32.gmra.mxu0 %v2420
    %v4035 = vpop.f32.mrf.mxu0
    %v4036 = vadd.f32 %v3779, %v4035
    %v4037 = vpop.f32.mrf.mxu0
    %v4038 = vadd.f32 %v3781, %v4037
    %4039 = vmatprep.mubr.f32.mxu0 %v2429
    %4040 = vmatmul.mubr.f32.gmra.mxu0 %v2428
    %v4041 = vpop.f32.mrf.mxu0
    %v4042 = vadd.f32 %v3785, %v4041
    %v4043 = vpop.f32.mrf.mxu0
    %v4044 = vadd.f32 %v3787, %v4043
    %4045 = vmatprep.mubr.f32.mxu0 %v2437
    %4046 = vmatmul.mubr.f32.gmra.mxu0 %v2436
    %v4047 = vpop.f32.mrf.mxu0
    %v4048 = vadd.f32 %v3791, %v4047
    %v4049 = vpop.f32.mrf.mxu0
    %v4050 = vadd.f32 %v3793, %v4049
    %4051 = vmatprep.mubr.f32.mxu0 %v2445
    %4052 = vmatmul.mubr.f32.gmra.mxu0 %v2444
    %v4053 = vpop.f32.mrf.mxu0
    %v4054 = vadd.f32 %v3797, %v4053
    %v4055 = vpop.f32.mrf.mxu0
    %v4056 = vadd.f32 %v3799, %v4055
    %4057 = vmatprep.mubr.f32.mxu0 %v2453
    %4058 = vmatmul.mubr.f32.gmra.mxu0 %v2452
    %v4059 = vpop.f32.mrf.mxu0
    %v4060 = vadd.f32 %v3803, %v4059
    %v4061 = vpop.f32.mrf.mxu0
    %v4062 = vadd.f32 %v3805, %v4061
    %4063 = vmatprep.mubr.f32.mxu0 %v2461
    %4064 = vmatmul.mubr.f32.gmra.mxu0 %v2460
    %v4065 = vpop.f32.mrf.mxu0
    %v4066 = vadd.f32 %v3809, %v4065
    %v4067 = vpop.f32.mrf.mxu0
    %v4068 = vadd.f32 %v3811, %v4067
    %4069 = vmatprep.mubr.f32.mxu0 %v2469
    %4070 = vmatmul.mubr.f32.gmra.mxu0 %v2468
    %v4071 = vpop.f32.mrf.mxu0
    %v4072 = vadd.f32 %v3815, %v4071
    %v4073 = vpop.f32.mrf.mxu0
    %v4074 = vadd.f32 %v3817, %v4073
    %4075 = vmatprep.mubr.f32.mxu0 %v2477
    %4076 = vmatmul.mubr.f32.gmra.mxu0 %v2476
    %v4077 = vpop.f32.mrf.mxu0
    %v4078 = vadd.f32 %v3821, %v4077
    %v4079 = vpop.f32.mrf.mxu0
    %v4080 = vadd.f32 %v3823, %v4079
    %4081 = vmatprep.mubr.f32.mxu0 %v2485
    %4082 = vmatmul.mubr.f32.gmra.mxu0 %v2484
    %v4083 = vpop.f32.mrf.mxu0
    %v4084 = vadd.f32 %v3827, %v4083
    %v4085 = vpop.f32.mrf.mxu0
    %v4086 = vadd.f32 %v3829, %v4085
    %4087 = vmatprep.mubr.f32.mxu0 %v2493
    %4088 = vmatmul.mubr.f32.gmra.mxu0 %v2492
    %v4089 = vpop.f32.mrf.mxu0
    %v4090 = vadd.f32 %v3833, %v4089
    %v4091 = vpop.f32.mrf.mxu0
    %v4092 = vadd.f32 %v3835, %v4091
    %4093 = vmatprep.mubr.f32.mxu0 %v2501
    %4094 = vmatmul.mubr.f32.gmra.mxu0 %v2500
    %v4095 = vpop.f32.mrf.mxu0
    %v4096 = vadd.f32 %v3839, %v4095
    %v4097 = vpop.f32.mrf.mxu0
    %v4098 = vadd.f32 %v3841, %v4097
    %4099 = vmatprep.mubr.f32.mxu0 %v2509
    %4100 = vmatmul.mubr.f32.gmra.mxu0 %v2508
    %v4101 = vpop.f32.mrf.mxu0
    %v4102 = vadd.f32 %v3845, %v4101
    %v4103 = vpop.f32.mrf.mxu0
    %v4104 = vadd.f32 %v3847, %v4103
    %4105 = vmatprep.mubr.f32.mxu0 %v2517
    %4106 = vmatmul.mubr.f32.gmra.mxu0 %v2516
    %v4107 = vpop.f32.mrf.mxu0
    %v4108 = vadd.f32 %v3851, %v4107
    %v4109 = vpop.f32.mrf.mxu0
    %v4110 = vadd.f32 %v3853, %v4109
    %4111 = vmatprep.mubr.f32.mxu0 %v2525
    %4112 = vmatmul.mubr.f32.gmra.mxu0 %v2524
    %v4113 = vpop.f32.mrf.mxu0
    %v4114 = vadd.f32 %v3857, %v4113
    %v4115 = vpop.f32.mrf.mxu0
    %v4116 = vadd.f32 %v3859, %v4115
    %4117 = vmatprep.mubr.f32.mxu0 %v2533
    %4118 = vmatmul.mubr.f32.gmra.mxu0 %v2532
    %v4119 = vpop.f32.mrf.mxu0
    %v4120 = vadd.f32 %v3863, %v4119
    %v4121 = vpop.f32.mrf.mxu0
    %v4122 = vadd.f32 %v3865, %v4121
    %4123 = vmatprep.mubr.f32.mxu0 %v2541
    %4124 = vmatmul.mubr.f32.gmra.mxu0 %v2540
    %v4125 = vpop.f32.mrf.mxu0
    %v4126 = vadd.f32 %v3869, %v4125
    %v4127 = vpop.f32.mrf.mxu0
    %v4128 = vadd.f32 %v3871, %v4127
    %4129 = vmatprep.mubr.f32.mxu0 %v2549
    %4130 = vmatmul.mubr.f32.gmra.mxu0 %v2548
    %v4131 = vpop.f32.mrf.mxu0
    %v4132 = vadd.f32 %v3875, %v4131
    %v4133 = vpop.f32.mrf.mxu0
    %v4134 = vadd.f32 %v3877, %v4133
    %4135 = vmatprep.mubr.f32.mxu0 %v2557
    %4136 = vmatmul.mubr.f32.gmra.mxu0 %v2556
    %v4137 = vpop.f32.mrf.mxu0
    %v4138 = vadd.f32 %v3881, %v4137
    %v4139 = vpop.f32.mrf.mxu0
    %v4140 = vadd.f32 %v3883, %v4139
    %4141 = vmatprep.mubr.f32.mxu0 %v2565
    %4142 = vmatmul.mubr.f32.gmra.mxu0 %v2564
    %v4143 = vpop.f32.mrf.mxu0
    %v4144 = vadd.f32 %v3887, %v4143
    %v4145 = vpop.f32.mrf.mxu0
    %v4146 = vadd.f32 %v3889, %v4145
    %4147 = vmatprep.mubr.f32.mxu0 %v2573
    %4148 = vmatmul.mubr.f32.gmra.mxu0 %v2572
    %v4149 = vpop.f32.mrf.mxu0
    %v4150 = vadd.f32 %v3893, %v4149
    %v4151 = vpop.f32.mrf.mxu0
    %v4152 = vadd.f32 %v3895, %v4151
    %4153 = vmatprep.mubr.f32.mxu0 %v2581
    %4154 = vmatmul.mubr.f32.gmra.mxu0 %v2580
    %v4155 = vpop.f32.mrf.mxu0
    %v4156 = vadd.f32 %v3899, %v4155
    %v4157 = vpop.f32.mrf.mxu0
    %v4158 = vadd.f32 %v3901, %v4157
    %4159 = vmatprep.mubr.f32.mxu0 %v2589
    %4160 = vmatmul.mubr.f32.gmra.mxu0 %v2588
    %v4161 = vpop.f32.mrf.mxu0
    %v4162 = vadd.f32 %v3905, %v4161
    %v4163 = vpop.f32.mrf.mxu0
    %v4164 = vadd.f32 %v3907, %v4163
    %4165 = vmatprep.mubr.f32.mxu0 %v2597
    %4166 = vmatmul.mubr.f32.gmra.mxu0 %v2596
    %v4167 = vpop.f32.mrf.mxu0
    %v4168 = vadd.f32 %v3911, %v4167
    %v4169 = vpop.f32.mrf.mxu0
    %v4170 = vadd.f32 %v3913, %v4169
    %4171 = vmatprep.mubr.f32.mxu0 %v2605
    %4172 = vmatmul.mubr.f32.gmra.mxu0 %v2604
    %v4173 = vpop.f32.mrf.mxu0
    %v4174 = vadd.f32 %v3917, %v4173
    %v4175 = vpop.f32.mrf.mxu0
    %v4176 = vadd.f32 %v3919, %v4175
    %4177 = vmatprep.mubr.f32.mxu0 %v2613
    %4178 = vmatmul.mubr.f32.gmra.mxu0 %v2612
    %v4179 = vpop.f32.mrf.mxu0
    %v4180 = vadd.f32 %v3923, %v4179
    %v4181 = vpop.f32.mrf.mxu0
    %v4182 = vadd.f32 %v3925, %v4181
    %4183 = vmatprep.mubr.f32.mxu0 %v2621
    %4184 = vmatmul.mubr.f32.gmra.mxu0 %v2620
    %v4185 = vpop.f32.mrf.mxu0
    %v4186 = vadd.f32 %v3929, %v4185
    %v4187 = vpop.f32.mrf.mxu0
    %v4188 = vadd.f32 %v3931, %v4187
    %4189 = vmatprep.mubr.f32.mxu0 %v2629
    %4190 = vmatmul.mubr.f32.gmra.mxu0 %v2628
    %v4191 = vpop.f32.mrf.mxu0
    %v4192 = vadd.f32 %v3935, %v4191
    %v4193 = vpop.f32.mrf.mxu0
    %v4194 = vadd.f32 %v3937, %v4193
    %4195 = vmatprep.mubr.f32.mxu0 %v2637
    %4196 = vmatmul.mubr.f32.gmra.mxu0 %v2636
    %v4197 = vpop.f32.mrf.mxu0
    %v4198 = vadd.f32 %v3941, %v4197
    %v4199 = vpop.f32.mrf.mxu0
    %v4200 = vadd.f32 %v3943, %v4199
    %4201 = vmatprep.mubr.f32.mxu0 %v2645
    %4202 = vmatmul.mubr.f32.gmra.mxu0 %v2644
    %v4203 = vpop.f32.mrf.mxu0
    %v4204 = vadd.f32 %v3947, %v4203
    %v4205 = vpop.f32.mrf.mxu0
    %v4206 = vadd.f32 %v3949, %v4205
    %4207 = vdwg.mxu0
    %4208 = vmatprep.subr.mxu0 %v2709
    %4209 = vmatpush1.msra.mxu0 %v2708
    %4210 = vmatprep.subr.mxu0 %v2705
    %4211 = vmatpush1.msra.mxu0 %v2704
    %4212 = vmatprep.subr.mxu0 %v2701
    %4213 = vmatpush1.msra.mxu0 %v2700
    %4214 = vmatprep.subr.mxu0 %v2697
    %4215 = vmatpush1.msra.mxu0 %v2696
    %4216 = vmatprep.subr.mxu0 %v2693
    %4217 = vmatpush1.msra.mxu0 %v2692
    %4218 = vmatprep.subr.mxu0 %v2689
    %4219 = vmatpush1.msra.mxu0 %v2688
    %4220 = vmatprep.subr.mxu0 %v2685
    %4221 = vmatpush1.msra.mxu0 %v2684
    %4222 = vmatprep.subr.mxu0 %v2681
    %4223 = vmatpush1.msra.mxu0 %v2680
    %4224 = vmatprep.subr.mxu0 %v2677
    %4225 = vmatpush1.msra.mxu0 %v2676
    %4226 = vmatprep.subr.mxu0 %v2673
    %4227 = vmatpush1.msra.mxu0 %v2672
    %4228 = vmatprep.subr.mxu0 %v2669
    %4229 = vmatpush1.msra.mxu0 %v2668
    %4230 = vmatprep.subr.mxu0 %v2665
    %4231 = vmatpush1.msra.mxu0 %v2664
    %4232 = vmatprep.subr.mxu0 %v2661
    %4233 = vmatpush1.msra.mxu0 %v2660
    %4234 = vmatprep.subr.mxu0 %v2657
    %4235 = vmatpush1.msra.mxu0 %v2656
    %4236 = vmatprep.subr.mxu0 %v2653
    %4237 = vmatpush1.msra.mxu0 %v2652
    %4238 = vmatprep.subr.mxu0 %v2649
    %4239 = vmatpush1.msra.mxu0 %v2648
    %4240 = vmatprep.subr.mxu0 %v2773
    %4241 = vmatpush2.msra.mxu0 %v2772
    %4242 = vmatprep.subr.mxu0 %v2769
    %4243 = vmatpush2.msra.mxu0 %v2768
    %4244 = vmatprep.subr.mxu0 %v2765
    %4245 = vmatpush2.msra.mxu0 %v2764
    %4246 = vmatprep.subr.mxu0 %v2761
    %4247 = vmatpush2.msra.mxu0 %v2760
    %4248 = vmatprep.subr.mxu0 %v2757
    %4249 = vmatpush2.msra.mxu0 %v2756
    %4250 = vmatprep.subr.mxu0 %v2753
    %4251 = vmatpush2.msra.mxu0 %v2752
    %4252 = vmatprep.subr.mxu0 %v2749
    %4253 = vmatpush2.msra.mxu0 %v2748
    %4254 = vmatprep.subr.mxu0 %v2745
    %4255 = vmatpush2.msra.mxu0 %v2744
    %4256 = vmatprep.subr.mxu0 %v2741
    %4257 = vmatpush2.msra.mxu0 %v2740
    %4258 = vmatprep.subr.mxu0 %v2737
    %4259 = vmatpush2.msra.mxu0 %v2736
    %4260 = vmatprep.subr.mxu0 %v2733
    %4261 = vmatpush2.msra.mxu0 %v2732
    %4262 = vmatprep.subr.mxu0 %v2729
    %4263 = vmatpush2.msra.mxu0 %v2728
    %4264 = vmatprep.subr.mxu0 %v2725
    %4265 = vmatpush2.msra.mxu0 %v2724
    %4266 = vmatprep.subr.mxu0 %v2721
    %4267 = vmatpush2.msra.mxu0 %v2720
    %4268 = vmatprep.subr.mxu0 %v2717
    %4269 = vmatpush2.msra.mxu0 %v2716
    %4270 = vmatprep.subr.mxu0 %v2713
    %4271 = vmatpush2.msra.mxu0 %v2712
    %4272 = vmatprep.mubr.f32.mxu0 %v2391
    %4273 = vmatmul.mubr.f32.gmra.mxu0 %v2390
    %v4274 = vpop.f32.mrf.mxu0
    %v4275 = vadd.f32 %v3171, %v4274
    %v4276 = vpop.f32.mrf.mxu0
    %v4277 = vadd.f32 %v3175, %v4276
    %4278 = vmatprep.mubr.f32.mxu0 %v2399
    %4279 = vmatmul.mubr.f32.gmra.mxu0 %v2398
    %v4280 = vpop.f32.mrf.mxu0
    %v4281 = vadd.f32 %v3171, %v4280
    %v4282 = vpop.f32.mrf.mxu0
    %v4283 = vadd.f32 %v3175, %v4282
    %4284 = vmatprep.mubr.f32.mxu0 %v2407
    %4285 = vmatmul.mubr.f32.gmra.mxu0 %v2406
    %v4286 = vpop.f32.mrf.mxu0
    %v4287 = vadd.f32 %v3171, %v4286
    %v4288 = vpop.f32.mrf.mxu0
    %v4289 = vadd.f32 %v3175, %v4288
    %4290 = vmatprep.mubr.f32.mxu0 %v2415
    %4291 = vmatmul.mubr.f32.gmra.mxu0 %v2414
    %v4292 = vpop.f32.mrf.mxu0
    %v4293 = vadd.f32 %v3171, %v4292
    %v4294 = vpop.f32.mrf.mxu0
    %v4295 = vadd.f32 %v3175, %v4294
    %4296 = vmatprep.mubr.f32.mxu0 %v2423
    %4297 = vmatmul.mubr.f32.gmra.mxu0 %v2422
    %v4298 = vpop.f32.mrf.mxu0
    %v4299 = vadd.f32 %v3171, %v4298
    %v4300 = vpop.f32.mrf.mxu0
    %v4301 = vadd.f32 %v3175, %v4300
    %4302 = vmatprep.mubr.f32.mxu0 %v2431
    %4303 = vmatmul.mubr.f32.gmra.mxu0 %v2430
    %v4304 = vpop.f32.mrf.mxu0
    %v4305 = vadd.f32 %v3171, %v4304
    %v4306 = vpop.f32.mrf.mxu0
    %v4307 = vadd.f32 %v3175, %v4306
    %4308 = vmatprep.mubr.f32.mxu0 %v2439
    %4309 = vmatmul.mubr.f32.gmra.mxu0 %v2438
    %v4310 = vpop.f32.mrf.mxu0
    %v4311 = vadd.f32 %v3171, %v4310
    %v4312 = vpop.f32.mrf.mxu0
    %v4313 = vadd.f32 %v3175, %v4312
    %4314 = vmatprep.mubr.f32.mxu0 %v2447
    %4315 = vmatmul.mubr.f32.gmra.mxu0 %v2446
    %v4316 = vpop.f32.mrf.mxu0
    %v4317 = vadd.f32 %v3171, %v4316
    %v4318 = vpop.f32.mrf.mxu0
    %v4319 = vadd.f32 %v3175, %v4318
    %4320 = vmatprep.mubr.f32.mxu0 %v2455
    %4321 = vmatmul.mubr.f32.gmra.mxu0 %v2454
    %v4322 = vpop.f32.mrf.mxu0
    %v4323 = vadd.f32 %v3171, %v4322
    %v4324 = vpop.f32.mrf.mxu0
    %v4325 = vadd.f32 %v3175, %v4324
    %4326 = vmatprep.mubr.f32.mxu0 %v2463
    %4327 = vmatmul.mubr.f32.gmra.mxu0 %v2462
    %v4328 = vpop.f32.mrf.mxu0
    %v4329 = vadd.f32 %v3171, %v4328
    %v4330 = vpop.f32.mrf.mxu0
    %v4331 = vadd.f32 %v3175, %v4330
    %4332 = vmatprep.mubr.f32.mxu0 %v2471
    %4333 = vmatmul.mubr.f32.gmra.mxu0 %v2470
    %v4334 = vpop.f32.mrf.mxu0
    %v4335 = vadd.f32 %v3171, %v4334
    %v4336 = vpop.f32.mrf.mxu0
    %v4337 = vadd.f32 %v3175, %v4336
    %4338 = vmatprep.mubr.f32.mxu0 %v2479
    %4339 = vmatmul.mubr.f32.gmra.mxu0 %v2478
    %v4340 = vpop.f32.mrf.mxu0
    %v4341 = vadd.f32 %v3171, %v4340
    %v4342 = vpop.f32.mrf.mxu0
    %v4343 = vadd.f32 %v3175, %v4342
    %4344 = vmatprep.mubr.f32.mxu0 %v2487
    %4345 = vmatmul.mubr.f32.gmra.mxu0 %v2486
    %v4346 = vpop.f32.mrf.mxu0
    %v4347 = vadd.f32 %v3171, %v4346
    %v4348 = vpop.f32.mrf.mxu0
    %v4349 = vadd.f32 %v3175, %v4348
    %4350 = vmatprep.mubr.f32.mxu0 %v2495
    %4351 = vmatmul.mubr.f32.gmra.mxu0 %v2494
    %v4352 = vpop.f32.mrf.mxu0
    %v4353 = vadd.f32 %v3171, %v4352
    %v4354 = vpop.f32.mrf.mxu0
    %v4355 = vadd.f32 %v3175, %v4354
    %4356 = vmatprep.mubr.f32.mxu0 %v2503
    %4357 = vmatmul.mubr.f32.gmra.mxu0 %v2502
    %v4358 = vpop.f32.mrf.mxu0
    %v4359 = vadd.f32 %v3171, %v4358
    %v4360 = vpop.f32.mrf.mxu0
    %v4361 = vadd.f32 %v3175, %v4360
    %4362 = vmatprep.mubr.f32.mxu0 %v2511
    %4363 = vmatmul.mubr.f32.gmra.mxu0 %v2510
    %v4364 = vpop.f32.mrf.mxu0
    %v4365 = vadd.f32 %v3171, %v4364
    %v4366 = vpop.f32.mrf.mxu0
    %v4367 = vadd.f32 %v3175, %v4366
    %4368 = vmatprep.mubr.f32.mxu0 %v2519
    %4369 = vmatmul.mubr.f32.gmra.mxu0 %v2518
    %v4370 = vpop.f32.mrf.mxu0
    %v4371 = vadd.f32 %v3171, %v4370
    %v4372 = vpop.f32.mrf.mxu0
    %v4373 = vadd.f32 %v3175, %v4372
    %4374 = vmatprep.mubr.f32.mxu0 %v2527
    %4375 = vmatmul.mubr.f32.gmra.mxu0 %v2526
    %v4376 = vpop.f32.mrf.mxu0
    %v4377 = vadd.f32 %v3171, %v4376
    %v4378 = vpop.f32.mrf.mxu0
    %v4379 = vadd.f32 %v3175, %v4378
    %4380 = vmatprep.mubr.f32.mxu0 %v2535
    %4381 = vmatmul.mubr.f32.gmra.mxu0 %v2534
    %v4382 = vpop.f32.mrf.mxu0
    %v4383 = vadd.f32 %v3171, %v4382
    %v4384 = vpop.f32.mrf.mxu0
    %v4385 = vadd.f32 %v3175, %v4384
    %4386 = vmatprep.mubr.f32.mxu0 %v2543
    %4387 = vmatmul.mubr.f32.gmra.mxu0 %v2542
    %v4388 = vpop.f32.mrf.mxu0
    %v4389 = vadd.f32 %v3171, %v4388
    %v4390 = vpop.f32.mrf.mxu0
    %v4391 = vadd.f32 %v3175, %v4390
    %4392 = vmatprep.mubr.f32.mxu0 %v2551
    %4393 = vmatmul.mubr.f32.gmra.mxu0 %v2550
    %v4394 = vpop.f32.mrf.mxu0
    %v4395 = vadd.f32 %v3171, %v4394
    %v4396 = vpop.f32.mrf.mxu0
    %v4397 = vadd.f32 %v3175, %v4396
    %4398 = vmatprep.mubr.f32.mxu0 %v2559
    %4399 = vmatmul.mubr.f32.gmra.mxu0 %v2558
    %v4400 = vpop.f32.mrf.mxu0
    %v4401 = vadd.f32 %v3171, %v4400
    %v4402 = vpop.f32.mrf.mxu0
    %v4403 = vadd.f32 %v3175, %v4402
    %4404 = vmatprep.mubr.f32.mxu0 %v2567
    %4405 = vmatmul.mubr.f32.gmra.mxu0 %v2566
    %v4406 = vpop.f32.mrf.mxu0
    %v4407 = vadd.f32 %v3171, %v4406
    %v4408 = vpop.f32.mrf.mxu0
    %v4409 = vadd.f32 %v3175, %v4408
    %4410 = vmatprep.mubr.f32.mxu0 %v2575
    %4411 = vmatmul.mubr.f32.gmra.mxu0 %v2574
    %v4412 = vpop.f32.mrf.mxu0
    %v4413 = vadd.f32 %v3171, %v4412
    %v4414 = vpop.f32.mrf.mxu0
    %v4415 = vadd.f32 %v3175, %v4414
    %4416 = vmatprep.mubr.f32.mxu0 %v2583
    %4417 = vmatmul.mubr.f32.gmra.mxu0 %v2582
    %v4418 = vpop.f32.mrf.mxu0
    %v4419 = vadd.f32 %v3171, %v4418
    %v4420 = vpop.f32.mrf.mxu0
    %v4421 = vadd.f32 %v3175, %v4420
    %4422 = vmatprep.mubr.f32.mxu0 %v2591
    %4423 = vmatmul.mubr.f32.gmra.mxu0 %v2590
    %v4424 = vpop.f32.mrf.mxu0
    %v4425 = vadd.f32 %v3171, %v4424
    %v4426 = vpop.f32.mrf.mxu0
    %v4427 = vadd.f32 %v3175, %v4426
    %4428 = vmatprep.mubr.f32.mxu0 %v2599
    %4429 = vmatmul.mubr.f32.gmra.mxu0 %v2598
    %v4430 = vpop.f32.mrf.mxu0
    %v4431 = vadd.f32 %v3171, %v4430
    %v4432 = vpop.f32.mrf.mxu0
    %v4433 = vadd.f32 %v3175, %v4432
    %4434 = vmatprep.mubr.f32.mxu0 %v2607
    %4435 = vmatmul.mubr.f32.gmra.mxu0 %v2606
    %v4436 = vpop.f32.mrf.mxu0
    %v4437 = vadd.f32 %v3171, %v4436
    %v4438 = vpop.f32.mrf.mxu0
    %v4439 = vadd.f32 %v3175, %v4438
    %4440 = vmatprep.mubr.f32.mxu0 %v2615
    %4441 = vmatmul.mubr.f32.gmra.mxu0 %v2614
    %v4442 = vpop.f32.mrf.mxu0
    %v4443 = vadd.f32 %v3171, %v4442
    %v4444 = vpop.f32.mrf.mxu0
    %v4445 = vadd.f32 %v3175, %v4444
    %4446 = vmatprep.mubr.f32.mxu0 %v2623
    %4447 = vmatmul.mubr.f32.gmra.mxu0 %v2622
    %v4448 = vpop.f32.mrf.mxu0
    %v4449 = vadd.f32 %v3171, %v4448
    %v4450 = vpop.f32.mrf.mxu0
    %v4451 = vadd.f32 %v3175, %v4450
    %4452 = vmatprep.mubr.f32.mxu0 %v2631
    %4453 = vmatmul.mubr.f32.gmra.mxu0 %v2630
    %v4454 = vpop.f32.mrf.mxu0
    %v4455 = vadd.f32 %v3171, %v4454
    %v4456 = vpop.f32.mrf.mxu0
    %v4457 = vadd.f32 %v3175, %v4456
    %4458 = vmatprep.mubr.f32.mxu0 %v2639
    %4459 = vmatmul.mubr.f32.gmra.mxu0 %v2638
    %v4460 = vpop.f32.mrf.mxu0
    %v4461 = vadd.f32 %v3171, %v4460
    %v4462 = vpop.f32.mrf.mxu0
    %v4463 = vadd.f32 %v3175, %v4462
    %4464 = vdwg.mxu0
    %4465 = vmatprep.subr.mxu0 %v2837
    %4466 = vmatpush1.msra.mxu0 %v2836
    %4467 = vmatprep.subr.mxu0 %v2833
    %4468 = vmatpush1.msra.mxu0 %v2832
    %4469 = vmatprep.subr.mxu0 %v2829
    %4470 = vmatpush1.msra.mxu0 %v2828
    %4471 = vmatprep.subr.mxu0 %v2825
    %4472 = vmatpush1.msra.mxu0 %v2824
    %4473 = vmatprep.subr.mxu0 %v2821
    %4474 = vmatpush1.msra.mxu0 %v2820
    %4475 = vmatprep.subr.mxu0 %v2817
    %4476 = vmatpush1.msra.mxu0 %v2816
    %4477 = vmatprep.subr.mxu0 %v2813
    %4478 = vmatpush1.msra.mxu0 %v2812
    %4479 = vmatprep.subr.mxu0 %v2809
    %4480 = vmatpush1.msra.mxu0 %v2808
    %4481 = vmatprep.subr.mxu0 %v2805
    %4482 = vmatpush1.msra.mxu0 %v2804
    %4483 = vmatprep.subr.mxu0 %v2801
    %4484 = vmatpush1.msra.mxu0 %v2800
    %4485 = vmatprep.subr.mxu0 %v2797
    %4486 = vmatpush1.msra.mxu0 %v2796
    %4487 = vmatprep.subr.mxu0 %v2793
    %4488 = vmatpush1.msra.mxu0 %v2792
    %4489 = vmatprep.subr.mxu0 %v2789
    %4490 = vmatpush1.msra.mxu0 %v2788
    %4491 = vmatprep.subr.mxu0 %v2785
    %4492 = vmatpush1.msra.mxu0 %v2784
    %4493 = vmatprep.subr.mxu0 %v2781
    %4494 = vmatpush1.msra.mxu0 %v2780
    %4495 = vmatprep.subr.mxu0 %v2777
    %4496 = vmatpush1.msra.mxu0 %v2776
    %4497 = vmatprep.subr.mxu0 %v2901
    %4498 = vmatpush2.msra.mxu0 %v2900
    %4499 = vmatprep.subr.mxu0 %v2897
    %4500 = vmatpush2.msra.mxu0 %v2896
    %4501 = vmatprep.subr.mxu0 %v2893
    %4502 = vmatpush2.msra.mxu0 %v2892
    %4503 = vmatprep.subr.mxu0 %v2889
    %4504 = vmatpush2.msra.mxu0 %v2888
    %4505 = vmatprep.subr.mxu0 %v2885
    %4506 = vmatpush2.msra.mxu0 %v2884
    %4507 = vmatprep.subr.mxu0 %v2881
    %4508 = vmatpush2.msra.mxu0 %v2880
    %4509 = vmatprep.subr.mxu0 %v2877
    %4510 = vmatpush2.msra.mxu0 %v2876
    %4511 = vmatprep.subr.mxu0 %v2873
    %4512 = vmatpush2.msra.mxu0 %v2872
    %4513 = vmatprep.subr.mxu0 %v2869
    %4514 = vmatpush2.msra.mxu0 %v2868
    %4515 = vmatprep.subr.mxu0 %v2865
    %4516 = vmatpush2.msra.mxu0 %v2864
    %4517 = vmatprep.subr.mxu0 %v2861
    %4518 = vmatpush2.msra.mxu0 %v2860
    %4519 = vmatprep.subr.mxu0 %v2857
    %4520 = vmatpush2.msra.mxu0 %v2856
    %4521 = vmatprep.subr.mxu0 %v2853
    %4522 = vmatpush2.msra.mxu0 %v2852
    %4523 = vmatprep.subr.mxu0 %v2849
    %4524 = vmatpush2.msra.mxu0 %v2848
    %4525 = vmatprep.subr.mxu0 %v2845
    %4526 = vmatpush2.msra.mxu0 %v2844
    %4527 = vmatprep.subr.mxu0 %v2841
    %4528 = vmatpush2.msra.mxu0 %v2840
    %4529 = vmatprep.mubr.f32.mxu0 %v2393
    %4530 = vmatmul.mubr.f32.gmra.mxu0 %v2392
    %v4531 = vpop.f32.mrf.mxu0
    %v4532 = vadd.f32 %v4275, %v4531
    %v4533 = vpop.f32.mrf.mxu0
    %v4534 = vadd.f32 %v4277, %v4533
    %4535 = vmatprep.mubr.f32.mxu0 %v2401
    %4536 = vmatmul.mubr.f32.gmra.mxu0 %v2400
    %v4537 = vpop.f32.mrf.mxu0
    %v4538 = vadd.f32 %v4281, %v4537
    %v4539 = vpop.f32.mrf.mxu0
    %v4540 = vadd.f32 %v4283, %v4539
    %4541 = vmatprep.mubr.f32.mxu0 %v2409
    %4542 = vmatmul.mubr.f32.gmra.mxu0 %v2408
    %v4543 = vpop.f32.mrf.mxu0
    %v4544 = vadd.f32 %v4287, %v4543
    %v4545 = vpop.f32.mrf.mxu0
    %v4546 = vadd.f32 %v4289, %v4545
    %4547 = vmatprep.mubr.f32.mxu0 %v2417
    %4548 = vmatmul.mubr.f32.gmra.mxu0 %v2416
    %v4549 = vpop.f32.mrf.mxu0
    %v4550 = vadd.f32 %v4293, %v4549
    %v4551 = vpop.f32.mrf.mxu0
    %v4552 = vadd.f32 %v4295, %v4551
    %4553 = vmatprep.mubr.f32.mxu0 %v2425
    %4554 = vmatmul.mubr.f32.gmra.mxu0 %v2424
    %v4555 = vpop.f32.mrf.mxu0
    %v4556 = vadd.f32 %v4299, %v4555
    %v4557 = vpop.f32.mrf.mxu0
    %v4558 = vadd.f32 %v4301, %v4557
    %4559 = vmatprep.mubr.f32.mxu0 %v2433
    %4560 = vmatmul.mubr.f32.gmra.mxu0 %v2432
    %v4561 = vpop.f32.mrf.mxu0
    %v4562 = vadd.f32 %v4305, %v4561
    %v4563 = vpop.f32.mrf.mxu0
    %v4564 = vadd.f32 %v4307, %v4563
    %4565 = vmatprep.mubr.f32.mxu0 %v2441
    %4566 = vmatmul.mubr.f32.gmra.mxu0 %v2440
    %v4567 = vpop.f32.mrf.mxu0
    %v4568 = vadd.f32 %v4311, %v4567
    %v4569 = vpop.f32.mrf.mxu0
    %v4570 = vadd.f32 %v4313, %v4569
    %4571 = vmatprep.mubr.f32.mxu0 %v2449
    %4572 = vmatmul.mubr.f32.gmra.mxu0 %v2448
    %v4573 = vpop.f32.mrf.mxu0
    %v4574 = vadd.f32 %v4317, %v4573
    %v4575 = vpop.f32.mrf.mxu0
    %v4576 = vadd.f32 %v4319, %v4575
    %4577 = vmatprep.mubr.f32.mxu0 %v2457
    %4578 = vmatmul.mubr.f32.gmra.mxu0 %v2456
    %v4579 = vpop.f32.mrf.mxu0
    %v4580 = vadd.f32 %v4323, %v4579
    %v4581 = vpop.f32.mrf.mxu0
    %v4582 = vadd.f32 %v4325, %v4581
    %4583 = vmatprep.mubr.f32.mxu0 %v2465
    %4584 = vmatmul.mubr.f32.gmra.mxu0 %v2464
    %v4585 = vpop.f32.mrf.mxu0
    %v4586 = vadd.f32 %v4329, %v4585
    %v4587 = vpop.f32.mrf.mxu0
    %v4588 = vadd.f32 %v4331, %v4587
    %4589 = vmatprep.mubr.f32.mxu0 %v2473
    %4590 = vmatmul.mubr.f32.gmra.mxu0 %v2472
    %v4591 = vpop.f32.mrf.mxu0
    %v4592 = vadd.f32 %v4335, %v4591
    %v4593 = vpop.f32.mrf.mxu0
    %v4594 = vadd.f32 %v4337, %v4593
    %4595 = vmatprep.mubr.f32.mxu0 %v2481
    %4596 = vmatmul.mubr.f32.gmra.mxu0 %v2480
    %v4597 = vpop.f32.mrf.mxu0
    %v4598 = vadd.f32 %v4341, %v4597
    %v4599 = vpop.f32.mrf.mxu0
    %v4600 = vadd.f32 %v4343, %v4599
    %4601 = vmatprep.mubr.f32.mxu0 %v2489
    %4602 = vmatmul.mubr.f32.gmra.mxu0 %v2488
    %v4603 = vpop.f32.mrf.mxu0
    %v4604 = vadd.f32 %v4347, %v4603
    %v4605 = vpop.f32.mrf.mxu0
    %v4606 = vadd.f32 %v4349, %v4605
    %4607 = vmatprep.mubr.f32.mxu0 %v2497
    %4608 = vmatmul.mubr.f32.gmra.mxu0 %v2496
    %v4609 = vpop.f32.mrf.mxu0
    %v4610 = vadd.f32 %v4353, %v4609
    %v4611 = vpop.f32.mrf.mxu0
    %v4612 = vadd.f32 %v4355, %v4611
    %4613 = vmatprep.mubr.f32.mxu0 %v2505
    %4614 = vmatmul.mubr.f32.gmra.mxu0 %v2504
    %v4615 = vpop.f32.mrf.mxu0
    %v4616 = vadd.f32 %v4359, %v4615
    %v4617 = vpop.f32.mrf.mxu0
    %v4618 = vadd.f32 %v4361, %v4617
    %4619 = vmatprep.mubr.f32.mxu0 %v2513
    %4620 = vmatmul.mubr.f32.gmra.mxu0 %v2512
    %v4621 = vpop.f32.mrf.mxu0
    %v4622 = vadd.f32 %v4365, %v4621
    %v4623 = vpop.f32.mrf.mxu0
    %v4624 = vadd.f32 %v4367, %v4623
    %4625 = vmatprep.mubr.f32.mxu0 %v2521
    %4626 = vmatmul.mubr.f32.gmra.mxu0 %v2520
    %v4627 = vpop.f32.mrf.mxu0
    %v4628 = vadd.f32 %v4371, %v4627
    %v4629 = vpop.f32.mrf.mxu0
    %v4630 = vadd.f32 %v4373, %v4629
    %4631 = vmatprep.mubr.f32.mxu0 %v2529
    %4632 = vmatmul.mubr.f32.gmra.mxu0 %v2528
    %v4633 = vpop.f32.mrf.mxu0
    %v4634 = vadd.f32 %v4377, %v4633
    %v4635 = vpop.f32.mrf.mxu0
    %v4636 = vadd.f32 %v4379, %v4635
    %4637 = vmatprep.mubr.f32.mxu0 %v2537
    %4638 = vmatmul.mubr.f32.gmra.mxu0 %v2536
    %v4639 = vpop.f32.mrf.mxu0
    %v4640 = vadd.f32 %v4383, %v4639
    %v4641 = vpop.f32.mrf.mxu0
    %v4642 = vadd.f32 %v4385, %v4641
    %4643 = vmatprep.mubr.f32.mxu0 %v2545
    %4644 = vmatmul.mubr.f32.gmra.mxu0 %v2544
    %v4645 = vpop.f32.mrf.mxu0
    %v4646 = vadd.f32 %v4389, %v4645
    %v4647 = vpop.f32.mrf.mxu0
    %v4648 = vadd.f32 %v4391, %v4647
    %4649 = vmatprep.mubr.f32.mxu0 %v2553
    %4650 = vmatmul.mubr.f32.gmra.mxu0 %v2552
    %v4651 = vpop.f32.mrf.mxu0
    %v4652 = vadd.f32 %v4395, %v4651
    %v4653 = vpop.f32.mrf.mxu0
    %v4654 = vadd.f32 %v4397, %v4653
    %4655 = vmatprep.mubr.f32.mxu0 %v2561
    %4656 = vmatmul.mubr.f32.gmra.mxu0 %v2560
    %v4657 = vpop.f32.mrf.mxu0
    %v4658 = vadd.f32 %v4401, %v4657
    %v4659 = vpop.f32.mrf.mxu0
    %v4660 = vadd.f32 %v4403, %v4659
    %4661 = vmatprep.mubr.f32.mxu0 %v2569
    %4662 = vmatmul.mubr.f32.gmra.mxu0 %v2568
    %v4663 = vpop.f32.mrf.mxu0
    %v4664 = vadd.f32 %v4407, %v4663
    %v4665 = vpop.f32.mrf.mxu0
    %v4666 = vadd.f32 %v4409, %v4665
    %4667 = vmatprep.mubr.f32.mxu0 %v2577
    %4668 = vmatmul.mubr.f32.gmra.mxu0 %v2576
    %v4669 = vpop.f32.mrf.mxu0
    %v4670 = vadd.f32 %v4413, %v4669
    %v4671 = vpop.f32.mrf.mxu0
    %v4672 = vadd.f32 %v4415, %v4671
    %4673 = vmatprep.mubr.f32.mxu0 %v2585
    %4674 = vmatmul.mubr.f32.gmra.mxu0 %v2584
    %v4675 = vpop.f32.mrf.mxu0
    %v4676 = vadd.f32 %v4419, %v4675
    %v4677 = vpop.f32.mrf.mxu0
    %v4678 = vadd.f32 %v4421, %v4677
    %4679 = vmatprep.mubr.f32.mxu0 %v2593
    %4680 = vmatmul.mubr.f32.gmra.mxu0 %v2592
    %v4681 = vpop.f32.mrf.mxu0
    %v4682 = vadd.f32 %v4425, %v4681
    %v4683 = vpop.f32.mrf.mxu0
    %v4684 = vadd.f32 %v4427, %v4683
    %4685 = vmatprep.mubr.f32.mxu0 %v2601
    %4686 = vmatmul.mubr.f32.gmra.mxu0 %v2600
    %v4687 = vpop.f32.mrf.mxu0
    %v4688 = vadd.f32 %v4431, %v4687
    %v4689 = vpop.f32.mrf.mxu0
    %v4690 = vadd.f32 %v4433, %v4689
    %4691 = vmatprep.mubr.f32.mxu0 %v2609
    %4692 = vmatmul.mubr.f32.gmra.mxu0 %v2608
    %v4693 = vpop.f32.mrf.mxu0
    %v4694 = vadd.f32 %v4437, %v4693
    %v4695 = vpop.f32.mrf.mxu0
    %v4696 = vadd.f32 %v4439, %v4695
    %4697 = vmatprep.mubr.f32.mxu0 %v2617
    %4698 = vmatmul.mubr.f32.gmra.mxu0 %v2616
    %v4699 = vpop.f32.mrf.mxu0
    %v4700 = vadd.f32 %v4443, %v4699
    %v4701 = vpop.f32.mrf.mxu0
    %v4702 = vadd.f32 %v4445, %v4701
    %4703 = vmatprep.mubr.f32.mxu0 %v2625
    %4704 = vmatmul.mubr.f32.gmra.mxu0 %v2624
    %v4705 = vpop.f32.mrf.mxu0
    %v4706 = vadd.f32 %v4449, %v4705
    %v4707 = vpop.f32.mrf.mxu0
    %v4708 = vadd.f32 %v4451, %v4707
    %4709 = vmatprep.mubr.f32.mxu0 %v2633
    %4710 = vmatmul.mubr.f32.gmra.mxu0 %v2632
    %v4711 = vpop.f32.mrf.mxu0
    %v4712 = vadd.f32 %v4455, %v4711
    %v4713 = vpop.f32.mrf.mxu0
    %v4714 = vadd.f32 %v4457, %v4713
    %4715 = vmatprep.mubr.f32.mxu0 %v2641
    %4716 = vmatmul.mubr.f32.gmra.mxu0 %v2640
    %v4717 = vpop.f32.mrf.mxu0
    %v4718 = vadd.f32 %v4461, %v4717
    %v4719 = vpop.f32.mrf.mxu0
    %v4720 = vadd.f32 %v4463, %v4719
    %4721 = vdwg.mxu0
    %4722 = vmatprep.subr.mxu0 %v2965
    %4723 = vmatpush1.msra.mxu0 %v2964
    %4724 = vmatprep.subr.mxu0 %v2961
    %4725 = vmatpush1.msra.mxu0 %v2960
    %4726 = vmatprep.subr.mxu0 %v2957
    %4727 = vmatpush1.msra.mxu0 %v2956
    %4728 = vmatprep.subr.mxu0 %v2953
    %4729 = vmatpush1.msra.mxu0 %v2952
    %4730 = vmatprep.subr.mxu0 %v2949
    %4731 = vmatpush1.msra.mxu0 %v2948
    %4732 = vmatprep.subr.mxu0 %v2945
    %4733 = vmatpush1.msra.mxu0 %v2944
    %4734 = vmatprep.subr.mxu0 %v2941
    %4735 = vmatpush1.msra.mxu0 %v2940
    %4736 = vmatprep.subr.mxu0 %v2937
    %4737 = vmatpush1.msra.mxu0 %v2936
    %4738 = vmatprep.subr.mxu0 %v2933
    %4739 = vmatpush1.msra.mxu0 %v2932
    %4740 = vmatprep.subr.mxu0 %v2929
    %4741 = vmatpush1.msra.mxu0 %v2928
    %4742 = vmatprep.subr.mxu0 %v2925
    %4743 = vmatpush1.msra.mxu0 %v2924
    %4744 = vmatprep.subr.mxu0 %v2921
    %4745 = vmatpush1.msra.mxu0 %v2920
    %4746 = vmatprep.subr.mxu0 %v2917
    %4747 = vmatpush1.msra.mxu0 %v2916
    %4748 = vmatprep.subr.mxu0 %v2913
    %4749 = vmatpush1.msra.mxu0 %v2912
    %4750 = vmatprep.subr.mxu0 %v2909
    %4751 = vmatpush1.msra.mxu0 %v2908
    %4752 = vmatprep.subr.mxu0 %v2905
    %4753 = vmatpush1.msra.mxu0 %v2904
    %4754 = vmatprep.subr.mxu0 %v3029
    %4755 = vmatpush2.msra.mxu0 %v3028
    %4756 = vmatprep.subr.mxu0 %v3025
    %4757 = vmatpush2.msra.mxu0 %v3024
    %4758 = vmatprep.subr.mxu0 %v3021
    %4759 = vmatpush2.msra.mxu0 %v3020
    %4760 = vmatprep.subr.mxu0 %v3017
    %4761 = vmatpush2.msra.mxu0 %v3016
    %4762 = vmatprep.subr.mxu0 %v3013
    %4763 = vmatpush2.msra.mxu0 %v3012
    %4764 = vmatprep.subr.mxu0 %v3009
    %4765 = vmatpush2.msra.mxu0 %v3008
    %4766 = vmatprep.subr.mxu0 %v3005
    %4767 = vmatpush2.msra.mxu0 %v3004
    %4768 = vmatprep.subr.mxu0 %v3001
    %4769 = vmatpush2.msra.mxu0 %v3000
    %4770 = vmatprep.subr.mxu0 %v2997
    %4771 = vmatpush2.msra.mxu0 %v2996
    %4772 = vmatprep.subr.mxu0 %v2993
    %4773 = vmatpush2.msra.mxu0 %v2992
    %4774 = vmatprep.subr.mxu0 %v2989
    %4775 = vmatpush2.msra.mxu0 %v2988
    %4776 = vmatprep.subr.mxu0 %v2985
    %4777 = vmatpush2.msra.mxu0 %v2984
    %4778 = vmatprep.subr.mxu0 %v2981
    %4779 = vmatpush2.msra.mxu0 %v2980
    %4780 = vmatprep.subr.mxu0 %v2977
    %4781 = vmatpush2.msra.mxu0 %v2976
    %4782 = vmatprep.subr.mxu0 %v2973
    %4783 = vmatpush2.msra.mxu0 %v2972
    %4784 = vmatprep.subr.mxu0 %v2969
    %4785 = vmatpush2.msra.mxu0 %v2968
    %4786 = vmatprep.mubr.f32.mxu0 %v2395
    %4787 = vmatmul.mubr.f32.gmra.mxu0 %v2394
    %v4788 = vpop.f32.mrf.mxu0
    %v4789 = vadd.f32 %v4532, %v4788
    %v4790 = vpop.f32.mrf.mxu0
    %v4791 = vadd.f32 %v4534, %v4790
    %4792 = vmatprep.mubr.f32.mxu0 %v2403
    %4793 = vmatmul.mubr.f32.gmra.mxu0 %v2402
    %v4794 = vpop.f32.mrf.mxu0
    %v4795 = vadd.f32 %v4538, %v4794
    %v4796 = vpop.f32.mrf.mxu0
    %v4797 = vadd.f32 %v4540, %v4796
    %4798 = vmatprep.mubr.f32.mxu0 %v2411
    %4799 = vmatmul.mubr.f32.gmra.mxu0 %v2410
    %v4800 = vpop.f32.mrf.mxu0
    %v4801 = vadd.f32 %v4544, %v4800
    %v4802 = vpop.f32.mrf.mxu0
    %v4803 = vadd.f32 %v4546, %v4802
    %4804 = vmatprep.mubr.f32.mxu0 %v2419
    %4805 = vmatmul.mubr.f32.gmra.mxu0 %v2418
    %v4806 = vpop.f32.mrf.mxu0
    %v4807 = vadd.f32 %v4550, %v4806
    %v4808 = vpop.f32.mrf.mxu0
    %v4809 = vadd.f32 %v4552, %v4808
    %4810 = vmatprep.mubr.f32.mxu0 %v2427
    %4811 = vmatmul.mubr.f32.gmra.mxu0 %v2426
    %v4812 = vpop.f32.mrf.mxu0
    %v4813 = vadd.f32 %v4556, %v4812
    %v4814 = vpop.f32.mrf.mxu0
    %v4815 = vadd.f32 %v4558, %v4814
    %4816 = vmatprep.mubr.f32.mxu0 %v2435
    %4817 = vmatmul.mubr.f32.gmra.mxu0 %v2434
    %v4818 = vpop.f32.mrf.mxu0
    %v4819 = vadd.f32 %v4562, %v4818
    %v4820 = vpop.f32.mrf.mxu0
    %v4821 = vadd.f32 %v4564, %v4820
    %4822 = vmatprep.mubr.f32.mxu0 %v2443
    %4823 = vmatmul.mubr.f32.gmra.mxu0 %v2442
    %v4824 = vpop.f32.mrf.mxu0
    %v4825 = vadd.f32 %v4568, %v4824
    %v4826 = vpop.f32.mrf.mxu0
    %v4827 = vadd.f32 %v4570, %v4826
    %4828 = vmatprep.mubr.f32.mxu0 %v2451
    %4829 = vmatmul.mubr.f32.gmra.mxu0 %v2450
    %v4830 = vpop.f32.mrf.mxu0
    %v4831 = vadd.f32 %v4574, %v4830
    %v4832 = vpop.f32.mrf.mxu0
    %v4833 = vadd.f32 %v4576, %v4832
    %4834 = vmatprep.mubr.f32.mxu0 %v2459
    %4835 = vmatmul.mubr.f32.gmra.mxu0 %v2458
    %v4836 = vpop.f32.mrf.mxu0
    %v4837 = vadd.f32 %v4580, %v4836
    %v4838 = vpop.f32.mrf.mxu0
    %v4839 = vadd.f32 %v4582, %v4838
    %4840 = vmatprep.mubr.f32.mxu0 %v2467
    %4841 = vmatmul.mubr.f32.gmra.mxu0 %v2466
    %v4842 = vpop.f32.mrf.mxu0
    %v4843 = vadd.f32 %v4586, %v4842
    %v4844 = vpop.f32.mrf.mxu0
    %v4845 = vadd.f32 %v4588, %v4844
    %4846 = vmatprep.mubr.f32.mxu0 %v2475
    %4847 = vmatmul.mubr.f32.gmra.mxu0 %v2474
    %v4848 = vpop.f32.mrf.mxu0
    %v4849 = vadd.f32 %v4592, %v4848
    %v4850 = vpop.f32.mrf.mxu0
    %v4851 = vadd.f32 %v4594, %v4850
    %4852 = vmatprep.mubr.f32.mxu0 %v2483
    %4853 = vmatmul.mubr.f32.gmra.mxu0 %v2482
    %v4854 = vpop.f32.mrf.mxu0
    %v4855 = vadd.f32 %v4598, %v4854
    %v4856 = vpop.f32.mrf.mxu0
    %v4857 = vadd.f32 %v4600, %v4856
    %4858 = vmatprep.mubr.f32.mxu0 %v2491
    %4859 = vmatmul.mubr.f32.gmra.mxu0 %v2490
    %v4860 = vpop.f32.mrf.mxu0
    %v4861 = vadd.f32 %v4604, %v4860
    %v4862 = vpop.f32.mrf.mxu0
    %v4863 = vadd.f32 %v4606, %v4862
    %4864 = vmatprep.mubr.f32.mxu0 %v2499
    %4865 = vmatmul.mubr.f32.gmra.mxu0 %v2498
    %v4866 = vpop.f32.mrf.mxu0
    %v4867 = vadd.f32 %v4610, %v4866
    %v4868 = vpop.f32.mrf.mxu0
    %v4869 = vadd.f32 %v4612, %v4868
    %4870 = vmatprep.mubr.f32.mxu0 %v2507
    %4871 = vmatmul.mubr.f32.gmra.mxu0 %v2506
    %v4872 = vpop.f32.mrf.mxu0
    %v4873 = vadd.f32 %v4616, %v4872
    %v4874 = vpop.f32.mrf.mxu0
    %v4875 = vadd.f32 %v4618, %v4874
    %4876 = vmatprep.mubr.f32.mxu0 %v2515
    %4877 = vmatmul.mubr.f32.gmra.mxu0 %v2514
    %v4878 = vpop.f32.mrf.mxu0
    %v4879 = vadd.f32 %v4622, %v4878
    %v4880 = vpop.f32.mrf.mxu0
    %v4881 = vadd.f32 %v4624, %v4880
    %4882 = vmatprep.mubr.f32.mxu0 %v2523
    %4883 = vmatmul.mubr.f32.gmra.mxu0 %v2522
    %v4884 = vpop.f32.mrf.mxu0
    %v4885 = vadd.f32 %v4628, %v4884
    %v4886 = vpop.f32.mrf.mxu0
    %v4887 = vadd.f32 %v4630, %v4886
    %4888 = vmatprep.mubr.f32.mxu0 %v2531
    %4889 = vmatmul.mubr.f32.gmra.mxu0 %v2530
    %v4890 = vpop.f32.mrf.mxu0
    %v4891 = vadd.f32 %v4634, %v4890
    %v4892 = vpop.f32.mrf.mxu0
    %v4893 = vadd.f32 %v4636, %v4892
    %4894 = vmatprep.mubr.f32.mxu0 %v2539
    %4895 = vmatmul.mubr.f32.gmra.mxu0 %v2538
    %v4896 = vpop.f32.mrf.mxu0
    %v4897 = vadd.f32 %v4640, %v4896
    %v4898 = vpop.f32.mrf.mxu0
    %v4899 = vadd.f32 %v4642, %v4898
    %4900 = vmatprep.mubr.f32.mxu0 %v2547
    %4901 = vmatmul.mubr.f32.gmra.mxu0 %v2546
    %v4902 = vpop.f32.mrf.mxu0
    %v4903 = vadd.f32 %v4646, %v4902
    %v4904 = vpop.f32.mrf.mxu0
    %v4905 = vadd.f32 %v4648, %v4904
    %4906 = vmatprep.mubr.f32.mxu0 %v2555
    %4907 = vmatmul.mubr.f32.gmra.mxu0 %v2554
    %v4908 = vpop.f32.mrf.mxu0
    %v4909 = vadd.f32 %v4652, %v4908
    %v4910 = vpop.f32.mrf.mxu0
    %v4911 = vadd.f32 %v4654, %v4910
    %4912 = vmatprep.mubr.f32.mxu0 %v2563
    %4913 = vmatmul.mubr.f32.gmra.mxu0 %v2562
    %v4914 = vpop.f32.mrf.mxu0
    %v4915 = vadd.f32 %v4658, %v4914
    %v4916 = vpop.f32.mrf.mxu0
    %v4917 = vadd.f32 %v4660, %v4916
    %4918 = vmatprep.mubr.f32.mxu0 %v2571
    %4919 = vmatmul.mubr.f32.gmra.mxu0 %v2570
    %v4920 = vpop.f32.mrf.mxu0
    %v4921 = vadd.f32 %v4664, %v4920
    %v4922 = vpop.f32.mrf.mxu0
    %v4923 = vadd.f32 %v4666, %v4922
    %4924 = vmatprep.mubr.f32.mxu0 %v2579
    %4925 = vmatmul.mubr.f32.gmra.mxu0 %v2578
    %v4926 = vpop.f32.mrf.mxu0
    %v4927 = vadd.f32 %v4670, %v4926
    %v4928 = vpop.f32.mrf.mxu0
    %v4929 = vadd.f32 %v4672, %v4928
    %4930 = vmatprep.mubr.f32.mxu0 %v2587
    %4931 = vmatmul.mubr.f32.gmra.mxu0 %v2586
    %v4932 = vpop.f32.mrf.mxu0
    %v4933 = vadd.f32 %v4676, %v4932
    %v4934 = vpop.f32.mrf.mxu0
    %v4935 = vadd.f32 %v4678, %v4934
    %4936 = vmatprep.mubr.f32.mxu0 %v2595
    %4937 = vmatmul.mubr.f32.gmra.mxu0 %v2594
    %v4938 = vpop.f32.mrf.mxu0
    %v4939 = vadd.f32 %v4682, %v4938
    %v4940 = vpop.f32.mrf.mxu0
    %v4941 = vadd.f32 %v4684, %v4940
    %4942 = vmatprep.mubr.f32.mxu0 %v2603
    %4943 = vmatmul.mubr.f32.gmra.mxu0 %v2602
    %v4944 = vpop.f32.mrf.mxu0
    %v4945 = vadd.f32 %v4688, %v4944
    %v4946 = vpop.f32.mrf.mxu0
    %v4947 = vadd.f32 %v4690, %v4946
    %4948 = vmatprep.mubr.f32.mxu0 %v2611
    %4949 = vmatmul.mubr.f32.gmra.mxu0 %v2610
    %v4950 = vpop.f32.mrf.mxu0
    %v4951 = vadd.f32 %v4694, %v4950
    %v4952 = vpop.f32.mrf.mxu0
    %v4953 = vadd.f32 %v4696, %v4952
    %4954 = vmatprep.mubr.f32.mxu0 %v2619
    %4955 = vmatmul.mubr.f32.gmra.mxu0 %v2618
    %v4956 = vpop.f32.mrf.mxu0
    %v4957 = vadd.f32 %v4700, %v4956
    %v4958 = vpop.f32.mrf.mxu0
    %v4959 = vadd.f32 %v4702, %v4958
    %4960 = vmatprep.mubr.f32.mxu0 %v2627
    %4961 = vmatmul.mubr.f32.gmra.mxu0 %v2626
    %v4962 = vpop.f32.mrf.mxu0
    %v4963 = vadd.f32 %v4706, %v4962
    %v4964 = vpop.f32.mrf.mxu0
    %v4965 = vadd.f32 %v4708, %v4964
    %4966 = vmatprep.mubr.f32.mxu0 %v2635
    %4967 = vmatmul.mubr.f32.gmra.mxu0 %v2634
    %v4968 = vpop.f32.mrf.mxu0
    %v4969 = vadd.f32 %v4712, %v4968
    %v4970 = vpop.f32.mrf.mxu0
    %v4971 = vadd.f32 %v4714, %v4970
    %4972 = vmatprep.mubr.f32.mxu0 %v2643
    %4973 = vmatmul.mubr.f32.gmra.mxu0 %v2642
    %v4974 = vpop.f32.mrf.mxu0
    %v4975 = vadd.f32 %v4718, %v4974
    %v4976 = vpop.f32.mrf.mxu0
    %v4977 = vadd.f32 %v4720, %v4976
    %4978 = vdwg.mxu0
    %4979 = vmatprep.subr.mxu0 %v3093
    %4980 = vmatpush1.msra.mxu0 %v3092
    %4981 = vmatprep.subr.mxu0 %v3089
    %4982 = vmatpush1.msra.mxu0 %v3088
    %4983 = vmatprep.subr.mxu0 %v3085
    %4984 = vmatpush1.msra.mxu0 %v3084
    %4985 = vmatprep.subr.mxu0 %v3081
    %4986 = vmatpush1.msra.mxu0 %v3080
    %4987 = vmatprep.subr.mxu0 %v3077
    %4988 = vmatpush1.msra.mxu0 %v3076
    %4989 = vmatprep.subr.mxu0 %v3073
    %4990 = vmatpush1.msra.mxu0 %v3072
    %4991 = vmatprep.subr.mxu0 %v3069
    %4992 = vmatpush1.msra.mxu0 %v3068
    %4993 = vmatprep.subr.mxu0 %v3065
    %4994 = vmatpush1.msra.mxu0 %v3064
    %4995 = vmatprep.subr.mxu0 %v3061
    %4996 = vmatpush1.msra.mxu0 %v3060
    %4997 = vmatprep.subr.mxu0 %v3057
    %4998 = vmatpush1.msra.mxu0 %v3056
    %4999 = vmatprep.subr.mxu0 %v3053
    %5000 = vmatpush1.msra.mxu0 %v3052
    %5001 = vmatprep.subr.mxu0 %v3049
    %5002 = vmatpush1.msra.mxu0 %v3048
    %5003 = vmatprep.subr.mxu0 %v3045
    %5004 = vmatpush1.msra.mxu0 %v3044
    %5005 = vmatprep.subr.mxu0 %v3041
    %5006 = vmatpush1.msra.mxu0 %v3040
    %5007 = vmatprep.subr.mxu0 %v3037
    %5008 = vmatpush1.msra.mxu0 %v3036
    %5009 = vmatprep.subr.mxu0 %v3033
    %5010 = vmatpush1.msra.mxu0 %v3032
    %5011 = vmatprep.subr.mxu0 %v3157
    %5012 = vmatpush2.msra.mxu0 %v3156
    %5013 = vmatprep.subr.mxu0 %v3153
    %5014 = vmatpush2.msra.mxu0 %v3152
    %5015 = vmatprep.subr.mxu0 %v3149
    %5016 = vmatpush2.msra.mxu0 %v3148
    %5017 = vmatprep.subr.mxu0 %v3145
    %5018 = vmatpush2.msra.mxu0 %v3144
    %5019 = vmatprep.subr.mxu0 %v3141
    %5020 = vmatpush2.msra.mxu0 %v3140
    %5021 = vmatprep.subr.mxu0 %v3137
    %5022 = vmatpush2.msra.mxu0 %v3136
    %5023 = vmatprep.subr.mxu0 %v3133
    %5024 = vmatpush2.msra.mxu0 %v3132
    %5025 = vmatprep.subr.mxu0 %v3129
    %5026 = vmatpush2.msra.mxu0 %v3128
    %5027 = vmatprep.subr.mxu0 %v3125
    %5028 = vmatpush2.msra.mxu0 %v3124
    %5029 = vmatprep.subr.mxu0 %v3121
    %5030 = vmatpush2.msra.mxu0 %v3120
    %5031 = vmatprep.subr.mxu0 %v3117
    %5032 = vmatpush2.msra.mxu0 %v3116
    %5033 = vmatprep.subr.mxu0 %v3113
    %5034 = vmatpush2.msra.mxu0 %v3112
    %5035 = vmatprep.subr.mxu0 %v3109
    %5036 = vmatpush2.msra.mxu0 %v3108
    %5037 = vmatprep.subr.mxu0 %v3105
    %5038 = vmatpush2.msra.mxu0 %v3104
    %5039 = vmatprep.subr.mxu0 %v3101
    %5040 = vmatpush2.msra.mxu0 %v3100
    %5041 = vmatprep.subr.mxu0 %v3097
    %5042 = vmatpush2.msra.mxu0 %v3096
    %5043 = vmatprep.mubr.f32.mxu0 %v2397
    %5044 = vmatmul.mubr.f32.gmra.mxu0 %v2396
    %v5045 = vpop.f32.mrf.mxu0
    %v5046 = vadd.f32 %v4789, %v5045
    %v5047 = vpop.f32.mrf.mxu0
    %v5048 = vadd.f32 %v4791, %v5047
    %5049 = vmatprep.mubr.f32.mxu0 %v2405
    %5050 = vmatmul.mubr.f32.gmra.mxu0 %v2404
    %v5051 = vpop.f32.mrf.mxu0
    %v5052 = vadd.f32 %v4795, %v5051
    %v5053 = vpop.f32.mrf.mxu0
    %v5054 = vadd.f32 %v4797, %v5053
    %5055 = vmatprep.mubr.f32.mxu0 %v2413
    %5056 = vmatmul.mubr.f32.gmra.mxu0 %v2412
    %v5057 = vpop.f32.mrf.mxu0
    %v5058 = vadd.f32 %v4801, %v5057
    %v5059 = vpop.f32.mrf.mxu0
    %v5060 = vadd.f32 %v4803, %v5059
    %5061 = vmatprep.mubr.f32.mxu0 %v2421
    %5062 = vmatmul.mubr.f32.gmra.mxu0 %v2420
    %v5063 = vpop.f32.mrf.mxu0
    %v5064 = vadd.f32 %v4807, %v5063
    %v5065 = vpop.f32.mrf.mxu0
    %v5066 = vadd.f32 %v4809, %v5065
    %5067 = vmatprep.mubr.f32.mxu0 %v2429
    %5068 = vmatmul.mubr.f32.gmra.mxu0 %v2428
    %v5069 = vpop.f32.mrf.mxu0
    %v5070 = vadd.f32 %v4813, %v5069
    %v5071 = vpop.f32.mrf.mxu0
    %v5072 = vadd.f32 %v4815, %v5071
    %5073 = vmatprep.mubr.f32.mxu0 %v2437
    %5074 = vmatmul.mubr.f32.gmra.mxu0 %v2436
    %v5075 = vpop.f32.mrf.mxu0
    %v5076 = vadd.f32 %v4819, %v5075
    %v5077 = vpop.f32.mrf.mxu0
    %v5078 = vadd.f32 %v4821, %v5077
    %5079 = vmatprep.mubr.f32.mxu0 %v2445
    %5080 = vmatmul.mubr.f32.gmra.mxu0 %v2444
    %v5081 = vpop.f32.mrf.mxu0
    %v5082 = vadd.f32 %v4825, %v5081
    %v5083 = vpop.f32.mrf.mxu0
    %v5084 = vadd.f32 %v4827, %v5083
    %5085 = vmatprep.mubr.f32.mxu0 %v2453
    %5086 = vmatmul.mubr.f32.gmra.mxu0 %v2452
    %v5087 = vpop.f32.mrf.mxu0
    %v5088 = vadd.f32 %v4831, %v5087
    %v5089 = vpop.f32.mrf.mxu0
    %v5090 = vadd.f32 %v4833, %v5089
    %5091 = vmatprep.mubr.f32.mxu0 %v2461
    %5092 = vmatmul.mubr.f32.gmra.mxu0 %v2460
    %v5093 = vpop.f32.mrf.mxu0
    %v5094 = vadd.f32 %v4837, %v5093
    %v5095 = vpop.f32.mrf.mxu0
    %v5096 = vadd.f32 %v4839, %v5095
    %5097 = vmatprep.mubr.f32.mxu0 %v2469
    %5098 = vmatmul.mubr.f32.gmra.mxu0 %v2468
    %v5099 = vpop.f32.mrf.mxu0
    %v5100 = vadd.f32 %v4843, %v5099
    %v5101 = vpop.f32.mrf.mxu0
    %v5102 = vadd.f32 %v4845, %v5101
    %5103 = vmatprep.mubr.f32.mxu0 %v2477
    %5104 = vmatmul.mubr.f32.gmra.mxu0 %v2476
    %v5105 = vpop.f32.mrf.mxu0
    %v5106 = vadd.f32 %v4849, %v5105
    %v5107 = vpop.f32.mrf.mxu0
    %v5108 = vadd.f32 %v4851, %v5107
    %5109 = vmatprep.mubr.f32.mxu0 %v2485
    %5110 = vmatmul.mubr.f32.gmra.mxu0 %v2484
    %v5111 = vpop.f32.mrf.mxu0
    %v5112 = vadd.f32 %v4855, %v5111
    %v5113 = vpop.f32.mrf.mxu0
    %v5114 = vadd.f32 %v4857, %v5113
    %5115 = vmatprep.mubr.f32.mxu0 %v2493
    %5116 = vmatmul.mubr.f32.gmra.mxu0 %v2492
    %v5117 = vpop.f32.mrf.mxu0
    %v5118 = vadd.f32 %v4861, %v5117
    %v5119 = vpop.f32.mrf.mxu0
    %v5120 = vadd.f32 %v4863, %v5119
    %5121 = vmatprep.mubr.f32.mxu0 %v2501
    %5122 = vmatmul.mubr.f32.gmra.mxu0 %v2500
    %v5123 = vpop.f32.mrf.mxu0
    %v5124 = vadd.f32 %v4867, %v5123
    %v5125 = vpop.f32.mrf.mxu0
    %v5126 = vadd.f32 %v4869, %v5125
    %5127 = vmatprep.mubr.f32.mxu0 %v2509
    %5128 = vmatmul.mubr.f32.gmra.mxu0 %v2508
    %v5129 = vpop.f32.mrf.mxu0
    %v5130 = vadd.f32 %v4873, %v5129
    %v5131 = vpop.f32.mrf.mxu0
    %v5132 = vadd.f32 %v4875, %v5131
    %5133 = vmatprep.mubr.f32.mxu0 %v2517
    %5134 = vmatmul.mubr.f32.gmra.mxu0 %v2516
    %v5135 = vpop.f32.mrf.mxu0
    %v5136 = vadd.f32 %v4879, %v5135
    %v5137 = vpop.f32.mrf.mxu0
    %v5138 = vadd.f32 %v4881, %v5137
    %5139 = vmatprep.mubr.f32.mxu0 %v2525
    %5140 = vmatmul.mubr.f32.gmra.mxu0 %v2524
    %v5141 = vpop.f32.mrf.mxu0
    %v5142 = vadd.f32 %v4885, %v5141
    %v5143 = vpop.f32.mrf.mxu0
    %v5144 = vadd.f32 %v4887, %v5143
    %5145 = vmatprep.mubr.f32.mxu0 %v2533
    %5146 = vmatmul.mubr.f32.gmra.mxu0 %v2532
    %v5147 = vpop.f32.mrf.mxu0
    %v5148 = vadd.f32 %v4891, %v5147
    %v5149 = vpop.f32.mrf.mxu0
    %v5150 = vadd.f32 %v4893, %v5149
    %5151 = vmatprep.mubr.f32.mxu0 %v2541
    %5152 = vmatmul.mubr.f32.gmra.mxu0 %v2540
    %v5153 = vpop.f32.mrf.mxu0
    %v5154 = vadd.f32 %v4897, %v5153
    %v5155 = vpop.f32.mrf.mxu0
    %v5156 = vadd.f32 %v4899, %v5155
    %5157 = vmatprep.mubr.f32.mxu0 %v2549
    %5158 = vmatmul.mubr.f32.gmra.mxu0 %v2548
    %v5159 = vpop.f32.mrf.mxu0
    %v5160 = vadd.f32 %v4903, %v5159
    %v5161 = vpop.f32.mrf.mxu0
    %v5162 = vadd.f32 %v4905, %v5161
    %5163 = vmatprep.mubr.f32.mxu0 %v2557
    %5164 = vmatmul.mubr.f32.gmra.mxu0 %v2556
    %v5165 = vpop.f32.mrf.mxu0
    %v5166 = vadd.f32 %v4909, %v5165
    %v5167 = vpop.f32.mrf.mxu0
    %v5168 = vadd.f32 %v4911, %v5167
    %5169 = vmatprep.mubr.f32.mxu0 %v2565
    %5170 = vmatmul.mubr.f32.gmra.mxu0 %v2564
    %v5171 = vpop.f32.mrf.mxu0
    %v5172 = vadd.f32 %v4915, %v5171
    %v5173 = vpop.f32.mrf.mxu0
    %v5174 = vadd.f32 %v4917, %v5173
    %5175 = vmatprep.mubr.f32.mxu0 %v2573
    %5176 = vmatmul.mubr.f32.gmra.mxu0 %v2572
    %v5177 = vpop.f32.mrf.mxu0
    %v5178 = vadd.f32 %v4921, %v5177
    %v5179 = vpop.f32.mrf.mxu0
    %v5180 = vadd.f32 %v4923, %v5179
    %5181 = vmatprep.mubr.f32.mxu0 %v2581
    %5182 = vmatmul.mubr.f32.gmra.mxu0 %v2580
    %v5183 = vpop.f32.mrf.mxu0
    %v5184 = vadd.f32 %v4927, %v5183
    %v5185 = vpop.f32.mrf.mxu0
    %v5186 = vadd.f32 %v4929, %v5185
    %5187 = vmatprep.mubr.f32.mxu0 %v2589
    %5188 = vmatmul.mubr.f32.gmra.mxu0 %v2588
    %v5189 = vpop.f32.mrf.mxu0
    %v5190 = vadd.f32 %v4933, %v5189
    %v5191 = vpop.f32.mrf.mxu0
    %v5192 = vadd.f32 %v4935, %v5191
    %5193 = vmatprep.mubr.f32.mxu0 %v2597
    %5194 = vmatmul.mubr.f32.gmra.mxu0 %v2596
    %v5195 = vpop.f32.mrf.mxu0
    %v5196 = vadd.f32 %v4939, %v5195
    %v5197 = vpop.f32.mrf.mxu0
    %v5198 = vadd.f32 %v4941, %v5197
    %5199 = vmatprep.mubr.f32.mxu0 %v2605
    %5200 = vmatmul.mubr.f32.gmra.mxu0 %v2604
    %v5201 = vpop.f32.mrf.mxu0
    %v5202 = vadd.f32 %v4945, %v5201
    %v5203 = vpop.f32.mrf.mxu0
    %v5204 = vadd.f32 %v4947, %v5203
    %5205 = vmatprep.mubr.f32.mxu0 %v2613
    %5206 = vmatmul.mubr.f32.gmra.mxu0 %v2612
    %v5207 = vpop.f32.mrf.mxu0
    %v5208 = vadd.f32 %v4951, %v5207
    %v5209 = vpop.f32.mrf.mxu0
    %v5210 = vadd.f32 %v4953, %v5209
    %5211 = vmatprep.mubr.f32.mxu0 %v2621
    %5212 = vmatmul.mubr.f32.gmra.mxu0 %v2620
    %v5213 = vpop.f32.mrf.mxu0
    %v5214 = vadd.f32 %v4957, %v5213
    %v5215 = vpop.f32.mrf.mxu0
    %v5216 = vadd.f32 %v4959, %v5215
    %5217 = vmatprep.mubr.f32.mxu0 %v2629
    %5218 = vmatmul.mubr.f32.gmra.mxu0 %v2628
    %v5219 = vpop.f32.mrf.mxu0
    %v5220 = vadd.f32 %v4963, %v5219
    %v5221 = vpop.f32.mrf.mxu0
    %v5222 = vadd.f32 %v4965, %v5221
    %5223 = vmatprep.mubr.f32.mxu0 %v2637
    %5224 = vmatmul.mubr.f32.gmra.mxu0 %v2636
    %v5225 = vpop.f32.mrf.mxu0
    %v5226 = vadd.f32 %v4969, %v5225
    %v5227 = vpop.f32.mrf.mxu0
    %v5228 = vadd.f32 %v4971, %v5227
    %5229 = vmatprep.mubr.f32.mxu0 %v2645
    %5230 = vmatmul.mubr.f32.gmra.mxu0 %v2644
    %v5231 = vpop.f32.mrf.mxu0
    %v5232 = vadd.f32 %v4975, %v5231
    %v5233 = vpop.f32.mrf.mxu0
    %v5234 = vadd.f32 %v4977, %v5233
    %5235 = vdwg.mxu0
    %vm5236 = vcmp.gt.f32.partialorder %v4018, 0.0
    %vm5237 = vcmp.gt.f32.partialorder %v4020, 0.0
    %vm5238 = vcmp.gt.f32.partialorder %v5046, 0.0
    %vm5239 = vcmp.gt.f32.partialorder %v5048, 0.0
    %vm5240 = vcmp.gt.f32.partialorder %v4024, 0.0
    %vm5241 = vcmp.gt.f32.partialorder %v4026, 0.0
    %vm5242 = vcmp.gt.f32.partialorder %v5052, 0.0
    %vm5243 = vcmp.gt.f32.partialorder %v5054, 0.0
    %vm5244 = vcmp.gt.f32.partialorder %v4030, 0.0
    %vm5245 = vcmp.gt.f32.partialorder %v4032, 0.0
    %vm5246 = vcmp.gt.f32.partialorder %v5058, 0.0
    %vm5247 = vcmp.gt.f32.partialorder %v5060, 0.0
    %vm5248 = vcmp.gt.f32.partialorder %v4036, 0.0
    %vm5249 = vcmp.gt.f32.partialorder %v4038, 0.0
    %vm5250 = vcmp.gt.f32.partialorder %v5064, 0.0
    %vm5251 = vcmp.gt.f32.partialorder %v5066, 0.0
    %vm5252 = vcmp.gt.f32.partialorder %v4042, 0.0
    %vm5253 = vcmp.gt.f32.partialorder %v4044, 0.0
    %vm5254 = vcmp.gt.f32.partialorder %v5070, 0.0
    %vm5255 = vcmp.gt.f32.partialorder %v5072, 0.0
    %vm5256 = vcmp.gt.f32.partialorder %v4048, 0.0
    %vm5257 = vcmp.gt.f32.partialorder %v4050, 0.0
    %vm5258 = vcmp.gt.f32.partialorder %v5076, 0.0
    %vm5259 = vcmp.gt.f32.partialorder %v5078, 0.0
    %vm5260 = vcmp.gt.f32.partialorder %v4054, 0.0
    %vm5261 = vcmp.gt.f32.partialorder %v4056, 0.0
    %vm5262 = vcmp.gt.f32.partialorder %v5082, 0.0
    %vm5263 = vcmp.gt.f32.partialorder %v5084, 0.0
    %vm5264 = vcmp.gt.f32.partialorder %v4060, 0.0
    %vm5265 = vcmp.gt.f32.partialorder %v4062, 0.0
    %vm5266 = vcmp.gt.f32.partialorder %v5088, 0.0
    %vm5267 = vcmp.gt.f32.partialorder %v5090, 0.0
    %vm5268 = vcmp.gt.f32.partialorder %v4066, 0.0
    %vm5269 = vcmp.gt.f32.partialorder %v4068, 0.0
    %vm5270 = vcmp.gt.f32.partialorder %v5094, 0.0
    %vm5271 = vcmp.gt.f32.partialorder %v5096, 0.0
    %vm5272 = vcmp.gt.f32.partialorder %v4072, 0.0
    %vm5273 = vcmp.gt.f32.partialorder %v4074, 0.0
    %vm5274 = vcmp.gt.f32.partialorder %v5100, 0.0
    %vm5275 = vcmp.gt.f32.partialorder %v5102, 0.0
    %vm5276 = vcmp.gt.f32.partialorder %v4078, 0.0
    %vm5277 = vcmp.gt.f32.partialorder %v4080, 0.0
    %vm5278 = vcmp.gt.f32.partialorder %v5106, 0.0
    %vm5279 = vcmp.gt.f32.partialorder %v5108, 0.0
    %vm5280 = vcmp.gt.f32.partialorder %v4084, 0.0
    %vm5281 = vcmp.gt.f32.partialorder %v4086, 0.0
    %vm5282 = vcmp.gt.f32.partialorder %v5112, 0.0
    %vm5283 = vcmp.gt.f32.partialorder %v5114, 0.0
    %vm5284 = vcmp.gt.f32.partialorder %v4090, 0.0
    %vm5285 = vcmp.gt.f32.partialorder %v4092, 0.0
    %vm5286 = vcmp.gt.f32.partialorder %v5118, 0.0
    %vm5287 = vcmp.gt.f32.partialorder %v5120, 0.0
    %vm5288 = vcmp.gt.f32.partialorder %v4096, 0.0
    %vm5289 = vcmp.gt.f32.partialorder %v4098, 0.0
    %vm5290 = vcmp.gt.f32.partialorder %v5124, 0.0
    %vm5291 = vcmp.gt.f32.partialorder %v5126, 0.0
    %vm5292 = vcmp.gt.f32.partialorder %v4102, 0.0
    %vm5293 = vcmp.gt.f32.partialorder %v4104, 0.0
    %vm5294 = vcmp.gt.f32.partialorder %v5130, 0.0
    %vm5295 = vcmp.gt.f32.partialorder %v5132, 0.0
    %vm5296 = vcmp.gt.f32.partialorder %v4108, 0.0
    %vm5297 = vcmp.gt.f32.partialorder %v4110, 0.0
    %vm5298 = vcmp.gt.f32.partialorder %v5136, 0.0
    %vm5299 = vcmp.gt.f32.partialorder %v5138, 0.0
    %vm5300 = vcmp.gt.f32.partialorder %v4114, 0.0
    %vm5301 = vcmp.gt.f32.partialorder %v4116, 0.0
    %vm5302 = vcmp.gt.f32.partialorder %v5142, 0.0
    %vm5303 = vcmp.gt.f32.partialorder %v5144, 0.0
    %vm5304 = vcmp.gt.f32.partialorder %v4120, 0.0
    %vm5305 = vcmp.gt.f32.partialorder %v4122, 0.0
    %vm5306 = vcmp.gt.f32.partialorder %v5148, 0.0
    %vm5307 = vcmp.gt.f32.partialorder %v5150, 0.0
    %vm5308 = vcmp.gt.f32.partialorder %v4126, 0.0
    %vm5309 = vcmp.gt.f32.partialorder %v4128, 0.0
    %vm5310 = vcmp.gt.f32.partialorder %v5154, 0.0
    %vm5311 = vcmp.gt.f32.partialorder %v5156, 0.0
    %vm5312 = vcmp.gt.f32.partialorder %v4132, 0.0
    %vm5313 = vcmp.gt.f32.partialorder %v4134, 0.0
    %vm5314 = vcmp.gt.f32.partialorder %v5160, 0.0
    %vm5315 = vcmp.gt.f32.partialorder %v5162, 0.0
    %vm5316 = vcmp.gt.f32.partialorder %v4138, 0.0
    %vm5317 = vcmp.gt.f32.partialorder %v4140, 0.0
    %vm5318 = vcmp.gt.f32.partialorder %v5166, 0.0
    %vm5319 = vcmp.gt.f32.partialorder %v5168, 0.0
    %vm5320 = vcmp.gt.f32.partialorder %v4144, 0.0
    %vm5321 = vcmp.gt.f32.partialorder %v4146, 0.0
    %vm5322 = vcmp.gt.f32.partialorder %v5172, 0.0
    %vm5323 = vcmp.gt.f32.partialorder %v5174, 0.0
    %vm5324 = vcmp.gt.f32.partialorder %v4150, 0.0
    %vm5325 = vcmp.gt.f32.partialorder %v4152, 0.0
    %vm5326 = vcmp.gt.f32.partialorder %v5178, 0.0
    %vm5327 = vcmp.gt.f32.partialorder %v5180, 0.0
    %vm5328 = vcmp.gt.f32.partialorder %v4156, 0.0
    %vm5329 = vcmp.gt.f32.partialorder %v4158, 0.0
    %vm5330 = vcmp.gt.f32.partialorder %v5184, 0.0
    %vm5331 = vcmp.gt.f32.partialorder %v5186, 0.0
    %vm5332 = vcmp.gt.f32.partialorder %v4162, 0.0
    %vm5333 = vcmp.gt.f32.partialorder %v4164, 0.0
    %vm5334 = vcmp.gt.f32.partialorder %v5190, 0.0
    %vm5335 = vcmp.gt.f32.partialorder %v5192, 0.0
    %vm5336 = vcmp.gt.f32.partialorder %v4168, 0.0
    %vm5337 = vcmp.gt.f32.partialorder %v4170, 0.0
    %vm5338 = vcmp.gt.f32.partialorder %v5196, 0.0
    %vm5339 = vcmp.gt.f32.partialorder %v5198, 0.0
    %vm5340 = vcmp.gt.f32.partialorder %v4174, 0.0
    %vm5341 = vcmp.gt.f32.partialorder %v4176, 0.0
    %vm5342 = vcmp.gt.f32.partialorder %v5202, 0.0
    %vm5343 = vcmp.gt.f32.partialorder %v5204, 0.0
    %vm5344 = vcmp.gt.f32.partialorder %v4180, 0.0
    %vm5345 = vcmp.gt.f32.partialorder %v4182, 0.0
    %vm5346 = vcmp.gt.f32.partialorder %v5208, 0.0
    %vm5347 = vcmp.gt.f32.partialorder %v5210, 0.0
    %vm5348 = vcmp.gt.f32.partialorder %v4186, 0.0
    %vm5349 = vcmp.gt.f32.partialorder %v4188, 0.0
    %vm5350 = vcmp.gt.f32.partialorder %v5214, 0.0
    %vm5351 = vcmp.gt.f32.partialorder %v5216, 0.0
    %vm5352 = vcmp.gt.f32.partialorder %v4192, 0.0
    %vm5353 = vcmp.gt.f32.partialorder %v4194, 0.0
    %vm5354 = vcmp.gt.f32.partialorder %v5220, 0.0
    %vm5355 = vcmp.gt.f32.partialorder %v5222, 0.0
    %vm5356 = vcmp.gt.f32.partialorder %v4198, 0.0
    %vm5357 = vcmp.gt.f32.partialorder %v4200, 0.0
    %vm5358 = vcmp.gt.f32.partialorder %v5226, 0.0
    %vm5359 = vcmp.gt.f32.partialorder %v5228, 0.0
    %vm5360 = vcmp.gt.f32.partialorder %v4204, 0.0
    %vm5361 = vcmp.gt.f32.partialorder %v4206, 0.0
    %vm5362 = vcmp.gt.f32.partialorder %v5232, 0.0
    %vm5363 = vcmp.gt.f32.partialorder %v5234, 0.0
    %v5364 = vmul.f32 %v4018, 0.2
    %v5365 = vmul.f32 %v4020, 0.2
    %v5366 = vmul.f32 %v5046, 0.2
    %v5367 = vmul.f32 %v5048, 0.2
    %v5368 = vmul.f32 %v4024, 0.2
    %v5369 = vmul.f32 %v4026, 0.2
    %v5370 = vmul.f32 %v5052, 0.2
    %v5371 = vmul.f32 %v5054, 0.2
    %v5372 = vmul.f32 %v4030, 0.2
    %v5373 = vmul.f32 %v4032, 0.2
    %v5374 = vmul.f32 %v5058, 0.2
    %v5375 = vmul.f32 %v5060, 0.2
    %v5376 = vmul.f32 %v4036, 0.2
    %v5377 = vmul.f32 %v4038, 0.2
    %v5378 = vmul.f32 %v5064, 0.2
    %v5379 = vmul.f32 %v5066, 0.2
    %v5380 = vmul.f32 %v4042, 0.2
    %v5381 = vmul.f32 %v4044, 0.2
    %v5382 = vmul.f32 %v5070, 0.2
    %v5383 = vmul.f32 %v5072, 0.2
    %v5384 = vmul.f32 %v4048, 0.2
    %v5385 = vmul.f32 %v4050, 0.2
    %v5386 = vmul.f32 %v5076, 0.2
    %v5387 = vmul.f32 %v5078, 0.2
    %v5388 = vmul.f32 %v4054, 0.2
    %v5389 = vmul.f32 %v4056, 0.2
    %v5390 = vmul.f32 %v5082, 0.2
    %v5391 = vmul.f32 %v5084, 0.2
    %v5392 = vmul.f32 %v4060, 0.2
    %v5393 = vmul.f32 %v4062, 0.2
    %v5394 = vmul.f32 %v5088, 0.2
    %v5395 = vmul.f32 %v5090, 0.2
    %v5396 = vmul.f32 %v4066, 0.2
    %v5397 = vmul.f32 %v4068, 0.2
    %v5398 = vmul.f32 %v5094, 0.2
    %v5399 = vmul.f32 %v5096, 0.2
    %v5400 = vmul.f32 %v4072, 0.2
    %v5401 = vmul.f32 %v4074, 0.2
    %v5402 = vmul.f32 %v5100, 0.2
    %v5403 = vmul.f32 %v5102, 0.2
    %v5404 = vmul.f32 %v4078, 0.2
    %v5405 = vmul.f32 %v4080, 0.2
    %v5406 = vmul.f32 %v5106, 0.2
    %v5407 = vmul.f32 %v5108, 0.2
    %v5408 = vmul.f32 %v4084, 0.2
    %v5409 = vmul.f32 %v4086, 0.2
    %v5410 = vmul.f32 %v5112, 0.2
    %v5411 = vmul.f32 %v5114, 0.2
    %v5412 = vmul.f32 %v4090, 0.2
    %v5413 = vmul.f32 %v4092, 0.2
    %v5414 = vmul.f32 %v5118, 0.2
    %v5415 = vmul.f32 %v5120, 0.2
    %v5416 = vmul.f32 %v4096, 0.2
    %v5417 = vmul.f32 %v4098, 0.2
    %v5418 = vmul.f32 %v5124, 0.2
    %v5419 = vmul.f32 %v5126, 0.2
    %v5420 = vmul.f32 %v4102, 0.2
    %v5421 = vmul.f32 %v4104, 0.2
    %v5422 = vmul.f32 %v5130, 0.2
    %v5423 = vmul.f32 %v5132, 0.2
    %v5424 = vmul.f32 %v4108, 0.2
    %v5425 = vmul.f32 %v4110, 0.2
    %v5426 = vmul.f32 %v5136, 0.2
    %v5427 = vmul.f32 %v5138, 0.2
    %v5428 = vmul.f32 %v4114, 0.2
    %v5429 = vmul.f32 %v4116, 0.2
    %v5430 = vmul.f32 %v5142, 0.2
    %v5431 = vmul.f32 %v5144, 0.2
    %v5432 = vmul.f32 %v4120, 0.2
    %v5433 = vmul.f32 %v4122, 0.2
    %v5434 = vmul.f32 %v5148, 0.2
    %v5435 = vmul.f32 %v5150, 0.2
    %v5436 = vmul.f32 %v4126, 0.2
    %v5437 = vmul.f32 %v4128, 0.2
    %v5438 = vmul.f32 %v5154, 0.2
    %v5439 = vmul.f32 %v5156, 0.2
    %v5440 = vmul.f32 %v4132, 0.2
    %v5441 = vmul.f32 %v4134, 0.2
    %v5442 = vmul.f32 %v5160, 0.2
    %v5443 = vmul.f32 %v5162, 0.2
    %v5444 = vmul.f32 %v4138, 0.2
    %v5445 = vmul.f32 %v4140, 0.2
    %v5446 = vmul.f32 %v5166, 0.2
    %v5447 = vmul.f32 %v5168, 0.2
    %v5448 = vmul.f32 %v4144, 0.2
    %v5449 = vmul.f32 %v4146, 0.2
    %v5450 = vmul.f32 %v5172, 0.2
    %v5451 = vmul.f32 %v5174, 0.2
    %v5452 = vmul.f32 %v4150, 0.2
    %v5453 = vmul.f32 %v4152, 0.2
    %v5454 = vmul.f32 %v5178, 0.2
    %v5455 = vmul.f32 %v5180, 0.2
    %v5456 = vmul.f32 %v4156, 0.2
    %v5457 = vmul.f32 %v4158, 0.2
    %v5458 = vmul.f32 %v5184, 0.2
    %v5459 = vmul.f32 %v5186, 0.2
    %v5460 = vmul.f32 %v4162, 0.2
    %v5461 = vmul.f32 %v4164, 0.2
    %v5462 = vmul.f32 %v5190, 0.2
    %v5463 = vmul.f32 %v5192, 0.2
    %v5464 = vmul.f32 %v4168, 0.2
    %v5465 = vmul.f32 %v4170, 0.2
    %v5466 = vmul.f32 %v5196, 0.2
    %v5467 = vmul.f32 %v5198, 0.2
    %v5468 = vmul.f32 %v4174, 0.2
    %v5469 = vmul.f32 %v4176, 0.2
    %v5470 = vmul.f32 %v5202, 0.2
    %v5471 = vmul.f32 %v5204, 0.2
    %v5472 = vmul.f32 %v4180, 0.2
    %v5473 = vmul.f32 %v4182, 0.2
    %v5474 = vmul.f32 %v5208, 0.2
    %v5475 = vmul.f32 %v5210, 0.2
    %v5476 = vmul.f32 %v4186, 0.2
    %v5477 = vmul.f32 %v4188, 0.2
    %v5478 = vmul.f32 %v5214, 0.2
    %v5479 = vmul.f32 %v5216, 0.2
    %v5480 = vmul.f32 %v4192, 0.2
    %v5481 = vmul.f32 %v4194, 0.2
    %v5482 = vmul.f32 %v5220, 0.2
    %v5483 = vmul.f32 %v5222, 0.2
    %v5484 = vmul.f32 %v4198, 0.2
    %v5485 = vmul.f32 %v4200, 0.2
    %v5486 = vmul.f32 %v5226, 0.2
    %v5487 = vmul.f32 %v5228, 0.2
    %v5488 = vmul.f32 %v4204, 0.2
    %v5489 = vmul.f32 %v4206, 0.2
    %v5490 = vmul.f32 %v5232, 0.2
    %v5491 = vmul.f32 %v5234, 0.2
    %v5492 = vsel %vm5236, %v4018, %v5364
    %v5493 = vsel %vm5237, %v4020, %v5365
    %v5494 = vsel %vm5238, %v5046, %v5366
    %v5495 = vsel %vm5239, %v5048, %v5367
    %v5496 = vsel %vm5240, %v4024, %v5368
    %v5497 = vsel %vm5241, %v4026, %v5369
    %v5498 = vsel %vm5242, %v5052, %v5370
    %v5499 = vsel %vm5243, %v5054, %v5371
    %v5500 = vsel %vm5244, %v4030, %v5372
    %v5501 = vsel %vm5245, %v4032, %v5373
    %v5502 = vsel %vm5246, %v5058, %v5374
    %v5503 = vsel %vm5247, %v5060, %v5375
    %v5504 = vsel %vm5248, %v4036, %v5376
    %v5505 = vsel %vm5249, %v4038, %v5377
    %v5506 = vsel %vm5250, %v5064, %v5378
    %v5507 = vsel %vm5251, %v5066, %v5379
    %v5508 = vsel %vm5252, %v4042, %v5380
    %v5509 = vsel %vm5253, %v4044, %v5381
    %v5510 = vsel %vm5254, %v5070, %v5382
    %v5511 = vsel %vm5255, %v5072, %v5383
    %v5512 = vsel %vm5256, %v4048, %v5384
    %v5513 = vsel %vm5257, %v4050, %v5385
    %v5514 = vsel %vm5258, %v5076, %v5386
    %v5515 = vsel %vm5259, %v5078, %v5387
    %v5516 = vsel %vm5260, %v4054, %v5388
    %v5517 = vsel %vm5261, %v4056, %v5389
    %v5518 = vsel %vm5262, %v5082, %v5390
    %v5519 = vsel %vm5263, %v5084, %v5391
    %v5520 = vsel %vm5264, %v4060, %v5392
    %v5521 = vsel %vm5265, %v4062, %v5393
    %v5522 = vsel %vm5266, %v5088, %v5394
    %v5523 = vsel %vm5267, %v5090, %v5395
    %v5524 = vsel %vm5268, %v4066, %v5396
    %v5525 = vsel %vm5269, %v4068, %v5397
    %v5526 = vsel %vm5270, %v5094, %v5398
    %v5527 = vsel %vm5271, %v5096, %v5399
    %v5528 = vsel %vm5272, %v4072, %v5400
    %v5529 = vsel %vm5273, %v4074, %v5401
    %v5530 = vsel %vm5274, %v5100, %v5402
    %v5531 = vsel %vm5275, %v5102, %v5403
    %v5532 = vsel %vm5276, %v4078, %v5404
    %v5533 = vsel %vm5277, %v4080, %v5405
    %v5534 = vsel %vm5278, %v5106, %v5406
    %v5535 = vsel %vm5279, %v5108, %v5407
    %v5536 = vsel %vm5280, %v4084, %v5408
    %v5537 = vsel %vm5281, %v4086, %v5409
    %v5538 = vsel %vm5282, %v5112, %v5410
    %v5539 = vsel %vm5283, %v5114, %v5411
    %v5540 = vsel %vm5284, %v4090, %v5412
    %v5541 = vsel %vm5285, %v4092, %v5413
    %v5542 = vsel %vm5286, %v5118, %v5414
    %v5543 = vsel %vm5287, %v5120, %v5415
    %v5544 = vsel %vm5288, %v4096, %v5416
    %v5545 = vsel %vm5289, %v4098, %v5417
    %v5546 = vsel %vm5290, %v5124, %v5418
    %v5547 = vsel %vm5291, %v5126, %v5419
    %v5548 = vsel %vm5292, %v4102, %v5420
    %v5549 = vsel %vm5293, %v4104, %v5421
    %v5550 = vsel %vm5294, %v5130, %v5422
    %v5551 = vsel %vm5295, %v5132, %v5423
    %v5552 = vsel %vm5296, %v4108, %v5424
    %v5553 = vsel %vm5297, %v4110, %v5425
    %v5554 = vsel %vm5298, %v5136, %v5426
    %v5555 = vsel %vm5299, %v5138, %v5427
    %v5556 = vsel %vm5300, %v4114, %v5428
    %v5557 = vsel %vm5301, %v4116, %v5429
    %v5558 = vsel %vm5302, %v5142, %v5430
    %v5559 = vsel %vm5303, %v5144, %v5431
    %v5560 = vsel %vm5304, %v4120, %v5432
    %v5561 = vsel %vm5305, %v4122, %v5433
    %v5562 = vsel %vm5306, %v5148, %v5434
    %v5563 = vsel %vm5307, %v5150, %v5435
    %v5564 = vsel %vm5308, %v4126, %v5436
    %v5565 = vsel %vm5309, %v4128, %v5437
    %v5566 = vsel %vm5310, %v5154, %v5438
    %v5567 = vsel %vm5311, %v5156, %v5439
    %v5568 = vsel %vm5312, %v4132, %v5440
    %v5569 = vsel %vm5313, %v4134, %v5441
    %v5570 = vsel %vm5314, %v5160, %v5442
    %v5571 = vsel %vm5315, %v5162, %v5443
    %v5572 = vsel %vm5316, %v4138, %v5444
    %v5573 = vsel %vm5317, %v4140, %v5445
    %v5574 = vsel %vm5318, %v5166, %v5446
    %v5575 = vsel %vm5319, %v5168, %v5447
    %v5576 = vsel %vm5320, %v4144, %v5448
    %v5577 = vsel %vm5321, %v4146, %v5449
    %v5578 = vsel %vm5322, %v5172, %v5450
    %v5579 = vsel %vm5323, %v5174, %v5451
    %v5580 = vsel %vm5324, %v4150, %v5452
    %v5581 = vsel %vm5325, %v4152, %v5453
    %v5582 = vsel %vm5326, %v5178, %v5454
    %v5583 = vsel %vm5327, %v5180, %v5455
    %v5584 = vsel %vm5328, %v4156, %v5456
    %v5585 = vsel %vm5329, %v4158, %v5457
    %v5586 = vsel %vm5330, %v5184, %v5458
    %v5587 = vsel %vm5331, %v5186, %v5459
    %v5588 = vsel %vm5332, %v4162, %v5460
    %v5589 = vsel %vm5333, %v4164, %v5461
    %v5590 = vsel %vm5334, %v5190, %v5462
    %v5591 = vsel %vm5335, %v5192, %v5463
    %v5592 = vsel %vm5336, %v4168, %v5464
    %v5593 = vsel %vm5337, %v4170, %v5465
    %v5594 = vsel %vm5338, %v5196, %v5466
    %v5595 = vsel %vm5339, %v5198, %v5467
    %v5596 = vsel %vm5340, %v4174, %v5468
    %v5597 = vsel %vm5341, %v4176, %v5469
    %v5598 = vsel %vm5342, %v5202, %v5470
    %v5599 = vsel %vm5343, %v5204, %v5471
    %v5600 = vsel %vm5344, %v4180, %v5472
    %v5601 = vsel %vm5345, %v4182, %v5473
    %v5602 = vsel %vm5346, %v5208, %v5474
    %v5603 = vsel %vm5347, %v5210, %v5475
    %v5604 = vsel %vm5348, %v4186, %v5476
    %v5605 = vsel %vm5349, %v4188, %v5477
    %v5606 = vsel %vm5350, %v5214, %v5478
    %v5607 = vsel %vm5351, %v5216, %v5479
    %v5608 = vsel %vm5352, %v4192, %v5480
    %v5609 = vsel %vm5353, %v4194, %v5481
    %v5610 = vsel %vm5354, %v5220, %v5482
    %v5611 = vsel %vm5355, %v5222, %v5483
    %v5612 = vsel %vm5356, %v4198, %v5484
    %v5613 = vsel %vm5357, %v4200, %v5485
    %v5614 = vsel %vm5358, %v5226, %v5486
    %v5615 = vsel %vm5359, %v5228, %v5487
    %v5616 = vsel %vm5360, %v4204, %v5488
    %v5617 = vsel %vm5361, %v4206, %v5489
    %v5618 = vsel %vm5362, %v5232, %v5490
    %v5619 = vsel %vm5363, %v5234, %v5491
    %v5620 = vld [vmem:[%s2] sm:$0xff]
    %v5621 = vld [vmem:[%s2 + $0x8] sm:$0xff]
    %v5622 = vld [vmem:[%s2 + $0x10] sm:$0xff]
    %v5623 = vld [vmem:[%s2 + $0x18] sm:$0xff]
    %v5624 = vld [vmem:[%s2 + $0x20] sm:$0xff]
    %v5625 = vld [vmem:[%s2 + $0x28] sm:$0xff]
    %v5626 = vld [vmem:[%s2 + $0x30] sm:$0xff]
    %v5627 = vld [vmem:[%s2 + $0x38] sm:$0xff]
    %v5628 = vld [vmem:[%s2 + $0x40] sm:$0xff]
    %v5629 = vld [vmem:[%s2 + $0x48] sm:$0xff]
    %v5630 = vld [vmem:[%s2 + $0x50] sm:$0xff]
    %v5631 = vld [vmem:[%s2 + $0x58] sm:$0xff]
    %v5632 = vld [vmem:[%s2 + $0x60] sm:$0xff]
    %v5633 = vld [vmem:[%s2 + $0x68] sm:$0xff]
    %v5634 = vld [vmem:[%s2 + $0x70] sm:$0xff]
    %v5635 = vld [vmem:[%s2 + $0x78] sm:$0xff]
    %v5636 = vld [vmem:[%s2 + $0x80] sm:$0xff]
    %v5637 = vld [vmem:[%s2 + $0x88] sm:$0xff]
    %v5638 = vld [vmem:[%s2 + $0x90] sm:$0xff]
    %v5639 = vld [vmem:[%s2 + $0x98] sm:$0xff]
    %v5640 = vld [vmem:[%s2 + $0xa0] sm:$0xff]
    %v5641 = vld [vmem:[%s2 + $0xa8] sm:$0xff]
    %v5642 = vld [vmem:[%s2 + $0xb0] sm:$0xff]
    %v5643 = vld [vmem:[%s2 + $0xb8] sm:$0xff]
    %v5644 = vld [vmem:[%s2 + $0xc0] sm:$0xff]
    %v5645 = vld [vmem:[%s2 + $0xc8] sm:$0xff]
    %v5646 = vld [vmem:[%s2 + $0xd0] sm:$0xff]
    %v5647 = vld [vmem:[%s2 + $0xd8] sm:$0xff]
    %v5648 = vld [vmem:[%s2 + $0xe0] sm:$0xff]
    %v5649 = vld [vmem:[%s2 + $0xe8] sm:$0xff]
    %v5650 = vld [vmem:[%s2 + $0xf0] sm:$0xff]
    %v5651 = vld [vmem:[%s2 + $0xf8] sm:$0xff]
    %v5652 = vld [vmem:[%s2 + $0x100] sm:$0xff]
    %v5653 = vld [vmem:[%s2 + $0x108] sm:$0xff]
    %v5654 = vld [vmem:[%s2 + $0x110] sm:$0xff]
    %v5655 = vld [vmem:[%s2 + $0x118] sm:$0xff]
    %v5656 = vld [vmem:[%s2 + $0x120] sm:$0xff]
    %v5657 = vld [vmem:[%s2 + $0x128] sm:$0xff]
    %v5658 = vld [vmem:[%s2 + $0x130] sm:$0xff]
    %v5659 = vld [vmem:[%s2 + $0x138] sm:$0xff]
    %v5660 = vld [vmem:[%s2 + $0x140] sm:$0xff]
    %v5661 = vld [vmem:[%s2 + $0x148] sm:$0xff]
    %v5662 = vld [vmem:[%s2 + $0x150] sm:$0xff]
    %v5663 = vld [vmem:[%s2 + $0x158] sm:$0xff]
    %v5664 = vld [vmem:[%s2 + $0x160] sm:$0xff]
    %v5665 = vld [vmem:[%s2 + $0x168] sm:$0xff]
    %v5666 = vld [vmem:[%s2 + $0x170] sm:$0xff]
    %v5667 = vld [vmem:[%s2 + $0x178] sm:$0xff]
    %v5668 = vld [vmem:[%s2 + $0x180] sm:$0xff]
    %v5669 = vld [vmem:[%s2 + $0x188] sm:$0xff]
    %v5670 = vld [vmem:[%s2 + $0x190] sm:$0xff]
    %v5671 = vld [vmem:[%s2 + $0x198] sm:$0xff]
    %v5672 = vld [vmem:[%s2 + $0x1a0] sm:$0xff]
    %v5673 = vld [vmem:[%s2 + $0x1a8] sm:$0xff]
    %v5674 = vld [vmem:[%s2 + $0x1b0] sm:$0xff]
    %v5675 = vld [vmem:[%s2 + $0x1b8] sm:$0xff]
    %v5676 = vld [vmem:[%s2 + $0x1c0] sm:$0xff]
    %v5677 = vld [vmem:[%s2 + $0x1c8] sm:$0xff]
    %v5678 = vld [vmem:[%s2 + $0x1d0] sm:$0xff]
    %v5679 = vld [vmem:[%s2 + $0x1d8] sm:$0xff]
    %v5680 = vld [vmem:[%s2 + $0x1e0] sm:$0xff]
    %v5681 = vld [vmem:[%s2 + $0x1e8] sm:$0xff]
    %v5682 = vld [vmem:[%s2 + $0x1f0] sm:$0xff]
    %v5683 = vld [vmem:[%s2 + $0x1f8] sm:$0xff]
    %v5684 = vld [vmem:[%s2 + $0x200] sm:$0xff]
    %v5685 = vld [vmem:[%s2 + $0x208] sm:$0xff]
    %v5686 = vld [vmem:[%s2 + $0x210] sm:$0xff]
    %v5687 = vld [vmem:[%s2 + $0x218] sm:$0xff]
    %v5688 = vld [vmem:[%s2 + $0x220] sm:$0xff]
    %v5689 = vld [vmem:[%s2 + $0x228] sm:$0xff]
    %v5690 = vld [vmem:[%s2 + $0x230] sm:$0xff]
    %v5691 = vld [vmem:[%s2 + $0x238] sm:$0xff]
    %v5692 = vld [vmem:[%s2 + $0x240] sm:$0xff]
    %v5693 = vld [vmem:[%s2 + $0x248] sm:$0xff]
    %v5694 = vld [vmem:[%s2 + $0x250] sm:$0xff]
    %v5695 = vld [vmem:[%s2 + $0x258] sm:$0xff]
    %v5696 = vld [vmem:[%s2 + $0x260] sm:$0xff]
    %v5697 = vld [vmem:[%s2 + $0x268] sm:$0xff]
    %v5698 = vld [vmem:[%s2 + $0x270] sm:$0xff]
    %v5699 = vld [vmem:[%s2 + $0x278] sm:$0xff]
    %v5700 = vld [vmem:[%s2 + $0x280] sm:$0xff]
    %v5701 = vld [vmem:[%s2 + $0x288] sm:$0xff]
    %v5702 = vld [vmem:[%s2 + $0x290] sm:$0xff]
    %v5703 = vld [vmem:[%s2 + $0x298] sm:$0xff]
    %v5704 = vld [vmem:[%s2 + $0x2a0] sm:$0xff]
    %v5705 = vld [vmem:[%s2 + $0x2a8] sm:$0xff]
    %v5706 = vld [vmem:[%s2 + $0x2b0] sm:$0xff]
    %v5707 = vld [vmem:[%s2 + $0x2b8] sm:$0xff]
    %v5708 = vld [vmem:[%s2 + $0x2c0] sm:$0xff]
    %v5709 = vld [vmem:[%s2 + $0x2c8] sm:$0xff]
    %v5710 = vld [vmem:[%s2 + $0x2d0] sm:$0xff]
    %v5711 = vld [vmem:[%s2 + $0x2d8] sm:$0xff]
    %v5712 = vld [vmem:[%s2 + $0x2e0] sm:$0xff]
    %v5713 = vld [vmem:[%s2 + $0x2e8] sm:$0xff]
    %v5714 = vld [vmem:[%s2 + $0x2f0] sm:$0xff]
    %v5715 = vld [vmem:[%s2 + $0x2f8] sm:$0xff]
    %v5716 = vld [vmem:[%s2 + $0x300] sm:$0xff]
    %v5717 = vld [vmem:[%s2 + $0x308] sm:$0xff]
    %v5718 = vld [vmem:[%s2 + $0x310] sm:$0xff]
    %v5719 = vld [vmem:[%s2 + $0x318] sm:$0xff]
    %v5720 = vld [vmem:[%s2 + $0x320] sm:$0xff]
    %v5721 = vld [vmem:[%s2 + $0x328] sm:$0xff]
    %v5722 = vld [vmem:[%s2 + $0x330] sm:$0xff]
    %v5723 = vld [vmem:[%s2 + $0x338] sm:$0xff]
    %v5724 = vld [vmem:[%s2 + $0x340] sm:$0xff]
    %v5725 = vld [vmem:[%s2 + $0x348] sm:$0xff]
    %v5726 = vld [vmem:[%s2 + $0x350] sm:$0xff]
    %v5727 = vld [vmem:[%s2 + $0x358] sm:$0xff]
    %v5728 = vld [vmem:[%s2 + $0x360] sm:$0xff]
    %v5729 = vld [vmem:[%s2 + $0x368] sm:$0xff]
    %v5730 = vld [vmem:[%s2 + $0x370] sm:$0xff]
    %v5731 = vld [vmem:[%s2 + $0x378] sm:$0xff]
    %v5732 = vld [vmem:[%s2 + $0x380] sm:$0xff]
    %v5733 = vld [vmem:[%s2 + $0x388] sm:$0xff]
    %v5734 = vld [vmem:[%s2 + $0x390] sm:$0xff]
    %v5735 = vld [vmem:[%s2 + $0x398] sm:$0xff]
    %v5736 = vld [vmem:[%s2 + $0x3a0] sm:$0xff]
    %v5737 = vld [vmem:[%s2 + $0x3a8] sm:$0xff]
    %v5738 = vld [vmem:[%s2 + $0x3b0] sm:$0xff]
    %v5739 = vld [vmem:[%s2 + $0x3b8] sm:$0xff]
    %v5740 = vld [vmem:[%s2 + $0x3c0] sm:$0xff]
    %v5741 = vld [vmem:[%s2 + $0x3c8] sm:$0xff]
    %v5742 = vld [vmem:[%s2 + $0x3d0] sm:$0xff]
    %v5743 = vld [vmem:[%s2 + $0x3d8] sm:$0xff]
    %v5744 = vld [vmem:[%s2 + $0x3e0] sm:$0xff]
    %v5745 = vld [vmem:[%s2 + $0x3e8] sm:$0xff]
    %v5746 = vld [vmem:[%s2 + $0x3f0] sm:$0xff]
    %v5747 = vld [vmem:[%s2 + $0x3f8] sm:$0xff]
    %v5748 = vmul.f32 %v5492, %v5620
    %v5749 = vmul.f32 %v5493, %v5621
    %v5750 = vmul.f32 %v5494, %v5622
    %v5751 = vmul.f32 %v5495, %v5623
    %v5752 = vmul.f32 %v5496, %v5624
    %v5753 = vmul.f32 %v5497, %v5625
    %v5754 = vmul.f32 %v5498, %v5626
    %v5755 = vmul.f32 %v5499, %v5627
    %v5756 = vmul.f32 %v5500, %v5628
    %v5757 = vmul.f32 %v5501, %v5629
    %v5758 = vmul.f32 %v5502, %v5630
    %v5759 = vmul.f32 %v5503, %v5631
    %v5760 = vmul.f32 %v5504, %v5632
    %v5761 = vmul.f32 %v5505, %v5633
    %v5762 = vmul.f32 %v5506, %v5634
    %v5763 = vmul.f32 %v5507, %v5635
    %v5764 = vmul.f32 %v5508, %v5636
    %v5765 = vmul.f32 %v5509, %v5637
    %v5766 = vmul.f32 %v5510, %v5638
    %v5767 = vmul.f32 %v5511, %v5639
    %v5768 = vmul.f32 %v5512, %v5640
    %v5769 = vmul.f32 %v5513, %v5641
    %v5770 = vmul.f32 %v5514, %v5642
    %v5771 = vmul.f32 %v5515, %v5643
    %v5772 = vmul.f32 %v5516, %v5644
    %v5773 = vmul.f32 %v5517, %v5645
    %v5774 = vmul.f32 %v5518, %v5646
    %v5775 = vmul.f32 %v5519, %v5647
    %v5776 = vmul.f32 %v5520, %v5648
    %v5777 = vmul.f32 %v5521, %v5649
    %v5778 = vmul.f32 %v5522, %v5650
    %v5779 = vmul.f32 %v5523, %v5651
    %v5780 = vmul.f32 %v5524, %v5652
    %v5781 = vmul.f32 %v5525, %v5653
    %v5782 = vmul.f32 %v5526, %v5654
    %v5783 = vmul.f32 %v5527, %v5655
    %v5784 = vmul.f32 %v5528, %v5656
    %v5785 = vmul.f32 %v5529, %v5657
    %v5786 = vmul.f32 %v5530, %v5658
    %v5787 = vmul.f32 %v5531, %v5659
    %v5788 = vmul.f32 %v5532, %v5660
    %v5789 = vmul.f32 %v5533, %v5661
    %v5790 = vmul.f32 %v5534, %v5662
    %v5791 = vmul.f32 %v5535, %v5663
    %v5792 = vmul.f32 %v5536, %v5664
    %v5793 = vmul.f32 %v5537, %v5665
    %v5794 = vmul.f32 %v5538, %v5666
    %v5795 = vmul.f32 %v5539, %v5667
    %v5796 = vmul.f32 %v5540, %v5668
    %v5797 = vmul.f32 %v5541, %v5669
    %v5798 = vmul.f32 %v5542, %v5670
    %v5799 = vmul.f32 %v5543, %v5671
    %v5800 = vmul.f32 %v5544, %v5672
    %v5801 = vmul.f32 %v5545, %v5673
    %v5802 = vmul.f32 %v5546, %v5674
    %v5803 = vmul.f32 %v5547, %v5675
    %v5804 = vmul.f32 %v5548, %v5676
    %v5805 = vmul.f32 %v5549, %v5677
    %v5806 = vmul.f32 %v5550, %v5678
    %v5807 = vmul.f32 %v5551, %v5679
    %v5808 = vmul.f32 %v5552, %v5680
    %v5809 = vmul.f32 %v5553, %v5681
    %v5810 = vmul.f32 %v5554, %v5682
    %v5811 = vmul.f32 %v5555, %v5683
    %v5812 = vmul.f32 %v5556, %v5684
    %v5813 = vmul.f32 %v5557, %v5685
    %v5814 = vmul.f32 %v5558, %v5686
    %v5815 = vmul.f32 %v5559, %v5687
    %v5816 = vmul.f32 %v5560, %v5688
    %v5817 = vmul.f32 %v5561, %v5689
    %v5818 = vmul.f32 %v5562, %v5690
    %v5819 = vmul.f32 %v5563, %v5691
    %v5820 = vmul.f32 %v5564, %v5692
    %v5821 = vmul.f32 %v5565, %v5693
    %v5822 = vmul.f32 %v5566, %v5694
    %v5823 = vmul.f32 %v5567, %v5695
    %v5824 = vmul.f32 %v5568, %v5696
    %v5825 = vmul.f32 %v5569, %v5697
    %v5826 = vmul.f32 %v5570, %v5698
    %v5827 = vmul.f32 %v5571, %v5699
    %v5828 = vmul.f32 %v5572, %v5700
    %v5829 = vmul.f32 %v5573, %v5701
    %v5830 = vmul.f32 %v5574, %v5702
    %v5831 = vmul.f32 %v5575, %v5703
    %v5832 = vmul.f32 %v5576, %v5704
    %v5833 = vmul.f32 %v5577, %v5705
    %v5834 = vmul.f32 %v5578, %v5706
    %v5835 = vmul.f32 %v5579, %v5707
    %v5836 = vmul.f32 %v5580, %v5708
    %v5837 = vmul.f32 %v5581, %v5709
    %v5838 = vmul.f32 %v5582, %v5710
    %v5839 = vmul.f32 %v5583, %v5711
    %v5840 = vmul.f32 %v5584, %v5712
    %v5841 = vmul.f32 %v5585, %v5713
    %v5842 = vmul.f32 %v5586, %v5714
    %v5843 = vmul.f32 %v5587, %v5715
    %v5844 = vmul.f32 %v5588, %v5716
    %v5845 = vmul.f32 %v5589, %v5717
    %v5846 = vmul.f32 %v5590, %v5718
    %v5847 = vmul.f32 %v5591, %v5719
    %v5848 = vmul.f32 %v5592, %v5720
    %v5849 = vmul.f32 %v5593, %v5721
    %v5850 = vmul.f32 %v5594, %v5722
    %v5851 = vmul.f32 %v5595, %v5723
    %v5852 = vmul.f32 %v5596, %v5724
    %v5853 = vmul.f32 %v5597, %v5725
    %v5854 = vmul.f32 %v5598, %v5726
    %v5855 = vmul.f32 %v5599, %v5727
    %v5856 = vmul.f32 %v5600, %v5728
    %v5857 = vmul.f32 %v5601, %v5729
    %v5858 = vmul.f32 %v5602, %v5730
    %v5859 = vmul.f32 %v5603, %v5731
    %v5860 = vmul.f32 %v5604, %v5732
    %v5861 = vmul.f32 %v5605, %v5733
    %v5862 = vmul.f32 %v5606, %v5734
    %v5863 = vmul.f32 %v5607, %v5735
    %v5864 = vmul.f32 %v5608, %v5736
    %v5865 = vmul.f32 %v5609, %v5737
    %v5866 = vmul.f32 %v5610, %v5738
    %v5867 = vmul.f32 %v5611, %v5739
    %v5868 = vmul.f32 %v5612, %v5740
    %v5869 = vmul.f32 %v5613, %v5741
    %v5870 = vmul.f32 %v5614, %v5742
    %v5871 = vmul.f32 %v5615, %v5743
    %v5872 = vmul.f32 %v5616, %v5744
    %v5873 = vmul.f32 %v5617, %v5745
    %v5874 = vmul.f32 %v5618, %v5746
    %v5875 = vmul.f32 %v5619, %v5747
    %v5876 = vld [vmem:[%s8] sm:$0xff]
    %v5877 = vld [vmem:[%s8 + $0x8] sm:$0xff]
    %v5878 = vld [vmem:[%s8 + $0x10] sm:$0xff]
    %v5879 = vld [vmem:[%s8 + $0x18] sm:$0xff]
    %v5880 = vld [vmem:[%s8 + $0x20] sm:$0xff]
    %v5881 = vld [vmem:[%s8 + $0x28] sm:$0xff]
    %v5882 = vld [vmem:[%s8 + $0x30] sm:$0xff]
    %v5883 = vld [vmem:[%s8 + $0x38] sm:$0xff]
    %v5884 = vld [vmem:[%s8 + $0x40] sm:$0xff]
    %v5885 = vld [vmem:[%s8 + $0x48] sm:$0xff]
    %v5886 = vld [vmem:[%s8 + $0x50] sm:$0xff]
    %v5887 = vld [vmem:[%s8 + $0x58] sm:$0xff]
    %v5888 = vld [vmem:[%s8 + $0x60] sm:$0xff]
    %v5889 = vld [vmem:[%s8 + $0x68] sm:$0xff]
    %v5890 = vld [vmem:[%s8 + $0x70] sm:$0xff]
    %v5891 = vld [vmem:[%s8 + $0x78] sm:$0xff]
    %v5892 = vld [vmem:[%s8 + $0x80] sm:$0xff]
    %v5893 = vld [vmem:[%s8 + $0x88] sm:$0xff]
    %v5894 = vld [vmem:[%s8 + $0x90] sm:$0xff]
    %v5895 = vld [vmem:[%s8 + $0x98] sm:$0xff]
    %v5896 = vld [vmem:[%s8 + $0xa0] sm:$0xff]
    %v5897 = vld [vmem:[%s8 + $0xa8] sm:$0xff]
    %v5898 = vld [vmem:[%s8 + $0xb0] sm:$0xff]
    %v5899 = vld [vmem:[%s8 + $0xb8] sm:$0xff]
    %v5900 = vld [vmem:[%s8 + $0xc0] sm:$0xff]
    %v5901 = vld [vmem:[%s8 + $0xc8] sm:$0xff]
    %v5902 = vld [vmem:[%s8 + $0xd0] sm:$0xff]
    %v5903 = vld [vmem:[%s8 + $0xd8] sm:$0xff]
    %v5904 = vld [vmem:[%s8 + $0xe0] sm:$0xff]
    %v5905 = vld [vmem:[%s8 + $0xe8] sm:$0xff]
    %v5906 = vld [vmem:[%s8 + $0xf0] sm:$0xff]
    %v5907 = vld [vmem:[%s8 + $0xf8] sm:$0xff]
    %v5908 = vld [vmem:[%s8 + $0x100] sm:$0xff]
    %v5909 = vld [vmem:[%s8 + $0x108] sm:$0xff]
    %v5910 = vld [vmem:[%s8 + $0x110] sm:$0xff]
    %v5911 = vld [vmem:[%s8 + $0x118] sm:$0xff]
    %v5912 = vld [vmem:[%s8 + $0x120] sm:$0xff]
    %v5913 = vld [vmem:[%s8 + $0x128] sm:$0xff]
    %v5914 = vld [vmem:[%s8 + $0x130] sm:$0xff]
    %v5915 = vld [vmem:[%s8 + $0x138] sm:$0xff]
    %v5916 = vld [vmem:[%s8 + $0x140] sm:$0xff]
    %v5917 = vld [vmem:[%s8 + $0x148] sm:$0xff]
    %v5918 = vld [vmem:[%s8 + $0x150] sm:$0xff]
    %v5919 = vld [vmem:[%s8 + $0x158] sm:$0xff]
    %v5920 = vld [vmem:[%s8 + $0x160] sm:$0xff]
    %v5921 = vld [vmem:[%s8 + $0x168] sm:$0xff]
    %v5922 = vld [vmem:[%s8 + $0x170] sm:$0xff]
    %v5923 = vld [vmem:[%s8 + $0x178] sm:$0xff]
    %v5924 = vld [vmem:[%s8 + $0x180] sm:$0xff]
    %v5925 = vld [vmem:[%s8 + $0x188] sm:$0xff]
    %v5926 = vld [vmem:[%s8 + $0x190] sm:$0xff]
    %v5927 = vld [vmem:[%s8 + $0x198] sm:$0xff]
    %v5928 = vld [vmem:[%s8 + $0x1a0] sm:$0xff]
    %v5929 = vld [vmem:[%s8 + $0x1a8] sm:$0xff]
    %v5930 = vld [vmem:[%s8 + $0x1b0] sm:$0xff]
    %v5931 = vld [vmem:[%s8 + $0x1b8] sm:$0xff]
    %v5932 = vld [vmem:[%s8 + $0x1c0] sm:$0xff]
    %v5933 = vld [vmem:[%s8 + $0x1c8] sm:$0xff]
    %v5934 = vld [vmem:[%s8 + $0x1d0] sm:$0xff]
    %v5935 = vld [vmem:[%s8 + $0x1d8] sm:$0xff]
    %v5936 = vld [vmem:[%s8 + $0x1e0] sm:$0xff]
    %v5937 = vld [vmem:[%s8 + $0x1e8] sm:$0xff]
    %v5938 = vld [vmem:[%s8 + $0x1f0] sm:$0xff]
    %v5939 = vld [vmem:[%s8 + $0x1f8] sm:$0xff]
    %v5940 = vld [vmem:[%s8 + $0x200] sm:$0xff]
    %v5941 = vld [vmem:[%s8 + $0x208] sm:$0xff]
    %v5942 = vld [vmem:[%s8 + $0x210] sm:$0xff]
    %v5943 = vld [vmem:[%s8 + $0x218] sm:$0xff]
    %v5944 = vld [vmem:[%s8 + $0x220] sm:$0xff]
    %v5945 = vld [vmem:[%s8 + $0x228] sm:$0xff]
    %v5946 = vld [vmem:[%s8 + $0x230] sm:$0xff]
    %v5947 = vld [vmem:[%s8 + $0x238] sm:$0xff]
    %v5948 = vld [vmem:[%s8 + $0x240] sm:$0xff]
    %v5949 = vld [vmem:[%s8 + $0x248] sm:$0xff]
    %v5950 = vld [vmem:[%s8 + $0x250] sm:$0xff]
    %v5951 = vld [vmem:[%s8 + $0x258] sm:$0xff]
    %v5952 = vld [vmem:[%s8 + $0x260] sm:$0xff]
    %v5953 = vld [vmem:[%s8 + $0x268] sm:$0xff]
    %v5954 = vld [vmem:[%s8 + $0x270] sm:$0xff]
    %v5955 = vld [vmem:[%s8 + $0x278] sm:$0xff]
    %v5956 = vld [vmem:[%s8 + $0x280] sm:$0xff]
    %v5957 = vld [vmem:[%s8 + $0x288] sm:$0xff]
    %v5958 = vld [vmem:[%s8 + $0x290] sm:$0xff]
    %v5959 = vld [vmem:[%s8 + $0x298] sm:$0xff]
    %v5960 = vld [vmem:[%s8 + $0x2a0] sm:$0xff]
    %v5961 = vld [vmem:[%s8 + $0x2a8] sm:$0xff]
    %v5962 = vld [vmem:[%s8 + $0x2b0] sm:$0xff]
    %v5963 = vld [vmem:[%s8 + $0x2b8] sm:$0xff]
    %v5964 = vld [vmem:[%s8 + $0x2c0] sm:$0xff]
    %v5965 = vld [vmem:[%s8 + $0x2c8] sm:$0xff]
    %v5966 = vld [vmem:[%s8 + $0x2d0] sm:$0xff]
    %v5967 = vld [vmem:[%s8 + $0x2d8] sm:$0xff]
    %v5968 = vld [vmem:[%s8 + $0x2e0] sm:$0xff]
    %v5969 = vld [vmem:[%s8 + $0x2e8] sm:$0xff]
    %v5970 = vld [vmem:[%s8 + $0x2f0] sm:$0xff]
    %v5971 = vld [vmem:[%s8 + $0x2f8] sm:$0xff]
    %v5972 = vld [vmem:[%s8 + $0x300] sm:$0xff]
    %v5973 = vld [vmem:[%s8 + $0x308] sm:$0xff]
    %v5974 = vld [vmem:[%s8 + $0x310] sm:$0xff]
    %v5975 = vld [vmem:[%s8 + $0x318] sm:$0xff]
    %v5976 = vld [vmem:[%s8 + $0x320] sm:$0xff]
    %v5977 = vld [vmem:[%s8 + $0x328] sm:$0xff]
    %v5978 = vld [vmem:[%s8 + $0x330] sm:$0xff]
    %v5979 = vld [vmem:[%s8 + $0x338] sm:$0xff]
    %v5980 = vld [vmem:[%s8 + $0x340] sm:$0xff]
    %v5981 = vld [vmem:[%s8 + $0x348] sm:$0xff]
    %v5982 = vld [vmem:[%s8 + $0x350] sm:$0xff]
    %v5983 = vld [vmem:[%s8 + $0x358] sm:$0xff]
    %v5984 = vld [vmem:[%s8 + $0x360] sm:$0xff]
    %v5985 = vld [vmem:[%s8 + $0x368] sm:$0xff]
    %v5986 = vld [vmem:[%s8 + $0x370] sm:$0xff]
    %v5987 = vld [vmem:[%s8 + $0x378] sm:$0xff]
    %v5988 = vld [vmem:[%s8 + $0x380] sm:$0xff]
    %v5989 = vld [vmem:[%s8 + $0x388] sm:$0xff]
    %v5990 = vld [vmem:[%s8 + $0x390] sm:$0xff]
    %v5991 = vld [vmem:[%s8 + $0x398] sm:$0xff]
    %v5992 = vld [vmem:[%s8 + $0x3a0] sm:$0xff]
    %v5993 = vld [vmem:[%s8 + $0x3a8] sm:$0xff]
    %v5994 = vld [vmem:[%s8 + $0x3b0] sm:$0xff]
    %v5995 = vld [vmem:[%s8 + $0x3b8] sm:$0xff]
    %v5996 = vld [vmem:[%s8 + $0x3c0] sm:$0xff]
    %v5997 = vld [vmem:[%s8 + $0x3c8] sm:$0xff]
    %v5998 = vld [vmem:[%s8 + $0x3d0] sm:$0xff]
    %v5999 = vld [vmem:[%s8 + $0x3d8] sm:$0xff]
    %v6000 = vld [vmem:[%s8 + $0x3e0] sm:$0xff]
    %v6001 = vld [vmem:[%s8 + $0x3e8] sm:$0xff]
    %v6002 = vld [vmem:[%s8 + $0x3f0] sm:$0xff]
    %v6003 = vld [vmem:[%s8 + $0x3f8] sm:$0xff]
    %v6004 = vld [vmem:[#allocation8] sm:$0x3]
    %v6006 = vlaneseq
    %v6007 = vshrl.u32 %v6006, 7
    %v6008 = vsub.s32 0, %v6007
    %v6009 = vrot.slane %v6004, %v6008
    %v6010 = vlaneseq
    %v6011 = vshrl.u32 %v6010, 7
    %v6012 = vsub.s32 1, %v6011
    %v6013 = vrot.slane %v6004, %v6012
    %6016 = vmatprep.subr.mxu0 %v5907
    %6017 = vmatpush1.msra.mxu0 %v5906
    %6018 = vmatprep.subr.mxu0 %v5905
    %6019 = vmatpush1.msra.mxu0 %v5904
    %6020 = vmatprep.subr.mxu0 %v5903
    %6021 = vmatpush1.msra.mxu0 %v5902
    %6022 = vmatprep.subr.mxu0 %v5901
    %6023 = vmatpush1.msra.mxu0 %v5900
    %6024 = vmatprep.subr.mxu0 %v5899
    %6025 = vmatpush1.msra.mxu0 %v5898
    %6026 = vmatprep.subr.mxu0 %v5897
    %6027 = vmatpush1.msra.mxu0 %v5896
    %6028 = vmatprep.subr.mxu0 %v5895
    %6029 = vmatpush1.msra.mxu0 %v5894
    %6030 = vmatprep.subr.mxu0 %v5893
    %6031 = vmatpush1.msra.mxu0 %v5892
    %6032 = vmatprep.subr.mxu0 %v5891
    %6033 = vmatpush1.msra.mxu0 %v5890
    %6034 = vmatprep.subr.mxu0 %v5889
    %6035 = vmatpush1.msra.mxu0 %v5888
    %6036 = vmatprep.subr.mxu0 %v5887
    %6037 = vmatpush1.msra.mxu0 %v5886
    %6038 = vmatprep.subr.mxu0 %v5885
    %6039 = vmatpush1.msra.mxu0 %v5884
    %6040 = vmatprep.subr.mxu0 %v5883
    %6041 = vmatpush1.msra.mxu0 %v5882
    %6042 = vmatprep.subr.mxu0 %v5881
    %6043 = vmatpush1.msra.mxu0 %v5880
    %6044 = vmatprep.subr.mxu0 %v5879
    %6045 = vmatpush1.msra.mxu0 %v5878
    %6046 = vmatprep.subr.mxu0 %v5877
    %6047 = vmatpush1.msra.mxu0 %v5876
    %6048 = vmatprep.subr.mxu0 %v5939
    %6049 = vmatpush2.msra.mxu0 %v5938
    %6050 = vmatprep.subr.mxu0 %v5937
    %6051 = vmatpush2.msra.mxu0 %v5936
    %6052 = vmatprep.subr.mxu0 %v5935
    %6053 = vmatpush2.msra.mxu0 %v5934
    %6054 = vmatprep.subr.mxu0 %v5933
    %6055 = vmatpush2.msra.mxu0 %v5932
    %6056 = vmatprep.subr.mxu0 %v5931
    %6057 = vmatpush2.msra.mxu0 %v5930
    %6058 = vmatprep.subr.mxu0 %v5929
    %6059 = vmatpush2.msra.mxu0 %v5928
    %6060 = vmatprep.subr.mxu0 %v5927
    %6061 = vmatpush2.msra.mxu0 %v5926
    %6062 = vmatprep.subr.mxu0 %v5925
    %6063 = vmatpush2.msra.mxu0 %v5924
    %6064 = vmatprep.subr.mxu0 %v5923
    %6065 = vmatpush2.msra.mxu0 %v5922
    %6066 = vmatprep.subr.mxu0 %v5921
    %6067 = vmatpush2.msra.mxu0 %v5920
    %6068 = vmatprep.subr.mxu0 %v5919
    %6069 = vmatpush2.msra.mxu0 %v5918
    %6070 = vmatprep.subr.mxu0 %v5917
    %6071 = vmatpush2.msra.mxu0 %v5916
    %6072 = vmatprep.subr.mxu0 %v5915
    %6073 = vmatpush2.msra.mxu0 %v5914
    %6074 = vmatprep.subr.mxu0 %v5913
    %6075 = vmatpush2.msra.mxu0 %v5912
    %6076 = vmatprep.subr.mxu0 %v5911
    %6077 = vmatpush2.msra.mxu0 %v5910
    %6078 = vmatprep.subr.mxu0 %v5909
    %6079 = vmatpush2.msra.mxu0 %v5908
    %6080 = vmatprep.mubr.f32.mxu0 %v5749
    %6081 = vmatmul.mubr.f32.gmra.mxu0 %v5748
    %v6082 = vpop.f32.mrf.mxu0
    %v6083 = vadd.f32 %v6009, %v6082
    %v6084 = vpop.f32.mrf.mxu0
    %v6085 = vadd.f32 %v6013, %v6084
    %6086 = vmatprep.mubr.f32.mxu0 %v5753
    %6087 = vmatmul.mubr.f32.gmra.mxu0 %v5752
    %v6088 = vpop.f32.mrf.mxu0
    %v6089 = vadd.f32 %v6009, %v6088
    %v6090 = vpop.f32.mrf.mxu0
    %v6091 = vadd.f32 %v6013, %v6090
    %6092 = vmatprep.mubr.f32.mxu0 %v5757
    %6093 = vmatmul.mubr.f32.gmra.mxu0 %v5756
    %v6094 = vpop.f32.mrf.mxu0
    %v6095 = vadd.f32 %v6009, %v6094
    %v6096 = vpop.f32.mrf.mxu0
    %v6097 = vadd.f32 %v6013, %v6096
    %6098 = vmatprep.mubr.f32.mxu0 %v5761
    %6099 = vmatmul.mubr.f32.gmra.mxu0 %v5760
    %v6100 = vpop.f32.mrf.mxu0
    %v6101 = vadd.f32 %v6009, %v6100
    %v6102 = vpop.f32.mrf.mxu0
    %v6103 = vadd.f32 %v6013, %v6102
    %6104 = vmatprep.mubr.f32.mxu0 %v5765
    %6105 = vmatmul.mubr.f32.gmra.mxu0 %v5764
    %v6106 = vpop.f32.mrf.mxu0
    %v6107 = vadd.f32 %v6009, %v6106
    %v6108 = vpop.f32.mrf.mxu0
    %v6109 = vadd.f32 %v6013, %v6108
    %6110 = vmatprep.mubr.f32.mxu0 %v5769
    %6111 = vmatmul.mubr.f32.gmra.mxu0 %v5768
    %v6112 = vpop.f32.mrf.mxu0
    %v6113 = vadd.f32 %v6009, %v6112
    %v6114 = vpop.f32.mrf.mxu0
    %v6115 = vadd.f32 %v6013, %v6114
    %6116 = vmatprep.mubr.f32.mxu0 %v5773
    %6117 = vmatmul.mubr.f32.gmra.mxu0 %v5772
    %v6118 = vpop.f32.mrf.mxu0
    %v6119 = vadd.f32 %v6009, %v6118
    %v6120 = vpop.f32.mrf.mxu0
    %v6121 = vadd.f32 %v6013, %v6120
    %6122 = vmatprep.mubr.f32.mxu0 %v5777
    %6123 = vmatmul.mubr.f32.gmra.mxu0 %v5776
    %v6124 = vpop.f32.mrf.mxu0
    %v6125 = vadd.f32 %v6009, %v6124
    %v6126 = vpop.f32.mrf.mxu0
    %v6127 = vadd.f32 %v6013, %v6126
    %6128 = vmatprep.mubr.f32.mxu0 %v5781
    %6129 = vmatmul.mubr.f32.gmra.mxu0 %v5780
    %v6130 = vpop.f32.mrf.mxu0
    %v6131 = vadd.f32 %v6009, %v6130
    %v6132 = vpop.f32.mrf.mxu0
    %v6133 = vadd.f32 %v6013, %v6132
    %6134 = vmatprep.mubr.f32.mxu0 %v5785
    %6135 = vmatmul.mubr.f32.gmra.mxu0 %v5784
    %v6136 = vpop.f32.mrf.mxu0
    %v6137 = vadd.f32 %v6009, %v6136
    %v6138 = vpop.f32.mrf.mxu0
    %v6139 = vadd.f32 %v6013, %v6138
    %6140 = vmatprep.mubr.f32.mxu0 %v5789
    %6141 = vmatmul.mubr.f32.gmra.mxu0 %v5788
    %v6142 = vpop.f32.mrf.mxu0
    %v6143 = vadd.f32 %v6009, %v6142
    %v6144 = vpop.f32.mrf.mxu0
    %v6145 = vadd.f32 %v6013, %v6144
    %6146 = vmatprep.mubr.f32.mxu0 %v5793
    %6147 = vmatmul.mubr.f32.gmra.mxu0 %v5792
    %v6148 = vpop.f32.mrf.mxu0
    %v6149 = vadd.f32 %v6009, %v6148
    %v6150 = vpop.f32.mrf.mxu0
    %v6151 = vadd.f32 %v6013, %v6150
    %6152 = vmatprep.mubr.f32.mxu0 %v5797
    %6153 = vmatmul.mubr.f32.gmra.mxu0 %v5796
    %v6154 = vpop.f32.mrf.mxu0
    %v6155 = vadd.f32 %v6009, %v6154
    %v6156 = vpop.f32.mrf.mxu0
    %v6157 = vadd.f32 %v6013, %v6156
    %6158 = vmatprep.mubr.f32.mxu0 %v5801
    %6159 = vmatmul.mubr.f32.gmra.mxu0 %v5800
    %v6160 = vpop.f32.mrf.mxu0
    %v6161 = vadd.f32 %v6009, %v6160
    %v6162 = vpop.f32.mrf.mxu0
    %v6163 = vadd.f32 %v6013, %v6162
    %6164 = vmatprep.mubr.f32.mxu0 %v5805
    %6165 = vmatmul.mubr.f32.gmra.mxu0 %v5804
    %v6166 = vpop.f32.mrf.mxu0
    %v6167 = vadd.f32 %v6009, %v6166
    %v6168 = vpop.f32.mrf.mxu0
    %v6169 = vadd.f32 %v6013, %v6168
    %6170 = vmatprep.mubr.f32.mxu0 %v5809
    %6171 = vmatmul.mubr.f32.gmra.mxu0 %v5808
    %v6172 = vpop.f32.mrf.mxu0
    %v6173 = vadd.f32 %v6009, %v6172
    %v6174 = vpop.f32.mrf.mxu0
    %v6175 = vadd.f32 %v6013, %v6174
    %6176 = vmatprep.mubr.f32.mxu0 %v5813
    %6177 = vmatmul.mubr.f32.gmra.mxu0 %v5812
    %v6178 = vpop.f32.mrf.mxu0
    %v6179 = vadd.f32 %v6009, %v6178
    %v6180 = vpop.f32.mrf.mxu0
    %v6181 = vadd.f32 %v6013, %v6180
    %6182 = vmatprep.mubr.f32.mxu0 %v5817
    %6183 = vmatmul.mubr.f32.gmra.mxu0 %v5816
    %v6184 = vpop.f32.mrf.mxu0
    %v6185 = vadd.f32 %v6009, %v6184
    %v6186 = vpop.f32.mrf.mxu0
    %v6187 = vadd.f32 %v6013, %v6186
    %6188 = vmatprep.mubr.f32.mxu0 %v5821
    %6189 = vmatmul.mubr.f32.gmra.mxu0 %v5820
    %v6190 = vpop.f32.mrf.mxu0
    %v6191 = vadd.f32 %v6009, %v6190
    %v6192 = vpop.f32.mrf.mxu0
    %v6193 = vadd.f32 %v6013, %v6192
    %6194 = vmatprep.mubr.f32.mxu0 %v5825
    %6195 = vmatmul.mubr.f32.gmra.mxu0 %v5824
    %v6196 = vpop.f32.mrf.mxu0
    %v6197 = vadd.f32 %v6009, %v6196
    %v6198 = vpop.f32.mrf.mxu0
    %v6199 = vadd.f32 %v6013, %v6198
    %6200 = vmatprep.mubr.f32.mxu0 %v5829
    %6201 = vmatmul.mubr.f32.gmra.mxu0 %v5828
    %v6202 = vpop.f32.mrf.mxu0
    %v6203 = vadd.f32 %v6009, %v6202
    %v6204 = vpop.f32.mrf.mxu0
    %v6205 = vadd.f32 %v6013, %v6204
    %6206 = vmatprep.mubr.f32.mxu0 %v5833
    %6207 = vmatmul.mubr.f32.gmra.mxu0 %v5832
    %v6208 = vpop.f32.mrf.mxu0
    %v6209 = vadd.f32 %v6009, %v6208
    %v6210 = vpop.f32.mrf.mxu0
    %v6211 = vadd.f32 %v6013, %v6210
    %6212 = vmatprep.mubr.f32.mxu0 %v5837
    %6213 = vmatmul.mubr.f32.gmra.mxu0 %v5836
    %v6214 = vpop.f32.mrf.mxu0
    %v6215 = vadd.f32 %v6009, %v6214
    %v6216 = vpop.f32.mrf.mxu0
    %v6217 = vadd.f32 %v6013, %v6216
    %6218 = vmatprep.mubr.f32.mxu0 %v5841
    %6219 = vmatmul.mubr.f32.gmra.mxu0 %v5840
    %v6220 = vpop.f32.mrf.mxu0
    %v6221 = vadd.f32 %v6009, %v6220
    %v6222 = vpop.f32.mrf.mxu0
    %v6223 = vadd.f32 %v6013, %v6222
    %6224 = vmatprep.mubr.f32.mxu0 %v5845
    %6225 = vmatmul.mubr.f32.gmra.mxu0 %v5844
    %v6226 = vpop.f32.mrf.mxu0
    %v6227 = vadd.f32 %v6009, %v6226
    %v6228 = vpop.f32.mrf.mxu0
    %v6229 = vadd.f32 %v6013, %v6228
    %6230 = vmatprep.mubr.f32.mxu0 %v5849
    %6231 = vmatmul.mubr.f32.gmra.mxu0 %v5848
    %v6232 = vpop.f32.mrf.mxu0
    %v6233 = vadd.f32 %v6009, %v6232
    %v6234 = vpop.f32.mrf.mxu0
    %v6235 = vadd.f32 %v6013, %v6234
    %6236 = vmatprep.mubr.f32.mxu0 %v5853
    %6237 = vmatmul.mubr.f32.gmra.mxu0 %v5852
    %v6238 = vpop.f32.mrf.mxu0
    %v6239 = vadd.f32 %v6009, %v6238
    %v6240 = vpop.f32.mrf.mxu0
    %v6241 = vadd.f32 %v6013, %v6240
    %6242 = vmatprep.mubr.f32.mxu0 %v5857
    %6243 = vmatmul.mubr.f32.gmra.mxu0 %v5856
    %v6244 = vpop.f32.mrf.mxu0
    %v6245 = vadd.f32 %v6009, %v6244
    %v6246 = vpop.f32.mrf.mxu0
    %v6247 = vadd.f32 %v6013, %v6246
    %6248 = vmatprep.mubr.f32.mxu0 %v5861
    %6249 = vmatmul.mubr.f32.gmra.mxu0 %v5860
    %v6250 = vpop.f32.mrf.mxu0
    %v6251 = vadd.f32 %v6009, %v6250
    %v6252 = vpop.f32.mrf.mxu0
    %v6253 = vadd.f32 %v6013, %v6252
    %6254 = vmatprep.mubr.f32.mxu0 %v5865
    %6255 = vmatmul.mubr.f32.gmra.mxu0 %v5864
    %v6256 = vpop.f32.mrf.mxu0
    %v6257 = vadd.f32 %v6009, %v6256
    %v6258 = vpop.f32.mrf.mxu0
    %v6259 = vadd.f32 %v6013, %v6258
    %6260 = vmatprep.mubr.f32.mxu0 %v5869
    %6261 = vmatmul.mubr.f32.gmra.mxu0 %v5868
    %v6262 = vpop.f32.mrf.mxu0
    %v6263 = vadd.f32 %v6009, %v6262
    %v6264 = vpop.f32.mrf.mxu0
    %v6265 = vadd.f32 %v6013, %v6264
    %6266 = vmatprep.mubr.f32.mxu0 %v5873
    %6267 = vmatmul.mubr.f32.gmra.mxu0 %v5872
    %v6268 = vpop.f32.mrf.mxu0
    %v6269 = vadd.f32 %v6009, %v6268
    %v6270 = vpop.f32.mrf.mxu0
    %v6271 = vadd.f32 %v6013, %v6270
    %6272 = vdwg.mxu0
    %6273 = vmatprep.subr.mxu0 %v5971
    %6274 = vmatpush1.msra.mxu0 %v5970
    %6275 = vmatprep.subr.mxu0 %v5969
    %6276 = vmatpush1.msra.mxu0 %v5968
    %6277 = vmatprep.subr.mxu0 %v5967
    %6278 = vmatpush1.msra.mxu0 %v5966
    %6279 = vmatprep.subr.mxu0 %v5965
    %6280 = vmatpush1.msra.mxu0 %v5964
    %6281 = vmatprep.subr.mxu0 %v5963
    %6282 = vmatpush1.msra.mxu0 %v5962
    %6283 = vmatprep.subr.mxu0 %v5961
    %6284 = vmatpush1.msra.mxu0 %v5960
    %6285 = vmatprep.subr.mxu0 %v5959
    %6286 = vmatpush1.msra.mxu0 %v5958
    %6287 = vmatprep.subr.mxu0 %v5957
    %6288 = vmatpush1.msra.mxu0 %v5956
    %6289 = vmatprep.subr.mxu0 %v5955
    %6290 = vmatpush1.msra.mxu0 %v5954
    %6291 = vmatprep.subr.mxu0 %v5953
    %6292 = vmatpush1.msra.mxu0 %v5952
    %6293 = vmatprep.subr.mxu0 %v5951
    %6294 = vmatpush1.msra.mxu0 %v5950
    %6295 = vmatprep.subr.mxu0 %v5949
    %6296 = vmatpush1.msra.mxu0 %v5948
    %6297 = vmatprep.subr.mxu0 %v5947
    %6298 = vmatpush1.msra.mxu0 %v5946
    %6299 = vmatprep.subr.mxu0 %v5945
    %6300 = vmatpush1.msra.mxu0 %v5944
    %6301 = vmatprep.subr.mxu0 %v5943
    %6302 = vmatpush1.msra.mxu0 %v5942
    %6303 = vmatprep.subr.mxu0 %v5941
    %6304 = vmatpush1.msra.mxu0 %v5940
    %6305 = vmatprep.subr.mxu0 %v6003
    %6306 = vmatpush2.msra.mxu0 %v6002
    %6307 = vmatprep.subr.mxu0 %v6001
    %6308 = vmatpush2.msra.mxu0 %v6000
    %6309 = vmatprep.subr.mxu0 %v5999
    %6310 = vmatpush2.msra.mxu0 %v5998
    %6311 = vmatprep.subr.mxu0 %v5997
    %6312 = vmatpush2.msra.mxu0 %v5996
    %6313 = vmatprep.subr.mxu0 %v5995
    %6314 = vmatpush2.msra.mxu0 %v5994
    %6315 = vmatprep.subr.mxu0 %v5993
    %6316 = vmatpush2.msra.mxu0 %v5992
    %6317 = vmatprep.subr.mxu0 %v5991
    %6318 = vmatpush2.msra.mxu0 %v5990
    %6319 = vmatprep.subr.mxu0 %v5989
    %6320 = vmatpush2.msra.mxu0 %v5988
    %6321 = vmatprep.subr.mxu0 %v5987
    %6322 = vmatpush2.msra.mxu0 %v5986
    %6323 = vmatprep.subr.mxu0 %v5985
    %6324 = vmatpush2.msra.mxu0 %v5984
    %6325 = vmatprep.subr.mxu0 %v5983
    %6326 = vmatpush2.msra.mxu0 %v5982
    %6327 = vmatprep.subr.mxu0 %v5981
    %6328 = vmatpush2.msra.mxu0 %v5980
    %6329 = vmatprep.subr.mxu0 %v5979
    %6330 = vmatpush2.msra.mxu0 %v5978
    %6331 = vmatprep.subr.mxu0 %v5977
    %6332 = vmatpush2.msra.mxu0 %v5976
    %6333 = vmatprep.subr.mxu0 %v5975
    %6334 = vmatpush2.msra.mxu0 %v5974
    %6335 = vmatprep.subr.mxu0 %v5973
    %6336 = vmatpush2.msra.mxu0 %v5972
    %6337 = vmatprep.mubr.f32.mxu0 %v5751
    %6338 = vmatmul.mubr.f32.gmra.mxu0 %v5750
    %v6339 = vpop.f32.mrf.mxu0
    %v6340 = vadd.f32 %v6083, %v6339
    %v6341 = vpop.f32.mrf.mxu0
    %v6342 = vadd.f32 %v6085, %v6341
    %6343 = vmatprep.mubr.f32.mxu0 %v5755
    %6344 = vmatmul.mubr.f32.gmra.mxu0 %v5754
    %v6345 = vpop.f32.mrf.mxu0
    %v6346 = vadd.f32 %v6089, %v6345
    %v6347 = vpop.f32.mrf.mxu0
    %v6348 = vadd.f32 %v6091, %v6347
    %6349 = vmatprep.mubr.f32.mxu0 %v5759
    %6350 = vmatmul.mubr.f32.gmra.mxu0 %v5758
    %v6351 = vpop.f32.mrf.mxu0
    %v6352 = vadd.f32 %v6095, %v6351
    %v6353 = vpop.f32.mrf.mxu0
    %v6354 = vadd.f32 %v6097, %v6353
    %6355 = vmatprep.mubr.f32.mxu0 %v5763
    %6356 = vmatmul.mubr.f32.gmra.mxu0 %v5762
    %v6357 = vpop.f32.mrf.mxu0
    %v6358 = vadd.f32 %v6101, %v6357
    %v6359 = vpop.f32.mrf.mxu0
    %v6360 = vadd.f32 %v6103, %v6359
    %6361 = vmatprep.mubr.f32.mxu0 %v5767
    %6362 = vmatmul.mubr.f32.gmra.mxu0 %v5766
    %v6363 = vpop.f32.mrf.mxu0
    %v6364 = vadd.f32 %v6107, %v6363
    %v6365 = vpop.f32.mrf.mxu0
    %v6366 = vadd.f32 %v6109, %v6365
    %6367 = vmatprep.mubr.f32.mxu0 %v5771
    %6368 = vmatmul.mubr.f32.gmra.mxu0 %v5770
    %v6369 = vpop.f32.mrf.mxu0
    %v6370 = vadd.f32 %v6113, %v6369
    %v6371 = vpop.f32.mrf.mxu0
    %v6372 = vadd.f32 %v6115, %v6371
    %6373 = vmatprep.mubr.f32.mxu0 %v5775
    %6374 = vmatmul.mubr.f32.gmra.mxu0 %v5774
    %v6375 = vpop.f32.mrf.mxu0
    %v6376 = vadd.f32 %v6119, %v6375
    %v6377 = vpop.f32.mrf.mxu0
    %v6378 = vadd.f32 %v6121, %v6377
    %6379 = vmatprep.mubr.f32.mxu0 %v5779
    %6380 = vmatmul.mubr.f32.gmra.mxu0 %v5778
    %v6381 = vpop.f32.mrf.mxu0
    %v6382 = vadd.f32 %v6125, %v6381
    %v6383 = vpop.f32.mrf.mxu0
    %v6384 = vadd.f32 %v6127, %v6383
    %6385 = vmatprep.mubr.f32.mxu0 %v5783
    %6386 = vmatmul.mubr.f32.gmra.mxu0 %v5782
    %v6387 = vpop.f32.mrf.mxu0
    %v6388 = vadd.f32 %v6131, %v6387
    %v6389 = vpop.f32.mrf.mxu0
    %v6390 = vadd.f32 %v6133, %v6389
    %6391 = vmatprep.mubr.f32.mxu0 %v5787
    %6392 = vmatmul.mubr.f32.gmra.mxu0 %v5786
    %v6393 = vpop.f32.mrf.mxu0
    %v6394 = vadd.f32 %v6137, %v6393
    %v6395 = vpop.f32.mrf.mxu0
    %v6396 = vadd.f32 %v6139, %v6395
    %6397 = vmatprep.mubr.f32.mxu0 %v5791
    %6398 = vmatmul.mubr.f32.gmra.mxu0 %v5790
    %v6399 = vpop.f32.mrf.mxu0
    %v6400 = vadd.f32 %v6143, %v6399
    %v6401 = vpop.f32.mrf.mxu0
    %v6402 = vadd.f32 %v6145, %v6401
    %6403 = vmatprep.mubr.f32.mxu0 %v5795
    %6404 = vmatmul.mubr.f32.gmra.mxu0 %v5794
    %v6405 = vpop.f32.mrf.mxu0
    %v6406 = vadd.f32 %v6149, %v6405
    %v6407 = vpop.f32.mrf.mxu0
    %v6408 = vadd.f32 %v6151, %v6407
    %6409 = vmatprep.mubr.f32.mxu0 %v5799
    %6410 = vmatmul.mubr.f32.gmra.mxu0 %v5798
    %v6411 = vpop.f32.mrf.mxu0
    %v6412 = vadd.f32 %v6155, %v6411
    %v6413 = vpop.f32.mrf.mxu0
    %v6414 = vadd.f32 %v6157, %v6413
    %6415 = vmatprep.mubr.f32.mxu0 %v5803
    %6416 = vmatmul.mubr.f32.gmra.mxu0 %v5802
    %v6417 = vpop.f32.mrf.mxu0
    %v6418 = vadd.f32 %v6161, %v6417
    %v6419 = vpop.f32.mrf.mxu0
    %v6420 = vadd.f32 %v6163, %v6419
    %6421 = vmatprep.mubr.f32.mxu0 %v5807
    %6422 = vmatmul.mubr.f32.gmra.mxu0 %v5806
    %v6423 = vpop.f32.mrf.mxu0
    %v6424 = vadd.f32 %v6167, %v6423
    %v6425 = vpop.f32.mrf.mxu0
    %v6426 = vadd.f32 %v6169, %v6425
    %6427 = vmatprep.mubr.f32.mxu0 %v5811
    %6428 = vmatmul.mubr.f32.gmra.mxu0 %v5810
    %v6429 = vpop.f32.mrf.mxu0
    %v6430 = vadd.f32 %v6173, %v6429
    %v6431 = vpop.f32.mrf.mxu0
    %v6432 = vadd.f32 %v6175, %v6431
    %6433 = vmatprep.mubr.f32.mxu0 %v5815
    %6434 = vmatmul.mubr.f32.gmra.mxu0 %v5814
    %v6435 = vpop.f32.mrf.mxu0
    %v6436 = vadd.f32 %v6179, %v6435
    %v6437 = vpop.f32.mrf.mxu0
    %v6438 = vadd.f32 %v6181, %v6437
    %6439 = vmatprep.mubr.f32.mxu0 %v5819
    %6440 = vmatmul.mubr.f32.gmra.mxu0 %v5818
    %v6441 = vpop.f32.mrf.mxu0
    %v6442 = vadd.f32 %v6185, %v6441
    %v6443 = vpop.f32.mrf.mxu0
    %v6444 = vadd.f32 %v6187, %v6443
    %6445 = vmatprep.mubr.f32.mxu0 %v5823
    %6446 = vmatmul.mubr.f32.gmra.mxu0 %v5822
    %v6447 = vpop.f32.mrf.mxu0
    %v6448 = vadd.f32 %v6191, %v6447
    %v6449 = vpop.f32.mrf.mxu0
    %v6450 = vadd.f32 %v6193, %v6449
    %6451 = vmatprep.mubr.f32.mxu0 %v5827
    %6452 = vmatmul.mubr.f32.gmra.mxu0 %v5826
    %v6453 = vpop.f32.mrf.mxu0
    %v6454 = vadd.f32 %v6197, %v6453
    %v6455 = vpop.f32.mrf.mxu0
    %v6456 = vadd.f32 %v6199, %v6455
    %6457 = vmatprep.mubr.f32.mxu0 %v5831
    %6458 = vmatmul.mubr.f32.gmra.mxu0 %v5830
    %v6459 = vpop.f32.mrf.mxu0
    %v6460 = vadd.f32 %v6203, %v6459
    %v6461 = vpop.f32.mrf.mxu0
    %v6462 = vadd.f32 %v6205, %v6461
    %6463 = vmatprep.mubr.f32.mxu0 %v5835
    %6464 = vmatmul.mubr.f32.gmra.mxu0 %v5834
    %v6465 = vpop.f32.mrf.mxu0
    %v6466 = vadd.f32 %v6209, %v6465
    %v6467 = vpop.f32.mrf.mxu0
    %v6468 = vadd.f32 %v6211, %v6467
    %6469 = vmatprep.mubr.f32.mxu0 %v5839
    %6470 = vmatmul.mubr.f32.gmra.mxu0 %v5838
    %v6471 = vpop.f32.mrf.mxu0
    %v6472 = vadd.f32 %v6215, %v6471
    %v6473 = vpop.f32.mrf.mxu0
    %v6474 = vadd.f32 %v6217, %v6473
    %6475 = vmatprep.mubr.f32.mxu0 %v5843
    %6476 = vmatmul.mubr.f32.gmra.mxu0 %v5842
    %v6477 = vpop.f32.mrf.mxu0
    %v6478 = vadd.f32 %v6221, %v6477
    %v6479 = vpop.f32.mrf.mxu0
    %v6480 = vadd.f32 %v6223, %v6479
    %6481 = vmatprep.mubr.f32.mxu0 %v5847
    %6482 = vmatmul.mubr.f32.gmra.mxu0 %v5846
    %v6483 = vpop.f32.mrf.mxu0
    %v6484 = vadd.f32 %v6227, %v6483
    %v6485 = vpop.f32.mrf.mxu0
    %v6486 = vadd.f32 %v6229, %v6485
    %6487 = vmatprep.mubr.f32.mxu0 %v5851
    %6488 = vmatmul.mubr.f32.gmra.mxu0 %v5850
    %v6489 = vpop.f32.mrf.mxu0
    %v6490 = vadd.f32 %v6233, %v6489
    %v6491 = vpop.f32.mrf.mxu0
    %v6492 = vadd.f32 %v6235, %v6491
    %6493 = vmatprep.mubr.f32.mxu0 %v5855
    %6494 = vmatmul.mubr.f32.gmra.mxu0 %v5854
    %v6495 = vpop.f32.mrf.mxu0
    %v6496 = vadd.f32 %v6239, %v6495
    %v6497 = vpop.f32.mrf.mxu0
    %v6498 = vadd.f32 %v6241, %v6497
    %6499 = vmatprep.mubr.f32.mxu0 %v5859
    %6500 = vmatmul.mubr.f32.gmra.mxu0 %v5858
    %v6501 = vpop.f32.mrf.mxu0
    %v6502 = vadd.f32 %v6245, %v6501
    %v6503 = vpop.f32.mrf.mxu0
    %v6504 = vadd.f32 %v6247, %v6503
    %6505 = vmatprep.mubr.f32.mxu0 %v5863
    %6506 = vmatmul.mubr.f32.gmra.mxu0 %v5862
    %v6507 = vpop.f32.mrf.mxu0
    %v6508 = vadd.f32 %v6251, %v6507
    %v6509 = vpop.f32.mrf.mxu0
    %v6510 = vadd.f32 %v6253, %v6509
    %6511 = vmatprep.mubr.f32.mxu0 %v5867
    %6512 = vmatmul.mubr.f32.gmra.mxu0 %v5866
    %v6513 = vpop.f32.mrf.mxu0
    %v6514 = vadd.f32 %v6257, %v6513
    %v6515 = vpop.f32.mrf.mxu0
    %v6516 = vadd.f32 %v6259, %v6515
    %6517 = vmatprep.mubr.f32.mxu0 %v5871
    %6518 = vmatmul.mubr.f32.gmra.mxu0 %v5870
    %v6519 = vpop.f32.mrf.mxu0
    %v6520 = vadd.f32 %v6263, %v6519
    %v6521 = vpop.f32.mrf.mxu0
    %v6522 = vadd.f32 %v6265, %v6521
    %6523 = vmatprep.mubr.f32.mxu0 %v5875
    %6524 = vmatmul.mubr.f32.gmra.mxu0 %v5874
    %v6525 = vpop.f32.mrf.mxu0
    %v6526 = vadd.f32 %v6269, %v6525
    %v6527 = vpop.f32.mrf.mxu0
    %v6528 = vadd.f32 %v6271, %v6527
    %6529 = vdwg.mxu0
    %vm6530 = vcmp.gt.f32.partialorder %v6340, 0.0
    %vm6531 = vcmp.gt.f32.partialorder %v6342, 0.0
    %vm6532 = vcmp.gt.f32.partialorder %v6346, 0.0
    %vm6533 = vcmp.gt.f32.partialorder %v6348, 0.0
    %vm6534 = vcmp.gt.f32.partialorder %v6352, 0.0
    %vm6535 = vcmp.gt.f32.partialorder %v6354, 0.0
    %vm6536 = vcmp.gt.f32.partialorder %v6358, 0.0
    %vm6537 = vcmp.gt.f32.partialorder %v6360, 0.0
    %vm6538 = vcmp.gt.f32.partialorder %v6364, 0.0
    %vm6539 = vcmp.gt.f32.partialorder %v6366, 0.0
    %vm6540 = vcmp.gt.f32.partialorder %v6370, 0.0
    %vm6541 = vcmp.gt.f32.partialorder %v6372, 0.0
    %vm6542 = vcmp.gt.f32.partialorder %v6376, 0.0
    %vm6543 = vcmp.gt.f32.partialorder %v6378, 0.0
    %vm6544 = vcmp.gt.f32.partialorder %v6382, 0.0
    %vm6545 = vcmp.gt.f32.partialorder %v6384, 0.0
    %vm6546 = vcmp.gt.f32.partialorder %v6388, 0.0
    %vm6547 = vcmp.gt.f32.partialorder %v6390, 0.0
    %vm6548 = vcmp.gt.f32.partialorder %v6394, 0.0
    %vm6549 = vcmp.gt.f32.partialorder %v6396, 0.0
    %vm6550 = vcmp.gt.f32.partialorder %v6400, 0.0
    %vm6551 = vcmp.gt.f32.partialorder %v6402, 0.0
    %vm6552 = vcmp.gt.f32.partialorder %v6406, 0.0
    %vm6553 = vcmp.gt.f32.partialorder %v6408, 0.0
    %vm6554 = vcmp.gt.f32.partialorder %v6412, 0.0
    %vm6555 = vcmp.gt.f32.partialorder %v6414, 0.0
    %vm6556 = vcmp.gt.f32.partialorder %v6418, 0.0
    %vm6557 = vcmp.gt.f32.partialorder %v6420, 0.0
    %vm6558 = vcmp.gt.f32.partialorder %v6424, 0.0
    %vm6559 = vcmp.gt.f32.partialorder %v6426, 0.0
    %vm6560 = vcmp.gt.f32.partialorder %v6430, 0.0
    %vm6561 = vcmp.gt.f32.partialorder %v6432, 0.0
    %vm6562 = vcmp.gt.f32.partialorder %v6436, 0.0
    %vm6563 = vcmp.gt.f32.partialorder %v6438, 0.0
    %vm6564 = vcmp.gt.f32.partialorder %v6442, 0.0
    %vm6565 = vcmp.gt.f32.partialorder %v6444, 0.0
    %vm6566 = vcmp.gt.f32.partialorder %v6448, 0.0
    %vm6567 = vcmp.gt.f32.partialorder %v6450, 0.0
    %vm6568 = vcmp.gt.f32.partialorder %v6454, 0.0
    %vm6569 = vcmp.gt.f32.partialorder %v6456, 0.0
    %vm6570 = vcmp.gt.f32.partialorder %v6460, 0.0
    %vm6571 = vcmp.gt.f32.partialorder %v6462, 0.0
    %vm6572 = vcmp.gt.f32.partialorder %v6466, 0.0
    %vm6573 = vcmp.gt.f32.partialorder %v6468, 0.0
    %vm6574 = vcmp.gt.f32.partialorder %v6472, 0.0
    %vm6575 = vcmp.gt.f32.partialorder %v6474, 0.0
    %vm6576 = vcmp.gt.f32.partialorder %v6478, 0.0
    %vm6577 = vcmp.gt.f32.partialorder %v6480, 0.0
    %vm6578 = vcmp.gt.f32.partialorder %v6484, 0.0
    %vm6579 = vcmp.gt.f32.partialorder %v6486, 0.0
    %vm6580 = vcmp.gt.f32.partialorder %v6490, 0.0
    %vm6581 = vcmp.gt.f32.partialorder %v6492, 0.0
    %vm6582 = vcmp.gt.f32.partialorder %v6496, 0.0
    %vm6583 = vcmp.gt.f32.partialorder %v6498, 0.0
    %vm6584 = vcmp.gt.f32.partialorder %v6502, 0.0
    %vm6585 = vcmp.gt.f32.partialorder %v6504, 0.0
    %vm6586 = vcmp.gt.f32.partialorder %v6508, 0.0
    %vm6587 = vcmp.gt.f32.partialorder %v6510, 0.0
    %vm6588 = vcmp.gt.f32.partialorder %v6514, 0.0
    %vm6589 = vcmp.gt.f32.partialorder %v6516, 0.0
    %vm6590 = vcmp.gt.f32.partialorder %v6520, 0.0
    %vm6591 = vcmp.gt.f32.partialorder %v6522, 0.0
    %vm6592 = vcmp.gt.f32.partialorder %v6526, 0.0
    %vm6593 = vcmp.gt.f32.partialorder %v6528, 0.0
    %v6594 = vmul.f32 %v6340, 0.2
    %v6595 = vmul.f32 %v6342, 0.2
    %v6596 = vmul.f32 %v6346, 0.2
    %v6597 = vmul.f32 %v6348, 0.2
    %v6598 = vmul.f32 %v6352, 0.2
    %v6599 = vmul.f32 %v6354, 0.2
    %v6600 = vmul.f32 %v6358, 0.2
    %v6601 = vmul.f32 %v6360, 0.2
    %v6602 = vmul.f32 %v6364, 0.2
    %v6603 = vmul.f32 %v6366, 0.2
    %v6604 = vmul.f32 %v6370, 0.2
    %v6605 = vmul.f32 %v6372, 0.2
    %v6606 = vmul.f32 %v6376, 0.2
    %v6607 = vmul.f32 %v6378, 0.2
    %v6608 = vmul.f32 %v6382, 0.2
    %v6609 = vmul.f32 %v6384, 0.2
    %v6610 = vmul.f32 %v6388, 0.2
    %v6611 = vmul.f32 %v6390, 0.2
    %v6612 = vmul.f32 %v6394, 0.2
    %v6613 = vmul.f32 %v6396, 0.2
    %v6614 = vmul.f32 %v6400, 0.2
    %v6615 = vmul.f32 %v6402, 0.2
    %v6616 = vmul.f32 %v6406, 0.2
    %v6617 = vmul.f32 %v6408, 0.2
    %v6618 = vmul.f32 %v6412, 0.2
    %v6619 = vmul.f32 %v6414, 0.2
    %v6620 = vmul.f32 %v6418, 0.2
    %v6621 = vmul.f32 %v6420, 0.2
    %v6622 = vmul.f32 %v6424, 0.2
    %v6623 = vmul.f32 %v6426, 0.2
    %v6624 = vmul.f32 %v6430, 0.2
    %v6625 = vmul.f32 %v6432, 0.2
    %v6626 = vmul.f32 %v6436, 0.2
    %v6627 = vmul.f32 %v6438, 0.2
    %v6628 = vmul.f32 %v6442, 0.2
    %v6629 = vmul.f32 %v6444, 0.2
    %v6630 = vmul.f32 %v6448, 0.2
    %v6631 = vmul.f32 %v6450, 0.2
    %v6632 = vmul.f32 %v6454, 0.2
    %v6633 = vmul.f32 %v6456, 0.2
    %v6634 = vmul.f32 %v6460, 0.2
    %v6635 = vmul.f32 %v6462, 0.2
    %v6636 = vmul.f32 %v6466, 0.2
    %v6637 = vmul.f32 %v6468, 0.2
    %v6638 = vmul.f32 %v6472, 0.2
    %v6639 = vmul.f32 %v6474, 0.2
    %v6640 = vmul.f32 %v6478, 0.2
    %v6641 = vmul.f32 %v6480, 0.2
    %v6642 = vmul.f32 %v6484, 0.2
    %v6643 = vmul.f32 %v6486, 0.2
    %v6644 = vmul.f32 %v6490, 0.2
    %v6645 = vmul.f32 %v6492, 0.2
    %v6646 = vmul.f32 %v6496, 0.2
    %v6647 = vmul.f32 %v6498, 0.2
    %v6648 = vmul.f32 %v6502, 0.2
    %v6649 = vmul.f32 %v6504, 0.2
    %v6650 = vmul.f32 %v6508, 0.2
    %v6651 = vmul.f32 %v6510, 0.2
    %v6652 = vmul.f32 %v6514, 0.2
    %v6653 = vmul.f32 %v6516, 0.2
    %v6654 = vmul.f32 %v6520, 0.2
    %v6655 = vmul.f32 %v6522, 0.2
    %v6656 = vmul.f32 %v6526, 0.2
    %v6657 = vmul.f32 %v6528, 0.2
    %v6658 = vsel %vm6530, %v6340, %v6594
    %v6659 = vsel %vm6531, %v6342, %v6595
    %v6660 = vsel %vm6532, %v6346, %v6596
    %v6661 = vsel %vm6533, %v6348, %v6597
    %v6662 = vsel %vm6534, %v6352, %v6598
    %v6663 = vsel %vm6535, %v6354, %v6599
    %v6664 = vsel %vm6536, %v6358, %v6600
    %v6665 = vsel %vm6537, %v6360, %v6601
    %v6666 = vsel %vm6538, %v6364, %v6602
    %v6667 = vsel %vm6539, %v6366, %v6603
    %v6668 = vsel %vm6540, %v6370, %v6604
    %v6669 = vsel %vm6541, %v6372, %v6605
    %v6670 = vsel %vm6542, %v6376, %v6606
    %v6671 = vsel %vm6543, %v6378, %v6607
    %v6672 = vsel %vm6544, %v6382, %v6608
    %v6673 = vsel %vm6545, %v6384, %v6609
    %v6674 = vsel %vm6546, %v6388, %v6610
    %v6675 = vsel %vm6547, %v6390, %v6611
    %v6676 = vsel %vm6548, %v6394, %v6612
    %v6677 = vsel %vm6549, %v6396, %v6613
    %v6678 = vsel %vm6550, %v6400, %v6614
    %v6679 = vsel %vm6551, %v6402, %v6615
    %v6680 = vsel %vm6552, %v6406, %v6616
    %v6681 = vsel %vm6553, %v6408, %v6617
    %v6682 = vsel %vm6554, %v6412, %v6618
    %v6683 = vsel %vm6555, %v6414, %v6619
    %v6684 = vsel %vm6556, %v6418, %v6620
    %v6685 = vsel %vm6557, %v6420, %v6621
    %v6686 = vsel %vm6558, %v6424, %v6622
    %v6687 = vsel %vm6559, %v6426, %v6623
    %v6688 = vsel %vm6560, %v6430, %v6624
    %v6689 = vsel %vm6561, %v6432, %v6625
    %v6690 = vsel %vm6562, %v6436, %v6626
    %v6691 = vsel %vm6563, %v6438, %v6627
    %v6692 = vsel %vm6564, %v6442, %v6628
    %v6693 = vsel %vm6565, %v6444, %v6629
    %v6694 = vsel %vm6566, %v6448, %v6630
    %v6695 = vsel %vm6567, %v6450, %v6631
    %v6696 = vsel %vm6568, %v6454, %v6632
    %v6697 = vsel %vm6569, %v6456, %v6633
    %v6698 = vsel %vm6570, %v6460, %v6634
    %v6699 = vsel %vm6571, %v6462, %v6635
    %v6700 = vsel %vm6572, %v6466, %v6636
    %v6701 = vsel %vm6573, %v6468, %v6637
    %v6702 = vsel %vm6574, %v6472, %v6638
    %v6703 = vsel %vm6575, %v6474, %v6639
    %v6704 = vsel %vm6576, %v6478, %v6640
    %v6705 = vsel %vm6577, %v6480, %v6641
    %v6706 = vsel %vm6578, %v6484, %v6642
    %v6707 = vsel %vm6579, %v6486, %v6643
    %v6708 = vsel %vm6580, %v6490, %v6644
    %v6709 = vsel %vm6581, %v6492, %v6645
    %v6710 = vsel %vm6582, %v6496, %v6646
    %v6711 = vsel %vm6583, %v6498, %v6647
    %v6712 = vsel %vm6584, %v6502, %v6648
    %v6713 = vsel %vm6585, %v6504, %v6649
    %v6714 = vsel %vm6586, %v6508, %v6650
    %v6715 = vsel %vm6587, %v6510, %v6651
    %v6716 = vsel %vm6588, %v6514, %v6652
    %v6717 = vsel %vm6589, %v6516, %v6653
    %v6718 = vsel %vm6590, %v6520, %v6654
    %v6719 = vsel %vm6591, %v6522, %v6655
    %v6720 = vsel %vm6592, %v6526, %v6656
    %v6721 = vsel %vm6593, %v6528, %v6657
    %v6722 = vld [vmem:[%s3] sm:$0xff]
    %v6723 = vld [vmem:[%s3 + $0x8] sm:$0xff]
    %v6724 = vld [vmem:[%s3 + $0x10] sm:$0xff]
    %v6725 = vld [vmem:[%s3 + $0x18] sm:$0xff]
    %v6726 = vld [vmem:[%s3 + $0x20] sm:$0xff]
    %v6727 = vld [vmem:[%s3 + $0x28] sm:$0xff]
    %v6728 = vld [vmem:[%s3 + $0x30] sm:$0xff]
    %v6729 = vld [vmem:[%s3 + $0x38] sm:$0xff]
    %v6730 = vld [vmem:[%s3 + $0x40] sm:$0xff]
    %v6731 = vld [vmem:[%s3 + $0x48] sm:$0xff]
    %v6732 = vld [vmem:[%s3 + $0x50] sm:$0xff]
    %v6733 = vld [vmem:[%s3 + $0x58] sm:$0xff]
    %v6734 = vld [vmem:[%s3 + $0x60] sm:$0xff]
    %v6735 = vld [vmem:[%s3 + $0x68] sm:$0xff]
    %v6736 = vld [vmem:[%s3 + $0x70] sm:$0xff]
    %v6737 = vld [vmem:[%s3 + $0x78] sm:$0xff]
    %v6738 = vld [vmem:[%s3 + $0x80] sm:$0xff]
    %v6739 = vld [vmem:[%s3 + $0x88] sm:$0xff]
    %v6740 = vld [vmem:[%s3 + $0x90] sm:$0xff]
    %v6741 = vld [vmem:[%s3 + $0x98] sm:$0xff]
    %v6742 = vld [vmem:[%s3 + $0xa0] sm:$0xff]
    %v6743 = vld [vmem:[%s3 + $0xa8] sm:$0xff]
    %v6744 = vld [vmem:[%s3 + $0xb0] sm:$0xff]
    %v6745 = vld [vmem:[%s3 + $0xb8] sm:$0xff]
    %v6746 = vld [vmem:[%s3 + $0xc0] sm:$0xff]
    %v6747 = vld [vmem:[%s3 + $0xc8] sm:$0xff]
    %v6748 = vld [vmem:[%s3 + $0xd0] sm:$0xff]
    %v6749 = vld [vmem:[%s3 + $0xd8] sm:$0xff]
    %v6750 = vld [vmem:[%s3 + $0xe0] sm:$0xff]
    %v6751 = vld [vmem:[%s3 + $0xe8] sm:$0xff]
    %v6752 = vld [vmem:[%s3 + $0xf0] sm:$0xff]
    %v6753 = vld [vmem:[%s3 + $0xf8] sm:$0xff]
    %v6754 = vld [vmem:[%s3 + $0x100] sm:$0xff]
    %v6755 = vld [vmem:[%s3 + $0x108] sm:$0xff]
    %v6756 = vld [vmem:[%s3 + $0x110] sm:$0xff]
    %v6757 = vld [vmem:[%s3 + $0x118] sm:$0xff]
    %v6758 = vld [vmem:[%s3 + $0x120] sm:$0xff]
    %v6759 = vld [vmem:[%s3 + $0x128] sm:$0xff]
    %v6760 = vld [vmem:[%s3 + $0x130] sm:$0xff]
    %v6761 = vld [vmem:[%s3 + $0x138] sm:$0xff]
    %v6762 = vld [vmem:[%s3 + $0x140] sm:$0xff]
    %v6763 = vld [vmem:[%s3 + $0x148] sm:$0xff]
    %v6764 = vld [vmem:[%s3 + $0x150] sm:$0xff]
    %v6765 = vld [vmem:[%s3 + $0x158] sm:$0xff]
    %v6766 = vld [vmem:[%s3 + $0x160] sm:$0xff]
    %v6767 = vld [vmem:[%s3 + $0x168] sm:$0xff]
    %v6768 = vld [vmem:[%s3 + $0x170] sm:$0xff]
    %v6769 = vld [vmem:[%s3 + $0x178] sm:$0xff]
    %v6770 = vld [vmem:[%s3 + $0x180] sm:$0xff]
    %v6771 = vld [vmem:[%s3 + $0x188] sm:$0xff]
    %v6772 = vld [vmem:[%s3 + $0x190] sm:$0xff]
    %v6773 = vld [vmem:[%s3 + $0x198] sm:$0xff]
    %v6774 = vld [vmem:[%s3 + $0x1a0] sm:$0xff]
    %v6775 = vld [vmem:[%s3 + $0x1a8] sm:$0xff]
    %v6776 = vld [vmem:[%s3 + $0x1b0] sm:$0xff]
    %v6777 = vld [vmem:[%s3 + $0x1b8] sm:$0xff]
    %v6778 = vld [vmem:[%s3 + $0x1c0] sm:$0xff]
    %v6779 = vld [vmem:[%s3 + $0x1c8] sm:$0xff]
    %v6780 = vld [vmem:[%s3 + $0x1d0] sm:$0xff]
    %v6781 = vld [vmem:[%s3 + $0x1d8] sm:$0xff]
    %v6782 = vld [vmem:[%s3 + $0x1e0] sm:$0xff]
    %v6783 = vld [vmem:[%s3 + $0x1e8] sm:$0xff]
    %v6784 = vld [vmem:[%s3 + $0x1f0] sm:$0xff]
    %v6785 = vld [vmem:[%s3 + $0x1f8] sm:$0xff]
    %v6786 = vmul.f32 %v6658, %v6722
    %v6787 = vmul.f32 %v6659, %v6723
    %v6788 = vmul.f32 %v6660, %v6724
    %v6789 = vmul.f32 %v6661, %v6725
    %v6790 = vmul.f32 %v6662, %v6726
    %v6791 = vmul.f32 %v6663, %v6727
    %v6792 = vmul.f32 %v6664, %v6728
    %v6793 = vmul.f32 %v6665, %v6729
    %v6794 = vmul.f32 %v6666, %v6730
    %v6795 = vmul.f32 %v6667, %v6731
    %v6796 = vmul.f32 %v6668, %v6732
    %v6797 = vmul.f32 %v6669, %v6733
    %v6798 = vmul.f32 %v6670, %v6734
    %v6799 = vmul.f32 %v6671, %v6735
    %v6800 = vmul.f32 %v6672, %v6736
    %v6801 = vmul.f32 %v6673, %v6737
    %v6802 = vmul.f32 %v6674, %v6738
    %v6803 = vmul.f32 %v6675, %v6739
    %v6804 = vmul.f32 %v6676, %v6740
    %v6805 = vmul.f32 %v6677, %v6741
    %v6806 = vmul.f32 %v6678, %v6742
    %v6807 = vmul.f32 %v6679, %v6743
    %v6808 = vmul.f32 %v6680, %v6744
    %v6809 = vmul.f32 %v6681, %v6745
    %v6810 = vmul.f32 %v6682, %v6746
    %v6811 = vmul.f32 %v6683, %v6747
    %v6812 = vmul.f32 %v6684, %v6748
    %v6813 = vmul.f32 %v6685, %v6749
    %v6814 = vmul.f32 %v6686, %v6750
    %v6815 = vmul.f32 %v6687, %v6751
    %v6816 = vmul.f32 %v6688, %v6752
    %v6817 = vmul.f32 %v6689, %v6753
    %v6818 = vmul.f32 %v6690, %v6754
    %v6819 = vmul.f32 %v6691, %v6755
    %v6820 = vmul.f32 %v6692, %v6756
    %v6821 = vmul.f32 %v6693, %v6757
    %v6822 = vmul.f32 %v6694, %v6758
    %v6823 = vmul.f32 %v6695, %v6759
    %v6824 = vmul.f32 %v6696, %v6760
    %v6825 = vmul.f32 %v6697, %v6761
    %v6826 = vmul.f32 %v6698, %v6762
    %v6827 = vmul.f32 %v6699, %v6763
    %v6828 = vmul.f32 %v6700, %v6764
    %v6829 = vmul.f32 %v6701, %v6765
    %v6830 = vmul.f32 %v6702, %v6766
    %v6831 = vmul.f32 %v6703, %v6767
    %v6832 = vmul.f32 %v6704, %v6768
    %v6833 = vmul.f32 %v6705, %v6769
    %v6834 = vmul.f32 %v6706, %v6770
    %v6835 = vmul.f32 %v6707, %v6771
    %v6836 = vmul.f32 %v6708, %v6772
    %v6837 = vmul.f32 %v6709, %v6773
    %v6838 = vmul.f32 %v6710, %v6774
    %v6839 = vmul.f32 %v6711, %v6775
    %v6840 = vmul.f32 %v6712, %v6776
    %v6841 = vmul.f32 %v6713, %v6777
    %v6842 = vmul.f32 %v6714, %v6778
    %v6843 = vmul.f32 %v6715, %v6779
    %v6844 = vmul.f32 %v6716, %v6780
    %v6845 = vmul.f32 %v6717, %v6781
    %v6846 = vmul.f32 %v6718, %v6782
    %v6847 = vmul.f32 %v6719, %v6783
    %v6848 = vmul.f32 %v6720, %v6784
    %v6849 = vmul.f32 %v6721, %v6785
    %v6850 = vld [vmem:[#allocation10] sm:$0x3]
    %v6852 = vlaneseq
    %v6853 = vshrl.u32 %v6852, 7
    %v6854 = vsub.s32 0, %v6853
    %v6855 = vrot.slane %v6850, %v6854
    %v6856 = vlaneseq
    %v6857 = vshrl.u32 %v6856, 7
    %v6858 = vsub.s32 1, %v6857
    %v6859 = vrot.slane %v6850, %v6858
    %v6862 = vmul.f32 %v6786, %v6855
    %v6863 = vmul.f32 %v6787, %v6859
    %v6864 = vmul.f32 %v6788, %v6855
    %v6865 = vmul.f32 %v6789, %v6859
    %v6866 = vmul.f32 %v6790, %v6855
    %v6867 = vmul.f32 %v6791, %v6859
    %v6868 = vmul.f32 %v6792, %v6855
    %v6869 = vmul.f32 %v6793, %v6859
    %v6870 = vmul.f32 %v6794, %v6855
    %v6871 = vmul.f32 %v6795, %v6859
    %v6872 = vmul.f32 %v6796, %v6855
    %v6873 = vmul.f32 %v6797, %v6859
    %v6874 = vmul.f32 %v6798, %v6855
    %v6875 = vmul.f32 %v6799, %v6859
    %v6876 = vmul.f32 %v6800, %v6855
    %v6877 = vmul.f32 %v6801, %v6859
    %v6878 = vmul.f32 %v6802, %v6855
    %v6879 = vmul.f32 %v6803, %v6859
    %v6880 = vmul.f32 %v6804, %v6855
    %v6881 = vmul.f32 %v6805, %v6859
    %v6882 = vmul.f32 %v6806, %v6855
    %v6883 = vmul.f32 %v6807, %v6859
    %v6884 = vmul.f32 %v6808, %v6855
    %v6885 = vmul.f32 %v6809, %v6859
    %v6886 = vmul.f32 %v6810, %v6855
    %v6887 = vmul.f32 %v6811, %v6859
    %v6888 = vmul.f32 %v6812, %v6855
    %v6889 = vmul.f32 %v6813, %v6859
    %v6890 = vmul.f32 %v6814, %v6855
    %v6891 = vmul.f32 %v6815, %v6859
    %v6892 = vmul.f32 %v6816, %v6855
    %v6893 = vmul.f32 %v6817, %v6859
    %v6894 = vmul.f32 %v6818, %v6855
    %v6895 = vmul.f32 %v6819, %v6859
    %v6896 = vmul.f32 %v6820, %v6855
    %v6897 = vmul.f32 %v6821, %v6859
    %v6898 = vmul.f32 %v6822, %v6855
    %v6899 = vmul.f32 %v6823, %v6859
    %v6900 = vmul.f32 %v6824, %v6855
    %v6901 = vmul.f32 %v6825, %v6859
    %v6902 = vmul.f32 %v6826, %v6855
    %v6903 = vmul.f32 %v6827, %v6859
    %v6904 = vmul.f32 %v6828, %v6855
    %v6905 = vmul.f32 %v6829, %v6859
    %v6906 = vmul.f32 %v6830, %v6855
    %v6907 = vmul.f32 %v6831, %v6859
    %v6908 = vmul.f32 %v6832, %v6855
    %v6909 = vmul.f32 %v6833, %v6859
    %v6910 = vmul.f32 %v6834, %v6855
    %v6911 = vmul.f32 %v6835, %v6859
    %v6912 = vmul.f32 %v6836, %v6855
    %v6913 = vmul.f32 %v6837, %v6859
    %v6914 = vmul.f32 %v6838, %v6855
    %v6915 = vmul.f32 %v6839, %v6859
    %v6916 = vmul.f32 %v6840, %v6855
    %v6917 = vmul.f32 %v6841, %v6859
    %v6918 = vmul.f32 %v6842, %v6855
    %v6919 = vmul.f32 %v6843, %v6859
    %v6920 = vmul.f32 %v6844, %v6855
    %v6921 = vmul.f32 %v6845, %v6859
    %v6922 = vmul.f32 %v6846, %v6855
    %v6923 = vmul.f32 %v6847, %v6859
    %v6924 = vmul.f32 %v6848, %v6855
    %v6925 = vmul.f32 %v6849, %v6859
    %v6926 = vadd.f32 %v6862, %v6863
    %6927 = vadd.xlane.f32.xlu0 %v6926
    %v6928 = vpop.xlane.xlu0 %6927
    %v6929 = vadd.f32 %v6864, %v6865
    %6930 = vadd.xlane.f32.xlu0 %v6929
    %v6931 = vpop.xlane.xlu0 %6930
    %v6932 = vadd.f32 %v6866, %v6867
    %6933 = vadd.xlane.f32.xlu0 %v6932
    %v6934 = vpop.xlane.xlu0 %6933
    %v6935 = vadd.f32 %v6868, %v6869
    %6936 = vadd.xlane.f32.xlu0 %v6935
    %v6937 = vpop.xlane.xlu0 %6936
    %v6938 = vadd.f32 %v6870, %v6871
    %6939 = vadd.xlane.f32.xlu0 %v6938
    %v6940 = vpop.xlane.xlu0 %6939
    %v6941 = vadd.f32 %v6872, %v6873
    %6942 = vadd.xlane.f32.xlu0 %v6941
    %v6943 = vpop.xlane.xlu0 %6942
    %v6944 = vadd.f32 %v6874, %v6875
    %6945 = vadd.xlane.f32.xlu0 %v6944
    %v6946 = vpop.xlane.xlu0 %6945
    %v6947 = vadd.f32 %v6876, %v6877
    %6948 = vadd.xlane.f32.xlu0 %v6947
    %v6949 = vpop.xlane.xlu0 %6948
    %v6950 = vadd.f32 %v6878, %v6879
    %6951 = vadd.xlane.f32.xlu0 %v6950
    %v6952 = vpop.xlane.xlu0 %6951
    %v6953 = vadd.f32 %v6880, %v6881
    %6954 = vadd.xlane.f32.xlu0 %v6953
    %v6955 = vpop.xlane.xlu0 %6954
    %v6956 = vadd.f32 %v6882, %v6883
    %6957 = vadd.xlane.f32.xlu0 %v6956
    %v6958 = vpop.xlane.xlu0 %6957
    %v6959 = vadd.f32 %v6884, %v6885
    %6960 = vadd.xlane.f32.xlu0 %v6959
    %v6961 = vpop.xlane.xlu0 %6960
    %v6962 = vadd.f32 %v6886, %v6887
    %6963 = vadd.xlane.f32.xlu0 %v6962
    %v6964 = vpop.xlane.xlu0 %6963
    %v6965 = vadd.f32 %v6888, %v6889
    %6966 = vadd.xlane.f32.xlu0 %v6965
    %v6967 = vpop.xlane.xlu0 %6966
    %v6968 = vadd.f32 %v6890, %v6891
    %6969 = vadd.xlane.f32.xlu0 %v6968
    %v6970 = vpop.xlane.xlu0 %6969
    %v6971 = vadd.f32 %v6892, %v6893
    %6972 = vadd.xlane.f32.xlu0 %v6971
    %v6973 = vpop.xlane.xlu0 %6972
    %v6974 = vadd.f32 %v6894, %v6895
    %6975 = vadd.xlane.f32.xlu0 %v6974
    %v6976 = vpop.xlane.xlu0 %6975
    %v6977 = vadd.f32 %v6896, %v6897
    %6978 = vadd.xlane.f32.xlu0 %v6977
    %v6979 = vpop.xlane.xlu0 %6978
    %v6980 = vadd.f32 %v6898, %v6899
    %6981 = vadd.xlane.f32.xlu0 %v6980
    %v6982 = vpop.xlane.xlu0 %6981
    %v6983 = vadd.f32 %v6900, %v6901
    %6984 = vadd.xlane.f32.xlu0 %v6983
    %v6985 = vpop.xlane.xlu0 %6984
    %v6986 = vadd.f32 %v6902, %v6903
    %6987 = vadd.xlane.f32.xlu0 %v6986
    %v6988 = vpop.xlane.xlu0 %6987
    %v6989 = vadd.f32 %v6904, %v6905
    %6990 = vadd.xlane.f32.xlu0 %v6989
    %v6991 = vpop.xlane.xlu0 %6990
    %v6992 = vadd.f32 %v6906, %v6907
    %6993 = vadd.xlane.f32.xlu0 %v6992
    %v6994 = vpop.xlane.xlu0 %6993
    %v6995 = vadd.f32 %v6908, %v6909
    %6996 = vadd.xlane.f32.xlu0 %v6995
    %v6997 = vpop.xlane.xlu0 %6996
    %v6998 = vadd.f32 %v6910, %v6911
    %6999 = vadd.xlane.f32.xlu0 %v6998
    %v7000 = vpop.xlane.xlu0 %6999
    %v7001 = vadd.f32 %v6912, %v6913
    %7002 = vadd.xlane.f32.xlu0 %v7001
    %v7003 = vpop.xlane.xlu0 %7002
    %v7004 = vadd.f32 %v6914, %v6915
    %7005 = vadd.xlane.f32.xlu0 %v7004
    %v7006 = vpop.xlane.xlu0 %7005
    %v7007 = vadd.f32 %v6916, %v6917
    %7008 = vadd.xlane.f32.xlu0 %v7007
    %v7009 = vpop.xlane.xlu0 %7008
    %v7010 = vadd.f32 %v6918, %v6919
    %7011 = vadd.xlane.f32.xlu0 %v7010
    %v7012 = vpop.xlane.xlu0 %7011
    %v7013 = vadd.f32 %v6920, %v6921
    %7014 = vadd.xlane.f32.xlu0 %v7013
    %v7015 = vpop.xlane.xlu0 %7014
    %v7016 = vadd.f32 %v6922, %v6923
    %7017 = vadd.xlane.f32.xlu0 %v7016
    %v7018 = vpop.xlane.xlu0 %7017
    %v7019 = vadd.f32 %v6924, %v6925
    %7020 = vadd.xlane.f32.xlu0 %v7019
    %v7021 = vpop.xlane.xlu0 %7020
    %v7022 = vld [vmem:[#allocation2] sm:$0x1]
    %v7024 = vlaneseq
    %v7025 = vshrl.u32 %v7024, 7
    %v7026 = vsub.s32 0, %v7025
    %v7027 = vrot.slane %v7022, %v7026
    %v7029 = vadd.f32 %v6928, %v7027
    %v7030 = vadd.f32 %v6931, %v7027
    %v7031 = vadd.f32 %v6934, %v7027
    %v7032 = vadd.f32 %v6937, %v7027
    %v7033 = vadd.f32 %v6940, %v7027
    %v7034 = vadd.f32 %v6943, %v7027
    %v7035 = vadd.f32 %v6946, %v7027
    %v7036 = vadd.f32 %v6949, %v7027
    %v7037 = vadd.f32 %v6952, %v7027
    %v7038 = vadd.f32 %v6955, %v7027
    %v7039 = vadd.f32 %v6958, %v7027
    %v7040 = vadd.f32 %v6961, %v7027
    %v7041 = vadd.f32 %v6964, %v7027
    %v7042 = vadd.f32 %v6967, %v7027
    %v7043 = vadd.f32 %v6970, %v7027
    %v7044 = vadd.f32 %v6973, %v7027
    %v7045 = vadd.f32 %v6976, %v7027
    %v7046 = vadd.f32 %v6979, %v7027
    %v7047 = vadd.f32 %v6982, %v7027
    %v7048 = vadd.f32 %v6985, %v7027
    %v7049 = vadd.f32 %v6988, %v7027
    %v7050 = vadd.f32 %v6991, %v7027
    %v7051 = vadd.f32 %v6994, %v7027
    %v7052 = vadd.f32 %v6997, %v7027
    %v7053 = vadd.f32 %v7000, %v7027
    %v7054 = vadd.f32 %v7003, %v7027
    %v7055 = vadd.f32 %v7006, %v7027
    %v7056 = vadd.f32 %v7009, %v7027
    %v7057 = vadd.f32 %v7012, %v7027
    %v7058 = vadd.f32 %v7015, %v7027
    %v7059 = vadd.f32 %v7018, %v7027
    %v7060 = vadd.f32 %v7021, %v7027
    %v7061 = vxor.u32 %v7029, 2147483648
    %v7062 = vxor.u32 %v7030, 2147483648
    %v7063 = vxor.u32 %v7031, 2147483648
    %v7064 = vxor.u32 %v7032, 2147483648
    %v7065 = vxor.u32 %v7033, 2147483648
    %v7066 = vxor.u32 %v7034, 2147483648
    %v7067 = vxor.u32 %v7035, 2147483648
    %v7068 = vxor.u32 %v7036, 2147483648
    %v7069 = vxor.u32 %v7037, 2147483648
    %v7070 = vxor.u32 %v7038, 2147483648
    %v7071 = vxor.u32 %v7039, 2147483648
    %v7072 = vxor.u32 %v7040, 2147483648
    %v7073 = vxor.u32 %v7041, 2147483648
    %v7074 = vxor.u32 %v7042, 2147483648
    %v7075 = vxor.u32 %v7043, 2147483648
    %v7076 = vxor.u32 %v7044, 2147483648
    %v7077 = vxor.u32 %v7045, 2147483648
    %v7078 = vxor.u32 %v7046, 2147483648
    %v7079 = vxor.u32 %v7047, 2147483648
    %v7080 = vxor.u32 %v7048, 2147483648
    %v7081 = vxor.u32 %v7049, 2147483648
    %v7082 = vxor.u32 %v7050, 2147483648
    %v7083 = vxor.u32 %v7051, 2147483648
    %v7084 = vxor.u32 %v7052, 2147483648
    %v7085 = vxor.u32 %v7053, 2147483648
    %v7086 = vxor.u32 %v7054, 2147483648
    %v7087 = vxor.u32 %v7055, 2147483648
    %v7088 = vxor.u32 %v7056, 2147483648
    %v7089 = vxor.u32 %v7057, 2147483648
    %v7090 = vxor.u32 %v7058, 2147483648
    %v7091 = vxor.u32 %v7059, 2147483648
    %v7092 = vxor.u32 %v7060, 2147483648
    %v7093 = vmul.f32 %v7061, 1.442695
    %v7094 = vpow.pop %v7093
    %v7095 = vmul.f32 %v7062, 1.442695
    %v7096 = vpow.pop %v7095
    %v7097 = vmul.f32 %v7063, 1.442695
    %v7098 = vpow.pop %v7097
    %v7099 = vmul.f32 %v7064, 1.442695
    %v7100 = vpow.pop %v7099
    %v7101 = vmul.f32 %v7065, 1.442695
    %v7102 = vpow.pop %v7101
    %v7103 = vmul.f32 %v7066, 1.442695
    %v7104 = vpow.pop %v7103
    %v7105 = vmul.f32 %v7067, 1.442695
    %v7106 = vpow.pop %v7105
    %v7107 = vmul.f32 %v7068, 1.442695
    %v7108 = vpow.pop %v7107
    %v7109 = vmul.f32 %v7069, 1.442695
    %v7110 = vpow.pop %v7109
    %v7111 = vmul.f32 %v7070, 1.442695
    %v7112 = vpow.pop %v7111
    %v7113 = vmul.f32 %v7071, 1.442695
    %v7114 = vpow.pop %v7113
    %v7115 = vmul.f32 %v7072, 1.442695
    %v7116 = vpow.pop %v7115
    %v7117 = vmul.f32 %v7073, 1.442695
    %v7118 = vpow.pop %v7117
    %v7119 = vmul.f32 %v7074, 1.442695
    %v7120 = vpow.pop %v7119
    %v7121 = vmul.f32 %v7075, 1.442695
    %v7122 = vpow.pop %v7121
    %v7123 = vmul.f32 %v7076, 1.442695
    %v7124 = vpow.pop %v7123
    %v7125 = vmul.f32 %v7077, 1.442695
    %v7126 = vpow.pop %v7125
    %v7127 = vmul.f32 %v7078, 1.442695
    %v7128 = vpow.pop %v7127
    %v7129 = vmul.f32 %v7079, 1.442695
    %v7130 = vpow.pop %v7129
    %v7131 = vmul.f32 %v7080, 1.442695
    %v7132 = vpow.pop %v7131
    %v7133 = vmul.f32 %v7081, 1.442695
    %v7134 = vpow.pop %v7133
    %v7135 = vmul.f32 %v7082, 1.442695
    %v7136 = vpow.pop %v7135
    %v7137 = vmul.f32 %v7083, 1.442695
    %v7138 = vpow.pop %v7137
    %v7139 = vmul.f32 %v7084, 1.442695
    %v7140 = vpow.pop %v7139
    %v7141 = vmul.f32 %v7085, 1.442695
    %v7142 = vpow.pop %v7141
    %v7143 = vmul.f32 %v7086, 1.442695
    %v7144 = vpow.pop %v7143
    %v7145 = vmul.f32 %v7087, 1.442695
    %v7146 = vpow.pop %v7145
    %v7147 = vmul.f32 %v7088, 1.442695
    %v7148 = vpow.pop %v7147
    %v7149 = vmul.f32 %v7089, 1.442695
    %v7150 = vpow.pop %v7149
    %v7151 = vmul.f32 %v7090, 1.442695
    %v7152 = vpow.pop %v7151
    %v7153 = vmul.f32 %v7091, 1.442695
    %v7154 = vpow.pop %v7153
    %v7155 = vmul.f32 %v7092, 1.442695
    %v7156 = vpow.pop %v7155
    %v7157 = vadd.f32 %v7094, 1.0
    %v7158 = vadd.f32 %v7096, 1.0
    %v7159 = vadd.f32 %v7098, 1.0
    %v7160 = vadd.f32 %v7100, 1.0
    %v7161 = vadd.f32 %v7102, 1.0
    %v7162 = vadd.f32 %v7104, 1.0
    %v7163 = vadd.f32 %v7106, 1.0
    %v7164 = vadd.f32 %v7108, 1.0
    %v7165 = vadd.f32 %v7110, 1.0
    %v7166 = vadd.f32 %v7112, 1.0
    %v7167 = vadd.f32 %v7114, 1.0
    %v7168 = vadd.f32 %v7116, 1.0
    %v7169 = vadd.f32 %v7118, 1.0
    %v7170 = vadd.f32 %v7120, 1.0
    %v7171 = vadd.f32 %v7122, 1.0
    %v7172 = vadd.f32 %v7124, 1.0
    %v7173 = vadd.f32 %v7126, 1.0
    %v7174 = vadd.f32 %v7128, 1.0
    %v7175 = vadd.f32 %v7130, 1.0
    %v7176 = vadd.f32 %v7132, 1.0
    %v7177 = vadd.f32 %v7134, 1.0
    %v7178 = vadd.f32 %v7136, 1.0
    %v7179 = vadd.f32 %v7138, 1.0
    %v7180 = vadd.f32 %v7140, 1.0
    %v7181 = vadd.f32 %v7142, 1.0
    %v7182 = vadd.f32 %v7144, 1.0
    %v7183 = vadd.f32 %v7146, 1.0
    %v7184 = vadd.f32 %v7148, 1.0
    %v7185 = vadd.f32 %v7150, 1.0
    %v7186 = vadd.f32 %v7152, 1.0
    %v7187 = vadd.f32 %v7154, 1.0
    %v7188 = vadd.f32 %v7156, 1.0
    %v7189 = vrcp.pop %v7157
    %v7190 = vmul.f32 1.0, %v7189
    %v7191 = vrcp.pop %v7158
    %v7192 = vmul.f32 1.0, %v7191
    %v7193 = vrcp.pop %v7159
    %v7194 = vmul.f32 1.0, %v7193
    %v7195 = vrcp.pop %v7160
    %v7196 = vmul.f32 1.0, %v7195
    %v7197 = vrcp.pop %v7161
    %v7198 = vmul.f32 1.0, %v7197
    %v7199 = vrcp.pop %v7162
    %v7200 = vmul.f32 1.0, %v7199
    %v7201 = vrcp.pop %v7163
    %v7202 = vmul.f32 1.0, %v7201
    %v7203 = vrcp.pop %v7164
    %v7204 = vmul.f32 1.0, %v7203
    %v7205 = vrcp.pop %v7165
    %v7206 = vmul.f32 1.0, %v7205
    %v7207 = vrcp.pop %v7166
    %v7208 = vmul.f32 1.0, %v7207
    %v7209 = vrcp.pop %v7167
    %v7210 = vmul.f32 1.0, %v7209
    %v7211 = vrcp.pop %v7168
    %v7212 = vmul.f32 1.0, %v7211
    %v7213 = vrcp.pop %v7169
    %v7214 = vmul.f32 1.0, %v7213
    %v7215 = vrcp.pop %v7170
    %v7216 = vmul.f32 1.0, %v7215
    %v7217 = vrcp.pop %v7171
    %v7218 = vmul.f32 1.0, %v7217
    %v7219 = vrcp.pop %v7172
    %v7220 = vmul.f32 1.0, %v7219
    %v7221 = vrcp.pop %v7173
    %v7222 = vmul.f32 1.0, %v7221
    %v7223 = vrcp.pop %v7174
    %v7224 = vmul.f32 1.0, %v7223
    %v7225 = vrcp.pop %v7175
    %v7226 = vmul.f32 1.0, %v7225
    %v7227 = vrcp.pop %v7176
    %v7228 = vmul.f32 1.0, %v7227
    %v7229 = vrcp.pop %v7177
    %v7230 = vmul.f32 1.0, %v7229
    %v7231 = vrcp.pop %v7178
    %v7232 = vmul.f32 1.0, %v7231
    %v7233 = vrcp.pop %v7179
    %v7234 = vmul.f32 1.0, %v7233
    %v7235 = vrcp.pop %v7180
    %v7236 = vmul.f32 1.0, %v7235
    %v7237 = vrcp.pop %v7181
    %v7238 = vmul.f32 1.0, %v7237
    %v7239 = vrcp.pop %v7182
    %v7240 = vmul.f32 1.0, %v7239
    %v7241 = vrcp.pop %v7183
    %v7242 = vmul.f32 1.0, %v7241
    %v7243 = vrcp.pop %v7184
    %v7244 = vmul.f32 1.0, %v7243
    %v7245 = vrcp.pop %v7185
    %v7246 = vmul.f32 1.0, %v7245
    %v7247 = vrcp.pop %v7186
    %v7248 = vmul.f32 1.0, %v7247
    %v7249 = vrcp.pop %v7187
    %v7250 = vmul.f32 1.0, %v7249
    %v7251 = vrcp.pop %v7188
    %v7252 = vmul.f32 1.0, %v7251
    %7254 = vset.pattern.permute.xlu0 0
    %7255 = vperm.xlu0 %7254, %v7190
    %v7256 = vpop.permute.xlu0 %7255
    %7259 = vset.pattern.permute.xlu0 0
    %7260 = vperm.xlu0 %7259, %v7192
    %v7261 = vpop.permute.xlu0 %7260
    %7264 = vset.pattern.permute.xlu0 0
    %7265 = vperm.xlu0 %7264, %v7194
    %v7266 = vpop.permute.xlu0 %7265
    %7269 = vset.pattern.permute.xlu0 0
    %7270 = vperm.xlu0 %7269, %v7196
    %v7271 = vpop.permute.xlu0 %7270
    %7274 = vset.pattern.permute.xlu0 0
    %7275 = vperm.xlu0 %7274, %v7198
    %v7276 = vpop.permute.xlu0 %7275
    %7279 = vset.pattern.permute.xlu0 0
    %7280 = vperm.xlu0 %7279, %v7200
    %v7281 = vpop.permute.xlu0 %7280
    %7284 = vset.pattern.permute.xlu0 0
    %7285 = vperm.xlu0 %7284, %v7202
    %v7286 = vpop.permute.xlu0 %7285
    %7289 = vset.pattern.permute.xlu0 0
    %7290 = vperm.xlu0 %7289, %v7204
    %v7291 = vpop.permute.xlu0 %7290
    %7294 = vset.pattern.permute.xlu0 0
    %7295 = vperm.xlu0 %7294, %v7206
    %v7296 = vpop.permute.xlu0 %7295
    %7299 = vset.pattern.permute.xlu0 0
    %7300 = vperm.xlu0 %7299, %v7208
    %v7301 = vpop.permute.xlu0 %7300
    %7304 = vset.pattern.permute.xlu0 0
    %7305 = vperm.xlu0 %7304, %v7210
    %v7306 = vpop.permute.xlu0 %7305
    %7309 = vset.pattern.permute.xlu0 0
    %7310 = vperm.xlu0 %7309, %v7212
    %v7311 = vpop.permute.xlu0 %7310
    %7314 = vset.pattern.permute.xlu0 0
    %7315 = vperm.xlu0 %7314, %v7214
    %v7316 = vpop.permute.xlu0 %7315
    %7319 = vset.pattern.permute.xlu0 0
    %7320 = vperm.xlu0 %7319, %v7216
    %v7321 = vpop.permute.xlu0 %7320
    %7324 = vset.pattern.permute.xlu0 0
    %7325 = vperm.xlu0 %7324, %v7218
    %v7326 = vpop.permute.xlu0 %7325
    %7329 = vset.pattern.permute.xlu0 0
    %7330 = vperm.xlu0 %7329, %v7220
    %v7331 = vpop.permute.xlu0 %7330
    %7334 = vset.pattern.permute.xlu0 0
    %7335 = vperm.xlu0 %7334, %v7222
    %v7336 = vpop.permute.xlu0 %7335
    %7339 = vset.pattern.permute.xlu0 0
    %7340 = vperm.xlu0 %7339, %v7224
    %v7341 = vpop.permute.xlu0 %7340
    %7344 = vset.pattern.permute.xlu0 0
    %7345 = vperm.xlu0 %7344, %v7226
    %v7346 = vpop.permute.xlu0 %7345
    %7349 = vset.pattern.permute.xlu0 0
    %7350 = vperm.xlu0 %7349, %v7228
    %v7351 = vpop.permute.xlu0 %7350
    %7354 = vset.pattern.permute.xlu0 0
    %7355 = vperm.xlu0 %7354, %v7230
    %v7356 = vpop.permute.xlu0 %7355
    %7359 = vset.pattern.permute.xlu0 0
    %7360 = vperm.xlu0 %7359, %v7232
    %v7361 = vpop.permute.xlu0 %7360
    %7364 = vset.pattern.permute.xlu0 0
    %7365 = vperm.xlu0 %7364, %v7234
    %v7366 = vpop.permute.xlu0 %7365
    %7369 = vset.pattern.permute.xlu0 0
    %7370 = vperm.xlu0 %7369, %v7236
    %v7371 = vpop.permute.xlu0 %7370
    %7374 = vset.pattern.permute.xlu0 0
    %7375 = vperm.xlu0 %7374, %v7238
    %v7376 = vpop.permute.xlu0 %7375
    %7379 = vset.pattern.permute.xlu0 0
    %7380 = vperm.xlu0 %7379, %v7240
    %v7381 = vpop.permute.xlu0 %7380
    %7384 = vset.pattern.permute.xlu0 0
    %7385 = vperm.xlu0 %7384, %v7242
    %v7386 = vpop.permute.xlu0 %7385
    %7389 = vset.pattern.permute.xlu0 0
    %7390 = vperm.xlu0 %7389, %v7244
    %v7391 = vpop.permute.xlu0 %7390
    %7394 = vset.pattern.permute.xlu0 0
    %7395 = vperm.xlu0 %7394, %v7246
    %v7396 = vpop.permute.xlu0 %7395
    %7399 = vset.pattern.permute.xlu0 0
    %7400 = vperm.xlu0 %7399, %v7248
    %v7401 = vpop.permute.xlu0 %7400
    %7404 = vset.pattern.permute.xlu0 0
    %7405 = vperm.xlu0 %7404, %v7250
    %v7406 = vpop.permute.xlu0 %7405
    %7409 = vset.pattern.permute.xlu0 0
    %7410 = vperm.xlu0 %7409, %v7252
    %v7411 = vpop.permute.xlu0 %7410
    %7413 = vst [vmem:[%s12] sm:$0xff] %v7256
    %7414 = vst [vmem:[%s12 + $0x8] sm:$0xff] %v7261
    %7415 = vst [vmem:[%s12 + $0x10] sm:$0xff] %v7266
    %7416 = vst [vmem:[%s12 + $0x18] sm:$0xff] %v7271
    %7417 = vst [vmem:[%s12 + $0x20] sm:$0xff] %v7276
    %7418 = vst [vmem:[%s12 + $0x28] sm:$0xff] %v7281
    %7419 = vst [vmem:[%s12 + $0x30] sm:$0xff] %v7286
    %7420 = vst [vmem:[%s12 + $0x38] sm:$0xff] %v7291
    %7421 = vst [vmem:[%s12 + $0x40] sm:$0xff] %v7296
    %7422 = vst [vmem:[%s12 + $0x48] sm:$0xff] %v7301
    %7423 = vst [vmem:[%s12 + $0x50] sm:$0xff] %v7306
    %7424 = vst [vmem:[%s12 + $0x58] sm:$0xff] %v7311
    %7425 = vst [vmem:[%s12 + $0x60] sm:$0xff] %v7316
    %7426 = vst [vmem:[%s12 + $0x68] sm:$0xff] %v7321
    %7427 = vst [vmem:[%s12 + $0x70] sm:$0xff] %v7326
    %7428 = vst [vmem:[%s12 + $0x78] sm:$0xff] %v7331
    %7429 = vst [vmem:[%s12 + $0x80] sm:$0xff] %v7336
    %7430 = vst [vmem:[%s12 + $0x88] sm:$0xff] %v7341
    %7431 = vst [vmem:[%s12 + $0x90] sm:$0xff] %v7346
    %7432 = vst [vmem:[%s12 + $0x98] sm:$0xff] %v7351
    %7433 = vst [vmem:[%s12 + $0xa0] sm:$0xff] %v7356
    %7434 = vst [vmem:[%s12 + $0xa8] sm:$0xff] %v7361
    %7435 = vst [vmem:[%s12 + $0xb0] sm:$0xff] %v7366
    %7436 = vst [vmem:[%s12 + $0xb8] sm:$0xff] %v7371
    %7437 = vst [vmem:[%s12 + $0xc0] sm:$0xff] %v7376
    %7438 = vst [vmem:[%s12 + $0xc8] sm:$0xff] %v7381
    %7439 = vst [vmem:[%s12 + $0xd0] sm:$0xff] %v7386
    %7440 = vst [vmem:[%s12 + $0xd8] sm:$0xff] %v7391
    %7441 = vst [vmem:[%s12 + $0xe0] sm:$0xff] %v7396
    %7442 = vst [vmem:[%s12 + $0xe8] sm:$0xff] %v7401
    %7443 = vst [vmem:[%s12 + $0xf0] sm:$0xff] %v7406
    %7444 = vst [vmem:[%s12 + $0xf8] sm:$0xff] %v7411
    // Predicated region
    $region70: #{discriminator_forward.3} parent=1 // pred_check
      _
    $region71: #{discriminator_forward.3} parent=1 // pred_check_branch
      %7446 = sbr.rel (0) target = $region73
    $region72: #{discriminator_forward.3} parent=1 // pred_region
      _
    $region73: #{discriminator_forward.3} parent=1 // pred_fallthru
      _
    // Predicated region
    $region74: #{discriminator_forward.3} parent=1 // pred_check
      _
    $region75: #{discriminator_forward.3} parent=1 // pred_check_branch
      %7448 = sbr.rel (0) target = $region77
    $region76: #{discriminator_forward.3} parent=1 // pred_region
      _
    $region77: #{discriminator_forward.3} parent=1 // pred_fallthru
      _
    %7449 = vsyncpa [#allocation4], 1
    %7450 = vsyncpa [#allocation6], 1
    %7451 = vsyncpa [#allocation9], 1

</llo_original>
